<compile_context>
chip_gen: v7x
topology: tpu7x:2x2x1
jax: 0.10.0
libtpu: 0.0.40
codegen_flags: <defaults>
</compile_context>

<pallas_src>
import numpy as np
import jax
import jax.numpy as jnp
from jax import lax
from jax.experimental import pallas as pl
from jax.experimental.pallas import tpu as pltpu

# ----------------------------- fused matmul kernel -----------------------------

def _round_up(x, m):
    return (x + m - 1) // m * m


def _make_mm_kernel(n_k, act, has_bias, has_res):
    """Returns (kernel_fn, needs_scratch)."""

    def epilogue(y, bias_ref, res_ref):
        if has_bias:
            y = y + bias_ref[...]
        if has_res:
            y = y + res_ref[...]
        if act == 'relu':
            y = jnp.maximum(y, 0.0)
        elif act == 'prelu':
            y = jnp.where(y >= 0.0, y, 0.25 * y)
        # act == 'none': identity
        return y

    if n_k == 1:
        # Single K step: no accumulator scratch, write the tile directly.
        def kernel(*refs):
            idx = 2
            a_ref, b_ref = refs[0], refs[1]
            bias_ref = refs[idx] if has_bias else None
            idx += int(has_bias)
            res_ref = refs[idx] if has_res else None
            idx += int(has_res)
            o_ref = refs[idx]
            y = jnp.dot(a_ref[...], b_ref[...], preferred_element_type=jnp.float32)
            o_ref[...] = epilogue(y, bias_ref, res_ref)
        return kernel, False

    def kernel(*refs):
        idx = 2
        a_ref, b_ref = refs[0], refs[1]
        bias_ref = refs[idx] if has_bias else None
        idx += int(has_bias)
        res_ref = refs[idx] if has_res else None
        idx += int(has_res)
        o_ref = refs[idx]
        acc_ref = refs[idx + 1]

        @pl.when(pl.program_id(2) == 0)
        def _():
            acc_ref[...] = jnp.zeros_like(acc_ref)

        acc_ref[...] += jnp.dot(a_ref[...], b_ref[...],
                                preferred_element_type=jnp.float32)

        @pl.when(pl.program_id(2) == n_k - 1)
        def _():
            o_ref[...] = epilogue(acc_ref[...], bias_ref, res_ref)

    return kernel, True


def fused_matmul(a, b, *, bias=None, residual=None, act='none'):
    """(M,K) @ (K,N) with bf16 operands / f32 accumulation, fused per-column bias,
    fused residual add and ReLU / PReLU(0.25) epilogue. Returns f32 (M,N)."""
    M, K = a.shape
    Kb, N = b.shape
    assert K == Kb

    # --- tiling (sized for the smallest VMEM: v7x 64 MiB / 32 MiB scoped) ---
    tn = 128                              # lane-dense output stores
    Np = _round_up(N, tn)
    tm = min(512, _round_up(M, 8))
    Mp = _round_up(M, tm)
    if K <= 1024:
        tk, Kp = K, K                     # single K step, no patch padding needed
    else:
        tk = 512
        Kp = _round_up(K, tk)
    n_k = Kp // tk

    a = a.astype(jnp.bfloat16)
    if (Mp, Kp) != (M, K):
        a = jnp.pad(a, ((0, Mp - M), (0, Kp - K)))
    b = b.astype(jnp.bfloat16)
    if (Kp, Np) != (K, N):
        b = jnp.pad(b, ((0, Kp - K), (0, Np - N)))

    inputs = [a, b]
    in_specs = [pl.BlockSpec((tm, tk), lambda i, j, k: (i, k)),
                pl.BlockSpec((tk, tn), lambda i, j, k: (k, j))]

    has_bias = bias is not None
    if has_bias:
        bb = bias.reshape(1, N).astype(jnp.float32)
        if Np != N:
            bb = jnp.pad(bb, ((0, 0), (0, Np - N)))
        inputs.append(bb)
        in_specs.append(pl.BlockSpec((1, tn), lambda i, j, k: (0, j)))

    has_res = residual is not None
    if has_res:
        rr = residual.astype(jnp.float32)
        if (Mp, Np) != (M, N):
            rr = jnp.pad(rr, ((0, Mp - M), (0, Np - N)))
        inputs.append(rr)
        in_specs.append(pl.BlockSpec((tm, tn), lambda i, j, k: (i, j)))

    kernel, needs_scratch = _make_mm_kernel(n_k, act, has_bias, has_res)
    scratch = [pltpu.VMEM((tm, tn), jnp.float32)] if needs_scratch else []

    out = pl.pallas_call(
        kernel,
        out_shape=jax.ShapeDtypeStruct((Mp, Np), jnp.float32),
        grid=(Mp // tm, Np // tn, n_k),
        in_specs=in_specs,
        out_specs=pl.BlockSpec((tm, tn), lambda i, j, k: (i, j)),
        scratch_shapes=scratch,
        compiler_params=pltpu.CompilerParams(
            dimension_semantics=("parallel", "parallel", "arbitrary")),
    )(*inputs)

    if (Mp, Np) != (M, N):
        out = out[:M, :N]
    return out


# ----------------------------- conv lowering (NHWC) -----------------------------

def _im2col(x, kh, kw, stride, dilation, padding):
    """x: (N,H,W,C) -> (N*oh*ow, kh*kw*C) bf16 patch matrix (layout-preserving)."""
    n, H, W, C = x.shape
    sh, sw = stride
    dh, dw = dilation
    (ph0, ph1), (pw0, pw1) = padding
    x = x.astype(jnp.bfloat16)
    if kh == 1 and kw == 1 and (sh, sw) == (1, 1) and (ph0, ph1, pw0, pw1) == (0, 0, 0, 0):
        return x.reshape(n * H * W, C), H, W           # zero-copy fast path (1x1 convs)
    xp = jnp.pad(x, ((0, 0), (ph0, ph1), (pw0, pw1), (0, 0)))
    Hp, Wp = H + ph0 + ph1, W + pw0 + pw1
    oh = (Hp - dh * (kh - 1) - 1) // sh + 1
    ow = (Wp - dw * (kw - 1) - 1) // sw + 1
    cols = []
    for i in range(kh):
        for j in range(kw):
            cols.append(xp[:, i * dh: i * dh + (oh - 1) * sh + 1: sh,
                              j * dw: j * dw + (ow - 1) * sw + 1: sw, :])
    pat = jnp.concatenate(cols, axis=-1)               # (N, oh, ow, kh*kw*C), C on lane axis
    return pat.reshape(n * oh * ow, kh * kw * C), oh, ow


def maxpool(x, k, s, p):
    """NHWC max pool."""
    return lax.reduce_window(
        x, -jnp.inf, lax.max,
        window_dimensions=(1, k, k, 1),
        window_strides=(1, s, s, 1),
        padding=((0, 0), (p, p), (p, p), (0, 0)))


def bilinear_resize(x, out_h, out_w):
    """Bilinear resize, align_corners=True (matches the reference's Upsample/interpolate)."""
    n, H, W, C = x.shape
    if (out_h, out_w) == (H, W):
        return x
    if out_h == 1 or H == 1:
        ys = jnp.zeros((out_h,), jnp.float32)
    else:
        ys = jnp.arange(out_h, dtype=jnp.float32) * ((H - 1) / (out_h - 1))
    if out_w == 1 or W == 1:
        xs = jnp.zeros((out_w,), jnp.float32)
    else:
        xs = jnp.arange(out_w, dtype=jnp.float32) * ((W - 1) / (out_w - 1))
    y0 = jnp.floor(ys).astype(jnp.int32)
    y1 = jnp.minimum(y0 + 1, H - 1)
    x0 = jnp.floor(xs).astype(jnp.int32)
    x1 = jnp.minimum(x0 + 1, W - 1)
    wy = (ys - y0.astype(jnp.float32))[None, :, None, None]
    wx = (xs - x0.astype(jnp.float32))[None, None, :, None]
    row = x[:, y0, :, :] * (1.0 - wy) + x[:, y1, :, :] * wy
    return row[:, :, x0, :] * (1.0 - wx) + row[:, :, x1, :] * wx


# ----------------------------- parameter init -----------------------------

_KEY = [jax.random.PRNGKey(42)]


def _next_key():
    _KEY[0], sub = jax.random.split(_KEY[0])
    return sub


def _kaiming(shape, fan_out):
    return jax.random.normal(_next_key(), shape, jnp.float32) * np.sqrt(2.0 / fan_out)


BN_SCALE = 1.0 / np.sqrt(1.0 + 1e-5)   # eval-mode BN with fresh running stats (mean 0, var 1)
# TODO(synk): when loading trained weights, fold the real running mean/var/gamma/beta into
#             the weight matrix and a bias vector (the kernel already supports a fused bias).


def _pair(v):
    return (v, v) if isinstance(v, int) else tuple(v)


# ----------------------------- layer builders (NHWC) -----------------------------

def make_conv_bn_act(in_ch, out_ch, kernel_size=3, stride=1, dilation=1, act_type='relu'):
    kh, kw = _pair(kernel_size)
    dh, dw = _pair(dilation)
    sh, sw = _pair(stride)
    ph, pw = dh * (kh - 1) // 2, dw * (kw - 1) // 2
    w = _kaiming((out_ch, in_ch, kh, kw), out_ch * kh * kw)
    # Weight matrix in (kh, kw, Cin) -> Cout order, BN scale folded, bf16 MXU operand.
    wmat = (w.transpose(2, 3, 1, 0).reshape(kh * kw * in_ch, out_ch)
            * BN_SCALE).astype(jnp.bfloat16)

    def apply(x):
        n = x.shape[0]
        pat, oh, ow = _im2col(x, kh, kw, (sh, sw), (dh, dw), ((ph, ph), (pw, pw)))
        out = fused_matmul(pat, wmat, act=act_type)     # BN bias is zero -> dropped
        return out.reshape(n, oh, ow, out_ch)
    return apply


def make_conv1x1(in_ch, out_ch):
    """conv1x1 (no BN). The bottleneck's residual add + activation is fused in here."""
    w = _kaiming((out_ch, in_ch, 1, 1), out_ch)
    wmat = w.reshape(out_ch, in_ch).T.astype(jnp.bfloat16)   # (Cin, Cout)

    def apply(x, residual=None, act='none'):
        n, H, W, _ = x.shape
        pat = x.astype(jnp.bfloat16).reshape(n * H * W, in_ch)
        res2 = None if residual is None else residual.reshape(n * H * W, out_ch)
        out = fused_matmul(pat, wmat, residual=res2, act=act)
        return out.reshape(n, H, W, out_ch)
    return apply


def make_deconv_subpixel(in_ch, out_ch, kernel_size=3, stride=2):
    """ConvTranspose2d(k=3, s=2, p=1, output_padding=1, bias=False) via sub-pixel
    (phase) decomposition packed into one matmul: (M, 4*Cin) @ (4*Cin, 4*Cout)."""
    assert kernel_size == 3 and stride == 2, "only the k=3, s=2 deconv used by ENet is lowered"
    w = _kaiming((in_ch, out_ch, 3, 3), in_ch * 9)     # PyTorch ConvTranspose2d layout

    # out[2i+a, 2j+b] = sum_{(dy,ky) in rowtaps(a), (dx,kx) in coltaps(b)} x[i+dy, j+dx] * w[ky, kx]
    def taps(par):
        return [(0, 1)] if par == 0 else [(0, 2), (1, 0)]

    wc = jnp.zeros((2, 2, in_ch, 4, out_ch), jnp.float32)
    for a in (0, 1):
        for b in (0, 1):
            p = 2 * a + b
            for dy, ky in taps(a):
                for dx, kx in taps(b):
                    wc = wc.at[dy, dx, :, p, :].set(w[:, :, ky, kx])
    wmat = wc.reshape(4 * in_ch, 4 * out_ch).astype(jnp.bfloat16)

    def apply(x):
        n, H, W, C = x.shape
        xp = jnp.pad(x.astype(jnp.bfloat16), ((0, 0), (0, 1), (0, 1), (0, 0)))
        pat = jnp.concatenate(
            [xp[:, dy:dy + H, dx:dx + W, :] for dy in (0, 1) for dx in (0, 1)], axis=-1)
        pat = pat.reshape(n * H * W, 4 * C)
        out = fused_matmul(pat, wmat, act='none')               # (M, 4*Cout)
        out = out.reshape(n, H, W, 2, 2, out_ch)
        out = out.transpose(0, 1, 3, 2, 4, 5).reshape(n, 2 * H, 2 * W, out_ch)
        return out
    return apply


def make_upsample(in_ch, out_ch, scale_factor=2, kernel_size=None,
                  upsample_type=None, act_type='relu'):
    """ModifiedUpsample."""
    if upsample_type == 'deconvolution':
        if kernel_size is None:
            kernel_size = 2 * scale_factor - 1
        return make_deconv_subpixel(in_ch, out_ch, kernel_size=kernel_size, stride=scale_factor)
    cba = make_conv_bn_act(in_ch, out_ch, 1, act_type=act_type)

    def apply(x):
        y = cba(x)
        return bilinear_resize(y, y.shape[1] * scale_factor, y.shape[2] * scale_factor)
    return apply


def make_bottleneck(in_ch, out_ch, conv_type, act_type='prelu',
                    upsample_type='regular', dilation=1, shrink_ratio=0.25):
    """ModifiedBottleneck (Dropout is identity at inference). The residual add and the
    final activation are fused into the last 1x1 conv's matmul epilogue."""
    hid = int(in_ch * shrink_ratio)
    left_conv = None

    if conv_type == 'regular':
        right = [make_conv_bn_act(in_ch, hid, 1), make_conv_bn_act(hid, hid, 3)]
    elif conv_type == 'downsampling':
        left_conv = make_conv_bn_act(in_ch, out_ch, 1)
        right = [make_conv_bn_act(in_ch, hid, 3, 2), make_conv_bn_act(hid, hid, 3)]
    elif conv_type == 'upsampling':
        left_conv = make_conv_bn_act(in_ch, out_ch, 1)
        right = [make_conv_bn_act(in_ch, hid, 1),
                 make_upsample(hid, hid, scale_factor=2, kernel_size=3,
                               upsample_type=upsample_type)]
    elif conv_type == 'dilate':
        right = [make_conv_bn_act(in_ch, hid, 1),
                 make_conv_bn_act(hid, hid, 3, dilation=dilation)]
    elif conv_type == 'asymmetric':
        right = [make_conv_bn_act(in_ch, hid, 1),
                 make_conv_bn_act(hid, hid, (5, 1)),
                 make_conv_bn_act(hid, hid, (1, 5))]
    else:
        raise ValueError(conv_type)

    right_last = make_conv1x1(hid, out_ch)   # + Dropout (identity at inference)

    def apply(x):
        # Left (skip) path first; it becomes the fused residual of the last right conv.
        if conv_type == 'downsampling':
            left = left_conv(maxpool(x, 2, 2, 0))
        elif conv_type == 'upsampling':
            xl = left_conv(x)
            left = bilinear_resize(xl, xl.shape[1] * 2, xl.shape[2] * 2)
        else:
            left = x
        xr = x
        for f in right:
            xr = f(xr)
        return right_last(xr, residual=left, act=act_type)
    return apply


def _bneck23_regular(ch, act_type):
    return [
        make_bottleneck(ch, ch, 'regular', act_type),
        make_bottleneck(ch, ch, 'dilate', act_type, dilation=2),
        make_bottleneck(ch, ch, 'asymmetric', act_type),
        make_bottleneck(ch, ch, 'dilate', act_type, dilation=4),
        make_bottleneck(ch, ch, 'regular', act_type),
        make_bottleneck(ch, ch, 'dilate', act_type, dilation=8),
        make_bottleneck(ch, ch, 'asymmetric', act_type),
        make_bottleneck(ch, ch, 'dilate', act_type, dilation=16),
    ]


def build_enet(num_classes, input_channels=3, act_type='prelu',
               upsample_type='deconvolution'):
    # ModifiedInitialBlock
    initial_conv = make_conv_bn_act(input_channels, 16 - input_channels, 3, 2,
                                    act_type=act_type)
    # ModifiedBottleNeck1: 16 -> 64
    bn1 = [make_bottleneck(16, 64, 'downsampling', act_type)] + \
          [make_bottleneck(64, 64, 'regular', act_type) for _ in range(4)]
    # ModifiedBottleNeck23 (downsample): 64 -> 128
    bn2 = [make_bottleneck(64, 128, 'downsampling', act_type)] + _bneck23_regular(128, act_type)
    # ModifiedBottleNeck23 (no downsample): 128 -> 128
    bn3 = _bneck23_regular(128, act_type)
    # ModifiedBottleNeck45: 128 -> 64 (extra conv)
    bn4 = [make_bottleneck(128, 64, 'upsampling', act_type, upsample_type),
           make_bottleneck(64, 64, 'regular', act_type),
           make_bottleneck(64, 64, 'regular', act_type)]
    # ModifiedBottleNeck45: 64 -> 16
    bn5 = [make_bottleneck(64, 16, 'upsampling', act_type, upsample_type),
           make_bottleneck(16, 16, 'regular', act_type)]
    # fullconv = ModifiedUpsample(16, num_classes, scale_factor=2, act_type=act_type)
    fullconv = make_upsample(16, num_classes, scale_factor=2, act_type=act_type)
    stages = bn1 + bn2 + bn3 + bn4 + bn5

    def forward(x_nchw):
        x = x_nchw.transpose(0, 2, 3, 1)               # NCHW -> NHWC (C on lane axis)
        in_h, in_w = x.shape[1], x.shape[2]
        # initial block: conv (stride 2) || maxpool(3,2,1), concat on channels
        x = jnp.concatenate([initial_conv(x), maxpool(x, 3, 2, 1)], axis=-1)
        for f in stages:
            x = f(x)
        x = fullconv(x)                                 # ConvBNAct 1x1 + bilinear x2
        x = bilinear_resize(x, in_h, in_w)              # F.interpolate(..., align_corners=True)
        return x.transpose(0, 3, 1, 2)                  # back to NCHW
    return forward


# ----------------------------- main -----------------------------

if __name__ == "__main__":
    num_classes = 4
    forward = build_enet(num_classes=num_classes, input_channels=3,
                         act_type='prelu', upsample_type='deconvolution')
    fwd = jax.jit(forward)

    x = jax.random.normal(jax.random.PRNGKey(0), (2, 3, 32, 32), jnp.float32)
    out = jax.block_until_ready(fwd(x))
    assert out.shape == (2, num_classes, 32, 32), out.shape
    assert bool(jnp.all(jnp.isfinite(out)))
    print("KERNEL_OK")
</pallas_src>

<mosaic_0001>
module attributes {stable_mosaic.version = 11 : i64} {
  func.func @kernel(%arg0: i32, %arg1: i32, %arg2: i32, %arg3: memref<512x27xbf16, #tpu.memory_space<vmem>>, %arg4: memref<27x128xbf16, #tpu.memory_space<vmem>>, %arg5: memref<512x128xf32, #tpu.memory_space<vmem>>) attributes {dimension_semantics = [#tpu.dimension_semantics<parallel>, #tpu.dimension_semantics<parallel>, #tpu.dimension_semantics<arbitrary>], iteration_bounds = array<i64: 1, 1, 1>, scalar_prefetch = 0 : i64, scratch_operands = 0 : i64, tpu.core_type = #tpu.core_type<tc>, window_params = [{transform_indices = @transform_0, window_bounds = array<i64: 512, 27>}, {transform_indices = @transform_1, window_bounds = array<i64: 27, 128>}, {transform_indices = @transform_2, window_bounds = array<i64: 512, 128>}]} {
    %c0 = arith.constant 0 : index
    %c0_0 = arith.constant 0 : index
    %0 = vector.load %arg3[%c0, %c0_0] : memref<512x27xbf16, #tpu.memory_space<vmem>>, vector<512x27xbf16>
    %c0_1 = arith.constant 0 : index
    %c0_2 = arith.constant 0 : index
    %1 = vector.load %arg4[%c0_1, %c0_2] : memref<27x128xbf16, #tpu.memory_space<vmem>>, vector<27x128xbf16>
    %cst = arith.constant dense<0.000000e+00> : vector<512x128xf32>
    %2 = tpu.matmul %0, %1, %cst {dimension_numbers = #tpu.dot_dimension_numbers<[1], [0], [0], [1], [0, 0, 1, 1], [], []>} : vector<512x27xbf16>, vector<27x128xbf16>, vector<512x128xf32> -> vector<512x128xf32>
    %cst_3 = arith.constant 0.000000e+00 : f32
    %3 = vector.broadcast %cst_3 : f32 to vector<512x128xf32>
    %4 = arith.cmpf oge, %2, %3 : vector<512x128xf32>
    %cst_4 = arith.constant 2.500000e-01 : f32
    %5 = vector.broadcast %cst_4 : f32 to vector<512x128xf32>
    %6 = arith.mulf %5, %2 : vector<512x128xf32>
    %7 = arith.select %4, %2, %6 : vector<512x128xi1>, vector<512x128xf32>
    %c0_5 = arith.constant 0 : index
    %c0_6 = arith.constant 0 : index
    %8 = vector.load %arg5[%c0_5, %c0_6] : memref<512x128xf32, #tpu.memory_space<vmem>>, vector<512x128xf32>
    tpu.vector_store %arg5[%c0_5, %c0_6], %7 {strides = array<i32>} : memref<512x128xf32, #tpu.memory_space<vmem>>, vector<512x128xf32>,
    return
  }
  func.func @transform_0(%arg0: i32, %arg1: i32, %arg2: i32) -> (i32, i32) {
    %c0_i32 = arith.constant 0 : i32
    return %arg0, %arg2 : i32, i32
  }
  func.func @transform_1(%arg0: i32, %arg1: i32, %arg2: i32) -> (i32, i32) {
    %c0_i32 = arith.constant 0 : i32
    return %arg2, %arg1 : i32, i32
  }
  func.func @transform_2(%arg0: i32, %arg1: i32, %arg2: i32) -> (i32, i32) {
    %c0_i32 = arith.constant 0 : i32
    return %arg0, %arg1 : i32, i32
  }
}

module attributes {stable_mosaic.version = 11 : i64} {
  func.func @kernel(%arg0: i32, %arg1: i32, %arg2: i32, %arg3: memref<128x144xbf16, #tpu.memory_space<vmem>>, %arg4: memref<144x128xbf16, #tpu.memory_space<vmem>>, %arg5: memref<128x128xf32, #tpu.memory_space<vmem>>) attributes {dimension_semantics = [#tpu.dimension_semantics<parallel>, #tpu.dimension_semantics<parallel>, #tpu.dimension_semantics<arbitrary>], iteration_bounds = array<i64: 1, 1, 1>, scalar_prefetch = 0 : i64, scratch_operands = 0 : i64, tpu.core_type = #tpu.core_type<tc>, window_params = [{transform_indices = @transform_0, window_bounds = array<i64: 128, 144>}, {transform_indices = @transform_1, window_bounds = array<i64: 144, 128>}, {transform_indices = @transform_2, window_bounds = array<i64: 128, 128>}]} {
    %c0 = arith.constant 0 : index
    %c0_0 = arith.constant 0 : index
    %0 = vector.load %arg3[%c0, %c0_0] : memref<128x144xbf16, #tpu.memory_space<vmem>>, vector<128x144xbf16>
    %c0_1 = arith.constant 0 : index
    %c0_2 = arith.constant 0 : index
    %1 = vector.load %arg4[%c0_1, %c0_2] : memref<144x128xbf16, #tpu.memory_space<vmem>>, vector<144x128xbf16>
    %cst = arith.constant dense<0.000000e+00> : vector<128x128xf32>
    %2 = tpu.matmul %0, %1, %cst {dimension_numbers = #tpu.dot_dimension_numbers<[1], [0], [0], [1], [0, 0, 1, 1], [], []>} : vector<128x144xbf16>, vector<144x128xbf16>, vector<128x128xf32> -> vector<128x128xf32>
    %cst_3 = arith.constant 0.000000e+00 : f32
    %3 = vector.broadcast %cst_3 : f32 to vector<128x128xf32>
    %4 = arith.maximumf %2, %3 : vector<128x128xf32>
    %c0_4 = arith.constant 0 : index
    %c0_5 = arith.constant 0 : index
    %5 = vector.load %arg5[%c0_4, %c0_5] : memref<128x128xf32, #tpu.memory_space<vmem>>, vector<128x128xf32>
    tpu.vector_store %arg5[%c0_4, %c0_5], %4 {strides = array<i32>} : memref<128x128xf32, #tpu.memory_space<vmem>>, vector<128x128xf32>,
    return
  }
  func.func @transform_0(%arg0: i32, %arg1: i32, %arg2: i32) -> (i32, i32) {
    %c0_i32 = arith.constant 0 : i32
    return %arg0, %arg2 : i32, i32
  }
  func.func @transform_1(%arg0: i32, %arg1: i32, %arg2: i32) -> (i32, i32) {
    %c0_i32 = arith.constant 0 : i32
    return %arg2, %arg1 : i32, i32
  }
  func.func @transform_2(%arg0: i32, %arg1: i32, %arg2: i32) -> (i32, i32) {
    %c0_i32 = arith.constant 0 : i32
    return %arg0, %arg1 : i32, i32
  }
}

module attributes {stable_mosaic.version = 11 : i64} {
  func.func @kernel(%arg0: i32, %arg1: i32, %arg2: i32, %arg3: memref<128x36xbf16, #tpu.memory_space<vmem>>, %arg4: memref<36x128xbf16, #tpu.memory_space<vmem>>, %arg5: memref<128x128xf32, #tpu.memory_space<vmem>>) attributes {dimension_semantics = [#tpu.dimension_semantics<parallel>, #tpu.dimension_semantics<parallel>, #tpu.dimension_semantics<arbitrary>], iteration_bounds = array<i64: 1, 1, 1>, scalar_prefetch = 0 : i64, scratch_operands = 0 : i64, tpu.core_type = #tpu.core_type<tc>, window_params = [{transform_indices = @transform_0, window_bounds = array<i64: 128, 36>}, {transform_indices = @transform_1, window_bounds = array<i64: 36, 128>}, {transform_indices = @transform_2, window_bounds = array<i64: 128, 128>}]} {
    %c0 = arith.constant 0 : index
    %c0_0 = arith.constant 0 : index
    %0 = vector.load %arg3[%c0, %c0_0] : memref<128x36xbf16, #tpu.memory_space<vmem>>, vector<128x36xbf16>
    %c0_1 = arith.constant 0 : index
    %c0_2 = arith.constant 0 : index
    %1 = vector.load %arg4[%c0_1, %c0_2] : memref<36x128xbf16, #tpu.memory_space<vmem>>, vector<36x128xbf16>
    %cst = arith.constant dense<0.000000e+00> : vector<128x128xf32>
    %2 = tpu.matmul %0, %1, %cst {dimension_numbers = #tpu.dot_dimension_numbers<[1], [0], [0], [1], [0, 0, 1, 1], [], []>} : vector<128x36xbf16>, vector<36x128xbf16>, vector<128x128xf32> -> vector<128x128xf32>
    %cst_3 = arith.constant 0.000000e+00 : f32
    %3 = vector.broadcast %cst_3 : f32 to vector<128x128xf32>
    %4 = arith.maximumf %2, %3 : vector<128x128xf32>
    %c0_4 = arith.constant 0 : index
    %c0_5 = arith.constant 0 : index
    %5 = vector.load %arg5[%c0_4, %c0_5] : memref<128x128xf32, #tpu.memory_space<vmem>>, vector<128x128xf32>
    tpu.vector_store %arg5[%c0_4, %c0_5], %4 {strides = array<i32>} : memref<128x128xf32, #tpu.memory_space<vmem>>, vector<128x128xf32>,
    return
  }
  func.func @transform_0(%arg0: i32, %arg1: i32, %arg2: i32) -> (i32, i32) {
    %c0_i32 = arith.constant 0 : i32
    return %arg0, %arg2 : i32, i32
  }
  func.func @transform_1(%arg0: i32, %arg1: i32, %arg2: i32) -> (i32, i32) {
    %c0_i32 = arith.constant 0 : i32
    return %arg2, %arg1 : i32, i32
  }
  func.func @transform_2(%arg0: i32, %arg1: i32, %arg2: i32) -> (i32, i32) {
    %c0_i32 = arith.constant 0 : i32
    return %arg0, %arg1 : i32, i32
  }
}

module attributes {stable_mosaic.version = 11 : i64} {
  func.func @kernel(%arg0: i32, %arg1: i32, %arg2: i32, %arg3: memref<128x16xbf16, #tpu.memory_space<vmem>>, %arg4: memref<16x128xbf16, #tpu.memory_space<vmem>>, %arg5: memref<128x128xf32, #tpu.memory_space<vmem>>) attributes {dimension_semantics = [#tpu.dimension_semantics<parallel>, #tpu.dimension_semantics<parallel>, #tpu.dimension_semantics<arbitrary>], iteration_bounds = array<i64: 1, 1, 1>, scalar_prefetch = 0 : i64, scratch_operands = 0 : i64, tpu.core_type = #tpu.core_type<tc>, window_params = [{transform_indices = @transform_0, window_bounds = array<i64: 128, 16>}, {transform_indices = @transform_1, window_bounds = array<i64: 16, 128>}, {transform_indices = @transform_2, window_bounds = array<i64: 128, 128>}]} {
    %c0 = arith.constant 0 : index
    %c0_0 = arith.constant 0 : index
    %0 = vector.load %arg3[%c0, %c0_0] : memref<128x16xbf16, #tpu.memory_space<vmem>>, vector<128x16xbf16>
    %c0_1 = arith.constant 0 : index
    %c0_2 = arith.constant 0 : index
    %1 = vector.load %arg4[%c0_1, %c0_2] : memref<16x128xbf16, #tpu.memory_space<vmem>>, vector<16x128xbf16>
    %cst = arith.constant dense<0.000000e+00> : vector<128x128xf32>
    %2 = tpu.matmul %0, %1, %cst {dimension_numbers = #tpu.dot_dimension_numbers<[1], [0], [0], [1], [0, 0, 1, 1], [], []>} : vector<128x16xbf16>, vector<16x128xbf16>, vector<128x128xf32> -> vector<128x128xf32>
    %cst_3 = arith.constant 0.000000e+00 : f32
    %3 = vector.broadcast %cst_3 : f32 to vector<128x128xf32>
    %4 = arith.maximumf %2, %3 : vector<128x128xf32>
    %c0_4 = arith.constant 0 : index
    %c0_5 = arith.constant 0 : index
    %5 = vector.load %arg5[%c0_4, %c0_5] : memref<128x128xf32, #tpu.memory_space<vmem>>, vector<128x128xf32>
    tpu.vector_store %arg5[%c0_4, %c0_5], %4 {strides = array<i32>} : memref<128x128xf32, #tpu.memory_space<vmem>>, vector<128x128xf32>,
    return
  }
  func.func @transform_0(%arg0: i32, %arg1: i32, %arg2: i32) -> (i32, i32) {
    %c0_i32 = arith.constant 0 : i32
    return %arg0, %arg2 : i32, i32
  }
  func.func @transform_1(%arg0: i32, %arg1: i32, %arg2: i32) -> (i32, i32) {
    %c0_i32 = arith.constant 0 : i32
    return %arg2, %arg1 : i32, i32
  }
  func.func @transform_2(%arg0: i32, %arg1: i32, %arg2: i32) -> (i32, i32) {
    %c0_i32 = arith.constant 0 : i32
    return %arg0, %arg1 : i32, i32
  }
}

module attributes {stable_mosaic.version = 11 : i64} {
  func.func @kernel(%arg0: i32, %arg1: i32, %arg2: i32, %arg3: memref<128x64xbf16, #tpu.memory_space<vmem>>, %arg4: memref<64x128xbf16, #tpu.memory_space<vmem>>, %arg5: memref<128x128xf32, #tpu.memory_space<vmem>>) attributes {dimension_semantics = [#tpu.dimension_semantics<parallel>, #tpu.dimension_semantics<parallel>, #tpu.dimension_semantics<arbitrary>], iteration_bounds = array<i64: 1, 1, 1>, scalar_prefetch = 0 : i64, scratch_operands = 0 : i64, tpu.core_type = #tpu.core_type<tc>, window_params = [{transform_indices = @transform_0, window_bounds = array<i64: 128, 64>}, {transform_indices = @transform_1, window_bounds = array<i64: 64, 128>}, {transform_indices = @transform_2, window_bounds = array<i64: 128, 128>}]} {
    %c0 = arith.constant 0 : index
    %c0_0 = arith.constant 0 : index
    %0 = vector.load %arg3[%c0, %c0_0] : memref<128x64xbf16, #tpu.memory_space<vmem>>, vector<128x64xbf16>
    %c0_1 = arith.constant 0 : index
    %c0_2 = arith.constant 0 : index
    %1 = vector.load %arg4[%c0_1, %c0_2] : memref<64x128xbf16, #tpu.memory_space<vmem>>, vector<64x128xbf16>
    %cst = arith.constant dense<0.000000e+00> : vector<128x128xf32>
    %2 = tpu.matmul %0, %1, %cst {dimension_numbers = #tpu.dot_dimension_numbers<[1], [0], [0], [1], [0, 0, 1, 1], [], []>} : vector<128x64xbf16>, vector<64x128xbf16>, vector<128x128xf32> -> vector<128x128xf32>
    %cst_3 = arith.constant 0.000000e+00 : f32
    %3 = vector.broadcast %cst_3 : f32 to vector<128x128xf32>
    %4 = arith.maximumf %2, %3 : vector<128x128xf32>
    %c0_4 = arith.constant 0 : index
    %c0_5 = arith.constant 0 : index
    %5 = vector.load %arg5[%c0_4, %c0_5] : memref<128x128xf32, #tpu.memory_space<vmem>>, vector<128x128xf32>
    tpu.vector_store %arg5[%c0_4, %c0_5], %4 {strides = array<i32>} : memref<128x128xf32, #tpu.memory_space<vmem>>, vector<128x128xf32>,
    return
  }
  func.func @transform_0(%arg0: i32, %arg1: i32, %arg2: i32) -> (i32, i32) {
    %c0_i32 = arith.constant 0 : i32
    return %arg0, %arg2 : i32, i32
  }
  func.func @transform_1(%arg0: i32, %arg1: i32, %arg2: i32) -> (i32, i32) {
    %c0_i32 = arith.constant 0 : i32
    return %arg2, %arg1 : i32, i32
  }
  func.func @transform_2(%arg0: i32, %arg1: i32, %arg2: i32) -> (i32, i32) {
    %c0_i32 = arith.constant 0 : i32
    return %arg0, %arg1 : i32, i32
  }
}

module attributes {stable_mosaic.version = 11 : i64} {
  func.func @kernel(%arg0: i32, %arg1: i32, %arg2: i32, %arg3: memref<128x4xbf16, #tpu.memory_space<vmem>>, %arg4: memref<4x128xbf16, #tpu.memory_space<vmem>>, %arg5: memref<128x128xf32, #tpu.memory_space<vmem>>, %arg6: memref<128x128xf32, #tpu.memory_space<vmem>>) attributes {dimension_semantics = [#tpu.dimension_semantics<parallel>, #tpu.dimension_semantics<parallel>, #tpu.dimension_semantics<arbitrary>], iteration_bounds = array<i64: 1, 1, 1>, scalar_prefetch = 0 : i64, scratch_operands = 0 : i64, tpu.core_type = #tpu.core_type<tc>, window_params = [{transform_indices = @transform_0, window_bounds = array<i64: 128, 4>}, {transform_indices = @transform_1, window_bounds = array<i64: 4, 128>}, {transform_indices = @transform_2, window_bounds = array<i64: 128, 128>}, {transform_indices = @transform_3, window_bounds = array<i64: 128, 128>}]} {
    %c0 = arith.constant 0 : index
    %c0_0 = arith.constant 0 : index
    %0 = vector.load %arg3[%c0, %c0_0] : memref<128x4xbf16, #tpu.memory_space<vmem>>, vector<128x4xbf16>
    %c0_1 = arith.constant 0 : index
    %c0_2 = arith.constant 0 : index
    %1 = vector.load %arg4[%c0_1, %c0_2] : memref<4x128xbf16, #tpu.memory_space<vmem>>, vector<4x128xbf16>
    %cst = arith.constant dense<0.000000e+00> : vector<128x128xf32>
    %2 = tpu.matmul %0, %1, %cst {dimension_numbers = #tpu.dot_dimension_numbers<[1], [0], [0], [1], [0, 0, 1, 1], [], []>} : vector<128x4xbf16>, vector<4x128xbf16>, vector<128x128xf32> -> vector<128x128xf32>
    %c0_3 = arith.constant 0 : index
    %c0_4 = arith.constant 0 : index
    %3 = vector.load %arg5[%c0_3, %c0_4] : memref<128x128xf32, #tpu.memory_space<vmem>>, vector<128x128xf32>
    %4 = arith.addf %2, %3 : vector<128x128xf32>
    %cst_5 = arith.constant 0.000000e+00 : f32
    %5 = vector.broadcast %cst_5 : f32 to vector<128x128xf32>
    %6 = arith.cmpf oge, %4, %5 : vector<128x128xf32>
    %cst_6 = arith.constant 2.500000e-01 : f32
    %7 = vector.broadcast %cst_6 : f32 to vector<128x128xf32>
    %8 = arith.mulf %7, %4 : vector<128x128xf32>
    %9 = arith.select %6, %4, %8 : vector<128x128xi1>, vector<128x128xf32>
    %c0_7 = arith.constant 0 : index
    %c0_8 = arith.constant 0 : index
    %10 = vector.load %arg6[%c0_7, %c0_8] : memref<128x128xf32, #tpu.memory_space<vmem>>, vector<128x128xf32>
    tpu.vector_store %arg6[%c0_7, %c0_8], %9 {strides = array<i32>} : memref<128x128xf32, #tpu.memory_space<vmem>>, vector<128x128xf32>,
    return
  }
  func.func @transform_0(%arg0: i32, %arg1: i32, %arg2: i32) -> (i32, i32) {
    %c0_i32 = arith.constant 0 : i32
    return %arg0, %arg2 : i32, i32
  }
  func.func @transform_1(%arg0: i32, %arg1: i32, %arg2: i32) -> (i32, i32) {
    %c0_i32 = arith.constant 0 : i32
    return %arg2, %arg1 : i32, i32
  }
  func.func @transform_2(%arg0: i32, %arg1: i32, %arg2: i32) -> (i32, i32) {
    %c0_i32 = arith.constant 0 : i32
    return %arg0, %arg1 : i32, i32
  }
  func.func @transform_3(%arg0: i32, %arg1: i32, %arg2: i32) -> (i32, i32) {
    %c0_i32 = arith.constant 0 : i32
    return %arg0, %arg1 : i32, i32
  }
}

module attributes {stable_mosaic.version = 11 : i64} {
  func.func @kernel(%arg0: i32, %arg1: i32, %arg2: i32, %arg3: memref<128x16xbf16, #tpu.memory_space<vmem>>, %arg4: memref<16x128xbf16, #tpu.memory_space<vmem>>, %arg5: memref<128x128xf32, #tpu.memory_space<vmem>>, %arg6: memref<128x128xf32, #tpu.memory_space<vmem>>) attributes {dimension_semantics = [#tpu.dimension_semantics<parallel>, #tpu.dimension_semantics<parallel>, #tpu.dimension_semantics<arbitrary>], iteration_bounds = array<i64: 1, 1, 1>, scalar_prefetch = 0 : i64, scratch_operands = 0 : i64, tpu.core_type = #tpu.core_type<tc>, window_params = [{transform_indices = @transform_0, window_bounds = array<i64: 128, 16>}, {transform_indices = @transform_1, window_bounds = array<i64: 16, 128>}, {transform_indices = @transform_2, window_bounds = array<i64: 128, 128>}, {transform_indices = @transform_3, window_bounds = array<i64: 128, 128>}]} {
    %c0 = arith.constant 0 : index
    %c0_0 = arith.constant 0 : index
    %0 = vector.load %arg3[%c0, %c0_0] : memref<128x16xbf16, #tpu.memory_space<vmem>>, vector<128x16xbf16>
    %c0_1 = arith.constant 0 : index
    %c0_2 = arith.constant 0 : index
    %1 = vector.load %arg4[%c0_1, %c0_2] : memref<16x128xbf16, #tpu.memory_space<vmem>>, vector<16x128xbf16>
    %cst = arith.constant dense<0.000000e+00> : vector<128x128xf32>
    %2 = tpu.matmul %0, %1, %cst {dimension_numbers = #tpu.dot_dimension_numbers<[1], [0], [0], [1], [0, 0, 1, 1], [], []>} : vector<128x16xbf16>, vector<16x128xbf16>, vector<128x128xf32> -> vector<128x128xf32>
    %c0_3 = arith.constant 0 : index
    %c0_4 = arith.constant 0 : index
    %3 = vector.load %arg5[%c0_3, %c0_4] : memref<128x128xf32, #tpu.memory_space<vmem>>, vector<128x128xf32>
    %4 = arith.addf %2, %3 : vector<128x128xf32>
    %cst_5 = arith.constant 0.000000e+00 : f32
    %5 = vector.broadcast %cst_5 : f32 to vector<128x128xf32>
    %6 = arith.cmpf oge, %4, %5 : vector<128x128xf32>
    %cst_6 = arith.constant 2.500000e-01 : f32
    %7 = vector.broadcast %cst_6 : f32 to vector<128x128xf32>
    %8 = arith.mulf %7, %4 : vector<128x128xf32>
    %9 = arith.select %6, %4, %8 : vector<128x128xi1>, vector<128x128xf32>
    %c0_7 = arith.constant 0 : index
    %c0_8 = arith.constant 0 : index
    %10 = vector.load %arg6[%c0_7, %c0_8] : memref<128x128xf32, #tpu.memory_space<vmem>>, vector<128x128xf32>
    tpu.vector_store %arg6[%c0_7, %c0_8], %9 {strides = array<i32>} : memref<128x128xf32, #tpu.memory_space<vmem>>, vector<128x128xf32>,
    return
  }
  func.func @transform_0(%arg0: i32, %arg1: i32, %arg2: i32) -> (i32, i32) {
    %c0_i32 = arith.constant 0 : i32
    return %arg0, %arg2 : i32, i32
  }
  func.func @transform_1(%arg0: i32, %arg1: i32, %arg2: i32) -> (i32, i32) {
    %c0_i32 = arith.constant 0 : i32
    return %arg2, %arg1 : i32, i32
  }
  func.func @transform_2(%arg0: i32, %arg1: i32, %arg2: i32) -> (i32, i32) {
    %c0_i32 = arith.constant 0 : i32
    return %arg0, %arg1 : i32, i32
  }
  func.func @transform_3(%arg0: i32, %arg1: i32, %arg2: i32) -> (i32, i32) {
    %c0_i32 = arith.constant 0 : i32
    return %arg0, %arg1 : i32, i32
  }
}

module attributes {stable_mosaic.version = 11 : i64} {
  func.func @kernel(%arg0: i32, %arg1: i32, %arg2: i32, %arg3: memref<32x576xbf16, #tpu.memory_space<vmem>>, %arg4: memref<576x128xbf16, #tpu.memory_space<vmem>>, %arg5: memref<32x128xf32, #tpu.memory_space<vmem>>) attributes {dimension_semantics = [#tpu.dimension_semantics<parallel>, #tpu.dimension_semantics<parallel>, #tpu.dimension_semantics<arbitrary>], iteration_bounds = array<i64: 1, 1, 1>, scalar_prefetch = 0 : i64, scratch_operands = 0 : i64, tpu.core_type = #tpu.core_type<tc>, window_params = [{transform_indices = @transform_0, window_bounds = array<i64: 32, 576>}, {transform_indices = @transform_1, window_bounds = array<i64: 576, 128>}, {transform_indices = @transform_2, window_bounds = array<i64: 32, 128>}]} {
    %c0 = arith.constant 0 : index
    %c0_0 = arith.constant 0 : index
    %0 = vector.load %arg3[%c0, %c0_0] : memref<32x576xbf16, #tpu.memory_space<vmem>>, vector<32x576xbf16>
    %c0_1 = arith.constant 0 : index
    %c0_2 = arith.constant 0 : index
    %1 = vector.load %arg4[%c0_1, %c0_2] : memref<576x128xbf16, #tpu.memory_space<vmem>>, vector<576x128xbf16>
    %cst = arith.constant dense<0.000000e+00> : vector<32x128xf32>
    %2 = tpu.matmul %0, %1, %cst {dimension_numbers = #tpu.dot_dimension_numbers<[1], [0], [0], [1], [0, 0, 1, 1], [], []>} : vector<32x576xbf16>, vector<576x128xbf16>, vector<32x128xf32> -> vector<32x128xf32>
    %cst_3 = arith.constant 0.000000e+00 : f32
    %3 = vector.broadcast %cst_3 : f32 to vector<32x128xf32>
    %4 = arith.maximumf %2, %3 : vector<32x128xf32>
    %c0_4 = arith.constant 0 : index
    %c0_5 = arith.constant 0 : index
    %5 = vector.load %arg5[%c0_4, %c0_5] : memref<32x128xf32, #tpu.memory_space<vmem>>, vector<32x128xf32>
    tpu.vector_store %arg5[%c0_4, %c0_5], %4 {strides = array<i32>} : memref<32x128xf32, #tpu.memory_space<vmem>>, vector<32x128xf32>,
    return
  }
  func.func @transform_0(%arg0: i32, %arg1: i32, %arg2: i32) -> (i32, i32) {
    %c0_i32 = arith.constant 0 : i32
    return %arg0, %arg2 : i32, i32
  }
  func.func @transform_1(%arg0: i32, %arg1: i32, %arg2: i32) -> (i32, i32) {
    %c0_i32 = arith.constant 0 : i32
    return %arg2, %arg1 : i32, i32
  }
  func.func @transform_2(%arg0: i32, %arg1: i32, %arg2: i32) -> (i32, i32) {
    %c0_i32 = arith.constant 0 : i32
    return %arg0, %arg1 : i32, i32
  }
}

module attributes {stable_mosaic.version = 11 : i64} {
  func.func @kernel(%arg0: i32, %arg1: i32, %arg2: i32, %arg3: memref<32x144xbf16, #tpu.memory_space<vmem>>, %arg4: memref<144x128xbf16, #tpu.memory_space<vmem>>, %arg5: memref<32x128xf32, #tpu.memory_space<vmem>>) attributes {dimension_semantics = [#tpu.dimension_semantics<parallel>, #tpu.dimension_semantics<parallel>, #tpu.dimension_semantics<arbitrary>], iteration_bounds = array<i64: 1, 1, 1>, scalar_prefetch = 0 : i64, scratch_operands = 0 : i64, tpu.core_type = #tpu.core_type<tc>, window_params = [{transform_indices = @transform_0, window_bounds = array<i64: 32, 144>}, {transform_indices = @transform_1, window_bounds = array<i64: 144, 128>}, {transform_indices = @transform_2, window_bounds = array<i64: 32, 128>}]} {
    %c0 = arith.constant 0 : index
    %c0_0 = arith.constant 0 : index
    %0 = vector.load %arg3[%c0, %c0_0] : memref<32x144xbf16, #tpu.memory_space<vmem>>, vector<32x144xbf16>
    %c0_1 = arith.constant 0 : index
    %c0_2 = arith.constant 0 : index
    %1 = vector.load %arg4[%c0_1, %c0_2] : memref<144x128xbf16, #tpu.memory_space<vmem>>, vector<144x128xbf16>
    %cst = arith.constant dense<0.000000e+00> : vector<32x128xf32>
    %2 = tpu.matmul %0, %1, %cst {dimension_numbers = #tpu.dot_dimension_numbers<[1], [0], [0], [1], [0, 0, 1, 1], [], []>} : vector<32x144xbf16>, vector<144x128xbf16>, vector<32x128xf32> -> vector<32x128xf32>
    %cst_3 = arith.constant 0.000000e+00 : f32
    %3 = vector.broadcast %cst_3 : f32 to vector<32x128xf32>
    %4 = arith.maximumf %2, %3 : vector<32x128xf32>
    %c0_4 = arith.constant 0 : index
    %c0_5 = arith.constant 0 : index
    %5 = vector.load %arg5[%c0_4, %c0_5] : memref<32x128xf32, #tpu.memory_space<vmem>>, vector<32x128xf32>
    tpu.vector_store %arg5[%c0_4, %c0_5], %4 {strides = array<i32>} : memref<32x128xf32, #tpu.memory_space<vmem>>, vector<32x128xf32>,
    return
  }
  func.func @transform_0(%arg0: i32, %arg1: i32, %arg2: i32) -> (i32, i32) {
    %c0_i32 = arith.constant 0 : i32
    return %arg0, %arg2 : i32, i32
  }
  func.func @transform_1(%arg0: i32, %arg1: i32, %arg2: i32) -> (i32, i32) {
    %c0_i32 = arith.constant 0 : i32
    return %arg2, %arg1 : i32, i32
  }
  func.func @transform_2(%arg0: i32, %arg1: i32, %arg2: i32) -> (i32, i32) {
    %c0_i32 = arith.constant 0 : i32
    return %arg0, %arg1 : i32, i32
  }
}

module attributes {stable_mosaic.version = 11 : i64} {
  func.func @kernel(%arg0: i32, %arg1: i32, %arg2: i32, %arg3: memref<32x16xbf16, #tpu.memory_space<vmem>>, %arg4: memref<16x128xbf16, #tpu.memory_space<vmem>>, %arg5: memref<32x128xf32, #tpu.memory_space<vmem>>, %arg6: memref<32x128xf32, #tpu.memory_space<vmem>>) attributes {dimension_semantics = [#tpu.dimension_semantics<parallel>, #tpu.dimension_semantics<parallel>, #tpu.dimension_semantics<arbitrary>], iteration_bounds = array<i64: 1, 1, 1>, scalar_prefetch = 0 : i64, scratch_operands = 0 : i64, tpu.core_type = #tpu.core_type<tc>, window_params = [{transform_indices = @transform_0, window_bounds = array<i64: 32, 16>}, {transform_indices = @transform_1, window_bounds = array<i64: 16, 128>}, {transform_indices = @transform_2, window_bounds = array<i64: 32, 128>}, {transform_indices = @transform_3, window_bounds = array<i64: 32, 128>}]} {
    %c0 = arith.constant 0 : index
    %c0_0 = arith.constant 0 : index
    %0 = vector.load %arg3[%c0, %c0_0] : memref<32x16xbf16, #tpu.memory_space<vmem>>, vector<32x16xbf16>
    %c0_1 = arith.constant 0 : index
    %c0_2 = arith.constant 0 : index
    %1 = vector.load %arg4[%c0_1, %c0_2] : memref<16x128xbf16, #tpu.memory_space<vmem>>, vector<16x128xbf16>
    %cst = arith.constant dense<0.000000e+00> : vector<32x128xf32>
    %2 = tpu.matmul %0, %1, %cst {dimension_numbers = #tpu.dot_dimension_numbers<[1], [0], [0], [1], [0, 0, 1, 1], [], []>} : vector<32x16xbf16>, vector<16x128xbf16>, vector<32x128xf32> -> vector<32x128xf32>
    %c0_3 = arith.constant 0 : index
    %c0_4 = arith.constant 0 : index
    %3 = vector.load %arg5[%c0_3, %c0_4] : memref<32x128xf32, #tpu.memory_space<vmem>>, vector<32x128xf32>
    %4 = arith.addf %2, %3 : vector<32x128xf32>
    %cst_5 = arith.constant 0.000000e+00 : f32
    %5 = vector.broadcast %cst_5 : f32 to vector<32x128xf32>
    %6 = arith.cmpf oge, %4, %5 : vector<32x128xf32>
    %cst_6 = arith.constant 2.500000e-01 : f32
    %7 = vector.broadcast %cst_6 : f32 to vector<32x128xf32>
    %8 = arith.mulf %7, %4 : vector<32x128xf32>
    %9 = arith.select %6, %4, %8 : vector<32x128xi1>, vector<32x128xf32>
    %c0_7 = arith.constant 0 : index
    %c0_8 = arith.constant 0 : index
    %10 = vector.load %arg6[%c0_7, %c0_8] : memref<32x128xf32, #tpu.memory_space<vmem>>, vector<32x128xf32>
    tpu.vector_store %arg6[%c0_7, %c0_8], %9 {strides = array<i32>} : memref<32x128xf32, #tpu.memory_space<vmem>>, vector<32x128xf32>,
    return
  }
  func.func @transform_0(%arg0: i32, %arg1: i32, %arg2: i32) -> (i32, i32) {
    %c0_i32 = arith.constant 0 : i32
    return %arg0, %arg2 : i32, i32
  }
  func.func @transform_1(%arg0: i32, %arg1: i32, %arg2: i32) -> (i32, i32) {
    %c0_i32 = arith.constant 0 : i32
    return %arg2, %arg1 : i32, i32
  }
  func.func @transform_2(%arg0: i32, %arg1: i32, %arg2: i32) -> (i32, i32) {
    %c0_i32 = arith.constant 0 : i32
    return %arg0, %arg1 : i32, i32
  }
  func.func @transform_3(%arg0: i32, %arg1: i32, %arg2: i32) -> (i32, i32) {
    %c0_i32 = arith.constant 0 : i32
    return %arg0, %arg1 : i32, i32
  }
}

module attributes {stable_mosaic.version = 11 : i64} {
  func.func @kernel(%arg0: i32, %arg1: i32, %arg2: i32, %arg3: memref<32x64xbf16, #tpu.memory_space<vmem>>, %arg4: memref<64x128xbf16, #tpu.memory_space<vmem>>, %arg5: memref<32x128xf32, #tpu.memory_space<vmem>>) attributes {dimension_semantics = [#tpu.dimension_semantics<parallel>, #tpu.dimension_semantics<parallel>, #tpu.dimension_semantics<arbitrary>], iteration_bounds = array<i64: 1, 1, 1>, scalar_prefetch = 0 : i64, scratch_operands = 0 : i64, tpu.core_type = #tpu.core_type<tc>, window_params = [{transform_indices = @transform_0, window_bounds = array<i64: 32, 64>}, {transform_indices = @transform_1, window_bounds = array<i64: 64, 128>}, {transform_indices = @transform_2, window_bounds = array<i64: 32, 128>}]} {
    %c0 = arith.constant 0 : index
    %c0_0 = arith.constant 0 : index
    %0 = vector.load %arg3[%c0, %c0_0] : memref<32x64xbf16, #tpu.memory_space<vmem>>, vector<32x64xbf16>
    %c0_1 = arith.constant 0 : index
    %c0_2 = arith.constant 0 : index
    %1 = vector.load %arg4[%c0_1, %c0_2] : memref<64x128xbf16, #tpu.memory_space<vmem>>, vector<64x128xbf16>
    %cst = arith.constant dense<0.000000e+00> : vector<32x128xf32>
    %2 = tpu.matmul %0, %1, %cst {dimension_numbers = #tpu.dot_dimension_numbers<[1], [0], [0], [1], [0, 0, 1, 1], [], []>} : vector<32x64xbf16>, vector<64x128xbf16>, vector<32x128xf32> -> vector<32x128xf32>
    %cst_3 = arith.constant 0.000000e+00 : f32
    %3 = vector.broadcast %cst_3 : f32 to vector<32x128xf32>
    %4 = arith.maximumf %2, %3 : vector<32x128xf32>
    %c0_4 = arith.constant 0 : index
    %c0_5 = arith.constant 0 : index
    %5 = vector.load %arg5[%c0_4, %c0_5] : memref<32x128xf32, #tpu.memory_space<vmem>>, vector<32x128xf32>
    tpu.vector_store %arg5[%c0_4, %c0_5], %4 {strides = array<i32>} : memref<32x128xf32, #tpu.memory_space<vmem>>, vector<32x128xf32>,
    return
  }
  func.func @transform_0(%arg0: i32, %arg1: i32, %arg2: i32) -> (i32, i32) {
    %c0_i32 = arith.constant 0 : i32
    return %arg0, %arg2 : i32, i32
  }
  func.func @transform_1(%arg0: i32, %arg1: i32, %arg2: i32) -> (i32, i32) {
    %c0_i32 = arith.constant 0 : i32
    return %arg2, %arg1 : i32, i32
  }
  func.func @transform_2(%arg0: i32, %arg1: i32, %arg2: i32) -> (i32, i32) {
    %c0_i32 = arith.constant 0 : i32
    return %arg0, %arg1 : i32, i32
  }
}

module attributes {stable_mosaic.version = 11 : i64} {
  func.func @kernel(%arg0: i32, %arg1: i32, %arg2: i32, %arg3: memref<32x128xbf16, #tpu.memory_space<vmem>>, %arg4: memref<128x128xbf16, #tpu.memory_space<vmem>>, %arg5: memref<32x128xf32, #tpu.memory_space<vmem>>) attributes {dimension_semantics = [#tpu.dimension_semantics<parallel>, #tpu.dimension_semantics<parallel>, #tpu.dimension_semantics<arbitrary>], iteration_bounds = array<i64: 1, 1, 1>, scalar_prefetch = 0 : i64, scratch_operands = 0 : i64, tpu.core_type = #tpu.core_type<tc>, window_params = [{transform_indices = @transform_0, window_bounds = array<i64: 32, 128>}, {transform_indices = @transform_1, window_bounds = array<i64: 128, 128>}, {transform_indices = @transform_2, window_bounds = array<i64: 32, 128>}]} {
    %c0 = arith.constant 0 : index
    %c0_0 = arith.constant 0 : index
    %0 = vector.load %arg3[%c0, %c0_0] : memref<32x128xbf16, #tpu.memory_space<vmem>>, vector<32x128xbf16>
    %c0_1 = arith.constant 0 : index
    %c0_2 = arith.constant 0 : index
    %1 = vector.load %arg4[%c0_1, %c0_2] : memref<128x128xbf16, #tpu.memory_space<vmem>>, vector<128x128xbf16>
    %cst = arith.constant dense<0.000000e+00> : vector<32x128xf32>
    %2 = tpu.matmul %0, %1, %cst {dimension_numbers = #tpu.dot_dimension_numbers<[1], [0], [0], [1], [0, 0, 1, 1], [], []>} : vector<32x128xbf16>, vector<128x128xbf16>, vector<32x128xf32> -> vector<32x128xf32>
    %cst_3 = arith.constant 0.000000e+00 : f32
    %3 = vector.broadcast %cst_3 : f32 to vector<32x128xf32>
    %4 = arith.maximumf %2, %3 : vector<32x128xf32>
    %c0_4 = arith.constant 0 : index
    %c0_5 = arith.constant 0 : index
    %5 = vector.load %arg5[%c0_4, %c0_5] : memref<32x128xf32, #tpu.memory_space<vmem>>, vector<32x128xf32>
    tpu.vector_store %arg5[%c0_4, %c0_5], %4 {strides = array<i32>} : memref<32x128xf32, #tpu.memory_space<vmem>>, vector<32x128xf32>,
    return
  }
  func.func @transform_0(%arg0: i32, %arg1: i32, %arg2: i32) -> (i32, i32) {
    %c0_i32 = arith.constant 0 : i32
    return %arg0, %arg2 : i32, i32
  }
  func.func @transform_1(%arg0: i32, %arg1: i32, %arg2: i32) -> (i32, i32) {
    %c0_i32 = arith.constant 0 : i32
    return %arg2, %arg1 : i32, i32
  }
  func.func @transform_2(%arg0: i32, %arg1: i32, %arg2: i32) -> (i32, i32) {
    %c0_i32 = arith.constant 0 : i32
    return %arg0, %arg1 : i32, i32
  }
}

module attributes {stable_mosaic.version = 11 : i64} {
  func.func @kernel(%arg0: i32, %arg1: i32, %arg2: i32, %arg3: memref<32x288xbf16, #tpu.memory_space<vmem>>, %arg4: memref<288x128xbf16, #tpu.memory_space<vmem>>, %arg5: memref<32x128xf32, #tpu.memory_space<vmem>>) attributes {dimension_semantics = [#tpu.dimension_semantics<parallel>, #tpu.dimension_semantics<parallel>, #tpu.dimension_semantics<arbitrary>], iteration_bounds = array<i64: 1, 1, 1>, scalar_prefetch = 0 : i64, scratch_operands = 0 : i64, tpu.core_type = #tpu.core_type<tc>, window_params = [{transform_indices = @transform_0, window_bounds = array<i64: 32, 288>}, {transform_indices = @transform_1, window_bounds = array<i64: 288, 128>}, {transform_indices = @transform_2, window_bounds = array<i64: 32, 128>}]} {
    %c0 = arith.constant 0 : index
    %c0_0 = arith.constant 0 : index
    %0 = vector.load %arg3[%c0, %c0_0] : memref<32x288xbf16, #tpu.memory_space<vmem>>, vector<32x288xbf16>
    %c0_1 = arith.constant 0 : index
    %c0_2 = arith.constant 0 : index
    %1 = vector.load %arg4[%c0_1, %c0_2] : memref<288x128xbf16, #tpu.memory_space<vmem>>, vector<288x128xbf16>
    %cst = arith.constant dense<0.000000e+00> : vector<32x128xf32>
    %2 = tpu.matmul %0, %1, %cst {dimension_numbers = #tpu.dot_dimension_numbers<[1], [0], [0], [1], [0, 0, 1, 1], [], []>} : vector<32x288xbf16>, vector<288x128xbf16>, vector<32x128xf32> -> vector<32x128xf32>
    %cst_3 = arith.constant 0.000000e+00 : f32
    %3 = vector.broadcast %cst_3 : f32 to vector<32x128xf32>
    %4 = arith.maximumf %2, %3 : vector<32x128xf32>
    %c0_4 = arith.constant 0 : index
    %c0_5 = arith.constant 0 : index
    %5 = vector.load %arg5[%c0_4, %c0_5] : memref<32x128xf32, #tpu.memory_space<vmem>>, vector<32x128xf32>
    tpu.vector_store %arg5[%c0_4, %c0_5], %4 {strides = array<i32>} : memref<32x128xf32, #tpu.memory_space<vmem>>, vector<32x128xf32>,
    return
  }
  func.func @transform_0(%arg0: i32, %arg1: i32, %arg2: i32) -> (i32, i32) {
    %c0_i32 = arith.constant 0 : i32
    return %arg0, %arg2 : i32, i32
  }
  func.func @transform_1(%arg0: i32, %arg1: i32, %arg2: i32) -> (i32, i32) {
    %c0_i32 = arith.constant 0 : i32
    return %arg2, %arg1 : i32, i32
  }
  func.func @transform_2(%arg0: i32, %arg1: i32, %arg2: i32) -> (i32, i32) {
    %c0_i32 = arith.constant 0 : i32
    return %arg0, %arg1 : i32, i32
  }
}

module attributes {stable_mosaic.version = 11 : i64} {
  func.func @kernel(%arg0: i32, %arg1: i32, %arg2: i32, %arg3: memref<32x32xbf16, #tpu.memory_space<vmem>>, %arg4: memref<32x128xbf16, #tpu.memory_space<vmem>>, %arg5: memref<32x128xf32, #tpu.memory_space<vmem>>, %arg6: memref<32x128xf32, #tpu.memory_space<vmem>>) attributes {dimension_semantics = [#tpu.dimension_semantics<parallel>, #tpu.dimension_semantics<parallel>, #tpu.dimension_semantics<arbitrary>], iteration_bounds = array<i64: 1, 1, 1>, scalar_prefetch = 0 : i64, scratch_operands = 0 : i64, tpu.core_type = #tpu.core_type<tc>, window_params = [{transform_indices = @transform_0, window_bounds = array<i64: 32, 32>}, {transform_indices = @transform_1, window_bounds = array<i64: 32, 128>}, {transform_indices = @transform_2, window_bounds = array<i64: 32, 128>}, {transform_indices = @transform_3, window_bounds = array<i64: 32, 128>}]} {
    %c0 = arith.constant 0 : index
    %c0_0 = arith.constant 0 : index
    %0 = vector.load %arg3[%c0, %c0_0] : memref<32x32xbf16, #tpu.memory_space<vmem>>, vector<32x32xbf16>
    %c0_1 = arith.constant 0 : index
    %c0_2 = arith.constant 0 : index
    %1 = vector.load %arg4[%c0_1, %c0_2] : memref<32x128xbf16, #tpu.memory_space<vmem>>, vector<32x128xbf16>
    %cst = arith.constant dense<0.000000e+00> : vector<32x128xf32>
    %2 = tpu.matmul %0, %1, %cst {dimension_numbers = #tpu.dot_dimension_numbers<[1], [0], [0], [1], [0, 0, 1, 1], [], []>} : vector<32x32xbf16>, vector<32x128xbf16>, vector<32x128xf32> -> vector<32x128xf32>
    %c0_3 = arith.constant 0 : index
    %c0_4 = arith.constant 0 : index
    %3 = vector.load %arg5[%c0_3, %c0_4] : memref<32x128xf32, #tpu.memory_space<vmem>>, vector<32x128xf32>
    %4 = arith.addf %2, %3 : vector<32x128xf32>
    %cst_5 = arith.constant 0.000000e+00 : f32
    %5 = vector.broadcast %cst_5 : f32 to vector<32x128xf32>
    %6 = arith.cmpf oge, %4, %5 : vector<32x128xf32>
    %cst_6 = arith.constant 2.500000e-01 : f32
    %7 = vector.broadcast %cst_6 : f32 to vector<32x128xf32>
    %8 = arith.mulf %7, %4 : vector<32x128xf32>
    %9 = arith.select %6, %4, %8 : vector<32x128xi1>, vector<32x128xf32>
    %c0_7 = arith.constant 0 : index
    %c0_8 = arith.constant 0 : index
    %10 = vector.load %arg6[%c0_7, %c0_8] : memref<32x128xf32, #tpu.memory_space<vmem>>, vector<32x128xf32>
    tpu.vector_store %arg6[%c0_7, %c0_8], %9 {strides = array<i32>} : memref<32x128xf32, #tpu.memory_space<vmem>>, vector<32x128xf32>,
    return
  }
  func.func @transform_0(%arg0: i32, %arg1: i32, %arg2: i32) -> (i32, i32) {
    %c0_i32 = arith.constant 0 : i32
    return %arg0, %arg2 : i32, i32
  }
  func.func @transform_1(%arg0: i32, %arg1: i32, %arg2: i32) -> (i32, i32) {
    %c0_i32 = arith.constant 0 : i32
    return %arg2, %arg1 : i32, i32
  }
  func.func @transform_2(%arg0: i32, %arg1: i32, %arg2: i32) -> (i32, i32) {
    %c0_i32 = arith.constant 0 : i32
    return %arg0, %arg1 : i32, i32
  }
  func.func @transform_3(%arg0: i32, %arg1: i32, %arg2: i32) -> (i32, i32) {
    %c0_i32 = arith.constant 0 : i32
    return %arg0, %arg1 : i32, i32
  }
}

module attributes {stable_mosaic.version = 11 : i64} {
  func.func @kernel(%arg0: i32, %arg1: i32, %arg2: i32, %arg3: memref<32x160xbf16, #tpu.memory_space<vmem>>, %arg4: memref<160x128xbf16, #tpu.memory_space<vmem>>, %arg5: memref<32x128xf32, #tpu.memory_space<vmem>>) attributes {dimension_semantics = [#tpu.dimension_semantics<parallel>, #tpu.dimension_semantics<parallel>, #tpu.dimension_semantics<arbitrary>], iteration_bounds = array<i64: 1, 1, 1>, scalar_prefetch = 0 : i64, scratch_operands = 0 : i64, tpu.core_type = #tpu.core_type<tc>, window_params = [{transform_indices = @transform_0, window_bounds = array<i64: 32, 160>}, {transform_indices = @transform_1, window_bounds = array<i64: 160, 128>}, {transform_indices = @transform_2, window_bounds = array<i64: 32, 128>}]} {
    %c0 = arith.constant 0 : index
    %c0_0 = arith.constant 0 : index
    %0 = vector.load %arg3[%c0, %c0_0] : memref<32x160xbf16, #tpu.memory_space<vmem>>, vector<32x160xbf16>
    %c0_1 = arith.constant 0 : index
    %c0_2 = arith.constant 0 : index
    %1 = vector.load %arg4[%c0_1, %c0_2] : memref<160x128xbf16, #tpu.memory_space<vmem>>, vector<160x128xbf16>
    %cst = arith.constant dense<0.000000e+00> : vector<32x128xf32>
    %2 = tpu.matmul %0, %1, %cst {dimension_numbers = #tpu.dot_dimension_numbers<[1], [0], [0], [1], [0, 0, 1, 1], [], []>} : vector<32x160xbf16>, vector<160x128xbf16>, vector<32x128xf32> -> vector<32x128xf32>
    %cst_3 = arith.constant 0.000000e+00 : f32
    %3 = vector.broadcast %cst_3 : f32 to vector<32x128xf32>
    %4 = arith.maximumf %2, %3 : vector<32x128xf32>
    %c0_4 = arith.constant 0 : index
    %c0_5 = arith.constant 0 : index
    %5 = vector.load %arg5[%c0_4, %c0_5] : memref<32x128xf32, #tpu.memory_space<vmem>>, vector<32x128xf32>
    tpu.vector_store %arg5[%c0_4, %c0_5], %4 {strides = array<i32>} : memref<32x128xf32, #tpu.memory_space<vmem>>, vector<32x128xf32>,
    return
  }
  func.func @transform_0(%arg0: i32, %arg1: i32, %arg2: i32) -> (i32, i32) {
    %c0_i32 = arith.constant 0 : i32
    return %arg0, %arg2 : i32, i32
  }
  func.func @transform_1(%arg0: i32, %arg1: i32, %arg2: i32) -> (i32, i32) {
    %c0_i32 = arith.constant 0 : i32
    return %arg2, %arg1 : i32, i32
  }
  func.func @transform_2(%arg0: i32, %arg1: i32, %arg2: i32) -> (i32, i32) {
    %c0_i32 = arith.constant 0 : i32
    return %arg0, %arg1 : i32, i32
  }
}

module attributes {stable_mosaic.version = 11 : i64} {
  func.func @kernel(%arg0: i32, %arg1: i32, %arg2: i32, %arg3: memref<32x128xbf16, #tpu.memory_space<vmem>>, %arg4: memref<128x128xbf16, #tpu.memory_space<vmem>>, %arg5: memref<32x128xf32, #tpu.memory_space<vmem>>) attributes {dimension_semantics = [#tpu.dimension_semantics<parallel>, #tpu.dimension_semantics<parallel>, #tpu.dimension_semantics<arbitrary>], iteration_bounds = array<i64: 1, 1, 1>, scalar_prefetch = 0 : i64, scratch_operands = 0 : i64, tpu.core_type = #tpu.core_type<tc>, window_params = [{transform_indices = @transform_0, window_bounds = array<i64: 32, 128>}, {transform_indices = @transform_1, window_bounds = array<i64: 128, 128>}, {transform_indices = @transform_2, window_bounds = array<i64: 32, 128>}]} {
    %c0 = arith.constant 0 : index
    %c0_0 = arith.constant 0 : index
    %0 = vector.load %arg3[%c0, %c0_0] : memref<32x128xbf16, #tpu.memory_space<vmem>>, vector<32x128xbf16>
    %c0_1 = arith.constant 0 : index
    %c0_2 = arith.constant 0 : index
    %1 = vector.load %arg4[%c0_1, %c0_2] : memref<128x128xbf16, #tpu.memory_space<vmem>>, vector<128x128xbf16>
    %cst = arith.constant dense<0.000000e+00> : vector<32x128xf32>
    %2 = tpu.matmul %0, %1, %cst {dimension_numbers = #tpu.dot_dimension_numbers<[1], [0], [0], [1], [0, 0, 1, 1], [], []>} : vector<32x128xbf16>, vector<128x128xbf16>, vector<32x128xf32> -> vector<32x128xf32>
    %c0_3 = arith.constant 0 : index
    %c0_4 = arith.constant 0 : index
    %3 = vector.load %arg5[%c0_3, %c0_4] : memref<32x128xf32, #tpu.memory_space<vmem>>, vector<32x128xf32>
    tpu.vector_store %arg5[%c0_3, %c0_4], %2 {strides = array<i32>} : memref<32x128xf32, #tpu.memory_space<vmem>>, vector<32x128xf32>,
    return
  }
  func.func @transform_0(%arg0: i32, %arg1: i32, %arg2: i32) -> (i32, i32) {
    %c0_i32 = arith.constant 0 : i32
    return %arg0, %arg2 : i32, i32
  }
  func.func @transform_1(%arg0: i32, %arg1: i32, %arg2: i32) -> (i32, i32) {
    %c0_i32 = arith.constant 0 : i32
    return %arg2, %arg1 : i32, i32
  }
  func.func @transform_2(%arg0: i32, %arg1: i32, %arg2: i32) -> (i32, i32) {
    %c0_i32 = arith.constant 0 : i32
    return %arg0, %arg1 : i32, i32
  }
}

module attributes {stable_mosaic.version = 11 : i64} {
  func.func @kernel(%arg0: i32, %arg1: i32, %arg2: i32, %arg3: memref<128x32xbf16, #tpu.memory_space<vmem>>, %arg4: memref<32x128xbf16, #tpu.memory_space<vmem>>, %arg5: memref<128x128xf32, #tpu.memory_space<vmem>>, %arg6: memref<128x128xf32, #tpu.memory_space<vmem>>) attributes {dimension_semantics = [#tpu.dimension_semantics<parallel>, #tpu.dimension_semantics<parallel>, #tpu.dimension_semantics<arbitrary>], iteration_bounds = array<i64: 1, 1, 1>, scalar_prefetch = 0 : i64, scratch_operands = 0 : i64, tpu.core_type = #tpu.core_type<tc>, window_params = [{transform_indices = @transform_0, window_bounds = array<i64: 128, 32>}, {transform_indices = @transform_1, window_bounds = array<i64: 32, 128>}, {transform_indices = @transform_2, window_bounds = array<i64: 128, 128>}, {transform_indices = @transform_3, window_bounds = array<i64: 128, 128>}]} {
    %c0 = arith.constant 0 : index
    %c0_0 = arith.constant 0 : index
    %0 = vector.load %arg3[%c0, %c0_0] : memref<128x32xbf16, #tpu.memory_space<vmem>>, vector<128x32xbf16>
    %c0_1 = arith.constant 0 : index
    %c0_2 = arith.constant 0 : index
    %1 = vector.load %arg4[%c0_1, %c0_2] : memref<32x128xbf16, #tpu.memory_space<vmem>>, vector<32x128xbf16>
    %cst = arith.constant dense<0.000000e+00> : vector<128x128xf32>
    %2 = tpu.matmul %0, %1, %cst {dimension_numbers = #tpu.dot_dimension_numbers<[1], [0], [0], [1], [0, 0, 1, 1], [], []>} : vector<128x32xbf16>, vector<32x128xbf16>, vector<128x128xf32> -> vector<128x128xf32>
    %c0_3 = arith.constant 0 : index
    %c0_4 = arith.constant 0 : index
    %3 = vector.load %arg5[%c0_3, %c0_4] : memref<128x128xf32, #tpu.memory_space<vmem>>, vector<128x128xf32>
    %4 = arith.addf %2, %3 : vector<128x128xf32>
    %cst_5 = arith.constant 0.000000e+00 : f32
    %5 = vector.broadcast %cst_5 : f32 to vector<128x128xf32>
    %6 = arith.cmpf oge, %4, %5 : vector<128x128xf32>
    %cst_6 = arith.constant 2.500000e-01 : f32
    %7 = vector.broadcast %cst_6 : f32 to vector<128x128xf32>
    %8 = arith.mulf %7, %4 : vector<128x128xf32>
    %9 = arith.select %6, %4, %8 : vector<128x128xi1>, vector<128x128xf32>
    %c0_7 = arith.constant 0 : index
    %c0_8 = arith.constant 0 : index
    %10 = vector.load %arg6[%c0_7, %c0_8] : memref<128x128xf32, #tpu.memory_space<vmem>>, vector<128x128xf32>
    tpu.vector_store %arg6[%c0_7, %c0_8], %9 {strides = array<i32>} : memref<128x128xf32, #tpu.memory_space<vmem>>, vector<128x128xf32>,
    return
  }
  func.func @transform_0(%arg0: i32, %arg1: i32, %arg2: i32) -> (i32, i32) {
    %c0_i32 = arith.constant 0 : i32
    return %arg0, %arg2 : i32, i32
  }
  func.func @transform_1(%arg0: i32, %arg1: i32, %arg2: i32) -> (i32, i32) {
    %c0_i32 = arith.constant 0 : i32
    return %arg2, %arg1 : i32, i32
  }
  func.func @transform_2(%arg0: i32, %arg1: i32, %arg2: i32) -> (i32, i32) {
    %c0_i32 = arith.constant 0 : i32
    return %arg0, %arg1 : i32, i32
  }
  func.func @transform_3(%arg0: i32, %arg1: i32, %arg2: i32) -> (i32, i32) {
    %c0_i32 = arith.constant 0 : i32
    return %arg0, %arg1 : i32, i32
  }
}

module attributes {stable_mosaic.version = 11 : i64} {
  func.func @kernel(%arg0: i32, %arg1: i32, %arg2: i32, %arg3: memref<128x64xbf16, #tpu.memory_space<vmem>>, %arg4: memref<64x128xbf16, #tpu.memory_space<vmem>>, %arg5: memref<128x128xf32, #tpu.memory_space<vmem>>) attributes {dimension_semantics = [#tpu.dimension_semantics<parallel>, #tpu.dimension_semantics<parallel>, #tpu.dimension_semantics<arbitrary>], iteration_bounds = array<i64: 1, 1, 1>, scalar_prefetch = 0 : i64, scratch_operands = 0 : i64, tpu.core_type = #tpu.core_type<tc>, window_params = [{transform_indices = @transform_0, window_bounds = array<i64: 128, 64>}, {transform_indices = @transform_1, window_bounds = array<i64: 64, 128>}, {transform_indices = @transform_2, window_bounds = array<i64: 128, 128>}]} {
    %c0 = arith.constant 0 : index
    %c0_0 = arith.constant 0 : index
    %0 = vector.load %arg3[%c0, %c0_0] : memref<128x64xbf16, #tpu.memory_space<vmem>>, vector<128x64xbf16>
    %c0_1 = arith.constant 0 : index
    %c0_2 = arith.constant 0 : index
    %1 = vector.load %arg4[%c0_1, %c0_2] : memref<64x128xbf16, #tpu.memory_space<vmem>>, vector<64x128xbf16>
    %cst = arith.constant dense<0.000000e+00> : vector<128x128xf32>
    %2 = tpu.matmul %0, %1, %cst {dimension_numbers = #tpu.dot_dimension_numbers<[1], [0], [0], [1], [0, 0, 1, 1], [], []>} : vector<128x64xbf16>, vector<64x128xbf16>, vector<128x128xf32> -> vector<128x128xf32>
    %c0_3 = arith.constant 0 : index
    %c0_4 = arith.constant 0 : index
    %3 = vector.load %arg5[%c0_3, %c0_4] : memref<128x128xf32, #tpu.memory_space<vmem>>, vector<128x128xf32>
    tpu.vector_store %arg5[%c0_3, %c0_4], %2 {strides = array<i32>} : memref<128x128xf32, #tpu.memory_space<vmem>>, vector<128x128xf32>,
    return
  }
  func.func @transform_0(%arg0: i32, %arg1: i32, %arg2: i32) -> (i32, i32) {
    %c0_i32 = arith.constant 0 : i32
    return %arg0, %arg2 : i32, i32
  }
  func.func @transform_1(%arg0: i32, %arg1: i32, %arg2: i32) -> (i32, i32) {
    %c0_i32 = arith.constant 0 : i32
    return %arg2, %arg1 : i32, i32
  }
  func.func @transform_2(%arg0: i32, %arg1: i32, %arg2: i32) -> (i32, i32) {
    %c0_i32 = arith.constant 0 : i32
    return %arg0, %arg1 : i32, i32
  }
}

module attributes {stable_mosaic.version = 11 : i64} {
  func.func @kernel(%arg0: i32, %arg1: i32, %arg2: i32, %arg3: memref<512x16xbf16, #tpu.memory_space<vmem>>, %arg4: memref<16x128xbf16, #tpu.memory_space<vmem>>, %arg5: memref<512x128xf32, #tpu.memory_space<vmem>>) attributes {dimension_semantics = [#tpu.dimension_semantics<parallel>, #tpu.dimension_semantics<parallel>, #tpu.dimension_semantics<arbitrary>], iteration_bounds = array<i64: 1, 1, 1>, scalar_prefetch = 0 : i64, scratch_operands = 0 : i64, tpu.core_type = #tpu.core_type<tc>, window_params = [{transform_indices = @transform_0, window_bounds = array<i64: 512, 16>}, {transform_indices = @transform_1, window_bounds = array<i64: 16, 128>}, {transform_indices = @transform_2, window_bounds = array<i64: 512, 128>}]} {
    %c0 = arith.constant 0 : index
    %c0_0 = arith.constant 0 : index
    %0 = vector.load %arg3[%c0, %c0_0] : memref<512x16xbf16, #tpu.memory_space<vmem>>, vector<512x16xbf16>
    %c0_1 = arith.constant 0 : index
    %c0_2 = arith.constant 0 : index
    %1 = vector.load %arg4[%c0_1, %c0_2] : memref<16x128xbf16, #tpu.memory_space<vmem>>, vector<16x128xbf16>
    %cst = arith.constant dense<0.000000e+00> : vector<512x128xf32>
    %2 = tpu.matmul %0, %1, %cst {dimension_numbers = #tpu.dot_dimension_numbers<[1], [0], [0], [1], [0, 0, 1, 1], [], []>} : vector<512x16xbf16>, vector<16x128xbf16>, vector<512x128xf32> -> vector<512x128xf32>
    %cst_3 = arith.constant 0.000000e+00 : f32
    %3 = vector.broadcast %cst_3 : f32 to vector<512x128xf32>
    %4 = arith.maximumf %2, %3 : vector<512x128xf32>
    %c0_4 = arith.constant 0 : index
    %c0_5 = arith.constant 0 : index
    %5 = vector.load %arg5[%c0_4, %c0_5] : memref<512x128xf32, #tpu.memory_space<vmem>>, vector<512x128xf32>
    tpu.vector_store %arg5[%c0_4, %c0_5], %4 {strides = array<i32>} : memref<512x128xf32, #tpu.memory_space<vmem>>, vector<512x128xf32>,
    return
  }
  func.func @transform_0(%arg0: i32, %arg1: i32, %arg2: i32) -> (i32, i32) {
    %c0_i32 = arith.constant 0 : i32
    return %arg0, %arg2 : i32, i32
  }
  func.func @transform_1(%arg0: i32, %arg1: i32, %arg2: i32) -> (i32, i32) {
    %c0_i32 = arith.constant 0 : i32
    return %arg2, %arg1 : i32, i32
  }
  func.func @transform_2(%arg0: i32, %arg1: i32, %arg2: i32) -> (i32, i32) {
    %c0_i32 = arith.constant 0 : i32
    return %arg0, %arg1 : i32, i32
  }
}

module attributes {stable_mosaic.version = 11 : i64} {
  func.func @kernel(%arg0: i32, %arg1: i32, %arg2: i32, %arg3: memref<512x16xbf16, #tpu.memory_space<vmem>>, %arg4: memref<16x128xbf16, #tpu.memory_space<vmem>>, %arg5: memref<512x128xf32, #tpu.memory_space<vmem>>, %arg6: memref<512x128xf32, #tpu.memory_space<vmem>>) attributes {dimension_semantics = [#tpu.dimension_semantics<parallel>, #tpu.dimension_semantics<parallel>, #tpu.dimension_semantics<arbitrary>], iteration_bounds = array<i64: 1, 1, 1>, scalar_prefetch = 0 : i64, scratch_operands = 0 : i64, tpu.core_type = #tpu.core_type<tc>, window_params = [{transform_indices = @transform_0, window_bounds = array<i64: 512, 16>}, {transform_indices = @transform_1, window_bounds = array<i64: 16, 128>}, {transform_indices = @transform_2, window_bounds = array<i64: 512, 128>}, {transform_indices = @transform_3, window_bounds = array<i64: 512, 128>}]} {
    %c0 = arith.constant 0 : index
    %c0_0 = arith.constant 0 : index
    %0 = vector.load %arg3[%c0, %c0_0] : memref<512x16xbf16, #tpu.memory_space<vmem>>, vector<512x16xbf16>
    %c0_1 = arith.constant 0 : index
    %c0_2 = arith.constant 0 : index
    %1 = vector.load %arg4[%c0_1, %c0_2] : memref<16x128xbf16, #tpu.memory_space<vmem>>, vector<16x128xbf16>
    %cst = arith.constant dense<0.000000e+00> : vector<512x128xf32>
    %2 = tpu.matmul %0, %1, %cst {dimension_numbers = #tpu.dot_dimension_numbers<[1], [0], [0], [1], [0, 0, 1, 1], [], []>} : vector<512x16xbf16>, vector<16x128xbf16>, vector<512x128xf32> -> vector<512x128xf32>
    %c0_3 = arith.constant 0 : index
    %c0_4 = arith.constant 0 : index
    %3 = vector.load %arg5[%c0_3, %c0_4] : memref<512x128xf32, #tpu.memory_space<vmem>>, vector<512x128xf32>
    %4 = arith.addf %2, %3 : vector<512x128xf32>
    %cst_5 = arith.constant 0.000000e+00 : f32
    %5 = vector.broadcast %cst_5 : f32 to vector<512x128xf32>
    %6 = arith.cmpf oge, %4, %5 : vector<512x128xf32>
    %cst_6 = arith.constant 2.500000e-01 : f32
    %7 = vector.broadcast %cst_6 : f32 to vector<512x128xf32>
    %8 = arith.mulf %7, %4 : vector<512x128xf32>
    %9 = arith.select %6, %4, %8 : vector<512x128xi1>, vector<512x128xf32>
    %c0_7 = arith.constant 0 : index
    %c0_8 = arith.constant 0 : index
    %10 = vector.load %arg6[%c0_7, %c0_8] : memref<512x128xf32, #tpu.memory_space<vmem>>, vector<512x128xf32>
    tpu.vector_store %arg6[%c0_7, %c0_8], %9 {strides = array<i32>} : memref<512x128xf32, #tpu.memory_space<vmem>>, vector<512x128xf32>,
    return
  }
  func.func @transform_0(%arg0: i32, %arg1: i32, %arg2: i32) -> (i32, i32) {
    %c0_i32 = arith.constant 0 : i32
    return %arg0, %arg2 : i32, i32
  }
  func.func @transform_1(%arg0: i32, %arg1: i32, %arg2: i32) -> (i32, i32) {
    %c0_i32 = arith.constant 0 : i32
    return %arg2, %arg1 : i32, i32
  }
  func.func @transform_2(%arg0: i32, %arg1: i32, %arg2: i32) -> (i32, i32) {
    %c0_i32 = arith.constant 0 : i32
    return %arg0, %arg1 : i32, i32
  }
  func.func @transform_3(%arg0: i32, %arg1: i32, %arg2: i32) -> (i32, i32) {
    %c0_i32 = arith.constant 0 : i32
    return %arg0, %arg1 : i32, i32
  }
}

module attributes {stable_mosaic.version = 11 : i64} {
  func.func @kernel(%arg0: i32, %arg1: i32, %arg2: i32, %arg3: memref<512x36xbf16, #tpu.memory_space<vmem>>, %arg4: memref<36x128xbf16, #tpu.memory_space<vmem>>, %arg5: memref<512x128xf32, #tpu.memory_space<vmem>>) attributes {dimension_semantics = [#tpu.dimension_semantics<parallel>, #tpu.dimension_semantics<parallel>, #tpu.dimension_semantics<arbitrary>], iteration_bounds = array<i64: 1, 1, 1>, scalar_prefetch = 0 : i64, scratch_operands = 0 : i64, tpu.core_type = #tpu.core_type<tc>, window_params = [{transform_indices = @transform_0, window_bounds = array<i64: 512, 36>}, {transform_indices = @transform_1, window_bounds = array<i64: 36, 128>}, {transform_indices = @transform_2, window_bounds = array<i64: 512, 128>}]} {
    %c0 = arith.constant 0 : index
    %c0_0 = arith.constant 0 : index
    %0 = vector.load %arg3[%c0, %c0_0] : memref<512x36xbf16, #tpu.memory_space<vmem>>, vector<512x36xbf16>
    %c0_1 = arith.constant 0 : index
    %c0_2 = arith.constant 0 : index
    %1 = vector.load %arg4[%c0_1, %c0_2] : memref<36x128xbf16, #tpu.memory_space<vmem>>, vector<36x128xbf16>
    %cst = arith.constant dense<0.000000e+00> : vector<512x128xf32>
    %2 = tpu.matmul %0, %1, %cst {dimension_numbers = #tpu.dot_dimension_numbers<[1], [0], [0], [1], [0, 0, 1, 1], [], []>} : vector<512x36xbf16>, vector<36x128xbf16>, vector<512x128xf32> -> vector<512x128xf32>
    %cst_3 = arith.constant 0.000000e+00 : f32
    %3 = vector.broadcast %cst_3 : f32 to vector<512x128xf32>
    %4 = arith.maximumf %2, %3 : vector<512x128xf32>
    %c0_4 = arith.constant 0 : index
    %c0_5 = arith.constant 0 : index
    %5 = vector.load %arg5[%c0_4, %c0_5] : memref<512x128xf32, #tpu.memory_space<vmem>>, vector<512x128xf32>
    tpu.vector_store %arg5[%c0_4, %c0_5], %4 {strides = array<i32>} : memref<512x128xf32, #tpu.memory_space<vmem>>, vector<512x128xf32>,
    return
  }
  func.func @transform_0(%arg0: i32, %arg1: i32, %arg2: i32) -> (i32, i32) {
    %c0_i32 = arith.constant 0 : i32
    return %arg0, %arg2 : i32, i32
  }
  func.func @transform_1(%arg0: i32, %arg1: i32, %arg2: i32) -> (i32, i32) {
    %c0_i32 = arith.constant 0 : i32
    return %arg2, %arg1 : i32, i32
  }
  func.func @transform_2(%arg0: i32, %arg1: i32, %arg2: i32) -> (i32, i32) {
    %c0_i32 = arith.constant 0 : i32
    return %arg0, %arg1 : i32, i32
  }
}

module attributes {stable_mosaic.version = 11 : i64} {
  func.func @kernel(%arg0: i32, %arg1: i32, %arg2: i32, %arg3: memref<512x4xbf16, #tpu.memory_space<vmem>>, %arg4: memref<4x128xbf16, #tpu.memory_space<vmem>>, %arg5: memref<512x128xf32, #tpu.memory_space<vmem>>, %arg6: memref<512x128xf32, #tpu.memory_space<vmem>>) attributes {dimension_semantics = [#tpu.dimension_semantics<parallel>, #tpu.dimension_semantics<parallel>, #tpu.dimension_semantics<arbitrary>], iteration_bounds = array<i64: 1, 1, 1>, scalar_prefetch = 0 : i64, scratch_operands = 0 : i64, tpu.core_type = #tpu.core_type<tc>, window_params = [{transform_indices = @transform_0, window_bounds = array<i64: 512, 4>}, {transform_indices = @transform_1, window_bounds = array<i64: 4, 128>}, {transform_indices = @transform_2, window_bounds = array<i64: 512, 128>}, {transform_indices = @transform_3, window_bounds = array<i64: 512, 128>}]} {
    %c0 = arith.constant 0 : index
    %c0_0 = arith.constant 0 : index
    %0 = vector.load %arg3[%c0, %c0_0] : memref<512x4xbf16, #tpu.memory_space<vmem>>, vector<512x4xbf16>
    %c0_1 = arith.constant 0 : index
    %c0_2 = arith.constant 0 : index
    %1 = vector.load %arg4[%c0_1, %c0_2] : memref<4x128xbf16, #tpu.memory_space<vmem>>, vector<4x128xbf16>
    %cst = arith.constant dense<0.000000e+00> : vector<512x128xf32>
    %2 = tpu.matmul %0, %1, %cst {dimension_numbers = #tpu.dot_dimension_numbers<[1], [0], [0], [1], [0, 0, 1, 1], [], []>} : vector<512x4xbf16>, vector<4x128xbf16>, vector<512x128xf32> -> vector<512x128xf32>
    %c0_3 = arith.constant 0 : index
    %c0_4 = arith.constant 0 : index
    %3 = vector.load %arg5[%c0_3, %c0_4] : memref<512x128xf32, #tpu.memory_space<vmem>>, vector<512x128xf32>
    %4 = arith.addf %2, %3 : vector<512x128xf32>
    %cst_5 = arith.constant 0.000000e+00 : f32
    %5 = vector.broadcast %cst_5 : f32 to vector<512x128xf32>
    %6 = arith.cmpf oge, %4, %5 : vector<512x128xf32>
    %cst_6 = arith.constant 2.500000e-01 : f32
    %7 = vector.broadcast %cst_6 : f32 to vector<512x128xf32>
    %8 = arith.mulf %7, %4 : vector<512x128xf32>
    %9 = arith.select %6, %4, %8 : vector<512x128xi1>, vector<512x128xf32>
    %c0_7 = arith.constant 0 : index
    %c0_8 = arith.constant 0 : index
    %10 = vector.load %arg6[%c0_7, %c0_8] : memref<512x128xf32, #tpu.memory_space<vmem>>, vector<512x128xf32>
    tpu.vector_store %arg6[%c0_7, %c0_8], %9 {strides = array<i32>} : memref<512x128xf32, #tpu.memory_space<vmem>>, vector<512x128xf32>,
    return
  }
  func.func @transform_0(%arg0: i32, %arg1: i32, %arg2: i32) -> (i32, i32) {
    %c0_i32 = arith.constant 0 : i32
    return %arg0, %arg2 : i32, i32
  }
  func.func @transform_1(%arg0: i32, %arg1: i32, %arg2: i32) -> (i32, i32) {
    %c0_i32 = arith.constant 0 : i32
    return %arg2, %arg1 : i32, i32
  }
  func.func @transform_2(%arg0: i32, %arg1: i32, %arg2: i32) -> (i32, i32) {
    %c0_i32 = arith.constant 0 : i32
    return %arg0, %arg1 : i32, i32
  }
  func.func @transform_3(%arg0: i32, %arg1: i32, %arg2: i32) -> (i32, i32) {
    %c0_i32 = arith.constant 0 : i32
    return %arg0, %arg1 : i32, i32
  }
}

module attributes {stable_mosaic.version = 11 : i64} {
  func.func @kernel(%arg0: i32, %arg1: i32, %arg2: i32, %arg3: memref<512x16xbf16, #tpu.memory_space<vmem>>, %arg4: memref<16x128xbf16, #tpu.memory_space<vmem>>, %arg5: memref<512x128xf32, #tpu.memory_space<vmem>>) attributes {dimension_semantics = [#tpu.dimension_semantics<parallel>, #tpu.dimension_semantics<parallel>, #tpu.dimension_semantics<arbitrary>], iteration_bounds = array<i64: 1, 1, 1>, scalar_prefetch = 0 : i64, scratch_operands = 0 : i64, tpu.core_type = #tpu.core_type<tc>, window_params = [{transform_indices = @transform_0, window_bounds = array<i64: 512, 16>}, {transform_indices = @transform_1, window_bounds = array<i64: 16, 128>}, {transform_indices = @transform_2, window_bounds = array<i64: 512, 128>}]} {
    %c0 = arith.constant 0 : index
    %c0_0 = arith.constant 0 : index
    %0 = vector.load %arg3[%c0, %c0_0] : memref<512x16xbf16, #tpu.memory_space<vmem>>, vector<512x16xbf16>
    %c0_1 = arith.constant 0 : index
    %c0_2 = arith.constant 0 : index
    %1 = vector.load %arg4[%c0_1, %c0_2] : memref<16x128xbf16, #tpu.memory_space<vmem>>, vector<16x128xbf16>
    %cst = arith.constant dense<0.000000e+00> : vector<512x128xf32>
    %2 = tpu.matmul %0, %1, %cst {dimension_numbers = #tpu.dot_dimension_numbers<[1], [0], [0], [1], [0, 0, 1, 1], [], []>} : vector<512x16xbf16>, vector<16x128xbf16>, vector<512x128xf32> -> vector<512x128xf32>
    %cst_3 = arith.constant 0.000000e+00 : f32
    %3 = vector.broadcast %cst_3 : f32 to vector<512x128xf32>
    %4 = arith.cmpf oge, %2, %3 : vector<512x128xf32>
    %cst_4 = arith.constant 2.500000e-01 : f32
    %5 = vector.broadcast %cst_4 : f32 to vector<512x128xf32>
    %6 = arith.mulf %5, %2 : vector<512x128xf32>
    %7 = arith.select %4, %2, %6 : vector<512x128xi1>, vector<512x128xf32>
    %c0_5 = arith.constant 0 : index
    %c0_6 = arith.constant 0 : index
    %8 = vector.load %arg5[%c0_5, %c0_6] : memref<512x128xf32, #tpu.memory_space<vmem>>, vector<512x128xf32>
    tpu.vector_store %arg5[%c0_5, %c0_6], %7 {strides = array<i32>} : memref<512x128xf32, #tpu.memory_space<vmem>>, vector<512x128xf32>,
    return
  }
  func.func @transform_0(%arg0: i32, %arg1: i32, %arg2: i32) -> (i32, i32) {
    %c0_i32 = arith.constant 0 : i32
    return %arg0, %arg2 : i32, i32
  }
  func.func @transform_1(%arg0: i32, %arg1: i32, %arg2: i32) -> (i32, i32) {
    %c0_i32 = arith.constant 0 : i32
    return %arg2, %arg1 : i32, i32
  }
  func.func @transform_2(%arg0: i32, %arg1: i32, %arg2: i32) -> (i32, i32) {
    %c0_i32 = arith.constant 0 : i32
    return %arg0, %arg1 : i32, i32
  }
}

</mosaic_0001>

<llo_original>
// kernel: forward.91
$region0: #{forward.91}
  #allocation0 [shape = 'u32[]', space=smem, size = 0x4, offset = 0x4, fixed_abs, tag = 'smem constant byte address 0x4 - core index']
  #allocation1 [shape = 'u32[144,128]{1,0:T(1,128)}', space=vmem, size = 0x12000, scoped, tag = 'internal scratch']
  %s0 = inlined_call_operand.vmem [shape: bf16[512,27], index: 0, kind: input, shape index: {}]
  %s1 = inlined_call_operand.vmem [shape: bf16[27,128], index: 1, kind: input, shape index: {}]
  %s2 = inlined_call_operand.vmem [shape: f32[512,128], index: 2, kind: output, shape index: {}]
  %s3 = sld [smem:[#allocation0]]
  $region18: #{forward.91} parent=0
    _
  %s5 = ssub.s32 1, %s3
  %s6 = scalar_select 0, %s5, %s3
  // Predicated region
  $region2: #{forward.91} parent=0 // pred_check
    _
  $region3: #{forward.91} parent=0 // pred_check_branch
    %8 = sbr.rel (0) target = $region5
  $region4: #{forward.91} parent=0 // pred_region
    _
  $region5: #{forward.91} parent=0 // pred_fallthru
    _
  // Predicated region
  $region6: #{forward.91} parent=0 // pred_check
    _
  $region7: #{forward.91} parent=0 // pred_check_branch
    %10 = sbr.rel (0) target = $region9
  $region8: #{forward.91} parent=0 // pred_region
    _
  $region9: #{forward.91} parent=0 // pred_fallthru
    _
  %v12 = vld [vmem:[%s0] sm:$0xf]
  %v13 = vld [vmem:[%s0 + $0x4] sm:$0xf]
  %v14 = vld [vmem:[%s0 + $0x8] sm:$0xf]
  %v15 = vld [vmem:[%s0 + $0xc] sm:$0xf]
  %v16 = vld [vmem:[%s0 + $0x10] sm:$0xf]
  %v17 = vld [vmem:[%s0 + $0x14] sm:$0xf]
  %v18 = vld [vmem:[%s0 + $0x18] sm:$0xf]
  %v19 = vld [vmem:[%s0 + $0x1c] sm:$0xf]
  %v20 = vld [vmem:[%s0 + $0x20] sm:$0xf]
  %v21 = vld [vmem:[%s0 + $0x24] sm:$0xf]
  %v22 = vld [vmem:[%s0 + $0x28] sm:$0xf]
  %v23 = vld [vmem:[%s0 + $0x2c] sm:$0xf]
  %v24 = vld [vmem:[%s0 + $0x30] sm:$0xf]
  %v25 = vld [vmem:[%s0 + $0x34] sm:$0xf]
  %v26 = vld [vmem:[%s0 + $0x38] sm:$0xf]
  %v27 = vld [vmem:[%s0 + $0x3c] sm:$0xf]
  %v28 = vld [vmem:[%s0 + $0x40] sm:$0xf]
  %v29 = vld [vmem:[%s0 + $0x44] sm:$0xf]
  %v30 = vld [vmem:[%s0 + $0x48] sm:$0xf]
  %v31 = vld [vmem:[%s0 + $0x4c] sm:$0xf]
  %v32 = vld [vmem:[%s0 + $0x50] sm:$0xf]
  %v33 = vld [vmem:[%s0 + $0x54] sm:$0xf]
  %v34 = vld [vmem:[%s0 + $0x58] sm:$0xf]
  %v35 = vld [vmem:[%s0 + $0x5c] sm:$0xf]
  %v36 = vld [vmem:[%s0 + $0x60] sm:$0xf]
  %v37 = vld [vmem:[%s0 + $0x64] sm:$0xf]
  %v38 = vld [vmem:[%s0 + $0x68] sm:$0xf]
  %v39 = vld [vmem:[%s0 + $0x6c] sm:$0xf]
  %v40 = vld [vmem:[%s0 + $0x70] sm:$0xf]
  %v41 = vld [vmem:[%s0 + $0x74] sm:$0xf]
  %v42 = vld [vmem:[%s0 + $0x78] sm:$0xf]
  %v43 = vld [vmem:[%s0 + $0x7c] sm:$0xf]
  %v44 = vld [vmem:[%s0 + $0x80] sm:$0xf]
  %v45 = vld [vmem:[%s0 + $0x84] sm:$0xf]
  %v46 = vld [vmem:[%s0 + $0x88] sm:$0xf]
  %v47 = vld [vmem:[%s0 + $0x8c] sm:$0xf]
  %v48 = vld [vmem:[%s0 + $0x90] sm:$0xf]
  %v49 = vld [vmem:[%s0 + $0x94] sm:$0xf]
  %v50 = vld [vmem:[%s0 + $0x98] sm:$0xf]
  %v51 = vld [vmem:[%s0 + $0x9c] sm:$0xf]
  %v52 = vld [vmem:[%s0 + $0xa0] sm:$0xf]
  %v53 = vld [vmem:[%s0 + $0xa4] sm:$0xf]
  %v54 = vld [vmem:[%s0 + $0xa8] sm:$0xf]
  %v55 = vld [vmem:[%s0 + $0xac] sm:$0xf]
  %v56 = vld [vmem:[%s0 + $0xb0] sm:$0xf]
  %v57 = vld [vmem:[%s0 + $0xb4] sm:$0xf]
  %v58 = vld [vmem:[%s0 + $0xb8] sm:$0xf]
  %v59 = vld [vmem:[%s0 + $0xbc] sm:$0xf]
  %v60 = vld [vmem:[%s0 + $0xc0] sm:$0xf]
  %v61 = vld [vmem:[%s0 + $0xc4] sm:$0xf]
  %v62 = vld [vmem:[%s0 + $0xc8] sm:$0xf]
  %v63 = vld [vmem:[%s0 + $0xcc] sm:$0xf]
  %v64 = vld [vmem:[%s0 + $0xd0] sm:$0xf]
  %v65 = vld [vmem:[%s0 + $0xd4] sm:$0xf]
  %v66 = vld [vmem:[%s0 + $0xd8] sm:$0xf]
  %v67 = vld [vmem:[%s0 + $0xdc] sm:$0xf]
  %v68 = vld [vmem:[%s0 + $0xe0] sm:$0xf]
  %v69 = vld [vmem:[%s0 + $0xe4] sm:$0xf]
  %v70 = vld [vmem:[%s0 + $0xe8] sm:$0xf]
  %v71 = vld [vmem:[%s0 + $0xec] sm:$0xf]
  %v72 = vld [vmem:[%s0 + $0xf0] sm:$0xf]
  %v73 = vld [vmem:[%s0 + $0xf4] sm:$0xf]
  %v74 = vld [vmem:[%s0 + $0xf8] sm:$0xf]
  %v75 = vld [vmem:[%s0 + $0xfc] sm:$0xf]
  %v76 = vld [vmem:[%s1] sm:$0xf]
  %v77 = vld [vmem:[%s1 + $0x4] sm:$0xf]
  %v78 = vld [vmem:[%s1 + $0x8] sm:$0xf]
  %v79 = vld [vmem:[%s1 + $0xc] sm:$0x3]
  %v144 = vunpack.c.l.b16 %v12
  %v145 = vunpack.c.l.b16 %v13
  %v146 = vunpack.c.l.b16 %v14
  %v147 = vunpack.c.l.b16 %v15
  %v148 = vunpack.c.l.b16 %v16
  %v149 = vunpack.c.l.b16 %v17
  %v150 = vunpack.c.l.b16 %v18
  %v151 = vunpack.c.l.b16 %v19
  %v152 = vunpack.c.l.b16 %v20
  %v153 = vunpack.c.l.b16 %v21
  %v154 = vunpack.c.l.b16 %v22
  %v155 = vunpack.c.l.b16 %v23
  %v156 = vunpack.c.l.b16 %v24
  %v157 = vunpack.c.l.b16 %v25
  %v158 = vunpack.c.l.b16 %v26
  %v159 = vunpack.c.l.b16 %v27
  %v160 = vunpack.c.l.b16 %v28
  %v161 = vunpack.c.l.b16 %v29
  %v162 = vunpack.c.l.b16 %v30
  %v163 = vunpack.c.l.b16 %v31
  %v164 = vunpack.c.l.b16 %v32
  %v165 = vunpack.c.l.b16 %v33
  %v166 = vunpack.c.l.b16 %v34
  %v167 = vunpack.c.l.b16 %v35
  %v168 = vunpack.c.l.b16 %v36
  %v169 = vunpack.c.l.b16 %v37
  %v170 = vunpack.c.l.b16 %v38
  %v171 = vunpack.c.l.b16 %v39
  %v172 = vunpack.c.l.b16 %v40
  %v173 = vunpack.c.l.b16 %v41
  %v174 = vunpack.c.l.b16 %v42
  %v175 = vunpack.c.l.b16 %v43
  %v176 = vunpack.c.l.b16 %v44
  %v177 = vunpack.c.l.b16 %v45
  %v178 = vunpack.c.l.b16 %v46
  %v179 = vunpack.c.l.b16 %v47
  %v180 = vunpack.c.l.b16 %v48
  %v181 = vunpack.c.l.b16 %v49
  %v182 = vunpack.c.l.b16 %v50
  %v183 = vunpack.c.l.b16 %v51
  %v184 = vunpack.c.l.b16 %v52
  %v185 = vunpack.c.l.b16 %v53
  %v186 = vunpack.c.l.b16 %v54
  %v187 = vunpack.c.l.b16 %v55
  %v188 = vunpack.c.l.b16 %v56
  %v189 = vunpack.c.l.b16 %v57
  %v190 = vunpack.c.l.b16 %v58
  %v191 = vunpack.c.l.b16 %v59
  %v192 = vunpack.c.l.b16 %v60
  %v193 = vunpack.c.l.b16 %v61
  %v194 = vunpack.c.l.b16 %v62
  %v195 = vunpack.c.l.b16 %v63
  %v196 = vunpack.c.l.b16 %v64
  %v197 = vunpack.c.l.b16 %v65
  %v198 = vunpack.c.l.b16 %v66
  %v199 = vunpack.c.l.b16 %v67
  %v200 = vunpack.c.l.b16 %v68
  %v201 = vunpack.c.l.b16 %v69
  %v202 = vunpack.c.l.b16 %v70
  %v203 = vunpack.c.l.b16 %v71
  %v204 = vunpack.c.l.b16 %v72
  %v205 = vunpack.c.l.b16 %v73
  %v206 = vunpack.c.l.b16 %v74
  %v207 = vunpack.c.l.b16 %v75
  %v208 = vpack.c.b16 %v145, %v144
  %v209 = vpack.c.b16 %v147, %v146
  %v210 = vpack.c.b16 %v149, %v148
  %v211 = vpack.c.b16 %v151, %v150
  %v212 = vpack.c.b16 %v153, %v152
  %v213 = vpack.c.b16 %v155, %v154
  %v214 = vpack.c.b16 %v157, %v156
  %v215 = vpack.c.b16 %v159, %v158
  %v216 = vpack.c.b16 %v161, %v160
  %v217 = vpack.c.b16 %v163, %v162
  %v218 = vpack.c.b16 %v165, %v164
  %v219 = vpack.c.b16 %v167, %v166
  %v220 = vpack.c.b16 %v169, %v168
  %v221 = vpack.c.b16 %v171, %v170
  %v222 = vpack.c.b16 %v173, %v172
  %v223 = vpack.c.b16 %v175, %v174
  %v224 = vpack.c.b16 %v177, %v176
  %v225 = vpack.c.b16 %v179, %v178
  %v226 = vpack.c.b16 %v181, %v180
  %v227 = vpack.c.b16 %v183, %v182
  %v228 = vpack.c.b16 %v185, %v184
  %v229 = vpack.c.b16 %v187, %v186
  %v230 = vpack.c.b16 %v189, %v188
  %v231 = vpack.c.b16 %v191, %v190
  %v232 = vpack.c.b16 %v193, %v192
  %v233 = vpack.c.b16 %v195, %v194
  %v234 = vpack.c.b16 %v197, %v196
  %v235 = vpack.c.b16 %v199, %v198
  %v236 = vpack.c.b16 %v201, %v200
  %v237 = vpack.c.b16 %v203, %v202
  %v238 = vpack.c.b16 %v205, %v204
  %v239 = vpack.c.b16 %v207, %v206
  %v244 = vunpack.c.l.b16 %v76
  %v245 = vunpack.c.l.b16 %v77
  %v246 = vunpack.c.l.b16 %v78
  %v247 = vunpack.c.l.b16 %v79
  %v248 = vpack.c.b16 %v245, %v244
  %v249 = vpack.c.b16 %v247, %v246
  %vm251 = vcmask 220160
  %v253 = vsel %vm251, %v208, 0
  %v256 = vsel %vm251, %v209, 0
  %v259 = vsel %vm251, %v210, 0
  %v262 = vsel %vm251, %v211, 0
  %v265 = vsel %vm251, %v212, 0
  %v268 = vsel %vm251, %v213, 0
  %v271 = vsel %vm251, %v214, 0
  %v274 = vsel %vm251, %v215, 0
  %v277 = vsel %vm251, %v216, 0
  %v280 = vsel %vm251, %v217, 0
  %v283 = vsel %vm251, %v218, 0
  %v286 = vsel %vm251, %v219, 0
  %v289 = vsel %vm251, %v220, 0
  %v292 = vsel %vm251, %v221, 0
  %v295 = vsel %vm251, %v222, 0
  %v298 = vsel %vm251, %v223, 0
  %v301 = vsel %vm251, %v224, 0
  %v304 = vsel %vm251, %v225, 0
  %v307 = vsel %vm251, %v226, 0
  %v310 = vsel %vm251, %v227, 0
  %v313 = vsel %vm251, %v228, 0
  %v316 = vsel %vm251, %v229, 0
  %v319 = vsel %vm251, %v230, 0
  %v322 = vsel %vm251, %v231, 0
  %v325 = vsel %vm251, %v232, 0
  %v328 = vsel %vm251, %v233, 0
  %v331 = vsel %vm251, %v234, 0
  %v334 = vsel %vm251, %v235, 0
  %v337 = vsel %vm251, %v236, 0
  %v340 = vsel %vm251, %v237, 0
  %v343 = vsel %vm251, %v238, 0
  %v346 = vsel %vm251, %v239, 0
  %vm348 = vcmask 1044480
  %vm349 = vcmask 1045504
  %v350 = vsel %vm348, 4294967295, 65535
  %v351 = vsel %vm349, %v350, 0
  %v353 = vand.u32 %v249, %v351
  %355 = vmatprep.subr.bf16.mxu0 0
  %356 = vmatpush1.bf16.msra.mxu0 %v248
  %357 = vmatprep.subr.bf16.mxu0 0
  %358 = vmatpush1.bf16.msra.mxu0 %v353
  %359 = vmatprep.subr.bf16.mxu0 0
  %360 = vmatpush1.bf16.msra.mxu0 0
  %361 = vmatprep.subr.bf16.mxu0 0
  %362 = vmatpush1.bf16.msra.mxu0 0
  %363 = vmatprep.subr.bf16.mxu0 0
  %364 = vmatpush1.bf16.msra.mxu0 0
  %365 = vmatprep.subr.bf16.mxu0 0
  %366 = vmatpush1.bf16.msra.mxu0 0
  %367 = vmatprep.subr.bf16.mxu0 0
  %368 = vmatpush1.bf16.msra.mxu0 0
  %369 = vmatprep.subr.bf16.mxu0 0
  %370 = vmatpush1.bf16.msra.mxu0 0
  %371 = vmatprep.subr.bf16.mxu0 0
  %372 = vmatpush1.bf16.msra.mxu0 0
  %373 = vmatprep.subr.bf16.mxu0 0
  %374 = vmatpush1.bf16.msra.mxu0 0
  %375 = vmatprep.subr.bf16.mxu0 0
  %376 = vmatpush1.bf16.msra.mxu0 0
  %377 = vmatprep.subr.bf16.mxu0 0
  %378 = vmatpush1.bf16.msra.mxu0 0
  %379 = vmatprep.subr.bf16.mxu0 0
  %380 = vmatpush1.bf16.msra.mxu0 0
  %381 = vmatprep.subr.bf16.mxu0 0
  %382 = vmatpush1.bf16.msra.mxu0 0
  %383 = vmatprep.subr.bf16.mxu0 0
  %384 = vmatpush1.bf16.msra.mxu0 0
  %385 = vmatprep.subr.bf16.mxu0 0
  %386 = vmatpush1.bf16.msra.mxu0 0
  %387 = vmatprep.mubr.bf16.mxu0 0
  %388 = vmatmul.mubr.bf16.gmra.mrb[0].mxu0 %v253
  %v389 = vpop.f32.mrb[0].mxu0
  %v390 = vadd.f32 0.0, %v389
  %v391 = vpop.f32.mrb[0].mxu0
  %v392 = vpop.f32.mrb[0].mxu0
  %v393 = vadd.f32 0.0, %v392
  %v394 = vpop.f32.mrb[0].mxu0
  %395 = vmatprep.mubr.bf16.mxu0 0
  %396 = vmatmul.mubr.bf16.gmra.mrb[0].mxu0 %v256
  %v397 = vpop.f32.mrb[0].mxu0
  %v398 = vadd.f32 0.0, %v397
  %v399 = vpop.f32.mrb[0].mxu0
  %v400 = vpop.f32.mrb[0].mxu0
  %v401 = vadd.f32 0.0, %v400
  %v402 = vpop.f32.mrb[0].mxu0
  %403 = vmatprep.mubr.bf16.mxu0 0
  %404 = vmatmul.mubr.bf16.gmra.mrb[0].mxu0 %v259
  %v405 = vpop.f32.mrb[0].mxu0
  %v406 = vadd.f32 0.0, %v405
  %v407 = vpop.f32.mrb[0].mxu0
  %v408 = vpop.f32.mrb[0].mxu0
  %v409 = vadd.f32 0.0, %v408
  %v410 = vpop.f32.mrb[0].mxu0
  %411 = vmatprep.mubr.bf16.mxu0 0
  %412 = vmatmul.mubr.bf16.gmra.mrb[0].mxu0 %v262
  %v413 = vpop.f32.mrb[0].mxu0
  %v414 = vadd.f32 0.0, %v413
  %v415 = vpop.f32.mrb[0].mxu0
  %v416 = vpop.f32.mrb[0].mxu0
  %v417 = vadd.f32 0.0, %v416
  %v418 = vpop.f32.mrb[0].mxu0
  %419 = vmatprep.mubr.bf16.mxu0 0
  %420 = vmatmul.mubr.bf16.gmra.mrb[0].mxu0 %v265
  %v421 = vpop.f32.mrb[0].mxu0
  %v422 = vadd.f32 0.0, %v421
  %v423 = vpop.f32.mrb[0].mxu0
  %v424 = vpop.f32.mrb[0].mxu0
  %v425 = vadd.f32 0.0, %v424
  %v426 = vpop.f32.mrb[0].mxu0
  %427 = vmatprep.mubr.bf16.mxu0 0
  %428 = vmatmul.mubr.bf16.gmra.mrb[0].mxu0 %v268
  %v429 = vpop.f32.mrb[0].mxu0
  %v430 = vadd.f32 0.0, %v429
  %v431 = vpop.f32.mrb[0].mxu0
  %v432 = vpop.f32.mrb[0].mxu0
  %v433 = vadd.f32 0.0, %v432
  %v434 = vpop.f32.mrb[0].mxu0
  %435 = vmatprep.mubr.bf16.mxu0 0
  %436 = vmatmul.mubr.bf16.gmra.mrb[0].mxu0 %v271
  %v437 = vpop.f32.mrb[0].mxu0
  %v438 = vadd.f32 0.0, %v437
  %v439 = vpop.f32.mrb[0].mxu0
  %v440 = vpop.f32.mrb[0].mxu0
  %v441 = vadd.f32 0.0, %v440
  %v442 = vpop.f32.mrb[0].mxu0
  %443 = vmatprep.mubr.bf16.mxu0 0
  %444 = vmatmul.mubr.bf16.gmra.mrb[0].mxu0 %v274
  %v445 = vpop.f32.mrb[0].mxu0
  %v446 = vadd.f32 0.0, %v445
  %v447 = vpop.f32.mrb[0].mxu0
  %v448 = vpop.f32.mrb[0].mxu0
  %v449 = vadd.f32 0.0, %v448
  %v450 = vpop.f32.mrb[0].mxu0
  %451 = vmatprep.mubr.bf16.mxu0 0
  %452 = vmatmul.mubr.bf16.gmra.mrb[0].mxu0 %v277
  %v453 = vpop.f32.mrb[0].mxu0
  %v454 = vadd.f32 0.0, %v453
  %v455 = vpop.f32.mrb[0].mxu0
  %v456 = vpop.f32.mrb[0].mxu0
  %v457 = vadd.f32 0.0, %v456
  %v458 = vpop.f32.mrb[0].mxu0
  %459 = vmatprep.mubr.bf16.mxu0 0
  %460 = vmatmul.mubr.bf16.gmra.mrb[0].mxu0 %v280
  %v461 = vpop.f32.mrb[0].mxu0
  %v462 = vadd.f32 0.0, %v461
  %v463 = vpop.f32.mrb[0].mxu0
  %v464 = vpop.f32.mrb[0].mxu0
  %v465 = vadd.f32 0.0, %v464
  %v466 = vpop.f32.mrb[0].mxu0
  %467 = vmatprep.mubr.bf16.mxu0 0
  %468 = vmatmul.mubr.bf16.gmra.mrb[0].mxu0 %v283
  %v469 = vpop.f32.mrb[0].mxu0
  %v470 = vadd.f32 0.0, %v469
  %v471 = vpop.f32.mrb[0].mxu0
  %v472 = vpop.f32.mrb[0].mxu0
  %v473 = vadd.f32 0.0, %v472
  %v474 = vpop.f32.mrb[0].mxu0
  %475 = vmatprep.mubr.bf16.mxu0 0
  %476 = vmatmul.mubr.bf16.gmra.mrb[0].mxu0 %v286
  %v477 = vpop.f32.mrb[0].mxu0
  %v478 = vadd.f32 0.0, %v477
  %v479 = vpop.f32.mrb[0].mxu0
  %v480 = vpop.f32.mrb[0].mxu0
  %v481 = vadd.f32 0.0, %v480
  %v482 = vpop.f32.mrb[0].mxu0
  %483 = vmatprep.mubr.bf16.mxu0 0
  %484 = vmatmul.mubr.bf16.gmra.mrb[0].mxu0 %v289
  %v485 = vpop.f32.mrb[0].mxu0
  %v486 = vadd.f32 0.0, %v485
  %v487 = vpop.f32.mrb[0].mxu0
  %v488 = vpop.f32.mrb[0].mxu0
  %v489 = vadd.f32 0.0, %v488
  %v490 = vpop.f32.mrb[0].mxu0
  %491 = vmatprep.mubr.bf16.mxu0 0
  %492 = vmatmul.mubr.bf16.gmra.mrb[0].mxu0 %v292
  %v493 = vpop.f32.mrb[0].mxu0
  %v494 = vadd.f32 0.0, %v493
  %v495 = vpop.f32.mrb[0].mxu0
  %v496 = vpop.f32.mrb[0].mxu0
  %v497 = vadd.f32 0.0, %v496
  %v498 = vpop.f32.mrb[0].mxu0
  %499 = vmatprep.mubr.bf16.mxu0 0
  %500 = vmatmul.mubr.bf16.gmra.mrb[0].mxu0 %v295
  %v501 = vpop.f32.mrb[0].mxu0
  %v502 = vadd.f32 0.0, %v501
  %v503 = vpop.f32.mrb[0].mxu0
  %v504 = vpop.f32.mrb[0].mxu0
  %v505 = vadd.f32 0.0, %v504
  %v506 = vpop.f32.mrb[0].mxu0
  %507 = vmatprep.mubr.bf16.mxu0 0
  %508 = vmatmul.mubr.bf16.gmra.mrb[0].mxu0 %v298
  %v509 = vpop.f32.mrb[0].mxu0
  %v510 = vadd.f32 0.0, %v509
  %v511 = vpop.f32.mrb[0].mxu0
  %v512 = vpop.f32.mrb[0].mxu0
  %v513 = vadd.f32 0.0, %v512
  %v514 = vpop.f32.mrb[0].mxu0
  %515 = vmatprep.mubr.bf16.mxu0 0
  %516 = vmatmul.mubr.bf16.gmra.mrb[0].mxu0 %v301
  %v517 = vpop.f32.mrb[0].mxu0
  %v518 = vadd.f32 0.0, %v517
  %v519 = vpop.f32.mrb[0].mxu0
  %v520 = vpop.f32.mrb[0].mxu0
  %v521 = vadd.f32 0.0, %v520
  %v522 = vpop.f32.mrb[0].mxu0
  %523 = vmatprep.mubr.bf16.mxu0 0
  %524 = vmatmul.mubr.bf16.gmra.mrb[0].mxu0 %v304
  %v525 = vpop.f32.mrb[0].mxu0
  %v526 = vadd.f32 0.0, %v525
  %v527 = vpop.f32.mrb[0].mxu0
  %v528 = vpop.f32.mrb[0].mxu0
  %v529 = vadd.f32 0.0, %v528
  %v530 = vpop.f32.mrb[0].mxu0
  %531 = vmatprep.mubr.bf16.mxu0 0
  %532 = vmatmul.mubr.bf16.gmra.mrb[0].mxu0 %v307
  %v533 = vpop.f32.mrb[0].mxu0
  %v534 = vadd.f32 0.0, %v533
  %v535 = vpop.f32.mrb[0].mxu0
  %v536 = vpop.f32.mrb[0].mxu0
  %v537 = vadd.f32 0.0, %v536
  %v538 = vpop.f32.mrb[0].mxu0
  %539 = vmatprep.mubr.bf16.mxu0 0
  %540 = vmatmul.mubr.bf16.gmra.mrb[0].mxu0 %v310
  %v541 = vpop.f32.mrb[0].mxu0
  %v542 = vadd.f32 0.0, %v541
  %v543 = vpop.f32.mrb[0].mxu0
  %v544 = vpop.f32.mrb[0].mxu0
  %v545 = vadd.f32 0.0, %v544
  %v546 = vpop.f32.mrb[0].mxu0
  %547 = vmatprep.mubr.bf16.mxu0 0
  %548 = vmatmul.mubr.bf16.gmra.mrb[0].mxu0 %v313
  %v549 = vpop.f32.mrb[0].mxu0
  %v550 = vadd.f32 0.0, %v549
  %v551 = vpop.f32.mrb[0].mxu0
  %v552 = vpop.f32.mrb[0].mxu0
  %v553 = vadd.f32 0.0, %v552
  %v554 = vpop.f32.mrb[0].mxu0
  %555 = vmatprep.mubr.bf16.mxu0 0
  %556 = vmatmul.mubr.bf16.gmra.mrb[0].mxu0 %v316
  %v557 = vpop.f32.mrb[0].mxu0
  %v558 = vadd.f32 0.0, %v557
  %v559 = vpop.f32.mrb[0].mxu0
  %v560 = vpop.f32.mrb[0].mxu0
  %v561 = vadd.f32 0.0, %v560
  %v562 = vpop.f32.mrb[0].mxu0
  %563 = vmatprep.mubr.bf16.mxu0 0
  %564 = vmatmul.mubr.bf16.gmra.mrb[0].mxu0 %v319
  %v565 = vpop.f32.mrb[0].mxu0
  %v566 = vadd.f32 0.0, %v565
  %v567 = vpop.f32.mrb[0].mxu0
  %v568 = vpop.f32.mrb[0].mxu0
  %v569 = vadd.f32 0.0, %v568
  %v570 = vpop.f32.mrb[0].mxu0
  %571 = vmatprep.mubr.bf16.mxu0 0
  %572 = vmatmul.mubr.bf16.gmra.mrb[0].mxu0 %v322
  %v573 = vpop.f32.mrb[0].mxu0
  %v574 = vadd.f32 0.0, %v573
  %v575 = vpop.f32.mrb[0].mxu0
  %v576 = vpop.f32.mrb[0].mxu0
  %v577 = vadd.f32 0.0, %v576
  %v578 = vpop.f32.mrb[0].mxu0
  %579 = vmatprep.mubr.bf16.mxu0 0
  %580 = vmatmul.mubr.bf16.gmra.mrb[0].mxu0 %v325
  %v581 = vpop.f32.mrb[0].mxu0
  %v582 = vadd.f32 0.0, %v581
  %v583 = vpop.f32.mrb[0].mxu0
  %v584 = vpop.f32.mrb[0].mxu0
  %v585 = vadd.f32 0.0, %v584
  %v586 = vpop.f32.mrb[0].mxu0
  %587 = vmatprep.mubr.bf16.mxu0 0
  %588 = vmatmul.mubr.bf16.gmra.mrb[0].mxu0 %v328
  %v589 = vpop.f32.mrb[0].mxu0
  %v590 = vadd.f32 0.0, %v589
  %v591 = vpop.f32.mrb[0].mxu0
  %v592 = vpop.f32.mrb[0].mxu0
  %v593 = vadd.f32 0.0, %v592
  %v594 = vpop.f32.mrb[0].mxu0
  %595 = vmatprep.mubr.bf16.mxu0 0
  %596 = vmatmul.mubr.bf16.gmra.mrb[0].mxu0 %v331
  %v597 = vpop.f32.mrb[0].mxu0
  %v598 = vadd.f32 0.0, %v597
  %v599 = vpop.f32.mrb[0].mxu0
  %v600 = vpop.f32.mrb[0].mxu0
  %v601 = vadd.f32 0.0, %v600
  %v602 = vpop.f32.mrb[0].mxu0
  %603 = vmatprep.mubr.bf16.mxu0 0
  %604 = vmatmul.mubr.bf16.gmra.mrb[0].mxu0 %v334
  %v605 = vpop.f32.mrb[0].mxu0
  %v606 = vadd.f32 0.0, %v605
  %v607 = vpop.f32.mrb[0].mxu0
  %v608 = vpop.f32.mrb[0].mxu0
  %v609 = vadd.f32 0.0, %v608
  %v610 = vpop.f32.mrb[0].mxu0
  %611 = vmatprep.mubr.bf16.mxu0 0
  %612 = vmatmul.mubr.bf16.gmra.mrb[0].mxu0 %v337
  %v613 = vpop.f32.mrb[0].mxu0
  %v614 = vadd.f32 0.0, %v613
  %v615 = vpop.f32.mrb[0].mxu0
  %v616 = vpop.f32.mrb[0].mxu0
  %v617 = vadd.f32 0.0, %v616
  %v618 = vpop.f32.mrb[0].mxu0
  %619 = vmatprep.mubr.bf16.mxu0 0
  %620 = vmatmul.mubr.bf16.gmra.mrb[0].mxu0 %v340
  %v621 = vpop.f32.mrb[0].mxu0
  %v622 = vadd.f32 0.0, %v621
  %v623 = vpop.f32.mrb[0].mxu0
  %v624 = vpop.f32.mrb[0].mxu0
  %v625 = vadd.f32 0.0, %v624
  %v626 = vpop.f32.mrb[0].mxu0
  %627 = vmatprep.mubr.bf16.mxu0 0
  %628 = vmatmul.mubr.bf16.gmra.mrb[0].mxu0 %v343
  %v629 = vpop.f32.mrb[0].mxu0
  %v630 = vadd.f32 0.0, %v629
  %v631 = vpop.f32.mrb[0].mxu0
  %v632 = vpop.f32.mrb[0].mxu0
  %v633 = vadd.f32 0.0, %v632
  %v634 = vpop.f32.mrb[0].mxu0
  %635 = vmatprep.mubr.bf16.mxu0 0
  %636 = vmatmul.mubr.bf16.gmra.mrb[0].mxu0 %v346
  %v637 = vpop.f32.mrb[0].mxu0
  %v638 = vadd.f32 0.0, %v637
  %v639 = vpop.f32.mrb[0].mxu0
  %v640 = vpop.f32.mrb[0].mxu0
  %v641 = vadd.f32 0.0, %v640
  %v642 = vpop.f32.mrb[0].mxu0
  %643 = vdwg.mxu0
  %vm644 = vcmp.ge.f32.partialorder %v390, 0.0
  %vm645 = vcmp.ge.f32.partialorder %v393, 0.0
  %vm646 = vcmp.ge.f32.partialorder %v398, 0.0
  %vm647 = vcmp.ge.f32.partialorder %v401, 0.0
  %vm648 = vcmp.ge.f32.partialorder %v406, 0.0
  %vm649 = vcmp.ge.f32.partialorder %v409, 0.0
  %vm650 = vcmp.ge.f32.partialorder %v414, 0.0
  %vm651 = vcmp.ge.f32.partialorder %v417, 0.0
  %vm652 = vcmp.ge.f32.partialorder %v422, 0.0
  %vm653 = vcmp.ge.f32.partialorder %v425, 0.0
  %vm654 = vcmp.ge.f32.partialorder %v430, 0.0
  %vm655 = vcmp.ge.f32.partialorder %v433, 0.0
  %vm656 = vcmp.ge.f32.partialorder %v438, 0.0
  %vm657 = vcmp.ge.f32.partialorder %v441, 0.0
  %vm658 = vcmp.ge.f32.partialorder %v446, 0.0
  %vm659 = vcmp.ge.f32.partialorder %v449, 0.0
  %vm660 = vcmp.ge.f32.partialorder %v454, 0.0
  %vm661 = vcmp.ge.f32.partialorder %v457, 0.0
  %vm662 = vcmp.ge.f32.partialorder %v462, 0.0
  %vm663 = vcmp.ge.f32.partialorder %v465, 0.0
  %vm664 = vcmp.ge.f32.partialorder %v470, 0.0
  %vm665 = vcmp.ge.f32.partialorder %v473, 0.0
  %vm666 = vcmp.ge.f32.partialorder %v478, 0.0
  %vm667 = vcmp.ge.f32.partialorder %v481, 0.0
  %vm668 = vcmp.ge.f32.partialorder %v486, 0.0
  %vm669 = vcmp.ge.f32.partialorder %v489, 0.0
  %vm670 = vcmp.ge.f32.partialorder %v494, 0.0
  %vm671 = vcmp.ge.f32.partialorder %v497, 0.0
  %vm672 = vcmp.ge.f32.partialorder %v502, 0.0
  %vm673 = vcmp.ge.f32.partialorder %v505, 0.0
  %vm674 = vcmp.ge.f32.partialorder %v510, 0.0
  %vm675 = vcmp.ge.f32.partialorder %v513, 0.0
  %vm676 = vcmp.ge.f32.partialorder %v518, 0.0
  %vm677 = vcmp.ge.f32.partialorder %v521, 0.0
  %vm678 = vcmp.ge.f32.partialorder %v526, 0.0
  %vm679 = vcmp.ge.f32.partialorder %v529, 0.0
  %vm680 = vcmp.ge.f32.partialorder %v534, 0.0
  %vm681 = vcmp.ge.f32.partialorder %v537, 0.0
  %vm682 = vcmp.ge.f32.partialorder %v542, 0.0
  %vm683 = vcmp.ge.f32.partialorder %v545, 0.0
  %vm684 = vcmp.ge.f32.partialorder %v550, 0.0
  %vm685 = vcmp.ge.f32.partialorder %v553, 0.0
  %vm686 = vcmp.ge.f32.partialorder %v558, 0.0
  %vm687 = vcmp.ge.f32.partialorder %v561, 0.0
  %vm688 = vcmp.ge.f32.partialorder %v566, 0.0
  %vm689 = vcmp.ge.f32.partialorder %v569, 0.0
  %vm690 = vcmp.ge.f32.partialorder %v574, 0.0
  %vm691 = vcmp.ge.f32.partialorder %v577, 0.0
  %vm692 = vcmp.ge.f32.partialorder %v582, 0.0
  %vm693 = vcmp.ge.f32.partialorder %v585, 0.0
  %vm694 = vcmp.ge.f32.partialorder %v590, 0.0
  %vm695 = vcmp.ge.f32.partialorder %v593, 0.0
  %vm696 = vcmp.ge.f32.partialorder %v598, 0.0
  %vm697 = vcmp.ge.f32.partialorder %v601, 0.0
  %vm698 = vcmp.ge.f32.partialorder %v606, 0.0
  %vm699 = vcmp.ge.f32.partialorder %v609, 0.0
  %vm700 = vcmp.ge.f32.partialorder %v614, 0.0
  %vm701 = vcmp.ge.f32.partialorder %v617, 0.0
  %vm702 = vcmp.ge.f32.partialorder %v622, 0.0
  %vm703 = vcmp.ge.f32.partialorder %v625, 0.0
  %vm704 = vcmp.ge.f32.partialorder %v630, 0.0
  %vm705 = vcmp.ge.f32.partialorder %v633, 0.0
  %vm706 = vcmp.ge.f32.partialorder %v638, 0.0
  %vm707 = vcmp.ge.f32.partialorder %v641, 0.0
  %v708 = vmul.f32 %v390, 0.25
  %v709 = vmul.f32 %v393, 0.25
  %v710 = vmul.f32 %v398, 0.25
  %v711 = vmul.f32 %v401, 0.25
  %v712 = vmul.f32 %v406, 0.25
  %v713 = vmul.f32 %v409, 0.25
  %v714 = vmul.f32 %v414, 0.25
  %v715 = vmul.f32 %v417, 0.25
  %v716 = vmul.f32 %v422, 0.25
  %v717 = vmul.f32 %v425, 0.25
  %v718 = vmul.f32 %v430, 0.25
  %v719 = vmul.f32 %v433, 0.25
  %v720 = vmul.f32 %v438, 0.25
  %v721 = vmul.f32 %v441, 0.25
  %v722 = vmul.f32 %v446, 0.25
  %v723 = vmul.f32 %v449, 0.25
  %v724 = vmul.f32 %v454, 0.25
  %v725 = vmul.f32 %v457, 0.25
  %v726 = vmul.f32 %v462, 0.25
  %v727 = vmul.f32 %v465, 0.25
  %v728 = vmul.f32 %v470, 0.25
  %v729 = vmul.f32 %v473, 0.25
  %v730 = vmul.f32 %v478, 0.25
  %v731 = vmul.f32 %v481, 0.25
  %v732 = vmul.f32 %v486, 0.25
  %v733 = vmul.f32 %v489, 0.25
  %v734 = vmul.f32 %v494, 0.25
  %v735 = vmul.f32 %v497, 0.25
  %v736 = vmul.f32 %v502, 0.25
  %v737 = vmul.f32 %v505, 0.25
  %v738 = vmul.f32 %v510, 0.25
  %v739 = vmul.f32 %v513, 0.25
  %v740 = vmul.f32 %v518, 0.25
  %v741 = vmul.f32 %v521, 0.25
  %v742 = vmul.f32 %v526, 0.25
  %v743 = vmul.f32 %v529, 0.25
  %v744 = vmul.f32 %v534, 0.25
  %v745 = vmul.f32 %v537, 0.25
  %v746 = vmul.f32 %v542, 0.25
  %v747 = vmul.f32 %v545, 0.25
  %v748 = vmul.f32 %v550, 0.25
  %v749 = vmul.f32 %v553, 0.25
  %v750 = vmul.f32 %v558, 0.25
  %v751 = vmul.f32 %v561, 0.25
  %v752 = vmul.f32 %v566, 0.25
  %v753 = vmul.f32 %v569, 0.25
  %v754 = vmul.f32 %v574, 0.25
  %v755 = vmul.f32 %v577, 0.25
  %v756 = vmul.f32 %v582, 0.25
  %v757 = vmul.f32 %v585, 0.25
  %v758 = vmul.f32 %v590, 0.25
  %v759 = vmul.f32 %v593, 0.25
  %v760 = vmul.f32 %v598, 0.25
  %v761 = vmul.f32 %v601, 0.25
  %v762 = vmul.f32 %v606, 0.25
  %v763 = vmul.f32 %v609, 0.25
  %v764 = vmul.f32 %v614, 0.25
  %v765 = vmul.f32 %v617, 0.25
  %v766 = vmul.f32 %v622, 0.25
  %v767 = vmul.f32 %v625, 0.25
  %v768 = vmul.f32 %v630, 0.25
  %v769 = vmul.f32 %v633, 0.25
  %v770 = vmul.f32 %v638, 0.25
  %v771 = vmul.f32 %v641, 0.25
  %v772 = vsel %vm644, %v390, %v708
  %v773 = vsel %vm645, %v393, %v709
  %v774 = vsel %vm646, %v398, %v710
  %v775 = vsel %vm647, %v401, %v711
  %v776 = vsel %vm648, %v406, %v712
  %v777 = vsel %vm649, %v409, %v713
  %v778 = vsel %vm650, %v414, %v714
  %v779 = vsel %vm651, %v417, %v715
  %v780 = vsel %vm652, %v422, %v716
  %v781 = vsel %vm653, %v425, %v717
  %v782 = vsel %vm654, %v430, %v718
  %v783 = vsel %vm655, %v433, %v719
  %v784 = vsel %vm656, %v438, %v720
  %v785 = vsel %vm657, %v441, %v721
  %v786 = vsel %vm658, %v446, %v722
  %v787 = vsel %vm659, %v449, %v723
  %v788 = vsel %vm660, %v454, %v724
  %v789 = vsel %vm661, %v457, %v725
  %v790 = vsel %vm662, %v462, %v726
  %v791 = vsel %vm663, %v465, %v727
  %v792 = vsel %vm664, %v470, %v728
  %v793 = vsel %vm665, %v473, %v729
  %v794 = vsel %vm666, %v478, %v730
  %v795 = vsel %vm667, %v481, %v731
  %v796 = vsel %vm668, %v486, %v732
  %v797 = vsel %vm669, %v489, %v733
  %v798 = vsel %vm670, %v494, %v734
  %v799 = vsel %vm671, %v497, %v735
  %v800 = vsel %vm672, %v502, %v736
  %v801 = vsel %vm673, %v505, %v737
  %v802 = vsel %vm674, %v510, %v738
  %v803 = vsel %vm675, %v513, %v739
  %v804 = vsel %vm676, %v518, %v740
  %v805 = vsel %vm677, %v521, %v741
  %v806 = vsel %vm678, %v526, %v742
  %v807 = vsel %vm679, %v529, %v743
  %v808 = vsel %vm680, %v534, %v744
  %v809 = vsel %vm681, %v537, %v745
  %v810 = vsel %vm682, %v542, %v746
  %v811 = vsel %vm683, %v545, %v747
  %v812 = vsel %vm684, %v550, %v748
  %v813 = vsel %vm685, %v553, %v749
  %v814 = vsel %vm686, %v558, %v750
  %v815 = vsel %vm687, %v561, %v751
  %v816 = vsel %vm688, %v566, %v752
  %v817 = vsel %vm689, %v569, %v753
  %v818 = vsel %vm690, %v574, %v754
  %v819 = vsel %vm691, %v577, %v755
  %v820 = vsel %vm692, %v582, %v756
  %v821 = vsel %vm693, %v585, %v757
  %v822 = vsel %vm694, %v590, %v758
  %v823 = vsel %vm695, %v593, %v759
  %v824 = vsel %vm696, %v598, %v760
  %v825 = vsel %vm697, %v601, %v761
  %v826 = vsel %vm698, %v606, %v762
  %v827 = vsel %vm699, %v609, %v763
  %v828 = vsel %vm700, %v614, %v764
  %v829 = vsel %vm701, %v617, %v765
  %v830 = vsel %vm702, %v622, %v766
  %v831 = vsel %vm703, %v625, %v767
  %v832 = vsel %vm704, %v630, %v768
  %v833 = vsel %vm705, %v633, %v769
  %v834 = vsel %vm706, %v638, %v770
  %v835 = vsel %vm707, %v641, %v771
  %836 = vst [vmem:[%s2] sm:$0xff] %v772
  %837 = vst [vmem:[%s2 + $0x8] sm:$0xff] %v773
  %838 = vst [vmem:[%s2 + $0x10] sm:$0xff] %v774
  %839 = vst [vmem:[%s2 + $0x18] sm:$0xff] %v775
  %840 = vst [vmem:[%s2 + $0x20] sm:$0xff] %v776
  %841 = vst [vmem:[%s2 + $0x28] sm:$0xff] %v777
  %842 = vst [vmem:[%s2 + $0x30] sm:$0xff] %v778
  %843 = vst [vmem:[%s2 + $0x38] sm:$0xff] %v779
  %844 = vst [vmem:[%s2 + $0x40] sm:$0xff] %v780
  %845 = vst [vmem:[%s2 + $0x48] sm:$0xff] %v781
  %846 = vst [vmem:[%s2 + $0x50] sm:$0xff] %v782
  %847 = vst [vmem:[%s2 + $0x58] sm:$0xff] %v783
  %848 = vst [vmem:[%s2 + $0x60] sm:$0xff] %v784
  %849 = vst [vmem:[%s2 + $0x68] sm:$0xff] %v785
  %850 = vst [vmem:[%s2 + $0x70] sm:$0xff] %v786
  %851 = vst [vmem:[%s2 + $0x78] sm:$0xff] %v787
  %852 = vst [vmem:[%s2 + $0x80] sm:$0xff] %v788
  %853 = vst [vmem:[%s2 + $0x88] sm:$0xff] %v789
  %854 = vst [vmem:[%s2 + $0x90] sm:$0xff] %v790
  %855 = vst [vmem:[%s2 + $0x98] sm:$0xff] %v791
  %856 = vst [vmem:[%s2 + $0xa0] sm:$0xff] %v792
  %857 = vst [vmem:[%s2 + $0xa8] sm:$0xff] %v793
  %858 = vst [vmem:[%s2 + $0xb0] sm:$0xff] %v794
  %859 = vst [vmem:[%s2 + $0xb8] sm:$0xff] %v795
  %860 = vst [vmem:[%s2 + $0xc0] sm:$0xff] %v796
  %861 = vst [vmem:[%s2 + $0xc8] sm:$0xff] %v797
  %862 = vst [vmem:[%s2 + $0xd0] sm:$0xff] %v798
  %863 = vst [vmem:[%s2 + $0xd8] sm:$0xff] %v799
  %864 = vst [vmem:[%s2 + $0xe0] sm:$0xff] %v800
  %865 = vst [vmem:[%s2 + $0xe8] sm:$0xff] %v801
  %866 = vst [vmem:[%s2 + $0xf0] sm:$0xff] %v802
  %867 = vst [vmem:[%s2 + $0xf8] sm:$0xff] %v803
  %868 = vst [vmem:[%s2 + $0x100] sm:$0xff] %v804
  %869 = vst [vmem:[%s2 + $0x108] sm:$0xff] %v805
  %870 = vst [vmem:[%s2 + $0x110] sm:$0xff] %v806
  %871 = vst [vmem:[%s2 + $0x118] sm:$0xff] %v807
  %872 = vst [vmem:[%s2 + $0x120] sm:$0xff] %v808
  %873 = vst [vmem:[%s2 + $0x128] sm:$0xff] %v809
  %874 = vst [vmem:[%s2 + $0x130] sm:$0xff] %v810
  %875 = vst [vmem:[%s2 + $0x138] sm:$0xff] %v811
  %876 = vst [vmem:[%s2 + $0x140] sm:$0xff] %v812
  %877 = vst [vmem:[%s2 + $0x148] sm:$0xff] %v813
  %878 = vst [vmem:[%s2 + $0x150] sm:$0xff] %v814
  %879 = vst [vmem:[%s2 + $0x158] sm:$0xff] %v815
  %880 = vst [vmem:[%s2 + $0x160] sm:$0xff] %v816
  %881 = vst [vmem:[%s2 + $0x168] sm:$0xff] %v817
  %882 = vst [vmem:[%s2 + $0x170] sm:$0xff] %v818
  %883 = vst [vmem:[%s2 + $0x178] sm:$0xff] %v819
  %884 = vst [vmem:[%s2 + $0x180] sm:$0xff] %v820
  %885 = vst [vmem:[%s2 + $0x188] sm:$0xff] %v821
  %886 = vst [vmem:[%s2 + $0x190] sm:$0xff] %v822
  %887 = vst [vmem:[%s2 + $0x198] sm:$0xff] %v823
  %888 = vst [vmem:[%s2 + $0x1a0] sm:$0xff] %v824
  %889 = vst [vmem:[%s2 + $0x1a8] sm:$0xff] %v825
  %890 = vst [vmem:[%s2 + $0x1b0] sm:$0xff] %v826
  %891 = vst [vmem:[%s2 + $0x1b8] sm:$0xff] %v827
  %892 = vst [vmem:[%s2 + $0x1c0] sm:$0xff] %v828
  %893 = vst [vmem:[%s2 + $0x1c8] sm:$0xff] %v829
  %894 = vst [vmem:[%s2 + $0x1d0] sm:$0xff] %v830
  %895 = vst [vmem:[%s2 + $0x1d8] sm:$0xff] %v831
  %896 = vst [vmem:[%s2 + $0x1e0] sm:$0xff] %v832
  %897 = vst [vmem:[%s2 + $0x1e8] sm:$0xff] %v833
  %898 = vst [vmem:[%s2 + $0x1f0] sm:$0xff] %v834
  %899 = vst [vmem:[%s2 + $0x1f8] sm:$0xff] %v835
  // Predicated region
  $region10: #{forward.91} parent=0 // pred_check
    _
  $region11: #{forward.91} parent=0 // pred_check_branch
    %901 = sbr.rel (0) target = $region13
  $region12: #{forward.91} parent=0 // pred_region
    _
  $region13: #{forward.91} parent=0 // pred_fallthru
    _
  // Predicated region
  $region14: #{forward.91} parent=0 // pred_check
    _
  $region15: #{forward.91} parent=0 // pred_check_branch
    %903 = sbr.rel (0) target = $region17
  $region16: #{forward.91} parent=0 // pred_region
    _
  $region17: #{forward.91} parent=0 // pred_fallthru
    _

// kernel: forward.93
$region0: #{forward.93}
  #allocation0 [shape = 'u32[]', space=smem, size = 0x4, offset = 0x4, fixed_abs, tag = 'smem constant byte address 0x4 - core index']
  #allocation1 [shape = 'u32[144,128]{1,0:T(1,128)}', space=vmem, size = 0x12000, scoped, tag = 'internal scratch']
  %s0 = inlined_call_operand.vmem [shape: bf16[128,144], index: 0, kind: input, shape index: {}]
  %s1 = inlined_call_operand.vmem [shape: bf16[144,128], index: 1, kind: input, shape index: {}]
  %s2 = inlined_call_operand.vmem [shape: f32[128,128], index: 2, kind: output, shape index: {}]
  %s3 = sld [smem:[#allocation0]]
  $region18: #{forward.93} parent=0
    _
  %s5 = ssub.s32 1, %s3
  %s6 = scalar_select 0, %s5, %s3
  // Predicated region
  $region2: #{forward.93} parent=0 // pred_check
    _
  $region3: #{forward.93} parent=0 // pred_check_branch
    %8 = sbr.rel (0) target = $region5
  $region4: #{forward.93} parent=0 // pred_region
    _
  $region5: #{forward.93} parent=0 // pred_fallthru
    _
  // Predicated region
  $region6: #{forward.93} parent=0 // pred_check
    _
  $region7: #{forward.93} parent=0 // pred_check_branch
    %10 = sbr.rel (0) target = $region9
  $region8: #{forward.93} parent=0 // pred_region
    _
  $region9: #{forward.93} parent=0 // pred_fallthru
    _
  %v12 = vld [vmem:[%s0] sm:$0xff]
  %v13 = vld [vmem:[%s0 + $0x8] sm:$0xff]
  %v14 = vld [vmem:[%s0 + $0x10] sm:$0xff]
  %v15 = vld [vmem:[%s0 + $0x18] sm:$0xff]
  %v16 = vld [vmem:[%s0 + $0x20] sm:$0xff]
  %v17 = vld [vmem:[%s0 + $0x28] sm:$0xff]
  %v18 = vld [vmem:[%s0 + $0x30] sm:$0xff]
  %v19 = vld [vmem:[%s0 + $0x38] sm:$0xff]
  %v20 = vld [vmem:[%s0 + $0x40] sm:$0xff]
  %v21 = vld [vmem:[%s0 + $0x48] sm:$0xff]
  %v22 = vld [vmem:[%s0 + $0x50] sm:$0xff]
  %v23 = vld [vmem:[%s0 + $0x58] sm:$0xff]
  %v24 = vld [vmem:[%s0 + $0x60] sm:$0xff]
  %v25 = vld [vmem:[%s0 + $0x68] sm:$0xff]
  %v26 = vld [vmem:[%s0 + $0x70] sm:$0xff]
  %v27 = vld [vmem:[%s0 + $0x78] sm:$0xff]
  %v28 = vld [vmem:[%s1] sm:$0xf]
  %v29 = vld [vmem:[%s1 + $0x4] sm:$0xf]
  %v30 = vld [vmem:[%s1 + $0x8] sm:$0xf]
  %v31 = vld [vmem:[%s1 + $0xc] sm:$0xf]
  %v32 = vld [vmem:[%s1 + $0x10] sm:$0xf]
  %v33 = vld [vmem:[%s1 + $0x14] sm:$0xf]
  %v34 = vld [vmem:[%s1 + $0x18] sm:$0xf]
  %v35 = vld [vmem:[%s1 + $0x1c] sm:$0xf]
  %v36 = vld [vmem:[%s1 + $0x20] sm:$0xf]
  %v37 = vld [vmem:[%s1 + $0x24] sm:$0xf]
  %v38 = vld [vmem:[%s1 + $0x28] sm:$0xf]
  %v39 = vld [vmem:[%s1 + $0x2c] sm:$0xf]
  %v40 = vld [vmem:[%s1 + $0x30] sm:$0xf]
  %v41 = vld [vmem:[%s1 + $0x34] sm:$0xf]
  %v42 = vld [vmem:[%s1 + $0x38] sm:$0xf]
  %v43 = vld [vmem:[%s1 + $0x3c] sm:$0xf]
  %v44 = vld [vmem:[%s1 + $0x40] sm:$0xf]
  %v45 = vld [vmem:[%s1 + $0x44] sm:$0xf]
  %v62 = vunpack.c.l.b16 %v12
  %v63 = vunpack.c.h.b16 %v12
  %v64 = vunpack.c.l.b16 %v13
  %v65 = vunpack.c.h.b16 %v13
  %v66 = vunpack.c.l.b16 %v14
  %v67 = vunpack.c.h.b16 %v14
  %v68 = vunpack.c.l.b16 %v15
  %v69 = vunpack.c.h.b16 %v15
  %v70 = vunpack.c.l.b16 %v16
  %v71 = vunpack.c.h.b16 %v16
  %v72 = vunpack.c.l.b16 %v17
  %v73 = vunpack.c.h.b16 %v17
  %v74 = vunpack.c.l.b16 %v18
  %v75 = vunpack.c.h.b16 %v18
  %v76 = vunpack.c.l.b16 %v19
  %v77 = vunpack.c.h.b16 %v19
  %v78 = vunpack.c.l.b16 %v20
  %v79 = vunpack.c.h.b16 %v20
  %v80 = vunpack.c.l.b16 %v21
  %v81 = vunpack.c.h.b16 %v21
  %v82 = vunpack.c.l.b16 %v22
  %v83 = vunpack.c.h.b16 %v22
  %v84 = vunpack.c.l.b16 %v23
  %v85 = vunpack.c.h.b16 %v23
  %v86 = vunpack.c.l.b16 %v24
  %v87 = vunpack.c.h.b16 %v24
  %v88 = vunpack.c.l.b16 %v25
  %v89 = vunpack.c.h.b16 %v25
  %v90 = vunpack.c.l.b16 %v26
  %v91 = vunpack.c.h.b16 %v26
  %v92 = vunpack.c.l.b16 %v27
  %v93 = vunpack.c.h.b16 %v27
  %v94 = vpack.c.b16 %v64, %v62
  %v95 = vpack.c.b16 %v65, %v63
  %v96 = vpack.c.b16 %v68, %v66
  %v97 = vpack.c.b16 %v69, %v67
  %v98 = vpack.c.b16 %v72, %v70
  %v99 = vpack.c.b16 %v73, %v71
  %v100 = vpack.c.b16 %v76, %v74
  %v101 = vpack.c.b16 %v77, %v75
  %v102 = vpack.c.b16 %v80, %v78
  %v103 = vpack.c.b16 %v81, %v79
  %v104 = vpack.c.b16 %v84, %v82
  %v105 = vpack.c.b16 %v85, %v83
  %v106 = vpack.c.b16 %v88, %v86
  %v107 = vpack.c.b16 %v89, %v87
  %v108 = vpack.c.b16 %v92, %v90
  %v109 = vpack.c.b16 %v93, %v91
  %v136 = vunpack.c.l.b16 %v28
  %v137 = vunpack.c.l.b16 %v29
  %v138 = vunpack.c.l.b16 %v30
  %v139 = vunpack.c.l.b16 %v31
  %v140 = vunpack.c.l.b16 %v32
  %v141 = vunpack.c.l.b16 %v33
  %v142 = vunpack.c.l.b16 %v34
  %v143 = vunpack.c.l.b16 %v35
  %v144 = vunpack.c.l.b16 %v36
  %v145 = vunpack.c.l.b16 %v37
  %v146 = vunpack.c.l.b16 %v38
  %v147 = vunpack.c.l.b16 %v39
  %v148 = vunpack.c.l.b16 %v40
  %v149 = vunpack.c.l.b16 %v41
  %v150 = vunpack.c.l.b16 %v42
  %v151 = vunpack.c.l.b16 %v43
  %v152 = vunpack.c.l.b16 %v44
  %v153 = vunpack.c.l.b16 %v45
  %v154 = vpack.c.b16 %v137, %v136
  %v155 = vpack.c.b16 %v139, %v138
  %v156 = vpack.c.b16 %v141, %v140
  %v157 = vpack.c.b16 %v143, %v142
  %v158 = vpack.c.b16 %v145, %v144
  %v159 = vpack.c.b16 %v147, %v146
  %v160 = vpack.c.b16 %v149, %v148
  %v161 = vpack.c.b16 %v151, %v150
  %v162 = vpack.c.b16 %v153, %v152
  %vm172 = vcmask 130048
  %v174 = vsel %vm172, %v95, 0
  %v177 = vsel %vm172, %v97, 0
  %v180 = vsel %vm172, %v99, 0
  %v183 = vsel %vm172, %v101, 0
  %v186 = vsel %vm172, %v103, 0
  %v189 = vsel %vm172, %v105, 0
  %v192 = vsel %vm172, %v107, 0
  %v195 = vsel %vm172, %v109, 0
  %197 = vmatprep.subr.bf16.mxu0 0
  %198 = vmatpush1.bf16.msra.mxu0 %v154
  %199 = vmatprep.subr.bf16.mxu0 0
  %200 = vmatpush1.bf16.msra.mxu0 %v155
  %201 = vmatprep.subr.bf16.mxu0 0
  %202 = vmatpush1.bf16.msra.mxu0 %v156
  %203 = vmatprep.subr.bf16.mxu0 0
  %204 = vmatpush1.bf16.msra.mxu0 %v157
  %205 = vmatprep.subr.bf16.mxu0 0
  %206 = vmatpush1.bf16.msra.mxu0 %v158
  %207 = vmatprep.subr.bf16.mxu0 0
  %208 = vmatpush1.bf16.msra.mxu0 %v159
  %209 = vmatprep.subr.bf16.mxu0 0
  %210 = vmatpush1.bf16.msra.mxu0 %v160
  %211 = vmatprep.subr.bf16.mxu0 0
  %212 = vmatpush1.bf16.msra.mxu0 %v161
  %213 = vmatprep.subr.bf16.mxu0 0
  %214 = vmatpush1.bf16.msra.mxu0 %v162
  %215 = vmatprep.subr.bf16.mxu0 0
  %216 = vmatpush1.bf16.msra.mxu0 0
  %217 = vmatprep.subr.bf16.mxu0 0
  %218 = vmatpush1.bf16.msra.mxu0 0
  %219 = vmatprep.subr.bf16.mxu0 0
  %220 = vmatpush1.bf16.msra.mxu0 0
  %221 = vmatprep.subr.bf16.mxu0 0
  %222 = vmatpush1.bf16.msra.mxu0 0
  %223 = vmatprep.subr.bf16.mxu0 0
  %224 = vmatpush1.bf16.msra.mxu0 0
  %225 = vmatprep.subr.bf16.mxu0 0
  %226 = vmatpush1.bf16.msra.mxu0 0
  %227 = vmatprep.subr.bf16.mxu0 0
  %228 = vmatpush1.bf16.msra.mxu0 0
  %229 = vmatprep.mubr.bf16.mxu0 %v174
  %230 = vmatmul.mubr.bf16.gmra.mrb[0].mxu0 %v94
  %v231 = vpop.f32.mrb[0].mxu0
  %v232 = vadd.f32 0.0, %v231
  %v233 = vpop.f32.mrb[0].mxu0
  %v234 = vpop.f32.mrb[0].mxu0
  %v235 = vadd.f32 0.0, %v234
  %v236 = vpop.f32.mrb[0].mxu0
  %237 = vmatprep.mubr.bf16.mxu0 %v177
  %238 = vmatmul.mubr.bf16.gmra.mrb[0].mxu0 %v96
  %v239 = vpop.f32.mrb[0].mxu0
  %v240 = vadd.f32 0.0, %v239
  %v241 = vpop.f32.mrb[0].mxu0
  %v242 = vpop.f32.mrb[0].mxu0
  %v243 = vadd.f32 0.0, %v242
  %v244 = vpop.f32.mrb[0].mxu0
  %245 = vmatprep.mubr.bf16.mxu0 %v180
  %246 = vmatmul.mubr.bf16.gmra.mrb[0].mxu0 %v98
  %v247 = vpop.f32.mrb[0].mxu0
  %v248 = vadd.f32 0.0, %v247
  %v249 = vpop.f32.mrb[0].mxu0
  %v250 = vpop.f32.mrb[0].mxu0
  %v251 = vadd.f32 0.0, %v250
  %v252 = vpop.f32.mrb[0].mxu0
  %253 = vmatprep.mubr.bf16.mxu0 %v183
  %254 = vmatmul.mubr.bf16.gmra.mrb[0].mxu0 %v100
  %v255 = vpop.f32.mrb[0].mxu0
  %v256 = vadd.f32 0.0, %v255
  %v257 = vpop.f32.mrb[0].mxu0
  %v258 = vpop.f32.mrb[0].mxu0
  %v259 = vadd.f32 0.0, %v258
  %v260 = vpop.f32.mrb[0].mxu0
  %261 = vmatprep.mubr.bf16.mxu0 %v186
  %262 = vmatmul.mubr.bf16.gmra.mrb[0].mxu0 %v102
  %v263 = vpop.f32.mrb[0].mxu0
  %v264 = vadd.f32 0.0, %v263
  %v265 = vpop.f32.mrb[0].mxu0
  %v266 = vpop.f32.mrb[0].mxu0
  %v267 = vadd.f32 0.0, %v266
  %v268 = vpop.f32.mrb[0].mxu0
  %269 = vmatprep.mubr.bf16.mxu0 %v189
  %270 = vmatmul.mubr.bf16.gmra.mrb[0].mxu0 %v104
  %v271 = vpop.f32.mrb[0].mxu0
  %v272 = vadd.f32 0.0, %v271
  %v273 = vpop.f32.mrb[0].mxu0
  %v274 = vpop.f32.mrb[0].mxu0
  %v275 = vadd.f32 0.0, %v274
  %v276 = vpop.f32.mrb[0].mxu0
  %277 = vmatprep.mubr.bf16.mxu0 %v192
  %278 = vmatmul.mubr.bf16.gmra.mrb[0].mxu0 %v106
  %v279 = vpop.f32.mrb[0].mxu0
  %v280 = vadd.f32 0.0, %v279
  %v281 = vpop.f32.mrb[0].mxu0
  %v282 = vpop.f32.mrb[0].mxu0
  %v283 = vadd.f32 0.0, %v282
  %v284 = vpop.f32.mrb[0].mxu0
  %285 = vmatprep.mubr.bf16.mxu0 %v195
  %286 = vmatmul.mubr.bf16.gmra.mrb[0].mxu0 %v108
  %v287 = vpop.f32.mrb[0].mxu0
  %v288 = vadd.f32 0.0, %v287
  %v289 = vpop.f32.mrb[0].mxu0
  %v290 = vpop.f32.mrb[0].mxu0
  %v291 = vadd.f32 0.0, %v290
  %v292 = vpop.f32.mrb[0].mxu0
  %293 = vdwg.mxu0
  %v294 = vmax.f32 %v232, 0.0
  %v295 = vmax.f32 %v235, 0.0
  %v296 = vmax.f32 %v240, 0.0
  %v297 = vmax.f32 %v243, 0.0
  %v298 = vmax.f32 %v248, 0.0
  %v299 = vmax.f32 %v251, 0.0
  %v300 = vmax.f32 %v256, 0.0
  %v301 = vmax.f32 %v259, 0.0
  %v302 = vmax.f32 %v264, 0.0
  %v303 = vmax.f32 %v267, 0.0
  %v304 = vmax.f32 %v272, 0.0
  %v305 = vmax.f32 %v275, 0.0
  %v306 = vmax.f32 %v280, 0.0
  %v307 = vmax.f32 %v283, 0.0
  %v308 = vmax.f32 %v288, 0.0
  %v309 = vmax.f32 %v291, 0.0
  %310 = vst [vmem:[%s2] sm:$0xff] %v294
  %311 = vst [vmem:[%s2 + $0x8] sm:$0xff] %v295
  %312 = vst [vmem:[%s2 + $0x10] sm:$0xff] %v296
  %313 = vst [vmem:[%s2 + $0x18] sm:$0xff] %v297
  %314 = vst [vmem:[%s2 + $0x20] sm:$0xff] %v298
  %315 = vst [vmem:[%s2 + $0x28] sm:$0xff] %v299
  %316 = vst [vmem:[%s2 + $0x30] sm:$0xff] %v300
  %317 = vst [vmem:[%s2 + $0x38] sm:$0xff] %v301
  %318 = vst [vmem:[%s2 + $0x40] sm:$0xff] %v302
  %319 = vst [vmem:[%s2 + $0x48] sm:$0xff] %v303
  %320 = vst [vmem:[%s2 + $0x50] sm:$0xff] %v304
  %321 = vst [vmem:[%s2 + $0x58] sm:$0xff] %v305
  %322 = vst [vmem:[%s2 + $0x60] sm:$0xff] %v306
  %323 = vst [vmem:[%s2 + $0x68] sm:$0xff] %v307
  %324 = vst [vmem:[%s2 + $0x70] sm:$0xff] %v308
  %325 = vst [vmem:[%s2 + $0x78] sm:$0xff] %v309
  // Predicated region
  $region10: #{forward.93} parent=0 // pred_check
    _
  $region11: #{forward.93} parent=0 // pred_check_branch
    %327 = sbr.rel (0) target = $region13
  $region12: #{forward.93} parent=0 // pred_region
    _
  $region13: #{forward.93} parent=0 // pred_fallthru
    _
  // Predicated region
  $region14: #{forward.93} parent=0 // pred_check
    _
  $region15: #{forward.93} parent=0 // pred_check_branch
    %329 = sbr.rel (0) target = $region17
  $region16: #{forward.93} parent=0 // pred_region
    _
  $region17: #{forward.93} parent=0 // pred_fallthru
    _

// kernel: forward.94
$region0: #{forward.94}
  #allocation0 [shape = 'u32[]', space=smem, size = 0x4, offset = 0x4, fixed_abs, tag = 'smem constant byte address 0x4 - core index']
  #allocation1 [shape = 'u32[144,128]{1,0:T(1,128)}', space=vmem, size = 0x12000, scoped, tag = 'internal scratch']
  %s0 = inlined_call_operand.vmem [shape: bf16[128,36], index: 0, kind: input, shape index: {}]
  %s1 = inlined_call_operand.vmem [shape: bf16[36,128], index: 1, kind: input, shape index: {}]
  %s2 = inlined_call_operand.vmem [shape: f32[128,128], index: 2, kind: output, shape index: {}]
  %s3 = sld [smem:[#allocation0]]
  $region18: #{forward.94} parent=0
    _
  %s5 = ssub.s32 1, %s3
  %s6 = scalar_select 0, %s5, %s3
  // Predicated region
  $region2: #{forward.94} parent=0 // pred_check
    _
  $region3: #{forward.94} parent=0 // pred_check_branch
    %8 = sbr.rel (0) target = $region5
  $region4: #{forward.94} parent=0 // pred_region
    _
  $region5: #{forward.94} parent=0 // pred_fallthru
    _
  // Predicated region
  $region6: #{forward.94} parent=0 // pred_check
    _
  $region7: #{forward.94} parent=0 // pred_check_branch
    %10 = sbr.rel (0) target = $region9
  $region8: #{forward.94} parent=0 // pred_region
    _
  $region9: #{forward.94} parent=0 // pred_fallthru
    _
  %v12 = vld [vmem:[%s0] sm:$0xf]
  %v13 = vld [vmem:[%s0 + $0x4] sm:$0xf]
  %v14 = vld [vmem:[%s0 + $0x8] sm:$0xf]
  %v15 = vld [vmem:[%s0 + $0xc] sm:$0xf]
  %v16 = vld [vmem:[%s0 + $0x10] sm:$0xf]
  %v17 = vld [vmem:[%s0 + $0x14] sm:$0xf]
  %v18 = vld [vmem:[%s0 + $0x18] sm:$0xf]
  %v19 = vld [vmem:[%s0 + $0x1c] sm:$0xf]
  %v20 = vld [vmem:[%s0 + $0x20] sm:$0xf]
  %v21 = vld [vmem:[%s0 + $0x24] sm:$0xf]
  %v22 = vld [vmem:[%s0 + $0x28] sm:$0xf]
  %v23 = vld [vmem:[%s0 + $0x2c] sm:$0xf]
  %v24 = vld [vmem:[%s0 + $0x30] sm:$0xf]
  %v25 = vld [vmem:[%s0 + $0x34] sm:$0xf]
  %v26 = vld [vmem:[%s0 + $0x38] sm:$0xf]
  %v27 = vld [vmem:[%s0 + $0x3c] sm:$0xf]
  %v28 = vld [vmem:[%s1] sm:$0xf]
  %v29 = vld [vmem:[%s1 + $0x4] sm:$0xf]
  %v30 = vld [vmem:[%s1 + $0x8] sm:$0xf]
  %v31 = vld [vmem:[%s1 + $0xc] sm:$0xf]
  %v32 = vld [vmem:[%s1 + $0x10] sm:$0x3]
  %v49 = vunpack.c.l.b16 %v12
  %v50 = vunpack.c.l.b16 %v13
  %v51 = vunpack.c.l.b16 %v14
  %v52 = vunpack.c.l.b16 %v15
  %v53 = vunpack.c.l.b16 %v16
  %v54 = vunpack.c.l.b16 %v17
  %v55 = vunpack.c.l.b16 %v18
  %v56 = vunpack.c.l.b16 %v19
  %v57 = vunpack.c.l.b16 %v20
  %v58 = vunpack.c.l.b16 %v21
  %v59 = vunpack.c.l.b16 %v22
  %v60 = vunpack.c.l.b16 %v23
  %v61 = vunpack.c.l.b16 %v24
  %v62 = vunpack.c.l.b16 %v25
  %v63 = vunpack.c.l.b16 %v26
  %v64 = vunpack.c.l.b16 %v27
  %v65 = vpack.c.b16 %v50, %v49
  %v66 = vpack.c.b16 %v52, %v51
  %v67 = vpack.c.b16 %v54, %v53
  %v68 = vpack.c.b16 %v56, %v55
  %v69 = vpack.c.b16 %v58, %v57
  %v70 = vpack.c.b16 %v60, %v59
  %v71 = vpack.c.b16 %v62, %v61
  %v72 = vpack.c.b16 %v64, %v63
  %v78 = vunpack.c.l.b16 %v28
  %v79 = vunpack.c.l.b16 %v29
  %v80 = vunpack.c.l.b16 %v30
  %v81 = vunpack.c.l.b16 %v31
  %v82 = vunpack.c.l.b16 %v32
  %v83 = vpack.c.b16 %v79, %v78
  %v84 = vpack.c.b16 %v81, %v80
  %v85 = vpack.c.b16 %v82, %v82
  %vm88 = vcmask 293888
  %v90 = vsel %vm88, %v65, 0
  %v93 = vsel %vm88, %v66, 0
  %v96 = vsel %vm88, %v67, 0
  %v99 = vsel %vm88, %v68, 0
  %v102 = vsel %vm88, %v69, 0
  %v105 = vsel %vm88, %v70, 0
  %v108 = vsel %vm88, %v71, 0
  %v111 = vsel %vm88, %v72, 0
  %vm113 = vcmask 1041408
  %v115 = vsel %vm113, %v85, 0
  %117 = vmatprep.subr.bf16.mxu0 0
  %118 = vmatpush1.bf16.msra.mxu0 %v83
  %119 = vmatprep.subr.bf16.mxu0 0
  %120 = vmatpush1.bf16.msra.mxu0 %v84
  %121 = vmatprep.subr.bf16.mxu0 0
  %122 = vmatpush1.bf16.msra.mxu0 %v115
  %123 = vmatprep.subr.bf16.mxu0 0
  %124 = vmatpush1.bf16.msra.mxu0 0
  %125 = vmatprep.subr.bf16.mxu0 0
  %126 = vmatpush1.bf16.msra.mxu0 0
  %127 = vmatprep.subr.bf16.mxu0 0
  %128 = vmatpush1.bf16.msra.mxu0 0
  %129 = vmatprep.subr.bf16.mxu0 0
  %130 = vmatpush1.bf16.msra.mxu0 0
  %131 = vmatprep.subr.bf16.mxu0 0
  %132 = vmatpush1.bf16.msra.mxu0 0
  %133 = vmatprep.subr.bf16.mxu0 0
  %134 = vmatpush1.bf16.msra.mxu0 0
  %135 = vmatprep.subr.bf16.mxu0 0
  %136 = vmatpush1.bf16.msra.mxu0 0
  %137 = vmatprep.subr.bf16.mxu0 0
  %138 = vmatpush1.bf16.msra.mxu0 0
  %139 = vmatprep.subr.bf16.mxu0 0
  %140 = vmatpush1.bf16.msra.mxu0 0
  %141 = vmatprep.subr.bf16.mxu0 0
  %142 = vmatpush1.bf16.msra.mxu0 0
  %143 = vmatprep.subr.bf16.mxu0 0
  %144 = vmatpush1.bf16.msra.mxu0 0
  %145 = vmatprep.subr.bf16.mxu0 0
  %146 = vmatpush1.bf16.msra.mxu0 0
  %147 = vmatprep.subr.bf16.mxu0 0
  %148 = vmatpush1.bf16.msra.mxu0 0
  %149 = vmatprep.mubr.bf16.mxu0 0
  %150 = vmatmul.mubr.bf16.gmra.mrb[0].mxu0 %v90
  %v151 = vpop.f32.mrb[0].mxu0
  %v152 = vadd.f32 0.0, %v151
  %v153 = vpop.f32.mrb[0].mxu0
  %v154 = vpop.f32.mrb[0].mxu0
  %v155 = vadd.f32 0.0, %v154
  %v156 = vpop.f32.mrb[0].mxu0
  %157 = vmatprep.mubr.bf16.mxu0 0
  %158 = vmatmul.mubr.bf16.gmra.mrb[0].mxu0 %v93
  %v159 = vpop.f32.mrb[0].mxu0
  %v160 = vadd.f32 0.0, %v159
  %v161 = vpop.f32.mrb[0].mxu0
  %v162 = vpop.f32.mrb[0].mxu0
  %v163 = vadd.f32 0.0, %v162
  %v164 = vpop.f32.mrb[0].mxu0
  %165 = vmatprep.mubr.bf16.mxu0 0
  %166 = vmatmul.mubr.bf16.gmra.mrb[0].mxu0 %v96
  %v167 = vpop.f32.mrb[0].mxu0
  %v168 = vadd.f32 0.0, %v167
  %v169 = vpop.f32.mrb[0].mxu0
  %v170 = vpop.f32.mrb[0].mxu0
  %v171 = vadd.f32 0.0, %v170
  %v172 = vpop.f32.mrb[0].mxu0
  %173 = vmatprep.mubr.bf16.mxu0 0
  %174 = vmatmul.mubr.bf16.gmra.mrb[0].mxu0 %v99
  %v175 = vpop.f32.mrb[0].mxu0
  %v176 = vadd.f32 0.0, %v175
  %v177 = vpop.f32.mrb[0].mxu0
  %v178 = vpop.f32.mrb[0].mxu0
  %v179 = vadd.f32 0.0, %v178
  %v180 = vpop.f32.mrb[0].mxu0
  %181 = vmatprep.mubr.bf16.mxu0 0
  %182 = vmatmul.mubr.bf16.gmra.mrb[0].mxu0 %v102
  %v183 = vpop.f32.mrb[0].mxu0
  %v184 = vadd.f32 0.0, %v183
  %v185 = vpop.f32.mrb[0].mxu0
  %v186 = vpop.f32.mrb[0].mxu0
  %v187 = vadd.f32 0.0, %v186
  %v188 = vpop.f32.mrb[0].mxu0
  %189 = vmatprep.mubr.bf16.mxu0 0
  %190 = vmatmul.mubr.bf16.gmra.mrb[0].mxu0 %v105
  %v191 = vpop.f32.mrb[0].mxu0
  %v192 = vadd.f32 0.0, %v191
  %v193 = vpop.f32.mrb[0].mxu0
  %v194 = vpop.f32.mrb[0].mxu0
  %v195 = vadd.f32 0.0, %v194
  %v196 = vpop.f32.mrb[0].mxu0
  %197 = vmatprep.mubr.bf16.mxu0 0
  %198 = vmatmul.mubr.bf16.gmra.mrb[0].mxu0 %v108
  %v199 = vpop.f32.mrb[0].mxu0
  %v200 = vadd.f32 0.0, %v199
  %v201 = vpop.f32.mrb[0].mxu0
  %v202 = vpop.f32.mrb[0].mxu0
  %v203 = vadd.f32 0.0, %v202
  %v204 = vpop.f32.mrb[0].mxu0
  %205 = vmatprep.mubr.bf16.mxu0 0
  %206 = vmatmul.mubr.bf16.gmra.mrb[0].mxu0 %v111
  %v207 = vpop.f32.mrb[0].mxu0
  %v208 = vadd.f32 0.0, %v207
  %v209 = vpop.f32.mrb[0].mxu0
  %v210 = vpop.f32.mrb[0].mxu0
  %v211 = vadd.f32 0.0, %v210
  %v212 = vpop.f32.mrb[0].mxu0
  %213 = vdwg.mxu0
  %v214 = vmax.f32 %v152, 0.0
  %v215 = vmax.f32 %v155, 0.0
  %v216 = vmax.f32 %v160, 0.0
  %v217 = vmax.f32 %v163, 0.0
  %v218 = vmax.f32 %v168, 0.0
  %v219 = vmax.f32 %v171, 0.0
  %v220 = vmax.f32 %v176, 0.0
  %v221 = vmax.f32 %v179, 0.0
  %v222 = vmax.f32 %v184, 0.0
  %v223 = vmax.f32 %v187, 0.0
  %v224 = vmax.f32 %v192, 0.0
  %v225 = vmax.f32 %v195, 0.0
  %v226 = vmax.f32 %v200, 0.0
  %v227 = vmax.f32 %v203, 0.0
  %v228 = vmax.f32 %v208, 0.0
  %v229 = vmax.f32 %v211, 0.0
  %230 = vst [vmem:[%s2] sm:$0xff] %v214
  %231 = vst [vmem:[%s2 + $0x8] sm:$0xff] %v215
  %232 = vst [vmem:[%s2 + $0x10] sm:$0xff] %v216
  %233 = vst [vmem:[%s2 + $0x18] sm:$0xff] %v217
  %234 = vst [vmem:[%s2 + $0x20] sm:$0xff] %v218
  %235 = vst [vmem:[%s2 + $0x28] sm:$0xff] %v219
  %236 = vst [vmem:[%s2 + $0x30] sm:$0xff] %v220
  %237 = vst [vmem:[%s2 + $0x38] sm:$0xff] %v221
  %238 = vst [vmem:[%s2 + $0x40] sm:$0xff] %v222
  %239 = vst [vmem:[%s2 + $0x48] sm:$0xff] %v223
  %240 = vst [vmem:[%s2 + $0x50] sm:$0xff] %v224
  %241 = vst [vmem:[%s2 + $0x58] sm:$0xff] %v225
  %242 = vst [vmem:[%s2 + $0x60] sm:$0xff] %v226
  %243 = vst [vmem:[%s2 + $0x68] sm:$0xff] %v227
  %244 = vst [vmem:[%s2 + $0x70] sm:$0xff] %v228
  %245 = vst [vmem:[%s2 + $0x78] sm:$0xff] %v229
  // Predicated region
  $region10: #{forward.94} parent=0 // pred_check
    _
  $region11: #{forward.94} parent=0 // pred_check_branch
    %247 = sbr.rel (0) target = $region13
  $region12: #{forward.94} parent=0 // pred_region
    _
  $region13: #{forward.94} parent=0 // pred_fallthru
    _
  // Predicated region
  $region14: #{forward.94} parent=0 // pred_check
    _
  $region15: #{forward.94} parent=0 // pred_check_branch
    %249 = sbr.rel (0) target = $region17
  $region16: #{forward.94} parent=0 // pred_region
    _
  $region17: #{forward.94} parent=0 // pred_fallthru
    _

// kernel: forward.92
$region0: #{forward.92}
  #allocation0 [shape = 'u32[]', space=smem, size = 0x4, offset = 0x4, fixed_abs, tag = 'smem constant byte address 0x4 - core index']
  #allocation1 [shape = 'u32[144,128]{1,0:T(1,128)}', space=vmem, size = 0x12000, scoped, tag = 'internal scratch']
  %s0 = inlined_call_operand.vmem [shape: bf16[128,16], index: 0, kind: input, shape index: {}]
  %s1 = inlined_call_operand.vmem [shape: bf16[16,128], index: 1, kind: input, shape index: {}]
  %s2 = inlined_call_operand.vmem [shape: f32[128,128], index: 2, kind: output, shape index: {}]
  %s3 = sld [smem:[#allocation0]]
  $region18: #{forward.92} parent=0
    _
  %s5 = ssub.s32 1, %s3
  %s6 = scalar_select 0, %s5, %s3
  // Predicated region
  $region2: #{forward.92} parent=0 // pred_check
    _
  $region3: #{forward.92} parent=0 // pred_check_branch
    %8 = sbr.rel (0) target = $region5
  $region4: #{forward.92} parent=0 // pred_region
    _
  $region5: #{forward.92} parent=0 // pred_fallthru
    _
  // Predicated region
  $region6: #{forward.92} parent=0 // pred_check
    _
  $region7: #{forward.92} parent=0 // pred_check_branch
    %10 = sbr.rel (0) target = $region9
  $region8: #{forward.92} parent=0 // pred_region
    _
  $region9: #{forward.92} parent=0 // pred_fallthru
    _
  %v12 = vld [vmem:[%s0] sm:$0xf]
  %v13 = vld [vmem:[%s0 + $0x4] sm:$0xf]
  %v14 = vld [vmem:[%s0 + $0x8] sm:$0xf]
  %v15 = vld [vmem:[%s0 + $0xc] sm:$0xf]
  %v16 = vld [vmem:[%s0 + $0x10] sm:$0xf]
  %v17 = vld [vmem:[%s0 + $0x14] sm:$0xf]
  %v18 = vld [vmem:[%s0 + $0x18] sm:$0xf]
  %v19 = vld [vmem:[%s0 + $0x1c] sm:$0xf]
  %v20 = vld [vmem:[%s0 + $0x20] sm:$0xf]
  %v21 = vld [vmem:[%s0 + $0x24] sm:$0xf]
  %v22 = vld [vmem:[%s0 + $0x28] sm:$0xf]
  %v23 = vld [vmem:[%s0 + $0x2c] sm:$0xf]
  %v24 = vld [vmem:[%s0 + $0x30] sm:$0xf]
  %v25 = vld [vmem:[%s0 + $0x34] sm:$0xf]
  %v26 = vld [vmem:[%s0 + $0x38] sm:$0xf]
  %v27 = vld [vmem:[%s0 + $0x3c] sm:$0xf]
  %v28 = vld [vmem:[%s1] sm:$0xf]
  %v29 = vld [vmem:[%s1 + $0x4] sm:$0xf]
  %v46 = vunpack.c.l.b16 %v12
  %v47 = vunpack.c.l.b16 %v13
  %v48 = vunpack.c.l.b16 %v14
  %v49 = vunpack.c.l.b16 %v15
  %v50 = vunpack.c.l.b16 %v16
  %v51 = vunpack.c.l.b16 %v17
  %v52 = vunpack.c.l.b16 %v18
  %v53 = vunpack.c.l.b16 %v19
  %v54 = vunpack.c.l.b16 %v20
  %v55 = vunpack.c.l.b16 %v21
  %v56 = vunpack.c.l.b16 %v22
  %v57 = vunpack.c.l.b16 %v23
  %v58 = vunpack.c.l.b16 %v24
  %v59 = vunpack.c.l.b16 %v25
  %v60 = vunpack.c.l.b16 %v26
  %v61 = vunpack.c.l.b16 %v27
  %v62 = vpack.c.b16 %v47, %v46
  %v63 = vpack.c.b16 %v49, %v48
  %v64 = vpack.c.b16 %v51, %v50
  %v65 = vpack.c.b16 %v53, %v52
  %v66 = vpack.c.b16 %v55, %v54
  %v67 = vpack.c.b16 %v57, %v56
  %v68 = vpack.c.b16 %v59, %v58
  %v69 = vpack.c.b16 %v61, %v60
  %v72 = vunpack.c.l.b16 %v28
  %v73 = vunpack.c.l.b16 %v29
  %v74 = vpack.c.b16 %v73, %v72
  %vm76 = vcmask 130048
  %v78 = vsel %vm76, %v62, 0
  %v81 = vsel %vm76, %v63, 0
  %v84 = vsel %vm76, %v64, 0
  %v87 = vsel %vm76, %v65, 0
  %v90 = vsel %vm76, %v66, 0
  %v93 = vsel %vm76, %v67, 0
  %v96 = vsel %vm76, %v68, 0
  %v99 = vsel %vm76, %v69, 0
  %101 = vmatprep.subr.bf16.mxu0 0
  %102 = vmatpush1.bf16.msra.mxu0 %v74
  %103 = vmatprep.subr.bf16.mxu0 0
  %104 = vmatpush1.bf16.msra.mxu0 0
  %105 = vmatprep.subr.bf16.mxu0 0
  %106 = vmatpush1.bf16.msra.mxu0 0
  %107 = vmatprep.subr.bf16.mxu0 0
  %108 = vmatpush1.bf16.msra.mxu0 0
  %109 = vmatprep.subr.bf16.mxu0 0
  %110 = vmatpush1.bf16.msra.mxu0 0
  %111 = vmatprep.subr.bf16.mxu0 0
  %112 = vmatpush1.bf16.msra.mxu0 0
  %113 = vmatprep.subr.bf16.mxu0 0
  %114 = vmatpush1.bf16.msra.mxu0 0
  %115 = vmatprep.subr.bf16.mxu0 0
  %116 = vmatpush1.bf16.msra.mxu0 0
  %117 = vmatprep.subr.bf16.mxu0 0
  %118 = vmatpush1.bf16.msra.mxu0 0
  %119 = vmatprep.subr.bf16.mxu0 0
  %120 = vmatpush1.bf16.msra.mxu0 0
  %121 = vmatprep.subr.bf16.mxu0 0
  %122 = vmatpush1.bf16.msra.mxu0 0
  %123 = vmatprep.subr.bf16.mxu0 0
  %124 = vmatpush1.bf16.msra.mxu0 0
  %125 = vmatprep.subr.bf16.mxu0 0
  %126 = vmatpush1.bf16.msra.mxu0 0
  %127 = vmatprep.subr.bf16.mxu0 0
  %128 = vmatpush1.bf16.msra.mxu0 0
  %129 = vmatprep.subr.bf16.mxu0 0
  %130 = vmatpush1.bf16.msra.mxu0 0
  %131 = vmatprep.subr.bf16.mxu0 0
  %132 = vmatpush1.bf16.msra.mxu0 0
  %133 = vmatprep.mubr.bf16.mxu0 0
  %134 = vmatmul.mubr.bf16.gmra.mrb[0].mxu0 %v78
  %v135 = vpop.f32.mrb[0].mxu0
  %v136 = vadd.f32 0.0, %v135
  %v137 = vpop.f32.mrb[0].mxu0
  %v138 = vpop.f32.mrb[0].mxu0
  %v139 = vadd.f32 0.0, %v138
  %v140 = vpop.f32.mrb[0].mxu0
  %141 = vmatprep.mubr.bf16.mxu0 0
  %142 = vmatmul.mubr.bf16.gmra.mrb[0].mxu0 %v81
  %v143 = vpop.f32.mrb[0].mxu0
  %v144 = vadd.f32 0.0, %v143
  %v145 = vpop.f32.mrb[0].mxu0
  %v146 = vpop.f32.mrb[0].mxu0
  %v147 = vadd.f32 0.0, %v146
  %v148 = vpop.f32.mrb[0].mxu0
  %149 = vmatprep.mubr.bf16.mxu0 0
  %150 = vmatmul.mubr.bf16.gmra.mrb[0].mxu0 %v84
  %v151 = vpop.f32.mrb[0].mxu0
  %v152 = vadd.f32 0.0, %v151
  %v153 = vpop.f32.mrb[0].mxu0
  %v154 = vpop.f32.mrb[0].mxu0
  %v155 = vadd.f32 0.0, %v154
  %v156 = vpop.f32.mrb[0].mxu0
  %157 = vmatprep.mubr.bf16.mxu0 0
  %158 = vmatmul.mubr.bf16.gmra.mrb[0].mxu0 %v87
  %v159 = vpop.f32.mrb[0].mxu0
  %v160 = vadd.f32 0.0, %v159
  %v161 = vpop.f32.mrb[0].mxu0
  %v162 = vpop.f32.mrb[0].mxu0
  %v163 = vadd.f32 0.0, %v162
  %v164 = vpop.f32.mrb[0].mxu0
  %165 = vmatprep.mubr.bf16.mxu0 0
  %166 = vmatmul.mubr.bf16.gmra.mrb[0].mxu0 %v90
  %v167 = vpop.f32.mrb[0].mxu0
  %v168 = vadd.f32 0.0, %v167
  %v169 = vpop.f32.mrb[0].mxu0
  %v170 = vpop.f32.mrb[0].mxu0
  %v171 = vadd.f32 0.0, %v170
  %v172 = vpop.f32.mrb[0].mxu0
  %173 = vmatprep.mubr.bf16.mxu0 0
  %174 = vmatmul.mubr.bf16.gmra.mrb[0].mxu0 %v93
  %v175 = vpop.f32.mrb[0].mxu0
  %v176 = vadd.f32 0.0, %v175
  %v177 = vpop.f32.mrb[0].mxu0
  %v178 = vpop.f32.mrb[0].mxu0
  %v179 = vadd.f32 0.0, %v178
  %v180 = vpop.f32.mrb[0].mxu0
  %181 = vmatprep.mubr.bf16.mxu0 0
  %182 = vmatmul.mubr.bf16.gmra.mrb[0].mxu0 %v96
  %v183 = vpop.f32.mrb[0].mxu0
  %v184 = vadd.f32 0.0, %v183
  %v185 = vpop.f32.mrb[0].mxu0
  %v186 = vpop.f32.mrb[0].mxu0
  %v187 = vadd.f32 0.0, %v186
  %v188 = vpop.f32.mrb[0].mxu0
  %189 = vmatprep.mubr.bf16.mxu0 0
  %190 = vmatmul.mubr.bf16.gmra.mrb[0].mxu0 %v99
  %v191 = vpop.f32.mrb[0].mxu0
  %v192 = vadd.f32 0.0, %v191
  %v193 = vpop.f32.mrb[0].mxu0
  %v194 = vpop.f32.mrb[0].mxu0
  %v195 = vadd.f32 0.0, %v194
  %v196 = vpop.f32.mrb[0].mxu0
  %197 = vdwg.mxu0
  %v198 = vmax.f32 %v136, 0.0
  %v199 = vmax.f32 %v139, 0.0
  %v200 = vmax.f32 %v144, 0.0
  %v201 = vmax.f32 %v147, 0.0
  %v202 = vmax.f32 %v152, 0.0
  %v203 = vmax.f32 %v155, 0.0
  %v204 = vmax.f32 %v160, 0.0
  %v205 = vmax.f32 %v163, 0.0
  %v206 = vmax.f32 %v168, 0.0
  %v207 = vmax.f32 %v171, 0.0
  %v208 = vmax.f32 %v176, 0.0
  %v209 = vmax.f32 %v179, 0.0
  %v210 = vmax.f32 %v184, 0.0
  %v211 = vmax.f32 %v187, 0.0
  %v212 = vmax.f32 %v192, 0.0
  %v213 = vmax.f32 %v195, 0.0
  %214 = vst [vmem:[%s2] sm:$0xff] %v198
  %215 = vst [vmem:[%s2 + $0x8] sm:$0xff] %v199
  %216 = vst [vmem:[%s2 + $0x10] sm:$0xff] %v200
  %217 = vst [vmem:[%s2 + $0x18] sm:$0xff] %v201
  %218 = vst [vmem:[%s2 + $0x20] sm:$0xff] %v202
  %219 = vst [vmem:[%s2 + $0x28] sm:$0xff] %v203
  %220 = vst [vmem:[%s2 + $0x30] sm:$0xff] %v204
  %221 = vst [vmem:[%s2 + $0x38] sm:$0xff] %v205
  %222 = vst [vmem:[%s2 + $0x40] sm:$0xff] %v206
  %223 = vst [vmem:[%s2 + $0x48] sm:$0xff] %v207
  %224 = vst [vmem:[%s2 + $0x50] sm:$0xff] %v208
  %225 = vst [vmem:[%s2 + $0x58] sm:$0xff] %v209
  %226 = vst [vmem:[%s2 + $0x60] sm:$0xff] %v210
  %227 = vst [vmem:[%s2 + $0x68] sm:$0xff] %v211
  %228 = vst [vmem:[%s2 + $0x70] sm:$0xff] %v212
  %229 = vst [vmem:[%s2 + $0x78] sm:$0xff] %v213
  // Predicated region
  $region10: #{forward.92} parent=0 // pred_check
    _
  $region11: #{forward.92} parent=0 // pred_check_branch
    %231 = sbr.rel (0) target = $region13
  $region12: #{forward.92} parent=0 // pred_region
    _
  $region13: #{forward.92} parent=0 // pred_fallthru
    _
  // Predicated region
  $region14: #{forward.92} parent=0 // pred_check
    _
  $region15: #{forward.92} parent=0 // pred_check_branch
    %233 = sbr.rel (0) target = $region17
  $region16: #{forward.92} parent=0 // pred_region
    _
  $region17: #{forward.92} parent=0 // pred_fallthru
    _

// kernel: forward.96
$region0: #{forward.96}
  #allocation0 [shape = 'u32[]', space=smem, size = 0x4, offset = 0x4, fixed_abs, tag = 'smem constant byte address 0x4 - core index']
  #allocation1 [shape = 'u32[144,128]{1,0:T(1,128)}', space=vmem, size = 0x12000, scoped, tag = 'internal scratch']
  %s0 = inlined_call_operand.vmem [shape: bf16[128,64], index: 0, kind: input, shape index: {}]
  %s1 = inlined_call_operand.vmem [shape: bf16[64,128], index: 1, kind: input, shape index: {}]
  %s2 = inlined_call_operand.vmem [shape: f32[128,128], index: 2, kind: output, shape index: {}]
  %s3 = sld [smem:[#allocation0]]
  $region18: #{forward.96} parent=0
    _
  %s5 = ssub.s32 1, %s3
  %s6 = scalar_select 0, %s5, %s3
  // Predicated region
  $region2: #{forward.96} parent=0 // pred_check
    _
  $region3: #{forward.96} parent=0 // pred_check_branch
    %8 = sbr.rel (0) target = $region5
  $region4: #{forward.96} parent=0 // pred_region
    _
  $region5: #{forward.96} parent=0 // pred_fallthru
    _
  // Predicated region
  $region6: #{forward.96} parent=0 // pred_check
    _
  $region7: #{forward.96} parent=0 // pred_check_branch
    %10 = sbr.rel (0) target = $region9
  $region8: #{forward.96} parent=0 // pred_region
    _
  $region9: #{forward.96} parent=0 // pred_fallthru
    _
  %v12 = vld [vmem:[%s0] sm:$0xf]
  %v13 = vld [vmem:[%s0 + $0x4] sm:$0xf]
  %v14 = vld [vmem:[%s0 + $0x8] sm:$0xf]
  %v15 = vld [vmem:[%s0 + $0xc] sm:$0xf]
  %v16 = vld [vmem:[%s0 + $0x10] sm:$0xf]
  %v17 = vld [vmem:[%s0 + $0x14] sm:$0xf]
  %v18 = vld [vmem:[%s0 + $0x18] sm:$0xf]
  %v19 = vld [vmem:[%s0 + $0x1c] sm:$0xf]
  %v20 = vld [vmem:[%s0 + $0x20] sm:$0xf]
  %v21 = vld [vmem:[%s0 + $0x24] sm:$0xf]
  %v22 = vld [vmem:[%s0 + $0x28] sm:$0xf]
  %v23 = vld [vmem:[%s0 + $0x2c] sm:$0xf]
  %v24 = vld [vmem:[%s0 + $0x30] sm:$0xf]
  %v25 = vld [vmem:[%s0 + $0x34] sm:$0xf]
  %v26 = vld [vmem:[%s0 + $0x38] sm:$0xf]
  %v27 = vld [vmem:[%s0 + $0x3c] sm:$0xf]
  %v28 = vld [vmem:[%s1] sm:$0xf]
  %v29 = vld [vmem:[%s1 + $0x4] sm:$0xf]
  %v30 = vld [vmem:[%s1 + $0x8] sm:$0xf]
  %v31 = vld [vmem:[%s1 + $0xc] sm:$0xf]
  %v32 = vld [vmem:[%s1 + $0x10] sm:$0xf]
  %v33 = vld [vmem:[%s1 + $0x14] sm:$0xf]
  %v34 = vld [vmem:[%s1 + $0x18] sm:$0xf]
  %v35 = vld [vmem:[%s1 + $0x1c] sm:$0xf]
  %v52 = vunpack.c.l.b16 %v12
  %v53 = vunpack.c.l.b16 %v13
  %v54 = vunpack.c.l.b16 %v14
  %v55 = vunpack.c.l.b16 %v15
  %v56 = vunpack.c.l.b16 %v16
  %v57 = vunpack.c.l.b16 %v17
  %v58 = vunpack.c.l.b16 %v18
  %v59 = vunpack.c.l.b16 %v19
  %v60 = vunpack.c.l.b16 %v20
  %v61 = vunpack.c.l.b16 %v21
  %v62 = vunpack.c.l.b16 %v22
  %v63 = vunpack.c.l.b16 %v23
  %v64 = vunpack.c.l.b16 %v24
  %v65 = vunpack.c.l.b16 %v25
  %v66 = vunpack.c.l.b16 %v26
  %v67 = vunpack.c.l.b16 %v27
  %v68 = vpack.c.b16 %v53, %v52
  %v69 = vpack.c.b16 %v55, %v54
  %v70 = vpack.c.b16 %v57, %v56
  %v71 = vpack.c.b16 %v59, %v58
  %v72 = vpack.c.b16 %v61, %v60
  %v73 = vpack.c.b16 %v63, %v62
  %v74 = vpack.c.b16 %v65, %v64
  %v75 = vpack.c.b16 %v67, %v66
  %v84 = vunpack.c.l.b16 %v28
  %v85 = vunpack.c.l.b16 %v29
  %v86 = vunpack.c.l.b16 %v30
  %v87 = vunpack.c.l.b16 %v31
  %v88 = vunpack.c.l.b16 %v32
  %v89 = vunpack.c.l.b16 %v33
  %v90 = vunpack.c.l.b16 %v34
  %v91 = vunpack.c.l.b16 %v35
  %v92 = vpack.c.b16 %v85, %v84
  %v93 = vpack.c.b16 %v87, %v86
  %v94 = vpack.c.b16 %v89, %v88
  %v95 = vpack.c.b16 %v91, %v90
  %vm100 = vcmask 523264
  %v102 = vsel %vm100, %v68, 0
  %v105 = vsel %vm100, %v69, 0
  %v108 = vsel %vm100, %v70, 0
  %v111 = vsel %vm100, %v71, 0
  %v114 = vsel %vm100, %v72, 0
  %v117 = vsel %vm100, %v73, 0
  %v120 = vsel %vm100, %v74, 0
  %v123 = vsel %vm100, %v75, 0
  %125 = vmatprep.subr.bf16.mxu0 0
  %126 = vmatpush1.bf16.msra.mxu0 %v92
  %127 = vmatprep.subr.bf16.mxu0 0
  %128 = vmatpush1.bf16.msra.mxu0 %v93
  %129 = vmatprep.subr.bf16.mxu0 0
  %130 = vmatpush1.bf16.msra.mxu0 %v94
  %131 = vmatprep.subr.bf16.mxu0 0
  %132 = vmatpush1.bf16.msra.mxu0 %v95
  %133 = vmatprep.subr.bf16.mxu0 0
  %134 = vmatpush1.bf16.msra.mxu0 0
  %135 = vmatprep.subr.bf16.mxu0 0
  %136 = vmatpush1.bf16.msra.mxu0 0
  %137 = vmatprep.subr.bf16.mxu0 0
  %138 = vmatpush1.bf16.msra.mxu0 0
  %139 = vmatprep.subr.bf16.mxu0 0
  %140 = vmatpush1.bf16.msra.mxu0 0
  %141 = vmatprep.subr.bf16.mxu0 0
  %142 = vmatpush1.bf16.msra.mxu0 0
  %143 = vmatprep.subr.bf16.mxu0 0
  %144 = vmatpush1.bf16.msra.mxu0 0
  %145 = vmatprep.subr.bf16.mxu0 0
  %146 = vmatpush1.bf16.msra.mxu0 0
  %147 = vmatprep.subr.bf16.mxu0 0
  %148 = vmatpush1.bf16.msra.mxu0 0
  %149 = vmatprep.subr.bf16.mxu0 0
  %150 = vmatpush1.bf16.msra.mxu0 0
  %151 = vmatprep.subr.bf16.mxu0 0
  %152 = vmatpush1.bf16.msra.mxu0 0
  %153 = vmatprep.subr.bf16.mxu0 0
  %154 = vmatpush1.bf16.msra.mxu0 0
  %155 = vmatprep.subr.bf16.mxu0 0
  %156 = vmatpush1.bf16.msra.mxu0 0
  %157 = vmatprep.mubr.bf16.mxu0 0
  %158 = vmatmul.mubr.bf16.gmra.mrb[0].mxu0 %v102
  %v159 = vpop.f32.mrb[0].mxu0
  %v160 = vadd.f32 0.0, %v159
  %v161 = vpop.f32.mrb[0].mxu0
  %v162 = vpop.f32.mrb[0].mxu0
  %v163 = vadd.f32 0.0, %v162
  %v164 = vpop.f32.mrb[0].mxu0
  %165 = vmatprep.mubr.bf16.mxu0 0
  %166 = vmatmul.mubr.bf16.gmra.mrb[0].mxu0 %v105
  %v167 = vpop.f32.mrb[0].mxu0
  %v168 = vadd.f32 0.0, %v167
  %v169 = vpop.f32.mrb[0].mxu0
  %v170 = vpop.f32.mrb[0].mxu0
  %v171 = vadd.f32 0.0, %v170
  %v172 = vpop.f32.mrb[0].mxu0
  %173 = vmatprep.mubr.bf16.mxu0 0
  %174 = vmatmul.mubr.bf16.gmra.mrb[0].mxu0 %v108
  %v175 = vpop.f32.mrb[0].mxu0
  %v176 = vadd.f32 0.0, %v175
  %v177 = vpop.f32.mrb[0].mxu0
  %v178 = vpop.f32.mrb[0].mxu0
  %v179 = vadd.f32 0.0, %v178
  %v180 = vpop.f32.mrb[0].mxu0
  %181 = vmatprep.mubr.bf16.mxu0 0
  %182 = vmatmul.mubr.bf16.gmra.mrb[0].mxu0 %v111
  %v183 = vpop.f32.mrb[0].mxu0
  %v184 = vadd.f32 0.0, %v183
  %v185 = vpop.f32.mrb[0].mxu0
  %v186 = vpop.f32.mrb[0].mxu0
  %v187 = vadd.f32 0.0, %v186
  %v188 = vpop.f32.mrb[0].mxu0
  %189 = vmatprep.mubr.bf16.mxu0 0
  %190 = vmatmul.mubr.bf16.gmra.mrb[0].mxu0 %v114
  %v191 = vpop.f32.mrb[0].mxu0
  %v192 = vadd.f32 0.0, %v191
  %v193 = vpop.f32.mrb[0].mxu0
  %v194 = vpop.f32.mrb[0].mxu0
  %v195 = vadd.f32 0.0, %v194
  %v196 = vpop.f32.mrb[0].mxu0
  %197 = vmatprep.mubr.bf16.mxu0 0
  %198 = vmatmul.mubr.bf16.gmra.mrb[0].mxu0 %v117
  %v199 = vpop.f32.mrb[0].mxu0
  %v200 = vadd.f32 0.0, %v199
  %v201 = vpop.f32.mrb[0].mxu0
  %v202 = vpop.f32.mrb[0].mxu0
  %v203 = vadd.f32 0.0, %v202
  %v204 = vpop.f32.mrb[0].mxu0
  %205 = vmatprep.mubr.bf16.mxu0 0
  %206 = vmatmul.mubr.bf16.gmra.mrb[0].mxu0 %v120
  %v207 = vpop.f32.mrb[0].mxu0
  %v208 = vadd.f32 0.0, %v207
  %v209 = vpop.f32.mrb[0].mxu0
  %v210 = vpop.f32.mrb[0].mxu0
  %v211 = vadd.f32 0.0, %v210
  %v212 = vpop.f32.mrb[0].mxu0
  %213 = vmatprep.mubr.bf16.mxu0 0
  %214 = vmatmul.mubr.bf16.gmra.mrb[0].mxu0 %v123
  %v215 = vpop.f32.mrb[0].mxu0
  %v216 = vadd.f32 0.0, %v215
  %v217 = vpop.f32.mrb[0].mxu0
  %v218 = vpop.f32.mrb[0].mxu0
  %v219 = vadd.f32 0.0, %v218
  %v220 = vpop.f32.mrb[0].mxu0
  %221 = vdwg.mxu0
  %v222 = vmax.f32 %v160, 0.0
  %v223 = vmax.f32 %v163, 0.0
  %v224 = vmax.f32 %v168, 0.0
  %v225 = vmax.f32 %v171, 0.0
  %v226 = vmax.f32 %v176, 0.0
  %v227 = vmax.f32 %v179, 0.0
  %v228 = vmax.f32 %v184, 0.0
  %v229 = vmax.f32 %v187, 0.0
  %v230 = vmax.f32 %v192, 0.0
  %v231 = vmax.f32 %v195, 0.0
  %v232 = vmax.f32 %v200, 0.0
  %v233 = vmax.f32 %v203, 0.0
  %v234 = vmax.f32 %v208, 0.0
  %v235 = vmax.f32 %v211, 0.0
  %v236 = vmax.f32 %v216, 0.0
  %v237 = vmax.f32 %v219, 0.0
  %238 = vst [vmem:[%s2] sm:$0xff] %v222
  %239 = vst [vmem:[%s2 + $0x8] sm:$0xff] %v223
  %240 = vst [vmem:[%s2 + $0x10] sm:$0xff] %v224
  %241 = vst [vmem:[%s2 + $0x18] sm:$0xff] %v225
  %242 = vst [vmem:[%s2 + $0x20] sm:$0xff] %v226
  %243 = vst [vmem:[%s2 + $0x28] sm:$0xff] %v227
  %244 = vst [vmem:[%s2 + $0x30] sm:$0xff] %v228
  %245 = vst [vmem:[%s2 + $0x38] sm:$0xff] %v229
  %246 = vst [vmem:[%s2 + $0x40] sm:$0xff] %v230
  %247 = vst [vmem:[%s2 + $0x48] sm:$0xff] %v231
  %248 = vst [vmem:[%s2 + $0x50] sm:$0xff] %v232
  %249 = vst [vmem:[%s2 + $0x58] sm:$0xff] %v233
  %250 = vst [vmem:[%s2 + $0x60] sm:$0xff] %v234
  %251 = vst [vmem:[%s2 + $0x68] sm:$0xff] %v235
  %252 = vst [vmem:[%s2 + $0x70] sm:$0xff] %v236
  %253 = vst [vmem:[%s2 + $0x78] sm:$0xff] %v237
  // Predicated region
  $region10: #{forward.96} parent=0 // pred_check
    _
  $region11: #{forward.96} parent=0 // pred_check_branch
    %255 = sbr.rel (0) target = $region13
  $region12: #{forward.96} parent=0 // pred_region
    _
  $region13: #{forward.96} parent=0 // pred_fallthru
    _
  // Predicated region
  $region14: #{forward.96} parent=0 // pred_check
    _
  $region15: #{forward.96} parent=0 // pred_check_branch
    %257 = sbr.rel (0) target = $region17
  $region16: #{forward.96} parent=0 // pred_region
    _
  $region17: #{forward.96} parent=0 // pred_fallthru
    _

// kernel: forward.95
$region0: #{forward.95}
  #allocation0 [shape = 'u32[]', space=smem, size = 0x4, offset = 0x4, fixed_abs, tag = 'smem constant byte address 0x4 - core index']
  #allocation1 [shape = 'u32[144,128]{1,0:T(1,128)}', space=vmem, size = 0x12000, scoped, tag = 'internal scratch']
  %s0 = inlined_call_operand.vmem [shape: bf16[128,4], index: 0, kind: input, shape index: {}]
  %s1 = inlined_call_operand.vmem [shape: bf16[4,128], index: 1, kind: input, shape index: {}]
  %s2 = inlined_call_operand.vmem [shape: f32[128,128], index: 2, kind: input, shape index: {}]
  %s3 = inlined_call_operand.vmem [shape: f32[128,128], index: 3, kind: output, shape index: {}]
  %s4 = sld [smem:[#allocation0]]
  $region22: #{forward.95} parent=0
    _
  %s6 = ssub.s32 1, %s4
  %s7 = scalar_select 0, %s6, %s4
  // Predicated region
  $region2: #{forward.95} parent=0 // pred_check
    _
  $region3: #{forward.95} parent=0 // pred_check_branch
    %9 = sbr.rel (0) target = $region5
  $region4: #{forward.95} parent=0 // pred_region
    _
  $region5: #{forward.95} parent=0 // pred_fallthru
    _
  // Predicated region
  $region6: #{forward.95} parent=0 // pred_check
    _
  $region7: #{forward.95} parent=0 // pred_check_branch
    %11 = sbr.rel (0) target = $region9
  $region8: #{forward.95} parent=0 // pred_region
    _
  $region9: #{forward.95} parent=0 // pred_fallthru
    _
  // Predicated region
  $region10: #{forward.95} parent=0 // pred_check
    _
  $region11: #{forward.95} parent=0 // pred_check_branch
    %13 = sbr.rel (0) target = $region13
  $region12: #{forward.95} parent=0 // pred_region
    _
  $region13: #{forward.95} parent=0 // pred_fallthru
    _
  %v15 = vld [vmem:[%s0] sm:$0xf]
  %v16 = vld [vmem:[%s0 + $0x4] sm:$0xf]
  %v17 = vld [vmem:[%s0 + $0x8] sm:$0xf]
  %v18 = vld [vmem:[%s0 + $0xc] sm:$0xf]
  %v19 = vld [vmem:[%s0 + $0x10] sm:$0xf]
  %v20 = vld [vmem:[%s0 + $0x14] sm:$0xf]
  %v21 = vld [vmem:[%s0 + $0x18] sm:$0xf]
  %v22 = vld [vmem:[%s0 + $0x1c] sm:$0xf]
  %v23 = vld [vmem:[%s0 + $0x20] sm:$0xf]
  %v24 = vld [vmem:[%s0 + $0x24] sm:$0xf]
  %v25 = vld [vmem:[%s0 + $0x28] sm:$0xf]
  %v26 = vld [vmem:[%s0 + $0x2c] sm:$0xf]
  %v27 = vld [vmem:[%s0 + $0x30] sm:$0xf]
  %v28 = vld [vmem:[%s0 + $0x34] sm:$0xf]
  %v29 = vld [vmem:[%s0 + $0x38] sm:$0xf]
  %v30 = vld [vmem:[%s0 + $0x3c] sm:$0xf]
  %v31 = vld [vmem:[%s1] sm:$0x3]
  %v32 = vld [vmem:[%s2] sm:$0xff]
  %v33 = vld [vmem:[%s2 + $0x8] sm:$0xff]
  %v34 = vld [vmem:[%s2 + $0x10] sm:$0xff]
  %v35 = vld [vmem:[%s2 + $0x18] sm:$0xff]
  %v36 = vld [vmem:[%s2 + $0x20] sm:$0xff]
  %v37 = vld [vmem:[%s2 + $0x28] sm:$0xff]
  %v38 = vld [vmem:[%s2 + $0x30] sm:$0xff]
  %v39 = vld [vmem:[%s2 + $0x38] sm:$0xff]
  %v40 = vld [vmem:[%s2 + $0x40] sm:$0xff]
  %v41 = vld [vmem:[%s2 + $0x48] sm:$0xff]
  %v42 = vld [vmem:[%s2 + $0x50] sm:$0xff]
  %v43 = vld [vmem:[%s2 + $0x58] sm:$0xff]
  %v44 = vld [vmem:[%s2 + $0x60] sm:$0xff]
  %v45 = vld [vmem:[%s2 + $0x68] sm:$0xff]
  %v46 = vld [vmem:[%s2 + $0x70] sm:$0xff]
  %v47 = vld [vmem:[%s2 + $0x78] sm:$0xff]
  %v64 = vunpack.c.l.b16 %v15
  %v65 = vunpack.c.l.b16 %v16
  %v66 = vunpack.c.l.b16 %v17
  %v67 = vunpack.c.l.b16 %v18
  %v68 = vunpack.c.l.b16 %v19
  %v69 = vunpack.c.l.b16 %v20
  %v70 = vunpack.c.l.b16 %v21
  %v71 = vunpack.c.l.b16 %v22
  %v72 = vunpack.c.l.b16 %v23
  %v73 = vunpack.c.l.b16 %v24
  %v74 = vunpack.c.l.b16 %v25
  %v75 = vunpack.c.l.b16 %v26
  %v76 = vunpack.c.l.b16 %v27
  %v77 = vunpack.c.l.b16 %v28
  %v78 = vunpack.c.l.b16 %v29
  %v79 = vunpack.c.l.b16 %v30
  %v80 = vpack.c.b16 %v65, %v64
  %v81 = vpack.c.b16 %v67, %v66
  %v82 = vpack.c.b16 %v69, %v68
  %v83 = vpack.c.b16 %v71, %v70
  %v84 = vpack.c.b16 %v73, %v72
  %v85 = vpack.c.b16 %v75, %v74
  %v86 = vpack.c.b16 %v77, %v76
  %v87 = vpack.c.b16 %v79, %v78
  %vm88 = vcmask 31744
  %v90 = vsel %vm88, %v80, 0
  %v93 = vsel %vm88, %v81, 0
  %v96 = vsel %vm88, %v82, 0
  %v99 = vsel %vm88, %v83, 0
  %v102 = vsel %vm88, %v84, 0
  %v105 = vsel %vm88, %v85, 0
  %v108 = vsel %vm88, %v86, 0
  %v111 = vsel %vm88, %v87, 0
  %vm113 = vcmask 1041408
  %v115 = vsel %vm113, %v31, 0
  %117 = vmatprep.subr.bf16.mxu0 0
  %118 = vmatpush1.bf16.msra.mxu0 %v115
  %119 = vmatprep.subr.bf16.mxu0 0
  %120 = vmatpush1.bf16.msra.mxu0 0
  %121 = vmatprep.subr.bf16.mxu0 0
  %122 = vmatpush1.bf16.msra.mxu0 0
  %123 = vmatprep.subr.bf16.mxu0 0
  %124 = vmatpush1.bf16.msra.mxu0 0
  %125 = vmatprep.subr.bf16.mxu0 0
  %126 = vmatpush1.bf16.msra.mxu0 0
  %127 = vmatprep.subr.bf16.mxu0 0
  %128 = vmatpush1.bf16.msra.mxu0 0
  %129 = vmatprep.subr.bf16.mxu0 0
  %130 = vmatpush1.bf16.msra.mxu0 0
  %131 = vmatprep.subr.bf16.mxu0 0
  %132 = vmatpush1.bf16.msra.mxu0 0
  %133 = vmatprep.subr.bf16.mxu0 0
  %134 = vmatpush1.bf16.msra.mxu0 0
  %135 = vmatprep.subr.bf16.mxu0 0
  %136 = vmatpush1.bf16.msra.mxu0 0
  %137 = vmatprep.subr.bf16.mxu0 0
  %138 = vmatpush1.bf16.msra.mxu0 0
  %139 = vmatprep.subr.bf16.mxu0 0
  %140 = vmatpush1.bf16.msra.mxu0 0
  %141 = vmatprep.subr.bf16.mxu0 0
  %142 = vmatpush1.bf16.msra.mxu0 0
  %143 = vmatprep.subr.bf16.mxu0 0
  %144 = vmatpush1.bf16.msra.mxu0 0
  %145 = vmatprep.subr.bf16.mxu0 0
  %146 = vmatpush1.bf16.msra.mxu0 0
  %147 = vmatprep.subr.bf16.mxu0 0
  %148 = vmatpush1.bf16.msra.mxu0 0
  %149 = vmatprep.mubr.bf16.mxu0 0
  %150 = vmatmul.mubr.bf16.gmra.mrb[0].mxu0 %v90
  %v151 = vpop.f32.mrb[0].mxu0
  %v152 = vadd.f32 %v32, %v151
  %v153 = vpop.f32.mrb[0].mxu0
  %v154 = vpop.f32.mrb[0].mxu0
  %v155 = vadd.f32 %v33, %v154
  %v156 = vpop.f32.mrb[0].mxu0
  %157 = vmatprep.mubr.bf16.mxu0 0
  %158 = vmatmul.mubr.bf16.gmra.mrb[0].mxu0 %v93
  %v159 = vpop.f32.mrb[0].mxu0
  %v160 = vadd.f32 %v34, %v159
  %v161 = vpop.f32.mrb[0].mxu0
  %v162 = vpop.f32.mrb[0].mxu0
  %v163 = vadd.f32 %v35, %v162
  %v164 = vpop.f32.mrb[0].mxu0
  %165 = vmatprep.mubr.bf16.mxu0 0
  %166 = vmatmul.mubr.bf16.gmra.mrb[0].mxu0 %v96
  %v167 = vpop.f32.mrb[0].mxu0
  %v168 = vadd.f32 %v36, %v167
  %v169 = vpop.f32.mrb[0].mxu0
  %v170 = vpop.f32.mrb[0].mxu0
  %v171 = vadd.f32 %v37, %v170
  %v172 = vpop.f32.mrb[0].mxu0
  %173 = vmatprep.mubr.bf16.mxu0 0
  %174 = vmatmul.mubr.bf16.gmra.mrb[0].mxu0 %v99
  %v175 = vpop.f32.mrb[0].mxu0
  %v176 = vadd.f32 %v38, %v175
  %v177 = vpop.f32.mrb[0].mxu0
  %v178 = vpop.f32.mrb[0].mxu0
  %v179 = vadd.f32 %v39, %v178
  %v180 = vpop.f32.mrb[0].mxu0
  %181 = vmatprep.mubr.bf16.mxu0 0
  %182 = vmatmul.mubr.bf16.gmra.mrb[0].mxu0 %v102
  %v183 = vpop.f32.mrb[0].mxu0
  %v184 = vadd.f32 %v40, %v183
  %v185 = vpop.f32.mrb[0].mxu0
  %v186 = vpop.f32.mrb[0].mxu0
  %v187 = vadd.f32 %v41, %v186
  %v188 = vpop.f32.mrb[0].mxu0
  %189 = vmatprep.mubr.bf16.mxu0 0
  %190 = vmatmul.mubr.bf16.gmra.mrb[0].mxu0 %v105
  %v191 = vpop.f32.mrb[0].mxu0
  %v192 = vadd.f32 %v42, %v191
  %v193 = vpop.f32.mrb[0].mxu0
  %v194 = vpop.f32.mrb[0].mxu0
  %v195 = vadd.f32 %v43, %v194
  %v196 = vpop.f32.mrb[0].mxu0
  %197 = vmatprep.mubr.bf16.mxu0 0
  %198 = vmatmul.mubr.bf16.gmra.mrb[0].mxu0 %v108
  %v199 = vpop.f32.mrb[0].mxu0
  %v200 = vadd.f32 %v44, %v199
  %v201 = vpop.f32.mrb[0].mxu0
  %v202 = vpop.f32.mrb[0].mxu0
  %v203 = vadd.f32 %v45, %v202
  %v204 = vpop.f32.mrb[0].mxu0
  %205 = vmatprep.mubr.bf16.mxu0 0
  %206 = vmatmul.mubr.bf16.gmra.mrb[0].mxu0 %v111
  %v207 = vpop.f32.mrb[0].mxu0
  %v208 = vadd.f32 %v46, %v207
  %v209 = vpop.f32.mrb[0].mxu0
  %v210 = vpop.f32.mrb[0].mxu0
  %v211 = vadd.f32 %v47, %v210
  %v212 = vpop.f32.mrb[0].mxu0
  %213 = vdwg.mxu0
  %vm214 = vcmp.ge.f32.partialorder %v152, 0.0
  %vm215 = vcmp.ge.f32.partialorder %v155, 0.0
  %vm216 = vcmp.ge.f32.partialorder %v160, 0.0
  %vm217 = vcmp.ge.f32.partialorder %v163, 0.0
  %vm218 = vcmp.ge.f32.partialorder %v168, 0.0
  %vm219 = vcmp.ge.f32.partialorder %v171, 0.0
  %vm220 = vcmp.ge.f32.partialorder %v176, 0.0
  %vm221 = vcmp.ge.f32.partialorder %v179, 0.0
  %vm222 = vcmp.ge.f32.partialorder %v184, 0.0
  %vm223 = vcmp.ge.f32.partialorder %v187, 0.0
  %vm224 = vcmp.ge.f32.partialorder %v192, 0.0
  %vm225 = vcmp.ge.f32.partialorder %v195, 0.0
  %vm226 = vcmp.ge.f32.partialorder %v200, 0.0
  %vm227 = vcmp.ge.f32.partialorder %v203, 0.0
  %vm228 = vcmp.ge.f32.partialorder %v208, 0.0
  %vm229 = vcmp.ge.f32.partialorder %v211, 0.0
  %v230 = vmul.f32 %v152, 0.25
  %v231 = vmul.f32 %v155, 0.25
  %v232 = vmul.f32 %v160, 0.25
  %v233 = vmul.f32 %v163, 0.25
  %v234 = vmul.f32 %v168, 0.25
  %v235 = vmul.f32 %v171, 0.25
  %v236 = vmul.f32 %v176, 0.25
  %v237 = vmul.f32 %v179, 0.25
  %v238 = vmul.f32 %v184, 0.25
  %v239 = vmul.f32 %v187, 0.25
  %v240 = vmul.f32 %v192, 0.25
  %v241 = vmul.f32 %v195, 0.25
  %v242 = vmul.f32 %v200, 0.25
  %v243 = vmul.f32 %v203, 0.25
  %v244 = vmul.f32 %v208, 0.25
  %v245 = vmul.f32 %v211, 0.25
  %v246 = vsel %vm214, %v152, %v230
  %v247 = vsel %vm215, %v155, %v231
  %v248 = vsel %vm216, %v160, %v232
  %v249 = vsel %vm217, %v163, %v233
  %v250 = vsel %vm218, %v168, %v234
  %v251 = vsel %vm219, %v171, %v235
  %v252 = vsel %vm220, %v176, %v236
  %v253 = vsel %vm221, %v179, %v237
  %v254 = vsel %vm222, %v184, %v238
  %v255 = vsel %vm223, %v187, %v239
  %v256 = vsel %vm224, %v192, %v240
  %v257 = vsel %vm225, %v195, %v241
  %v258 = vsel %vm226, %v200, %v242
  %v259 = vsel %vm227, %v203, %v243
  %v260 = vsel %vm228, %v208, %v244
  %v261 = vsel %vm229, %v211, %v245
  %262 = vst [vmem:[%s3] sm:$0xff] %v246
  %263 = vst [vmem:[%s3 + $0x8] sm:$0xff] %v247
  %264 = vst [vmem:[%s3 + $0x10] sm:$0xff] %v248
  %265 = vst [vmem:[%s3 + $0x18] sm:$0xff] %v249
  %266 = vst [vmem:[%s3 + $0x20] sm:$0xff] %v250
  %267 = vst [vmem:[%s3 + $0x28] sm:$0xff] %v251
  %268 = vst [vmem:[%s3 + $0x30] sm:$0xff] %v252
  %269 = vst [vmem:[%s3 + $0x38] sm:$0xff] %v253
  %270 = vst [vmem:[%s3 + $0x40] sm:$0xff] %v254
  %271 = vst [vmem:[%s3 + $0x48] sm:$0xff] %v255
  %272 = vst [vmem:[%s3 + $0x50] sm:$0xff] %v256
  %273 = vst [vmem:[%s3 + $0x58] sm:$0xff] %v257
  %274 = vst [vmem:[%s3 + $0x60] sm:$0xff] %v258
  %275 = vst [vmem:[%s3 + $0x68] sm:$0xff] %v259
  %276 = vst [vmem:[%s3 + $0x70] sm:$0xff] %v260
  %277 = vst [vmem:[%s3 + $0x78] sm:$0xff] %v261
  // Predicated region
  $region14: #{forward.95} parent=0 // pred_check
    _
  $region15: #{forward.95} parent=0 // pred_check_branch
    %279 = sbr.rel (0) target = $region17
  $region16: #{forward.95} parent=0 // pred_region
    _
  $region17: #{forward.95} parent=0 // pred_fallthru
    _
  // Predicated region
  $region18: #{forward.95} parent=0 // pred_check
    _
  $region19: #{forward.95} parent=0 // pred_check_branch
    %281 = sbr.rel (0) target = $region21
  $region20: #{forward.95} parent=0 // pred_region
    _
  $region21: #{forward.95} parent=0 // pred_fallthru
    _

// kernel: forward.98
$region0: #{forward.98}
  #allocation0 [shape = 'u32[]', space=smem, size = 0x4, offset = 0x4, fixed_abs, tag = 'smem constant byte address 0x4 - core index']
  #allocation1 [shape = 'u32[144,128]{1,0:T(1,128)}', space=vmem, size = 0x12000, scoped, tag = 'internal scratch']
  %s0 = inlined_call_operand.vmem [shape: bf16[128,16], index: 0, kind: input, shape index: {}]
  %s1 = inlined_call_operand.vmem [shape: bf16[16,128], index: 1, kind: input, shape index: {}]
  %s2 = inlined_call_operand.vmem [shape: f32[128,128], index: 2, kind: input, shape index: {}]
  %s3 = inlined_call_operand.vmem [shape: f32[128,128], index: 3, kind: output, shape index: {}]
  %s4 = sld [smem:[#allocation0]]
  $region22: #{forward.98} parent=0
    _
  %s6 = ssub.s32 1, %s4
  %s7 = scalar_select 0, %s6, %s4
  // Predicated region
  $region2: #{forward.98} parent=0 // pred_check
    _
  $region3: #{forward.98} parent=0 // pred_check_branch
    %9 = sbr.rel (0) target = $region5
  $region4: #{forward.98} parent=0 // pred_region
    _
  $region5: #{forward.98} parent=0 // pred_fallthru
    _
  // Predicated region
  $region6: #{forward.98} parent=0 // pred_check
    _
  $region7: #{forward.98} parent=0 // pred_check_branch
    %11 = sbr.rel (0) target = $region9
  $region8: #{forward.98} parent=0 // pred_region
    _
  $region9: #{forward.98} parent=0 // pred_fallthru
    _
  // Predicated region
  $region10: #{forward.98} parent=0 // pred_check
    _
  $region11: #{forward.98} parent=0 // pred_check_branch
    %13 = sbr.rel (0) target = $region13
  $region12: #{forward.98} parent=0 // pred_region
    _
  $region13: #{forward.98} parent=0 // pred_fallthru
    _
  %v15 = vld [vmem:[%s0] sm:$0xf]
  %v16 = vld [vmem:[%s0 + $0x4] sm:$0xf]
  %v17 = vld [vmem:[%s0 + $0x8] sm:$0xf]
  %v18 = vld [vmem:[%s0 + $0xc] sm:$0xf]
  %v19 = vld [vmem:[%s0 + $0x10] sm:$0xf]
  %v20 = vld [vmem:[%s0 + $0x14] sm:$0xf]
  %v21 = vld [vmem:[%s0 + $0x18] sm:$0xf]
  %v22 = vld [vmem:[%s0 + $0x1c] sm:$0xf]
  %v23 = vld [vmem:[%s0 + $0x20] sm:$0xf]
  %v24 = vld [vmem:[%s0 + $0x24] sm:$0xf]
  %v25 = vld [vmem:[%s0 + $0x28] sm:$0xf]
  %v26 = vld [vmem:[%s0 + $0x2c] sm:$0xf]
  %v27 = vld [vmem:[%s0 + $0x30] sm:$0xf]
  %v28 = vld [vmem:[%s0 + $0x34] sm:$0xf]
  %v29 = vld [vmem:[%s0 + $0x38] sm:$0xf]
  %v30 = vld [vmem:[%s0 + $0x3c] sm:$0xf]
  %v31 = vld [vmem:[%s1] sm:$0xf]
  %v32 = vld [vmem:[%s1 + $0x4] sm:$0xf]
  %v33 = vld [vmem:[%s2] sm:$0xff]
  %v34 = vld [vmem:[%s2 + $0x8] sm:$0xff]
  %v35 = vld [vmem:[%s2 + $0x10] sm:$0xff]
  %v36 = vld [vmem:[%s2 + $0x18] sm:$0xff]
  %v37 = vld [vmem:[%s2 + $0x20] sm:$0xff]
  %v38 = vld [vmem:[%s2 + $0x28] sm:$0xff]
  %v39 = vld [vmem:[%s2 + $0x30] sm:$0xff]
  %v40 = vld [vmem:[%s2 + $0x38] sm:$0xff]
  %v41 = vld [vmem:[%s2 + $0x40] sm:$0xff]
  %v42 = vld [vmem:[%s2 + $0x48] sm:$0xff]
  %v43 = vld [vmem:[%s2 + $0x50] sm:$0xff]
  %v44 = vld [vmem:[%s2 + $0x58] sm:$0xff]
  %v45 = vld [vmem:[%s2 + $0x60] sm:$0xff]
  %v46 = vld [vmem:[%s2 + $0x68] sm:$0xff]
  %v47 = vld [vmem:[%s2 + $0x70] sm:$0xff]
  %v48 = vld [vmem:[%s2 + $0x78] sm:$0xff]
  %v65 = vunpack.c.l.b16 %v15
  %v66 = vunpack.c.l.b16 %v16
  %v67 = vunpack.c.l.b16 %v17
  %v68 = vunpack.c.l.b16 %v18
  %v69 = vunpack.c.l.b16 %v19
  %v70 = vunpack.c.l.b16 %v20
  %v71 = vunpack.c.l.b16 %v21
  %v72 = vunpack.c.l.b16 %v22
  %v73 = vunpack.c.l.b16 %v23
  %v74 = vunpack.c.l.b16 %v24
  %v75 = vunpack.c.l.b16 %v25
  %v76 = vunpack.c.l.b16 %v26
  %v77 = vunpack.c.l.b16 %v27
  %v78 = vunpack.c.l.b16 %v28
  %v79 = vunpack.c.l.b16 %v29
  %v80 = vunpack.c.l.b16 %v30
  %v81 = vpack.c.b16 %v66, %v65
  %v82 = vpack.c.b16 %v68, %v67
  %v83 = vpack.c.b16 %v70, %v69
  %v84 = vpack.c.b16 %v72, %v71
  %v85 = vpack.c.b16 %v74, %v73
  %v86 = vpack.c.b16 %v76, %v75
  %v87 = vpack.c.b16 %v78, %v77
  %v88 = vpack.c.b16 %v80, %v79
  %v91 = vunpack.c.l.b16 %v31
  %v92 = vunpack.c.l.b16 %v32
  %v93 = vpack.c.b16 %v92, %v91
  %vm95 = vcmask 130048
  %v97 = vsel %vm95, %v81, 0
  %v100 = vsel %vm95, %v82, 0
  %v103 = vsel %vm95, %v83, 0
  %v106 = vsel %vm95, %v84, 0
  %v109 = vsel %vm95, %v85, 0
  %v112 = vsel %vm95, %v86, 0
  %v115 = vsel %vm95, %v87, 0
  %v118 = vsel %vm95, %v88, 0
  %120 = vmatprep.subr.bf16.mxu0 0
  %121 = vmatpush1.bf16.msra.mxu0 %v93
  %122 = vmatprep.subr.bf16.mxu0 0
  %123 = vmatpush1.bf16.msra.mxu0 0
  %124 = vmatprep.subr.bf16.mxu0 0
  %125 = vmatpush1.bf16.msra.mxu0 0
  %126 = vmatprep.subr.bf16.mxu0 0
  %127 = vmatpush1.bf16.msra.mxu0 0
  %128 = vmatprep.subr.bf16.mxu0 0
  %129 = vmatpush1.bf16.msra.mxu0 0
  %130 = vmatprep.subr.bf16.mxu0 0
  %131 = vmatpush1.bf16.msra.mxu0 0
  %132 = vmatprep.subr.bf16.mxu0 0
  %133 = vmatpush1.bf16.msra.mxu0 0
  %134 = vmatprep.subr.bf16.mxu0 0
  %135 = vmatpush1.bf16.msra.mxu0 0
  %136 = vmatprep.subr.bf16.mxu0 0
  %137 = vmatpush1.bf16.msra.mxu0 0
  %138 = vmatprep.subr.bf16.mxu0 0
  %139 = vmatpush1.bf16.msra.mxu0 0
  %140 = vmatprep.subr.bf16.mxu0 0
  %141 = vmatpush1.bf16.msra.mxu0 0
  %142 = vmatprep.subr.bf16.mxu0 0
  %143 = vmatpush1.bf16.msra.mxu0 0
  %144 = vmatprep.subr.bf16.mxu0 0
  %145 = vmatpush1.bf16.msra.mxu0 0
  %146 = vmatprep.subr.bf16.mxu0 0
  %147 = vmatpush1.bf16.msra.mxu0 0
  %148 = vmatprep.subr.bf16.mxu0 0
  %149 = vmatpush1.bf16.msra.mxu0 0
  %150 = vmatprep.subr.bf16.mxu0 0
  %151 = vmatpush1.bf16.msra.mxu0 0
  %152 = vmatprep.mubr.bf16.mxu0 0
  %153 = vmatmul.mubr.bf16.gmra.mrb[0].mxu0 %v97
  %v154 = vpop.f32.mrb[0].mxu0
  %v155 = vadd.f32 %v33, %v154
  %v156 = vpop.f32.mrb[0].mxu0
  %v157 = vpop.f32.mrb[0].mxu0
  %v158 = vadd.f32 %v34, %v157
  %v159 = vpop.f32.mrb[0].mxu0
  %160 = vmatprep.mubr.bf16.mxu0 0
  %161 = vmatmul.mubr.bf16.gmra.mrb[0].mxu0 %v100
  %v162 = vpop.f32.mrb[0].mxu0
  %v163 = vadd.f32 %v35, %v162
  %v164 = vpop.f32.mrb[0].mxu0
  %v165 = vpop.f32.mrb[0].mxu0
  %v166 = vadd.f32 %v36, %v165
  %v167 = vpop.f32.mrb[0].mxu0
  %168 = vmatprep.mubr.bf16.mxu0 0
  %169 = vmatmul.mubr.bf16.gmra.mrb[0].mxu0 %v103
  %v170 = vpop.f32.mrb[0].mxu0
  %v171 = vadd.f32 %v37, %v170
  %v172 = vpop.f32.mrb[0].mxu0
  %v173 = vpop.f32.mrb[0].mxu0
  %v174 = vadd.f32 %v38, %v173
  %v175 = vpop.f32.mrb[0].mxu0
  %176 = vmatprep.mubr.bf16.mxu0 0
  %177 = vmatmul.mubr.bf16.gmra.mrb[0].mxu0 %v106
  %v178 = vpop.f32.mrb[0].mxu0
  %v179 = vadd.f32 %v39, %v178
  %v180 = vpop.f32.mrb[0].mxu0
  %v181 = vpop.f32.mrb[0].mxu0
  %v182 = vadd.f32 %v40, %v181
  %v183 = vpop.f32.mrb[0].mxu0
  %184 = vmatprep.mubr.bf16.mxu0 0
  %185 = vmatmul.mubr.bf16.gmra.mrb[0].mxu0 %v109
  %v186 = vpop.f32.mrb[0].mxu0
  %v187 = vadd.f32 %v41, %v186
  %v188 = vpop.f32.mrb[0].mxu0
  %v189 = vpop.f32.mrb[0].mxu0
  %v190 = vadd.f32 %v42, %v189
  %v191 = vpop.f32.mrb[0].mxu0
  %192 = vmatprep.mubr.bf16.mxu0 0
  %193 = vmatmul.mubr.bf16.gmra.mrb[0].mxu0 %v112
  %v194 = vpop.f32.mrb[0].mxu0
  %v195 = vadd.f32 %v43, %v194
  %v196 = vpop.f32.mrb[0].mxu0
  %v197 = vpop.f32.mrb[0].mxu0
  %v198 = vadd.f32 %v44, %v197
  %v199 = vpop.f32.mrb[0].mxu0
  %200 = vmatprep.mubr.bf16.mxu0 0
  %201 = vmatmul.mubr.bf16.gmra.mrb[0].mxu0 %v115
  %v202 = vpop.f32.mrb[0].mxu0
  %v203 = vadd.f32 %v45, %v202
  %v204 = vpop.f32.mrb[0].mxu0
  %v205 = vpop.f32.mrb[0].mxu0
  %v206 = vadd.f32 %v46, %v205
  %v207 = vpop.f32.mrb[0].mxu0
  %208 = vmatprep.mubr.bf16.mxu0 0
  %209 = vmatmul.mubr.bf16.gmra.mrb[0].mxu0 %v118
  %v210 = vpop.f32.mrb[0].mxu0
  %v211 = vadd.f32 %v47, %v210
  %v212 = vpop.f32.mrb[0].mxu0
  %v213 = vpop.f32.mrb[0].mxu0
  %v214 = vadd.f32 %v48, %v213
  %v215 = vpop.f32.mrb[0].mxu0
  %216 = vdwg.mxu0
  %vm217 = vcmp.ge.f32.partialorder %v155, 0.0
  %vm218 = vcmp.ge.f32.partialorder %v158, 0.0
  %vm219 = vcmp.ge.f32.partialorder %v163, 0.0
  %vm220 = vcmp.ge.f32.partialorder %v166, 0.0
  %vm221 = vcmp.ge.f32.partialorder %v171, 0.0
  %vm222 = vcmp.ge.f32.partialorder %v174, 0.0
  %vm223 = vcmp.ge.f32.partialorder %v179, 0.0
  %vm224 = vcmp.ge.f32.partialorder %v182, 0.0
  %vm225 = vcmp.ge.f32.partialorder %v187, 0.0
  %vm226 = vcmp.ge.f32.partialorder %v190, 0.0
  %vm227 = vcmp.ge.f32.partialorder %v195, 0.0
  %vm228 = vcmp.ge.f32.partialorder %v198, 0.0
  %vm229 = vcmp.ge.f32.partialorder %v203, 0.0
  %vm230 = vcmp.ge.f32.partialorder %v206, 0.0
  %vm231 = vcmp.ge.f32.partialorder %v211, 0.0
  %vm232 = vcmp.ge.f32.partialorder %v214, 0.0
  %v233 = vmul.f32 %v155, 0.25
  %v234 = vmul.f32 %v158, 0.25
  %v235 = vmul.f32 %v163, 0.25
  %v236 = vmul.f32 %v166, 0.25
  %v237 = vmul.f32 %v171, 0.25
  %v238 = vmul.f32 %v174, 0.25
  %v239 = vmul.f32 %v179, 0.25
  %v240 = vmul.f32 %v182, 0.25
  %v241 = vmul.f32 %v187, 0.25
  %v242 = vmul.f32 %v190, 0.25
  %v243 = vmul.f32 %v195, 0.25
  %v244 = vmul.f32 %v198, 0.25
  %v245 = vmul.f32 %v203, 0.25
  %v246 = vmul.f32 %v206, 0.25
  %v247 = vmul.f32 %v211, 0.25
  %v248 = vmul.f32 %v214, 0.25
  %v249 = vsel %vm217, %v155, %v233
  %v250 = vsel %vm218, %v158, %v234
  %v251 = vsel %vm219, %v163, %v235
  %v252 = vsel %vm220, %v166, %v236
  %v253 = vsel %vm221, %v171, %v237
  %v254 = vsel %vm222, %v174, %v238
  %v255 = vsel %vm223, %v179, %v239
  %v256 = vsel %vm224, %v182, %v240
  %v257 = vsel %vm225, %v187, %v241
  %v258 = vsel %vm226, %v190, %v242
  %v259 = vsel %vm227, %v195, %v243
  %v260 = vsel %vm228, %v198, %v244
  %v261 = vsel %vm229, %v203, %v245
  %v262 = vsel %vm230, %v206, %v246
  %v263 = vsel %vm231, %v211, %v247
  %v264 = vsel %vm232, %v214, %v248
  %265 = vst [vmem:[%s3] sm:$0xff] %v249
  %266 = vst [vmem:[%s3 + $0x8] sm:$0xff] %v250
  %267 = vst [vmem:[%s3 + $0x10] sm:$0xff] %v251
  %268 = vst [vmem:[%s3 + $0x18] sm:$0xff] %v252
  %269 = vst [vmem:[%s3 + $0x20] sm:$0xff] %v253
  %270 = vst [vmem:[%s3 + $0x28] sm:$0xff] %v254
  %271 = vst [vmem:[%s3 + $0x30] sm:$0xff] %v255
  %272 = vst [vmem:[%s3 + $0x38] sm:$0xff] %v256
  %273 = vst [vmem:[%s3 + $0x40] sm:$0xff] %v257
  %274 = vst [vmem:[%s3 + $0x48] sm:$0xff] %v258
  %275 = vst [vmem:[%s3 + $0x50] sm:$0xff] %v259
  %276 = vst [vmem:[%s3 + $0x58] sm:$0xff] %v260
  %277 = vst [vmem:[%s3 + $0x60] sm:$0xff] %v261
  %278 = vst [vmem:[%s3 + $0x68] sm:$0xff] %v262
  %279 = vst [vmem:[%s3 + $0x70] sm:$0xff] %v263
  %280 = vst [vmem:[%s3 + $0x78] sm:$0xff] %v264
  // Predicated region
  $region14: #{forward.98} parent=0 // pred_check
    _
  $region15: #{forward.98} parent=0 // pred_check_branch
    %282 = sbr.rel (0) target = $region17
  $region16: #{forward.98} parent=0 // pred_region
    _
  $region17: #{forward.98} parent=0 // pred_fallthru
    _
  // Predicated region
  $region18: #{forward.98} parent=0 // pred_check
    _
  $region19: #{forward.98} parent=0 // pred_check_branch
    %284 = sbr.rel (0) target = $region21
  $region20: #{forward.98} parent=0 // pred_region
    _
  $region21: #{forward.98} parent=0 // pred_fallthru
    _

// kernel: forward.109
$region0: #{forward.109}
  #allocation0 [shape = 'u32[]', space=smem, size = 0x4, offset = 0x4, fixed_abs, tag = 'smem constant byte address 0x4 - core index']
  #allocation1 [shape = 'u32[144,128]{1,0:T(1,128)}', space=vmem, size = 0x12000, scoped, tag = 'internal scratch']
  %s0 = inlined_call_operand.vmem [shape: bf16[32,576], index: 0, kind: input, shape index: {}]
  %s1 = inlined_call_operand.vmem [shape: bf16[576,128], index: 1, kind: input, shape index: {}]
  %s2 = inlined_call_operand.vmem [shape: f32[32,128], index: 2, kind: output, shape index: {}]
  %s3 = sld [smem:[#allocation0]]
  $region18: #{forward.109} parent=0
    _
  %s5 = ssub.s32 1, %s3
  %s6 = scalar_select 0, %s5, %s3
  // Predicated region
  $region2: #{forward.109} parent=0 // pred_check
    _
  $region3: #{forward.109} parent=0 // pred_check_branch
    %8 = sbr.rel (0) target = $region5
  $region4: #{forward.109} parent=0 // pred_region
    _
  $region5: #{forward.109} parent=0 // pred_fallthru
    _
  // Predicated region
  $region6: #{forward.109} parent=0 // pred_check
    _
  $region7: #{forward.109} parent=0 // pred_check_branch
    %10 = sbr.rel (0) target = $region9
  $region8: #{forward.109} parent=0 // pred_region
    _
  $region9: #{forward.109} parent=0 // pred_fallthru
    _
  %v12 = vld [vmem:[%s0] sm:$0xff]
  %v13 = vld [vmem:[%s0 + $0x8] sm:$0xff]
  %v14 = vld [vmem:[%s0 + $0x10] sm:$0xf]
  %v15 = vld [vmem:[%s0 + $0x14] sm:$0xff]
  %v16 = vld [vmem:[%s0 + $0x1c] sm:$0xff]
  %v17 = vld [vmem:[%s0 + $0x24] sm:$0xf]
  %v18 = vld [vmem:[%s0 + $0x28] sm:$0xff]
  %v19 = vld [vmem:[%s0 + $0x30] sm:$0xff]
  %v20 = vld [vmem:[%s0 + $0x38] sm:$0xf]
  %v21 = vld [vmem:[%s0 + $0x3c] sm:$0xff]
  %v22 = vld [vmem:[%s0 + $0x44] sm:$0xff]
  %v23 = vld [vmem:[%s0 + $0x4c] sm:$0xf]
  %v24 = vld [vmem:[%s1] sm:$0xf]
  %v25 = vld [vmem:[%s1 + $0x4] sm:$0xf]
  %v26 = vld [vmem:[%s1 + $0x8] sm:$0xf]
  %v27 = vld [vmem:[%s1 + $0xc] sm:$0xf]
  %v28 = vld [vmem:[%s1 + $0x10] sm:$0xf]
  %v29 = vld [vmem:[%s1 + $0x14] sm:$0xf]
  %v30 = vld [vmem:[%s1 + $0x18] sm:$0xf]
  %v31 = vld [vmem:[%s1 + $0x1c] sm:$0xf]
  %v32 = vld [vmem:[%s1 + $0x20] sm:$0xf]
  %v33 = vld [vmem:[%s1 + $0x24] sm:$0xf]
  %v34 = vld [vmem:[%s1 + $0x28] sm:$0xf]
  %v35 = vld [vmem:[%s1 + $0x2c] sm:$0xf]
  %v36 = vld [vmem:[%s1 + $0x30] sm:$0xf]
  %v37 = vld [vmem:[%s1 + $0x34] sm:$0xf]
  %v38 = vld [vmem:[%s1 + $0x38] sm:$0xf]
  %v39 = vld [vmem:[%s1 + $0x3c] sm:$0xf]
  %v40 = vld [vmem:[%s1 + $0x40] sm:$0xf]
  %v41 = vld [vmem:[%s1 + $0x44] sm:$0xf]
  %v42 = vld [vmem:[%s1 + $0x48] sm:$0xf]
  %v43 = vld [vmem:[%s1 + $0x4c] sm:$0xf]
  %v44 = vld [vmem:[%s1 + $0x50] sm:$0xf]
  %v45 = vld [vmem:[%s1 + $0x54] sm:$0xf]
  %v46 = vld [vmem:[%s1 + $0x58] sm:$0xf]
  %v47 = vld [vmem:[%s1 + $0x5c] sm:$0xf]
  %v48 = vld [vmem:[%s1 + $0x60] sm:$0xf]
  %v49 = vld [vmem:[%s1 + $0x64] sm:$0xf]
  %v50 = vld [vmem:[%s1 + $0x68] sm:$0xf]
  %v51 = vld [vmem:[%s1 + $0x6c] sm:$0xf]
  %v52 = vld [vmem:[%s1 + $0x70] sm:$0xf]
  %v53 = vld [vmem:[%s1 + $0x74] sm:$0xf]
  %v54 = vld [vmem:[%s1 + $0x78] sm:$0xf]
  %v55 = vld [vmem:[%s1 + $0x7c] sm:$0xf]
  %v56 = vld [vmem:[%s1 + $0x80] sm:$0xf]
  %v57 = vld [vmem:[%s1 + $0x84] sm:$0xf]
  %v58 = vld [vmem:[%s1 + $0x88] sm:$0xf]
  %v59 = vld [vmem:[%s1 + $0x8c] sm:$0xf]
  %v60 = vld [vmem:[%s1 + $0x90] sm:$0xf]
  %v61 = vld [vmem:[%s1 + $0x94] sm:$0xf]
  %v62 = vld [vmem:[%s1 + $0x98] sm:$0xf]
  %v63 = vld [vmem:[%s1 + $0x9c] sm:$0xf]
  %v64 = vld [vmem:[%s1 + $0xa0] sm:$0xf]
  %v65 = vld [vmem:[%s1 + $0xa4] sm:$0xf]
  %v66 = vld [vmem:[%s1 + $0xa8] sm:$0xf]
  %v67 = vld [vmem:[%s1 + $0xac] sm:$0xf]
  %v68 = vld [vmem:[%s1 + $0xb0] sm:$0xf]
  %v69 = vld [vmem:[%s1 + $0xb4] sm:$0xf]
  %v70 = vld [vmem:[%s1 + $0xb8] sm:$0xf]
  %v71 = vld [vmem:[%s1 + $0xbc] sm:$0xf]
  %v72 = vld [vmem:[%s1 + $0xc0] sm:$0xf]
  %v73 = vld [vmem:[%s1 + $0xc4] sm:$0xf]
  %v74 = vld [vmem:[%s1 + $0xc8] sm:$0xf]
  %v75 = vld [vmem:[%s1 + $0xcc] sm:$0xf]
  %v76 = vld [vmem:[%s1 + $0xd0] sm:$0xf]
  %v77 = vld [vmem:[%s1 + $0xd4] sm:$0xf]
  %v78 = vld [vmem:[%s1 + $0xd8] sm:$0xf]
  %v79 = vld [vmem:[%s1 + $0xdc] sm:$0xf]
  %v80 = vld [vmem:[%s1 + $0xe0] sm:$0xf]
  %v81 = vld [vmem:[%s1 + $0xe4] sm:$0xf]
  %v82 = vld [vmem:[%s1 + $0xe8] sm:$0xf]
  %v83 = vld [vmem:[%s1 + $0xec] sm:$0xf]
  %v84 = vld [vmem:[%s1 + $0xf0] sm:$0xf]
  %v85 = vld [vmem:[%s1 + $0xf4] sm:$0xf]
  %v86 = vld [vmem:[%s1 + $0xf8] sm:$0xf]
  %v87 = vld [vmem:[%s1 + $0xfc] sm:$0xf]
  %v88 = vld [vmem:[%s1 + $0x100] sm:$0xf]
  %v89 = vld [vmem:[%s1 + $0x104] sm:$0xf]
  %v90 = vld [vmem:[%s1 + $0x108] sm:$0xf]
  %v91 = vld [vmem:[%s1 + $0x10c] sm:$0xf]
  %v92 = vld [vmem:[%s1 + $0x110] sm:$0xf]
  %v93 = vld [vmem:[%s1 + $0x114] sm:$0xf]
  %v94 = vld [vmem:[%s1 + $0x118] sm:$0xf]
  %v95 = vld [vmem:[%s1 + $0x11c] sm:$0xf]
  %v108 = vunpack.c.l.b16 %v12
  %v109 = vunpack.c.h.b16 %v12
  %v110 = vunpack.c.l.b16 %v13
  %v111 = vunpack.c.h.b16 %v13
  %v112 = vunpack.c.l.b16 %v14
  %v113 = vunpack.c.l.b16 %v15
  %v114 = vunpack.c.h.b16 %v15
  %v115 = vunpack.c.l.b16 %v16
  %v116 = vunpack.c.h.b16 %v16
  %v117 = vunpack.c.l.b16 %v17
  %v118 = vunpack.c.l.b16 %v18
  %v119 = vunpack.c.h.b16 %v18
  %v120 = vunpack.c.l.b16 %v19
  %v121 = vunpack.c.h.b16 %v19
  %v122 = vunpack.c.l.b16 %v20
  %v123 = vunpack.c.l.b16 %v21
  %v124 = vunpack.c.h.b16 %v21
  %v125 = vunpack.c.l.b16 %v22
  %v126 = vunpack.c.h.b16 %v22
  %v127 = vunpack.c.l.b16 %v23
  %v128 = vpack.c.b16 %v113, %v108
  %v129 = vpack.c.b16 %v114, %v109
  %v130 = vpack.c.b16 %v115, %v110
  %v131 = vpack.c.b16 %v116, %v111
  %v132 = vpack.c.b16 %v117, %v112
  %v133 = vpack.c.b16 %v123, %v118
  %v134 = vpack.c.b16 %v124, %v119
  %v135 = vpack.c.b16 %v125, %v120
  %v136 = vpack.c.b16 %v126, %v121
  %v137 = vpack.c.b16 %v127, %v122
  %v218 = vunpack.c.l.b16 %v24
  %v219 = vunpack.c.l.b16 %v25
  %v220 = vunpack.c.l.b16 %v26
  %v221 = vunpack.c.l.b16 %v27
  %v222 = vunpack.c.l.b16 %v28
  %v223 = vunpack.c.l.b16 %v29
  %v224 = vunpack.c.l.b16 %v30
  %v225 = vunpack.c.l.b16 %v31
  %v226 = vunpack.c.l.b16 %v32
  %v227 = vunpack.c.l.b16 %v33
  %v228 = vunpack.c.l.b16 %v34
  %v229 = vunpack.c.l.b16 %v35
  %v230 = vunpack.c.l.b16 %v36
  %v231 = vunpack.c.l.b16 %v37
  %v232 = vunpack.c.l.b16 %v38
  %v233 = vunpack.c.l.b16 %v39
  %v234 = vunpack.c.l.b16 %v40
  %v235 = vunpack.c.l.b16 %v41
  %v236 = vunpack.c.l.b16 %v42
  %v237 = vunpack.c.l.b16 %v43
  %v238 = vunpack.c.l.b16 %v44
  %v239 = vunpack.c.l.b16 %v45
  %v240 = vunpack.c.l.b16 %v46
  %v241 = vunpack.c.l.b16 %v47
  %v242 = vunpack.c.l.b16 %v48
  %v243 = vunpack.c.l.b16 %v49
  %v244 = vunpack.c.l.b16 %v50
  %v245 = vunpack.c.l.b16 %v51
  %v246 = vunpack.c.l.b16 %v52
  %v247 = vunpack.c.l.b16 %v53
  %v248 = vunpack.c.l.b16 %v54
  %v249 = vunpack.c.l.b16 %v55
  %v250 = vunpack.c.l.b16 %v56
  %v251 = vunpack.c.l.b16 %v57
  %v252 = vunpack.c.l.b16 %v58
  %v253 = vunpack.c.l.b16 %v59
  %v254 = vunpack.c.l.b16 %v60
  %v255 = vunpack.c.l.b16 %v61
  %v256 = vunpack.c.l.b16 %v62
  %v257 = vunpack.c.l.b16 %v63
  %v258 = vunpack.c.l.b16 %v64
  %v259 = vunpack.c.l.b16 %v65
  %v260 = vunpack.c.l.b16 %v66
  %v261 = vunpack.c.l.b16 %v67
  %v262 = vunpack.c.l.b16 %v68
  %v263 = vunpack.c.l.b16 %v69
  %v264 = vunpack.c.l.b16 %v70
  %v265 = vunpack.c.l.b16 %v71
  %v266 = vunpack.c.l.b16 %v72
  %v267 = vunpack.c.l.b16 %v73
  %v268 = vunpack.c.l.b16 %v74
  %v269 = vunpack.c.l.b16 %v75
  %v270 = vunpack.c.l.b16 %v76
  %v271 = vunpack.c.l.b16 %v77
  %v272 = vunpack.c.l.b16 %v78
  %v273 = vunpack.c.l.b16 %v79
  %v274 = vunpack.c.l.b16 %v80
  %v275 = vunpack.c.l.b16 %v81
  %v276 = vunpack.c.l.b16 %v82
  %v277 = vunpack.c.l.b16 %v83
  %v278 = vunpack.c.l.b16 %v84
  %v279 = vunpack.c.l.b16 %v85
  %v280 = vunpack.c.l.b16 %v86
  %v281 = vunpack.c.l.b16 %v87
  %v282 = vunpack.c.l.b16 %v88
  %v283 = vunpack.c.l.b16 %v89
  %v284 = vunpack.c.l.b16 %v90
  %v285 = vunpack.c.l.b16 %v91
  %v286 = vunpack.c.l.b16 %v92
  %v287 = vunpack.c.l.b16 %v93
  %v288 = vunpack.c.l.b16 %v94
  %v289 = vunpack.c.l.b16 %v95
  %v290 = vpack.c.b16 %v219, %v218
  %v291 = vpack.c.b16 %v221, %v220
  %v292 = vpack.c.b16 %v223, %v222
  %v293 = vpack.c.b16 %v225, %v224
  %v294 = vpack.c.b16 %v227, %v226
  %v295 = vpack.c.b16 %v229, %v228
  %v296 = vpack.c.b16 %v231, %v230
  %v297 = vpack.c.b16 %v233, %v232
  %v298 = vpack.c.b16 %v235, %v234
  %v299 = vpack.c.b16 %v237, %v236
  %v300 = vpack.c.b16 %v239, %v238
  %v301 = vpack.c.b16 %v241, %v240
  %v302 = vpack.c.b16 %v243, %v242
  %v303 = vpack.c.b16 %v245, %v244
  %v304 = vpack.c.b16 %v247, %v246
  %v305 = vpack.c.b16 %v249, %v248
  %v306 = vpack.c.b16 %v251, %v250
  %v307 = vpack.c.b16 %v253, %v252
  %v308 = vpack.c.b16 %v255, %v254
  %v309 = vpack.c.b16 %v257, %v256
  %v310 = vpack.c.b16 %v259, %v258
  %v311 = vpack.c.b16 %v261, %v260
  %v312 = vpack.c.b16 %v263, %v262
  %v313 = vpack.c.b16 %v265, %v264
  %v314 = vpack.c.b16 %v267, %v266
  %v315 = vpack.c.b16 %v269, %v268
  %v316 = vpack.c.b16 %v271, %v270
  %v317 = vpack.c.b16 %v273, %v272
  %v318 = vpack.c.b16 %v275, %v274
  %v319 = vpack.c.b16 %v277, %v276
  %v320 = vpack.c.b16 %v279, %v278
  %v321 = vpack.c.b16 %v281, %v280
  %v322 = vpack.c.b16 %v283, %v282
  %v323 = vpack.c.b16 %v285, %v284
  %v324 = vpack.c.b16 %v287, %v286
  %v325 = vpack.c.b16 %v289, %v288
  %vm362 = vcmask 523264
  %v364 = vsel %vm362, %v132, 0
  %v367 = vsel %vm362, %v137, 0
  %369 = vmatprep.subr.bf16.mxu0 0
  %370 = vmatpush1.bf16.msra.mxu0 %v290
  %371 = vmatprep.subr.bf16.mxu0 0
  %372 = vmatpush1.bf16.msra.mxu0 %v291
  %373 = vmatprep.subr.bf16.mxu0 0
  %374 = vmatpush1.bf16.msra.mxu0 %v292
  %375 = vmatprep.subr.bf16.mxu0 0
  %376 = vmatpush1.bf16.msra.mxu0 %v293
  %377 = vmatprep.subr.bf16.mxu0 0
  %378 = vmatpush1.bf16.msra.mxu0 %v294
  %379 = vmatprep.subr.bf16.mxu0 0
  %380 = vmatpush1.bf16.msra.mxu0 %v295
  %381 = vmatprep.subr.bf16.mxu0 0
  %382 = vmatpush1.bf16.msra.mxu0 %v296
  %383 = vmatprep.subr.bf16.mxu0 0
  %384 = vmatpush1.bf16.msra.mxu0 %v297
  %385 = vmatprep.subr.bf16.mxu0 0
  %386 = vmatpush1.bf16.msra.mxu0 %v298
  %387 = vmatprep.subr.bf16.mxu0 0
  %388 = vmatpush1.bf16.msra.mxu0 %v299
  %389 = vmatprep.subr.bf16.mxu0 0
  %390 = vmatpush1.bf16.msra.mxu0 %v300
  %391 = vmatprep.subr.bf16.mxu0 0
  %392 = vmatpush1.bf16.msra.mxu0 %v301
  %393 = vmatprep.subr.bf16.mxu0 0
  %394 = vmatpush1.bf16.msra.mxu0 %v302
  %395 = vmatprep.subr.bf16.mxu0 0
  %396 = vmatpush1.bf16.msra.mxu0 %v303
  %397 = vmatprep.subr.bf16.mxu0 0
  %398 = vmatpush1.bf16.msra.mxu0 %v304
  %399 = vmatprep.subr.bf16.mxu0 0
  %400 = vmatpush1.bf16.msra.mxu0 %v305
  %401 = vmatprep.mubr.bf16.mxu0 %v129
  %402 = vmatmul.mubr.bf16.gmra.mrb[0].mxu0 %v128
  %v403 = vpop.f32.mrb[0].mxu0
  %v404 = vadd.f32 0.0, %v403
  %v405 = vpop.f32.mrb[0].mxu0
  %v406 = vpop.f32.mrb[0].mxu0
  %v407 = vadd.f32 0.0, %v406
  %v408 = vpop.f32.mrb[0].mxu0
  %409 = vmatprep.mubr.bf16.mxu0 %v134
  %410 = vmatmul.mubr.bf16.gmra.mrb[0].mxu0 %v133
  %v411 = vpop.f32.mrb[0].mxu0
  %v412 = vadd.f32 0.0, %v411
  %v413 = vpop.f32.mrb[0].mxu0
  %v414 = vpop.f32.mrb[0].mxu0
  %v415 = vadd.f32 0.0, %v414
  %v416 = vpop.f32.mrb[0].mxu0
  %417 = vdwg.mxu0
  %418 = vmatprep.subr.bf16.mxu0 0
  %419 = vmatpush1.bf16.msra.mxu0 %v306
  %420 = vmatprep.subr.bf16.mxu0 0
  %421 = vmatpush1.bf16.msra.mxu0 %v307
  %422 = vmatprep.subr.bf16.mxu0 0
  %423 = vmatpush1.bf16.msra.mxu0 %v308
  %424 = vmatprep.subr.bf16.mxu0 0
  %425 = vmatpush1.bf16.msra.mxu0 %v309
  %426 = vmatprep.subr.bf16.mxu0 0
  %427 = vmatpush1.bf16.msra.mxu0 %v310
  %428 = vmatprep.subr.bf16.mxu0 0
  %429 = vmatpush1.bf16.msra.mxu0 %v311
  %430 = vmatprep.subr.bf16.mxu0 0
  %431 = vmatpush1.bf16.msra.mxu0 %v312
  %432 = vmatprep.subr.bf16.mxu0 0
  %433 = vmatpush1.bf16.msra.mxu0 %v313
  %434 = vmatprep.subr.bf16.mxu0 0
  %435 = vmatpush1.bf16.msra.mxu0 %v314
  %436 = vmatprep.subr.bf16.mxu0 0
  %437 = vmatpush1.bf16.msra.mxu0 %v315
  %438 = vmatprep.subr.bf16.mxu0 0
  %439 = vmatpush1.bf16.msra.mxu0 %v316
  %440 = vmatprep.subr.bf16.mxu0 0
  %441 = vmatpush1.bf16.msra.mxu0 %v317
  %442 = vmatprep.subr.bf16.mxu0 0
  %443 = vmatpush1.bf16.msra.mxu0 %v318
  %444 = vmatprep.subr.bf16.mxu0 0
  %445 = vmatpush1.bf16.msra.mxu0 %v319
  %446 = vmatprep.subr.bf16.mxu0 0
  %447 = vmatpush1.bf16.msra.mxu0 %v320
  %448 = vmatprep.subr.bf16.mxu0 0
  %449 = vmatpush1.bf16.msra.mxu0 %v321
  %450 = vmatprep.mubr.bf16.mxu0 %v131
  %451 = vmatmul.mubr.bf16.gmra.mrb[0].mxu0 %v130
  %v452 = vpop.f32.mrb[0].mxu0
  %v453 = vadd.f32 %v404, %v452
  %v454 = vpop.f32.mrb[0].mxu0
  %v455 = vpop.f32.mrb[0].mxu0
  %v456 = vadd.f32 %v407, %v455
  %v457 = vpop.f32.mrb[0].mxu0
  %458 = vmatprep.mubr.bf16.mxu0 %v136
  %459 = vmatmul.mubr.bf16.gmra.mrb[0].mxu0 %v135
  %v460 = vpop.f32.mrb[0].mxu0
  %v461 = vadd.f32 %v412, %v460
  %v462 = vpop.f32.mrb[0].mxu0
  %v463 = vpop.f32.mrb[0].mxu0
  %v464 = vadd.f32 %v415, %v463
  %v465 = vpop.f32.mrb[0].mxu0
  %466 = vdwg.mxu0
  %467 = vmatprep.subr.bf16.mxu0 0
  %468 = vmatpush1.bf16.msra.mxu0 %v322
  %469 = vmatprep.subr.bf16.mxu0 0
  %470 = vmatpush1.bf16.msra.mxu0 %v323
  %471 = vmatprep.subr.bf16.mxu0 0
  %472 = vmatpush1.bf16.msra.mxu0 %v324
  %473 = vmatprep.subr.bf16.mxu0 0
  %474 = vmatpush1.bf16.msra.mxu0 %v325
  %475 = vmatprep.subr.bf16.mxu0 0
  %476 = vmatpush1.bf16.msra.mxu0 0
  %477 = vmatprep.subr.bf16.mxu0 0
  %478 = vmatpush1.bf16.msra.mxu0 0
  %479 = vmatprep.subr.bf16.mxu0 0
  %480 = vmatpush1.bf16.msra.mxu0 0
  %481 = vmatprep.subr.bf16.mxu0 0
  %482 = vmatpush1.bf16.msra.mxu0 0
  %483 = vmatprep.subr.bf16.mxu0 0
  %484 = vmatpush1.bf16.msra.mxu0 0
  %485 = vmatprep.subr.bf16.mxu0 0
  %486 = vmatpush1.bf16.msra.mxu0 0
  %487 = vmatprep.subr.bf16.mxu0 0
  %488 = vmatpush1.bf16.msra.mxu0 0
  %489 = vmatprep.subr.bf16.mxu0 0
  %490 = vmatpush1.bf16.msra.mxu0 0
  %491 = vmatprep.subr.bf16.mxu0 0
  %492 = vmatpush1.bf16.msra.mxu0 0
  %493 = vmatprep.subr.bf16.mxu0 0
  %494 = vmatpush1.bf16.msra.mxu0 0
  %495 = vmatprep.subr.bf16.mxu0 0
  %496 = vmatpush1.bf16.msra.mxu0 0
  %497 = vmatprep.subr.bf16.mxu0 0
  %498 = vmatpush1.bf16.msra.mxu0 0
  %499 = vmatprep.mubr.bf16.mxu0 0
  %500 = vmatmul.mubr.bf16.gmra.mrb[0].mxu0 %v364
  %v501 = vpop.f32.mrb[0].mxu0
  %v502 = vadd.f32 %v453, %v501
  %v503 = vpop.f32.mrb[0].mxu0
  %v504 = vpop.f32.mrb[0].mxu0
  %v505 = vadd.f32 %v456, %v504
  %v506 = vpop.f32.mrb[0].mxu0
  %507 = vmatprep.mubr.bf16.mxu0 0
  %508 = vmatmul.mubr.bf16.gmra.mrb[0].mxu0 %v367
  %v509 = vpop.f32.mrb[0].mxu0
  %v510 = vadd.f32 %v461, %v509
  %v511 = vpop.f32.mrb[0].mxu0
  %v512 = vpop.f32.mrb[0].mxu0
  %v513 = vadd.f32 %v464, %v512
  %v514 = vpop.f32.mrb[0].mxu0
  %515 = vdwg.mxu0
  %v516 = vmax.f32 %v502, 0.0
  %v517 = vmax.f32 %v505, 0.0
  %v518 = vmax.f32 %v510, 0.0
  %v519 = vmax.f32 %v513, 0.0
  %520 = vst [vmem:[%s2] sm:$0xff] %v516
  %521 = vst [vmem:[%s2 + $0x8] sm:$0xff] %v517
  %522 = vst [vmem:[%s2 + $0x10] sm:$0xff] %v518
  %523 = vst [vmem:[%s2 + $0x18] sm:$0xff] %v519
  // Predicated region
  $region10: #{forward.109} parent=0 // pred_check
    _
  $region11: #{forward.109} parent=0 // pred_check_branch
    %525 = sbr.rel (0) target = $region13
  $region12: #{forward.109} parent=0 // pred_region
    _
  $region13: #{forward.109} parent=0 // pred_fallthru
    _
  // Predicated region
  $region14: #{forward.109} parent=0 // pred_check
    _
  $region15: #{forward.109} parent=0 // pred_check_branch
    %527 = sbr.rel (0) target = $region17
  $region16: #{forward.109} parent=0 // pred_region
    _
  $region17: #{forward.109} parent=0 // pred_fallthru
    _

// kernel: forward.110
$region0: #{forward.110}
  #allocation0 [shape = 'u32[]', space=smem, size = 0x4, offset = 0x4, fixed_abs, tag = 'smem constant byte address 0x4 - core index']
  #allocation1 [shape = 'u32[144,128]{1,0:T(1,128)}', space=vmem, size = 0x12000, scoped, tag = 'internal scratch']
  %s0 = inlined_call_operand.vmem [shape: bf16[32,144], index: 0, kind: input, shape index: {}]
  %s1 = inlined_call_operand.vmem [shape: bf16[144,128], index: 1, kind: input, shape index: {}]
  %s2 = inlined_call_operand.vmem [shape: f32[32,128], index: 2, kind: output, shape index: {}]
  %s3 = sld [smem:[#allocation0]]
  $region18: #{forward.110} parent=0
    _
  %s5 = ssub.s32 1, %s3
  %s6 = scalar_select 0, %s5, %s3
  // Predicated region
  $region2: #{forward.110} parent=0 // pred_check
    _
  $region3: #{forward.110} parent=0 // pred_check_branch
    %8 = sbr.rel (0) target = $region5
  $region4: #{forward.110} parent=0 // pred_region
    _
  $region5: #{forward.110} parent=0 // pred_fallthru
    _
  // Predicated region
  $region6: #{forward.110} parent=0 // pred_check
    _
  $region7: #{forward.110} parent=0 // pred_check_branch
    %10 = sbr.rel (0) target = $region9
  $region8: #{forward.110} parent=0 // pred_region
    _
  $region9: #{forward.110} parent=0 // pred_fallthru
    _
  %v12 = vld [vmem:[%s0] sm:$0xff]
  %v13 = vld [vmem:[%s0 + $0x8] sm:$0xff]
  %v14 = vld [vmem:[%s0 + $0x10] sm:$0xff]
  %v15 = vld [vmem:[%s0 + $0x18] sm:$0xff]
  %v16 = vld [vmem:[%s1] sm:$0xf]
  %v17 = vld [vmem:[%s1 + $0x4] sm:$0xf]
  %v18 = vld [vmem:[%s1 + $0x8] sm:$0xf]
  %v19 = vld [vmem:[%s1 + $0xc] sm:$0xf]
  %v20 = vld [vmem:[%s1 + $0x10] sm:$0xf]
  %v21 = vld [vmem:[%s1 + $0x14] sm:$0xf]
  %v22 = vld [vmem:[%s1 + $0x18] sm:$0xf]
  %v23 = vld [vmem:[%s1 + $0x1c] sm:$0xf]
  %v24 = vld [vmem:[%s1 + $0x20] sm:$0xf]
  %v25 = vld [vmem:[%s1 + $0x24] sm:$0xf]
  %v26 = vld [vmem:[%s1 + $0x28] sm:$0xf]
  %v27 = vld [vmem:[%s1 + $0x2c] sm:$0xf]
  %v28 = vld [vmem:[%s1 + $0x30] sm:$0xf]
  %v29 = vld [vmem:[%s1 + $0x34] sm:$0xf]
  %v30 = vld [vmem:[%s1 + $0x38] sm:$0xf]
  %v31 = vld [vmem:[%s1 + $0x3c] sm:$0xf]
  %v32 = vld [vmem:[%s1 + $0x40] sm:$0xf]
  %v33 = vld [vmem:[%s1 + $0x44] sm:$0xf]
  %v38 = vunpack.c.l.b16 %v12
  %v39 = vunpack.c.h.b16 %v12
  %v40 = vunpack.c.l.b16 %v13
  %v41 = vunpack.c.h.b16 %v13
  %v42 = vunpack.c.l.b16 %v14
  %v43 = vunpack.c.h.b16 %v14
  %v44 = vunpack.c.l.b16 %v15
  %v45 = vunpack.c.h.b16 %v15
  %v46 = vpack.c.b16 %v40, %v38
  %v47 = vpack.c.b16 %v41, %v39
  %v48 = vpack.c.b16 %v44, %v42
  %v49 = vpack.c.b16 %v45, %v43
  %v70 = vunpack.c.l.b16 %v16
  %v71 = vunpack.c.l.b16 %v17
  %v72 = vunpack.c.l.b16 %v18
  %v73 = vunpack.c.l.b16 %v19
  %v74 = vunpack.c.l.b16 %v20
  %v75 = vunpack.c.l.b16 %v21
  %v76 = vunpack.c.l.b16 %v22
  %v77 = vunpack.c.l.b16 %v23
  %v78 = vunpack.c.l.b16 %v24
  %v79 = vunpack.c.l.b16 %v25
  %v80 = vunpack.c.l.b16 %v26
  %v81 = vunpack.c.l.b16 %v27
  %v82 = vunpack.c.l.b16 %v28
  %v83 = vunpack.c.l.b16 %v29
  %v84 = vunpack.c.l.b16 %v30
  %v85 = vunpack.c.l.b16 %v31
  %v86 = vunpack.c.l.b16 %v32
  %v87 = vunpack.c.l.b16 %v33
  %v88 = vpack.c.b16 %v71, %v70
  %v89 = vpack.c.b16 %v73, %v72
  %v90 = vpack.c.b16 %v75, %v74
  %v91 = vpack.c.b16 %v77, %v76
  %v92 = vpack.c.b16 %v79, %v78
  %v93 = vpack.c.b16 %v81, %v80
  %v94 = vpack.c.b16 %v83, %v82
  %v95 = vpack.c.b16 %v85, %v84
  %v96 = vpack.c.b16 %v87, %v86
  %vm106 = vcmask 130048
  %v108 = vsel %vm106, %v47, 0
  %v111 = vsel %vm106, %v49, 0
  %113 = vmatprep.subr.bf16.mxu0 0
  %114 = vmatpush1.bf16.msra.mxu0 %v88
  %115 = vmatprep.subr.bf16.mxu0 0
  %116 = vmatpush1.bf16.msra.mxu0 %v89
  %117 = vmatprep.subr.bf16.mxu0 0
  %118 = vmatpush1.bf16.msra.mxu0 %v90
  %119 = vmatprep.subr.bf16.mxu0 0
  %120 = vmatpush1.bf16.msra.mxu0 %v91
  %121 = vmatprep.subr.bf16.mxu0 0
  %122 = vmatpush1.bf16.msra.mxu0 %v92
  %123 = vmatprep.subr.bf16.mxu0 0
  %124 = vmatpush1.bf16.msra.mxu0 %v93
  %125 = vmatprep.subr.bf16.mxu0 0
  %126 = vmatpush1.bf16.msra.mxu0 %v94
  %127 = vmatprep.subr.bf16.mxu0 0
  %128 = vmatpush1.bf16.msra.mxu0 %v95
  %129 = vmatprep.subr.bf16.mxu0 0
  %130 = vmatpush1.bf16.msra.mxu0 %v96
  %131 = vmatprep.subr.bf16.mxu0 0
  %132 = vmatpush1.bf16.msra.mxu0 0
  %133 = vmatprep.subr.bf16.mxu0 0
  %134 = vmatpush1.bf16.msra.mxu0 0
  %135 = vmatprep.subr.bf16.mxu0 0
  %136 = vmatpush1.bf16.msra.mxu0 0
  %137 = vmatprep.subr.bf16.mxu0 0
  %138 = vmatpush1.bf16.msra.mxu0 0
  %139 = vmatprep.subr.bf16.mxu0 0
  %140 = vmatpush1.bf16.msra.mxu0 0
  %141 = vmatprep.subr.bf16.mxu0 0
  %142 = vmatpush1.bf16.msra.mxu0 0
  %143 = vmatprep.subr.bf16.mxu0 0
  %144 = vmatpush1.bf16.msra.mxu0 0
  %145 = vmatprep.mubr.bf16.mxu0 %v108
  %146 = vmatmul.mubr.bf16.gmra.mrb[0].mxu0 %v46
  %v147 = vpop.f32.mrb[0].mxu0
  %v148 = vadd.f32 0.0, %v147
  %v149 = vpop.f32.mrb[0].mxu0
  %v150 = vpop.f32.mrb[0].mxu0
  %v151 = vadd.f32 0.0, %v150
  %v152 = vpop.f32.mrb[0].mxu0
  %153 = vmatprep.mubr.bf16.mxu0 %v111
  %154 = vmatmul.mubr.bf16.gmra.mrb[0].mxu0 %v48
  %v155 = vpop.f32.mrb[0].mxu0
  %v156 = vadd.f32 0.0, %v155
  %v157 = vpop.f32.mrb[0].mxu0
  %v158 = vpop.f32.mrb[0].mxu0
  %v159 = vadd.f32 0.0, %v158
  %v160 = vpop.f32.mrb[0].mxu0
  %161 = vdwg.mxu0
  %v162 = vmax.f32 %v148, 0.0
  %v163 = vmax.f32 %v151, 0.0
  %v164 = vmax.f32 %v156, 0.0
  %v165 = vmax.f32 %v159, 0.0
  %166 = vst [vmem:[%s2] sm:$0xff] %v162
  %167 = vst [vmem:[%s2 + $0x8] sm:$0xff] %v163
  %168 = vst [vmem:[%s2 + $0x10] sm:$0xff] %v164
  %169 = vst [vmem:[%s2 + $0x18] sm:$0xff] %v165
  // Predicated region
  $region10: #{forward.110} parent=0 // pred_check
    _
  $region11: #{forward.110} parent=0 // pred_check_branch
    %171 = sbr.rel (0) target = $region13
  $region12: #{forward.110} parent=0 // pred_region
    _
  $region13: #{forward.110} parent=0 // pred_fallthru
    _
  // Predicated region
  $region14: #{forward.110} parent=0 // pred_check
    _
  $region15: #{forward.110} parent=0 // pred_check_branch
    %173 = sbr.rel (0) target = $region17
  $region16: #{forward.110} parent=0 // pred_region
    _
  $region17: #{forward.110} parent=0 // pred_fallthru
    _

// kernel: forward.111
$region0: #{forward.111}
  #allocation0 [shape = 'u32[]', space=smem, size = 0x4, offset = 0x4, fixed_abs, tag = 'smem constant byte address 0x4 - core index']
  #allocation1 [shape = 'u32[144,128]{1,0:T(1,128)}', space=vmem, size = 0x12000, scoped, tag = 'internal scratch']
  %s0 = inlined_call_operand.vmem [shape: bf16[32,16], index: 0, kind: input, shape index: {}]
  %s1 = inlined_call_operand.vmem [shape: bf16[16,128], index: 1, kind: input, shape index: {}]
  %s2 = inlined_call_operand.vmem [shape: f32[32,128], index: 2, kind: input, shape index: {}]
  %s3 = inlined_call_operand.vmem [shape: f32[32,128], index: 3, kind: output, shape index: {}]
  %s4 = sld [smem:[#allocation0]]
  $region22: #{forward.111} parent=0
    _
  %s6 = ssub.s32 1, %s4
  %s7 = scalar_select 0, %s6, %s4
  // Predicated region
  $region2: #{forward.111} parent=0 // pred_check
    _
  $region3: #{forward.111} parent=0 // pred_check_branch
    %9 = sbr.rel (0) target = $region5
  $region4: #{forward.111} parent=0 // pred_region
    _
  $region5: #{forward.111} parent=0 // pred_fallthru
    _
  // Predicated region
  $region6: #{forward.111} parent=0 // pred_check
    _
  $region7: #{forward.111} parent=0 // pred_check_branch
    %11 = sbr.rel (0) target = $region9
  $region8: #{forward.111} parent=0 // pred_region
    _
  $region9: #{forward.111} parent=0 // pred_fallthru
    _
  // Predicated region
  $region10: #{forward.111} parent=0 // pred_check
    _
  $region11: #{forward.111} parent=0 // pred_check_branch
    %13 = sbr.rel (0) target = $region13
  $region12: #{forward.111} parent=0 // pred_region
    _
  $region13: #{forward.111} parent=0 // pred_fallthru
    _
  %v15 = vld [vmem:[%s0] sm:$0xf]
  %v16 = vld [vmem:[%s0 + $0x4] sm:$0xf]
  %v17 = vld [vmem:[%s0 + $0x8] sm:$0xf]
  %v18 = vld [vmem:[%s0 + $0xc] sm:$0xf]
  %v19 = vld [vmem:[%s1] sm:$0xf]
  %v20 = vld [vmem:[%s1 + $0x4] sm:$0xf]
  %v21 = vld [vmem:[%s2] sm:$0xff]
  %v22 = vld [vmem:[%s2 + $0x8] sm:$0xff]
  %v23 = vld [vmem:[%s2 + $0x10] sm:$0xff]
  %v24 = vld [vmem:[%s2 + $0x18] sm:$0xff]
  %v29 = vunpack.c.l.b16 %v15
  %v30 = vunpack.c.l.b16 %v16
  %v31 = vunpack.c.l.b16 %v17
  %v32 = vunpack.c.l.b16 %v18
  %v33 = vpack.c.b16 %v30, %v29
  %v34 = vpack.c.b16 %v32, %v31
  %v37 = vunpack.c.l.b16 %v19
  %v38 = vunpack.c.l.b16 %v20
  %v39 = vpack.c.b16 %v38, %v37
  %vm41 = vcmask 130048
  %v43 = vsel %vm41, %v33, 0
  %v46 = vsel %vm41, %v34, 0
  %48 = vmatprep.subr.bf16.mxu0 0
  %49 = vmatpush1.bf16.msra.mxu0 %v39
  %50 = vmatprep.subr.bf16.mxu0 0
  %51 = vmatpush1.bf16.msra.mxu0 0
  %52 = vmatprep.subr.bf16.mxu0 0
  %53 = vmatpush1.bf16.msra.mxu0 0
  %54 = vmatprep.subr.bf16.mxu0 0
  %55 = vmatpush1.bf16.msra.mxu0 0
  %56 = vmatprep.subr.bf16.mxu0 0
  %57 = vmatpush1.bf16.msra.mxu0 0
  %58 = vmatprep.subr.bf16.mxu0 0
  %59 = vmatpush1.bf16.msra.mxu0 0
  %60 = vmatprep.subr.bf16.mxu0 0
  %61 = vmatpush1.bf16.msra.mxu0 0
  %62 = vmatprep.subr.bf16.mxu0 0
  %63 = vmatpush1.bf16.msra.mxu0 0
  %64 = vmatprep.subr.bf16.mxu0 0
  %65 = vmatpush1.bf16.msra.mxu0 0
  %66 = vmatprep.subr.bf16.mxu0 0
  %67 = vmatpush1.bf16.msra.mxu0 0
  %68 = vmatprep.subr.bf16.mxu0 0
  %69 = vmatpush1.bf16.msra.mxu0 0
  %70 = vmatprep.subr.bf16.mxu0 0
  %71 = vmatpush1.bf16.msra.mxu0 0
  %72 = vmatprep.subr.bf16.mxu0 0
  %73 = vmatpush1.bf16.msra.mxu0 0
  %74 = vmatprep.subr.bf16.mxu0 0
  %75 = vmatpush1.bf16.msra.mxu0 0
  %76 = vmatprep.subr.bf16.mxu0 0
  %77 = vmatpush1.bf16.msra.mxu0 0
  %78 = vmatprep.subr.bf16.mxu0 0
  %79 = vmatpush1.bf16.msra.mxu0 0
  %80 = vmatprep.mubr.bf16.mxu0 0
  %81 = vmatmul.mubr.bf16.gmra.mrb[0].mxu0 %v43
  %v82 = vpop.f32.mrb[0].mxu0
  %v83 = vadd.f32 %v21, %v82
  %v84 = vpop.f32.mrb[0].mxu0
  %v85 = vpop.f32.mrb[0].mxu0
  %v86 = vadd.f32 %v22, %v85
  %v87 = vpop.f32.mrb[0].mxu0
  %88 = vmatprep.mubr.bf16.mxu0 0
  %89 = vmatmul.mubr.bf16.gmra.mrb[0].mxu0 %v46
  %v90 = vpop.f32.mrb[0].mxu0
  %v91 = vadd.f32 %v23, %v90
  %v92 = vpop.f32.mrb[0].mxu0
  %v93 = vpop.f32.mrb[0].mxu0
  %v94 = vadd.f32 %v24, %v93
  %v95 = vpop.f32.mrb[0].mxu0
  %96 = vdwg.mxu0
  %vm97 = vcmp.ge.f32.partialorder %v83, 0.0
  %vm98 = vcmp.ge.f32.partialorder %v86, 0.0
  %vm99 = vcmp.ge.f32.partialorder %v91, 0.0
  %vm100 = vcmp.ge.f32.partialorder %v94, 0.0
  %v101 = vmul.f32 %v83, 0.25
  %v102 = vmul.f32 %v86, 0.25
  %v103 = vmul.f32 %v91, 0.25
  %v104 = vmul.f32 %v94, 0.25
  %v105 = vsel %vm97, %v83, %v101
  %v106 = vsel %vm98, %v86, %v102
  %v107 = vsel %vm99, %v91, %v103
  %v108 = vsel %vm100, %v94, %v104
  %109 = vst [vmem:[%s3] sm:$0xff] %v105
  %110 = vst [vmem:[%s3 + $0x8] sm:$0xff] %v106
  %111 = vst [vmem:[%s3 + $0x10] sm:$0xff] %v107
  %112 = vst [vmem:[%s3 + $0x18] sm:$0xff] %v108
  // Predicated region
  $region14: #{forward.111} parent=0 // pred_check
    _
  $region15: #{forward.111} parent=0 // pred_check_branch
    %114 = sbr.rel (0) target = $region17
  $region16: #{forward.111} parent=0 // pred_region
    _
  $region17: #{forward.111} parent=0 // pred_fallthru
    _
  // Predicated region
  $region18: #{forward.111} parent=0 // pred_check
    _
  $region19: #{forward.111} parent=0 // pred_check_branch
    %116 = sbr.rel (0) target = $region21
  $region20: #{forward.111} parent=0 // pred_region
    _
  $region21: #{forward.111} parent=0 // pred_fallthru
    _

// kernel: forward.108
$region0: #{forward.108}
  #allocation0 [shape = 'u32[]', space=smem, size = 0x4, offset = 0x4, fixed_abs, tag = 'smem constant byte address 0x4 - core index']
  #allocation1 [shape = 'u32[144,128]{1,0:T(1,128)}', space=vmem, size = 0x12000, scoped, tag = 'internal scratch']
  %s0 = inlined_call_operand.vmem [shape: bf16[32,64], index: 0, kind: input, shape index: {}]
  %s1 = inlined_call_operand.vmem [shape: bf16[64,128], index: 1, kind: input, shape index: {}]
  %s2 = inlined_call_operand.vmem [shape: f32[32,128], index: 2, kind: output, shape index: {}]
  %s3 = sld [smem:[#allocation0]]
  $region18: #{forward.108} parent=0
    _
  %s5 = ssub.s32 1, %s3
  %s6 = scalar_select 0, %s5, %s3
  // Predicated region
  $region2: #{forward.108} parent=0 // pred_check
    _
  $region3: #{forward.108} parent=0 // pred_check_branch
    %8 = sbr.rel (0) target = $region5
  $region4: #{forward.108} parent=0 // pred_region
    _
  $region5: #{forward.108} parent=0 // pred_fallthru
    _
  // Predicated region
  $region6: #{forward.108} parent=0 // pred_check
    _
  $region7: #{forward.108} parent=0 // pred_check_branch
    %10 = sbr.rel (0) target = $region9
  $region8: #{forward.108} parent=0 // pred_region
    _
  $region9: #{forward.108} parent=0 // pred_fallthru
    _
  %v12 = vld [vmem:[%s0] sm:$0xf]
  %v13 = vld [vmem:[%s0 + $0x4] sm:$0xf]
  %v14 = vld [vmem:[%s0 + $0x8] sm:$0xf]
  %v15 = vld [vmem:[%s0 + $0xc] sm:$0xf]
  %v16 = vld [vmem:[%s1] sm:$0xf]
  %v17 = vld [vmem:[%s1 + $0x4] sm:$0xf]
  %v18 = vld [vmem:[%s1 + $0x8] sm:$0xf]
  %v19 = vld [vmem:[%s1 + $0xc] sm:$0xf]
  %v20 = vld [vmem:[%s1 + $0x10] sm:$0xf]
  %v21 = vld [vmem:[%s1 + $0x14] sm:$0xf]
  %v22 = vld [vmem:[%s1 + $0x18] sm:$0xf]
  %v23 = vld [vmem:[%s1 + $0x1c] sm:$0xf]
  %v28 = vunpack.c.l.b16 %v12
  %v29 = vunpack.c.l.b16 %v13
  %v30 = vunpack.c.l.b16 %v14
  %v31 = vunpack.c.l.b16 %v15
  %v32 = vpack.c.b16 %v29, %v28
  %v33 = vpack.c.b16 %v31, %v30
  %v42 = vunpack.c.l.b16 %v16
  %v43 = vunpack.c.l.b16 %v17
  %v44 = vunpack.c.l.b16 %v18
  %v45 = vunpack.c.l.b16 %v19
  %v46 = vunpack.c.l.b16 %v20
  %v47 = vunpack.c.l.b16 %v21
  %v48 = vunpack.c.l.b16 %v22
  %v49 = vunpack.c.l.b16 %v23
  %v50 = vpack.c.b16 %v43, %v42
  %v51 = vpack.c.b16 %v45, %v44
  %v52 = vpack.c.b16 %v47, %v46
  %v53 = vpack.c.b16 %v49, %v48
  %vm58 = vcmask 523264
  %v60 = vsel %vm58, %v32, 0
  %v63 = vsel %vm58, %v33, 0
  %65 = vmatprep.subr.bf16.mxu0 0
  %66 = vmatpush1.bf16.msra.mxu0 %v50
  %67 = vmatprep.subr.bf16.mxu0 0
  %68 = vmatpush1.bf16.msra.mxu0 %v51
  %69 = vmatprep.subr.bf16.mxu0 0
  %70 = vmatpush1.bf16.msra.mxu0 %v52
  %71 = vmatprep.subr.bf16.mxu0 0
  %72 = vmatpush1.bf16.msra.mxu0 %v53
  %73 = vmatprep.subr.bf16.mxu0 0
  %74 = vmatpush1.bf16.msra.mxu0 0
  %75 = vmatprep.subr.bf16.mxu0 0
  %76 = vmatpush1.bf16.msra.mxu0 0
  %77 = vmatprep.subr.bf16.mxu0 0
  %78 = vmatpush1.bf16.msra.mxu0 0
  %79 = vmatprep.subr.bf16.mxu0 0
  %80 = vmatpush1.bf16.msra.mxu0 0
  %81 = vmatprep.subr.bf16.mxu0 0
  %82 = vmatpush1.bf16.msra.mxu0 0
  %83 = vmatprep.subr.bf16.mxu0 0
  %84 = vmatpush1.bf16.msra.mxu0 0
  %85 = vmatprep.subr.bf16.mxu0 0
  %86 = vmatpush1.bf16.msra.mxu0 0
  %87 = vmatprep.subr.bf16.mxu0 0
  %88 = vmatpush1.bf16.msra.mxu0 0
  %89 = vmatprep.subr.bf16.mxu0 0
  %90 = vmatpush1.bf16.msra.mxu0 0
  %91 = vmatprep.subr.bf16.mxu0 0
  %92 = vmatpush1.bf16.msra.mxu0 0
  %93 = vmatprep.subr.bf16.mxu0 0
  %94 = vmatpush1.bf16.msra.mxu0 0
  %95 = vmatprep.subr.bf16.mxu0 0
  %96 = vmatpush1.bf16.msra.mxu0 0
  %97 = vmatprep.mubr.bf16.mxu0 0
  %98 = vmatmul.mubr.bf16.gmra.mrb[0].mxu0 %v60
  %v99 = vpop.f32.mrb[0].mxu0
  %v100 = vadd.f32 0.0, %v99
  %v101 = vpop.f32.mrb[0].mxu0
  %v102 = vpop.f32.mrb[0].mxu0
  %v103 = vadd.f32 0.0, %v102
  %v104 = vpop.f32.mrb[0].mxu0
  %105 = vmatprep.mubr.bf16.mxu0 0
  %106 = vmatmul.mubr.bf16.gmra.mrb[0].mxu0 %v63
  %v107 = vpop.f32.mrb[0].mxu0
  %v108 = vadd.f32 0.0, %v107
  %v109 = vpop.f32.mrb[0].mxu0
  %v110 = vpop.f32.mrb[0].mxu0
  %v111 = vadd.f32 0.0, %v110
  %v112 = vpop.f32.mrb[0].mxu0
  %113 = vdwg.mxu0
  %v114 = vmax.f32 %v100, 0.0
  %v115 = vmax.f32 %v103, 0.0
  %v116 = vmax.f32 %v108, 0.0
  %v117 = vmax.f32 %v111, 0.0
  %118 = vst [vmem:[%s2] sm:$0xff] %v114
  %119 = vst [vmem:[%s2 + $0x8] sm:$0xff] %v115
  %120 = vst [vmem:[%s2 + $0x10] sm:$0xff] %v116
  %121 = vst [vmem:[%s2 + $0x18] sm:$0xff] %v117
  // Predicated region
  $region10: #{forward.108} parent=0 // pred_check
    _
  $region11: #{forward.108} parent=0 // pred_check_branch
    %123 = sbr.rel (0) target = $region13
  $region12: #{forward.108} parent=0 // pred_region
    _
  $region13: #{forward.108} parent=0 // pred_fallthru
    _
  // Predicated region
  $region14: #{forward.108} parent=0 // pred_check
    _
  $region15: #{forward.108} parent=0 // pred_check_branch
    %125 = sbr.rel (0) target = $region17
  $region16: #{forward.108} parent=0 // pred_region
    _
  $region17: #{forward.108} parent=0 // pred_fallthru
    _

// kernel: forward.112
$region0: #{forward.112}
  #allocation0 [shape = 'u32[]', space=smem, size = 0x4, offset = 0x4, fixed_abs, tag = 'smem constant byte address 0x4 - core index']
  #allocation1 [shape = 'u32[144,128]{1,0:T(1,128)}', space=vmem, size = 0x12000, scoped, tag = 'internal scratch']
  %s0 = inlined_call_operand.vmem [shape: bf16[32,128], index: 0, kind: input, shape index: {}]
  %s1 = inlined_call_operand.vmem [shape: bf16[128,128], index: 1, kind: input, shape index: {}]
  %s2 = inlined_call_operand.vmem [shape: f32[32,128], index: 2, kind: output, shape index: {}]
  %s3 = sld [smem:[#allocation0]]
  $region18: #{forward.112} parent=0
    _
  %s5 = ssub.s32 1, %s3
  %s6 = scalar_select 0, %s5, %s3
  // Predicated region
  $region2: #{forward.112} parent=0 // pred_check
    _
  $region3: #{forward.112} parent=0 // pred_check_branch
    %8 = sbr.rel (0) target = $region5
  $region4: #{forward.112} parent=0 // pred_region
    _
  $region5: #{forward.112} parent=0 // pred_fallthru
    _
  // Predicated region
  $region6: #{forward.112} parent=0 // pred_check
    _
  $region7: #{forward.112} parent=0 // pred_check_branch
    %10 = sbr.rel (0) target = $region9
  $region8: #{forward.112} parent=0 // pred_region
    _
  $region9: #{forward.112} parent=0 // pred_fallthru
    _
  %v12 = vld [vmem:[%s0] sm:$0xf]
  %v13 = vld [vmem:[%s0 + $0x4] sm:$0xf]
  %v14 = vld [vmem:[%s0 + $0x8] sm:$0xf]
  %v15 = vld [vmem:[%s0 + $0xc] sm:$0xf]
  %v16 = vld [vmem:[%s1] sm:$0xf]
  %v17 = vld [vmem:[%s1 + $0x4] sm:$0xf]
  %v18 = vld [vmem:[%s1 + $0x8] sm:$0xf]
  %v19 = vld [vmem:[%s1 + $0xc] sm:$0xf]
  %v20 = vld [vmem:[%s1 + $0x10] sm:$0xf]
  %v21 = vld [vmem:[%s1 + $0x14] sm:$0xf]
  %v22 = vld [vmem:[%s1 + $0x18] sm:$0xf]
  %v23 = vld [vmem:[%s1 + $0x1c] sm:$0xf]
  %v24 = vld [vmem:[%s1 + $0x20] sm:$0xf]
  %v25 = vld [vmem:[%s1 + $0x24] sm:$0xf]
  %v26 = vld [vmem:[%s1 + $0x28] sm:$0xf]
  %v27 = vld [vmem:[%s1 + $0x2c] sm:$0xf]
  %v28 = vld [vmem:[%s1 + $0x30] sm:$0xf]
  %v29 = vld [vmem:[%s1 + $0x34] sm:$0xf]
  %v30 = vld [vmem:[%s1 + $0x38] sm:$0xf]
  %v31 = vld [vmem:[%s1 + $0x3c] sm:$0xf]
  %v36 = vunpack.c.l.b16 %v12
  %v37 = vunpack.c.l.b16 %v13
  %v38 = vunpack.c.l.b16 %v14
  %v39 = vunpack.c.l.b16 %v15
  %v40 = vpack.c.b16 %v37, %v36
  %v41 = vpack.c.b16 %v39, %v38
  %v60 = vunpack.c.l.b16 %v16
  %v61 = vunpack.c.l.b16 %v17
  %v62 = vunpack.c.l.b16 %v18
  %v63 = vunpack.c.l.b16 %v19
  %v64 = vunpack.c.l.b16 %v20
  %v65 = vunpack.c.l.b16 %v21
  %v66 = vunpack.c.l.b16 %v22
  %v67 = vunpack.c.l.b16 %v23
  %v68 = vunpack.c.l.b16 %v24
  %v69 = vunpack.c.l.b16 %v25
  %v70 = vunpack.c.l.b16 %v26
  %v71 = vunpack.c.l.b16 %v27
  %v72 = vunpack.c.l.b16 %v28
  %v73 = vunpack.c.l.b16 %v29
  %v74 = vunpack.c.l.b16 %v30
  %v75 = vunpack.c.l.b16 %v31
  %v76 = vpack.c.b16 %v61, %v60
  %v77 = vpack.c.b16 %v63, %v62
  %v78 = vpack.c.b16 %v65, %v64
  %v79 = vpack.c.b16 %v67, %v66
  %v80 = vpack.c.b16 %v69, %v68
  %v81 = vpack.c.b16 %v71, %v70
  %v82 = vpack.c.b16 %v73, %v72
  %v83 = vpack.c.b16 %v75, %v74
  %92 = vmatprep.subr.bf16.mxu0 0
  %93 = vmatpush1.bf16.msra.mxu0 %v76
  %94 = vmatprep.subr.bf16.mxu0 0
  %95 = vmatpush1.bf16.msra.mxu0 %v77
  %96 = vmatprep.subr.bf16.mxu0 0
  %97 = vmatpush1.bf16.msra.mxu0 %v78
  %98 = vmatprep.subr.bf16.mxu0 0
  %99 = vmatpush1.bf16.msra.mxu0 %v79
  %100 = vmatprep.subr.bf16.mxu0 0
  %101 = vmatpush1.bf16.msra.mxu0 %v80
  %102 = vmatprep.subr.bf16.mxu0 0
  %103 = vmatpush1.bf16.msra.mxu0 %v81
  %104 = vmatprep.subr.bf16.mxu0 0
  %105 = vmatpush1.bf16.msra.mxu0 %v82
  %106 = vmatprep.subr.bf16.mxu0 0
  %107 = vmatpush1.bf16.msra.mxu0 %v83
  %108 = vmatprep.subr.bf16.mxu0 0
  %109 = vmatpush1.bf16.msra.mxu0 0
  %110 = vmatprep.subr.bf16.mxu0 0
  %111 = vmatpush1.bf16.msra.mxu0 0
  %112 = vmatprep.subr.bf16.mxu0 0
  %113 = vmatpush1.bf16.msra.mxu0 0
  %114 = vmatprep.subr.bf16.mxu0 0
  %115 = vmatpush1.bf16.msra.mxu0 0
  %116 = vmatprep.subr.bf16.mxu0 0
  %117 = vmatpush1.bf16.msra.mxu0 0
  %118 = vmatprep.subr.bf16.mxu0 0
  %119 = vmatpush1.bf16.msra.mxu0 0
  %120 = vmatprep.subr.bf16.mxu0 0
  %121 = vmatpush1.bf16.msra.mxu0 0
  %122 = vmatprep.subr.bf16.mxu0 0
  %123 = vmatpush1.bf16.msra.mxu0 0
  %124 = vmatprep.mubr.bf16.mxu0 0
  %125 = vmatmul.mubr.bf16.gmra.mrb[0].mxu0 %v40
  %v126 = vpop.f32.mrb[0].mxu0
  %v127 = vadd.f32 0.0, %v126
  %v128 = vpop.f32.mrb[0].mxu0
  %v129 = vpop.f32.mrb[0].mxu0
  %v130 = vadd.f32 0.0, %v129
  %v131 = vpop.f32.mrb[0].mxu0
  %132 = vmatprep.mubr.bf16.mxu0 0
  %133 = vmatmul.mubr.bf16.gmra.mrb[0].mxu0 %v41
  %v134 = vpop.f32.mrb[0].mxu0
  %v135 = vadd.f32 0.0, %v134
  %v136 = vpop.f32.mrb[0].mxu0
  %v137 = vpop.f32.mrb[0].mxu0
  %v138 = vadd.f32 0.0, %v137
  %v139 = vpop.f32.mrb[0].mxu0
  %140 = vdwg.mxu0
  %v141 = vmax.f32 %v127, 0.0
  %v142 = vmax.f32 %v130, 0.0
  %v143 = vmax.f32 %v135, 0.0
  %v144 = vmax.f32 %v138, 0.0
  %145 = vst [vmem:[%s2] sm:$0xff] %v141
  %146 = vst [vmem:[%s2 + $0x8] sm:$0xff] %v142
  %147 = vst [vmem:[%s2 + $0x10] sm:$0xff] %v143
  %148 = vst [vmem:[%s2 + $0x18] sm:$0xff] %v144
  // Predicated region
  $region10: #{forward.112} parent=0 // pred_check
    _
  $region11: #{forward.112} parent=0 // pred_check_branch
    %150 = sbr.rel (0) target = $region13
  $region12: #{forward.112} parent=0 // pred_region
    _
  $region13: #{forward.112} parent=0 // pred_fallthru
    _
  // Predicated region
  $region14: #{forward.112} parent=0 // pred_check
    _
  $region15: #{forward.112} parent=0 // pred_check_branch
    %152 = sbr.rel (0) target = $region17
  $region16: #{forward.112} parent=0 // pred_region
    _
  $region17: #{forward.112} parent=0 // pred_fallthru
    _

// kernel: forward.113
$region0: #{forward.113}
  #allocation0 [shape = 'u32[]', space=smem, size = 0x4, offset = 0x4, fixed_abs, tag = 'smem constant byte address 0x4 - core index']
  #allocation1 [shape = 'u32[144,128]{1,0:T(1,128)}', space=vmem, size = 0x12000, scoped, tag = 'internal scratch']
  %s0 = inlined_call_operand.vmem [shape: bf16[32,288], index: 0, kind: input, shape index: {}]
  %s1 = inlined_call_operand.vmem [shape: bf16[288,128], index: 1, kind: input, shape index: {}]
  %s2 = inlined_call_operand.vmem [shape: f32[32,128], index: 2, kind: output, shape index: {}]
  %s3 = sld [smem:[#allocation0]]
  $region18: #{forward.113} parent=0
    _
  %s5 = ssub.s32 1, %s3
  %s6 = scalar_select 0, %s5, %s3
  // Predicated region
  $region2: #{forward.113} parent=0 // pred_check
    _
  $region3: #{forward.113} parent=0 // pred_check_branch
    %8 = sbr.rel (0) target = $region5
  $region4: #{forward.113} parent=0 // pred_region
    _
  $region5: #{forward.113} parent=0 // pred_fallthru
    _
  // Predicated region
  $region6: #{forward.113} parent=0 // pred_check
    _
  $region7: #{forward.113} parent=0 // pred_check_branch
    %10 = sbr.rel (0) target = $region9
  $region8: #{forward.113} parent=0 // pred_region
    _
  $region9: #{forward.113} parent=0 // pred_fallthru
    _
  %v12 = vld [vmem:[%s0] sm:$0xff]
  %v13 = vld [vmem:[%s0 + $0x8] sm:$0xf]
  %v14 = vld [vmem:[%s0 + $0xc] sm:$0xff]
  %v15 = vld [vmem:[%s0 + $0x14] sm:$0xf]
  %v16 = vld [vmem:[%s0 + $0x18] sm:$0xff]
  %v17 = vld [vmem:[%s0 + $0x20] sm:$0xf]
  %v18 = vld [vmem:[%s0 + $0x24] sm:$0xff]
  %v19 = vld [vmem:[%s0 + $0x2c] sm:$0xf]
  %v20 = vld [vmem:[%s1] sm:$0xf]
  %v21 = vld [vmem:[%s1 + $0x4] sm:$0xf]
  %v22 = vld [vmem:[%s1 + $0x8] sm:$0xf]
  %v23 = vld [vmem:[%s1 + $0xc] sm:$0xf]
  %v24 = vld [vmem:[%s1 + $0x10] sm:$0xf]
  %v25 = vld [vmem:[%s1 + $0x14] sm:$0xf]
  %v26 = vld [vmem:[%s1 + $0x18] sm:$0xf]
  %v27 = vld [vmem:[%s1 + $0x1c] sm:$0xf]
  %v28 = vld [vmem:[%s1 + $0x20] sm:$0xf]
  %v29 = vld [vmem:[%s1 + $0x24] sm:$0xf]
  %v30 = vld [vmem:[%s1 + $0x28] sm:$0xf]
  %v31 = vld [vmem:[%s1 + $0x2c] sm:$0xf]
  %v32 = vld [vmem:[%s1 + $0x30] sm:$0xf]
  %v33 = vld [vmem:[%s1 + $0x34] sm:$0xf]
  %v34 = vld [vmem:[%s1 + $0x38] sm:$0xf]
  %v35 = vld [vmem:[%s1 + $0x3c] sm:$0xf]
  %v36 = vld [vmem:[%s1 + $0x40] sm:$0xf]
  %v37 = vld [vmem:[%s1 + $0x44] sm:$0xf]
  %v38 = vld [vmem:[%s1 + $0x48] sm:$0xf]
  %v39 = vld [vmem:[%s1 + $0x4c] sm:$0xf]
  %v40 = vld [vmem:[%s1 + $0x50] sm:$0xf]
  %v41 = vld [vmem:[%s1 + $0x54] sm:$0xf]
  %v42 = vld [vmem:[%s1 + $0x58] sm:$0xf]
  %v43 = vld [vmem:[%s1 + $0x5c] sm:$0xf]
  %v44 = vld [vmem:[%s1 + $0x60] sm:$0xf]
  %v45 = vld [vmem:[%s1 + $0x64] sm:$0xf]
  %v46 = vld [vmem:[%s1 + $0x68] sm:$0xf]
  %v47 = vld [vmem:[%s1 + $0x6c] sm:$0xf]
  %v48 = vld [vmem:[%s1 + $0x70] sm:$0xf]
  %v49 = vld [vmem:[%s1 + $0x74] sm:$0xf]
  %v50 = vld [vmem:[%s1 + $0x78] sm:$0xf]
  %v51 = vld [vmem:[%s1 + $0x7c] sm:$0xf]
  %v52 = vld [vmem:[%s1 + $0x80] sm:$0xf]
  %v53 = vld [vmem:[%s1 + $0x84] sm:$0xf]
  %v54 = vld [vmem:[%s1 + $0x88] sm:$0xf]
  %v55 = vld [vmem:[%s1 + $0x8c] sm:$0xf]
  %v64 = vunpack.c.l.b16 %v12
  %v65 = vunpack.c.h.b16 %v12
  %v66 = vunpack.c.l.b16 %v13
  %v67 = vunpack.c.l.b16 %v14
  %v68 = vunpack.c.h.b16 %v14
  %v69 = vunpack.c.l.b16 %v15
  %v70 = vunpack.c.l.b16 %v16
  %v71 = vunpack.c.h.b16 %v16
  %v72 = vunpack.c.l.b16 %v17
  %v73 = vunpack.c.l.b16 %v18
  %v74 = vunpack.c.h.b16 %v18
  %v75 = vunpack.c.l.b16 %v19
  %v76 = vpack.c.b16 %v67, %v64
  %v77 = vpack.c.b16 %v68, %v65
  %v78 = vpack.c.b16 %v69, %v66
  %v79 = vpack.c.b16 %v73, %v70
  %v80 = vpack.c.b16 %v74, %v71
  %v81 = vpack.c.b16 %v75, %v72
  %v122 = vunpack.c.l.b16 %v20
  %v123 = vunpack.c.l.b16 %v21
  %v124 = vunpack.c.l.b16 %v22
  %v125 = vunpack.c.l.b16 %v23
  %v126 = vunpack.c.l.b16 %v24
  %v127 = vunpack.c.l.b16 %v25
  %v128 = vunpack.c.l.b16 %v26
  %v129 = vunpack.c.l.b16 %v27
  %v130 = vunpack.c.l.b16 %v28
  %v131 = vunpack.c.l.b16 %v29
  %v132 = vunpack.c.l.b16 %v30
  %v133 = vunpack.c.l.b16 %v31
  %v134 = vunpack.c.l.b16 %v32
  %v135 = vunpack.c.l.b16 %v33
  %v136 = vunpack.c.l.b16 %v34
  %v137 = vunpack.c.l.b16 %v35
  %v138 = vunpack.c.l.b16 %v36
  %v139 = vunpack.c.l.b16 %v37
  %v140 = vunpack.c.l.b16 %v38
  %v141 = vunpack.c.l.b16 %v39
  %v142 = vunpack.c.l.b16 %v40
  %v143 = vunpack.c.l.b16 %v41
  %v144 = vunpack.c.l.b16 %v42
  %v145 = vunpack.c.l.b16 %v43
  %v146 = vunpack.c.l.b16 %v44
  %v147 = vunpack.c.l.b16 %v45
  %v148 = vunpack.c.l.b16 %v46
  %v149 = vunpack.c.l.b16 %v47
  %v150 = vunpack.c.l.b16 %v48
  %v151 = vunpack.c.l.b16 %v49
  %v152 = vunpack.c.l.b16 %v50
  %v153 = vunpack.c.l.b16 %v51
  %v154 = vunpack.c.l.b16 %v52
  %v155 = vunpack.c.l.b16 %v53
  %v156 = vunpack.c.l.b16 %v54
  %v157 = vunpack.c.l.b16 %v55
  %v158 = vpack.c.b16 %v123, %v122
  %v159 = vpack.c.b16 %v125, %v124
  %v160 = vpack.c.b16 %v127, %v126
  %v161 = vpack.c.b16 %v129, %v128
  %v162 = vpack.c.b16 %v131, %v130
  %v163 = vpack.c.b16 %v133, %v132
  %v164 = vpack.c.b16 %v135, %v134
  %v165 = vpack.c.b16 %v137, %v136
  %v166 = vpack.c.b16 %v139, %v138
  %v167 = vpack.c.b16 %v141, %v140
  %v168 = vpack.c.b16 %v143, %v142
  %v169 = vpack.c.b16 %v145, %v144
  %v170 = vpack.c.b16 %v147, %v146
  %v171 = vpack.c.b16 %v149, %v148
  %v172 = vpack.c.b16 %v151, %v150
  %v173 = vpack.c.b16 %v153, %v152
  %v174 = vpack.c.b16 %v155, %v154
  %v175 = vpack.c.b16 %v157, %v156
  %vm194 = vcmask 261120
  %v196 = vsel %vm194, %v78, 0
  %v199 = vsel %vm194, %v81, 0
  %201 = vmatprep.subr.bf16.mxu0 0
  %202 = vmatpush1.bf16.msra.mxu0 %v158
  %203 = vmatprep.subr.bf16.mxu0 0
  %204 = vmatpush1.bf16.msra.mxu0 %v159
  %205 = vmatprep.subr.bf16.mxu0 0
  %206 = vmatpush1.bf16.msra.mxu0 %v160
  %207 = vmatprep.subr.bf16.mxu0 0
  %208 = vmatpush1.bf16.msra.mxu0 %v161
  %209 = vmatprep.subr.bf16.mxu0 0
  %210 = vmatpush1.bf16.msra.mxu0 %v162
  %211 = vmatprep.subr.bf16.mxu0 0
  %212 = vmatpush1.bf16.msra.mxu0 %v163
  %213 = vmatprep.subr.bf16.mxu0 0
  %214 = vmatpush1.bf16.msra.mxu0 %v164
  %215 = vmatprep.subr.bf16.mxu0 0
  %216 = vmatpush1.bf16.msra.mxu0 %v165
  %217 = vmatprep.subr.bf16.mxu0 0
  %218 = vmatpush1.bf16.msra.mxu0 %v166
  %219 = vmatprep.subr.bf16.mxu0 0
  %220 = vmatpush1.bf16.msra.mxu0 %v167
  %221 = vmatprep.subr.bf16.mxu0 0
  %222 = vmatpush1.bf16.msra.mxu0 %v168
  %223 = vmatprep.subr.bf16.mxu0 0
  %224 = vmatpush1.bf16.msra.mxu0 %v169
  %225 = vmatprep.subr.bf16.mxu0 0
  %226 = vmatpush1.bf16.msra.mxu0 %v170
  %227 = vmatprep.subr.bf16.mxu0 0
  %228 = vmatpush1.bf16.msra.mxu0 %v171
  %229 = vmatprep.subr.bf16.mxu0 0
  %230 = vmatpush1.bf16.msra.mxu0 %v172
  %231 = vmatprep.subr.bf16.mxu0 0
  %232 = vmatpush1.bf16.msra.mxu0 %v173
  %233 = vmatprep.mubr.bf16.mxu0 %v77
  %234 = vmatmul.mubr.bf16.gmra.mrb[0].mxu0 %v76
  %v235 = vpop.f32.mrb[0].mxu0
  %v236 = vadd.f32 0.0, %v235
  %v237 = vpop.f32.mrb[0].mxu0
  %v238 = vpop.f32.mrb[0].mxu0
  %v239 = vadd.f32 0.0, %v238
  %v240 = vpop.f32.mrb[0].mxu0
  %241 = vmatprep.mubr.bf16.mxu0 %v80
  %242 = vmatmul.mubr.bf16.gmra.mrb[0].mxu0 %v79
  %v243 = vpop.f32.mrb[0].mxu0
  %v244 = vadd.f32 0.0, %v243
  %v245 = vpop.f32.mrb[0].mxu0
  %v246 = vpop.f32.mrb[0].mxu0
  %v247 = vadd.f32 0.0, %v246
  %v248 = vpop.f32.mrb[0].mxu0
  %249 = vdwg.mxu0
  %250 = vmatprep.subr.bf16.mxu0 0
  %251 = vmatpush1.bf16.msra.mxu0 %v174
  %252 = vmatprep.subr.bf16.mxu0 0
  %253 = vmatpush1.bf16.msra.mxu0 %v175
  %254 = vmatprep.subr.bf16.mxu0 0
  %255 = vmatpush1.bf16.msra.mxu0 0
  %256 = vmatprep.subr.bf16.mxu0 0
  %257 = vmatpush1.bf16.msra.mxu0 0
  %258 = vmatprep.subr.bf16.mxu0 0
  %259 = vmatpush1.bf16.msra.mxu0 0
  %260 = vmatprep.subr.bf16.mxu0 0
  %261 = vmatpush1.bf16.msra.mxu0 0
  %262 = vmatprep.subr.bf16.mxu0 0
  %263 = vmatpush1.bf16.msra.mxu0 0
  %264 = vmatprep.subr.bf16.mxu0 0
  %265 = vmatpush1.bf16.msra.mxu0 0
  %266 = vmatprep.subr.bf16.mxu0 0
  %267 = vmatpush1.bf16.msra.mxu0 0
  %268 = vmatprep.subr.bf16.mxu0 0
  %269 = vmatpush1.bf16.msra.mxu0 0
  %270 = vmatprep.subr.bf16.mxu0 0
  %271 = vmatpush1.bf16.msra.mxu0 0
  %272 = vmatprep.subr.bf16.mxu0 0
  %273 = vmatpush1.bf16.msra.mxu0 0
  %274 = vmatprep.subr.bf16.mxu0 0
  %275 = vmatpush1.bf16.msra.mxu0 0
  %276 = vmatprep.subr.bf16.mxu0 0
  %277 = vmatpush1.bf16.msra.mxu0 0
  %278 = vmatprep.subr.bf16.mxu0 0
  %279 = vmatpush1.bf16.msra.mxu0 0
  %280 = vmatprep.subr.bf16.mxu0 0
  %281 = vmatpush1.bf16.msra.mxu0 0
  %282 = vmatprep.mubr.bf16.mxu0 0
  %283 = vmatmul.mubr.bf16.gmra.mrb[0].mxu0 %v196
  %v284 = vpop.f32.mrb[0].mxu0
  %v285 = vadd.f32 %v236, %v284
  %v286 = vpop.f32.mrb[0].mxu0
  %v287 = vpop.f32.mrb[0].mxu0
  %v288 = vadd.f32 %v239, %v287
  %v289 = vpop.f32.mrb[0].mxu0
  %290 = vmatprep.mubr.bf16.mxu0 0
  %291 = vmatmul.mubr.bf16.gmra.mrb[0].mxu0 %v199
  %v292 = vpop.f32.mrb[0].mxu0
  %v293 = vadd.f32 %v244, %v292
  %v294 = vpop.f32.mrb[0].mxu0
  %v295 = vpop.f32.mrb[0].mxu0
  %v296 = vadd.f32 %v247, %v295
  %v297 = vpop.f32.mrb[0].mxu0
  %298 = vdwg.mxu0
  %v299 = vmax.f32 %v285, 0.0
  %v300 = vmax.f32 %v288, 0.0
  %v301 = vmax.f32 %v293, 0.0
  %v302 = vmax.f32 %v296, 0.0
  %303 = vst [vmem:[%s2] sm:$0xff] %v299
  %304 = vst [vmem:[%s2 + $0x8] sm:$0xff] %v300
  %305 = vst [vmem:[%s2 + $0x10] sm:$0xff] %v301
  %306 = vst [vmem:[%s2 + $0x18] sm:$0xff] %v302
  // Predicated region
  $region10: #{forward.113} parent=0 // pred_check
    _
  $region11: #{forward.113} parent=0 // pred_check_branch
    %308 = sbr.rel (0) target = $region13
  $region12: #{forward.113} parent=0 // pred_region
    _
  $region13: #{forward.113} parent=0 // pred_fallthru
    _
  // Predicated region
  $region14: #{forward.113} parent=0 // pred_check
    _
  $region15: #{forward.113} parent=0 // pred_check_branch
    %310 = sbr.rel (0) target = $region17
  $region16: #{forward.113} parent=0 // pred_region
    _
  $region17: #{forward.113} parent=0 // pred_fallthru
    _

// kernel: forward.114
$region0: #{forward.114}
  #allocation0 [shape = 'u32[]', space=smem, size = 0x4, offset = 0x4, fixed_abs, tag = 'smem constant byte address 0x4 - core index']
  #allocation1 [shape = 'u32[144,128]{1,0:T(1,128)}', space=vmem, size = 0x12000, scoped, tag = 'internal scratch']
  %s0 = inlined_call_operand.vmem [shape: bf16[32,32], index: 0, kind: input, shape index: {}]
  %s1 = inlined_call_operand.vmem [shape: bf16[32,128], index: 1, kind: input, shape index: {}]
  %s2 = inlined_call_operand.vmem [shape: f32[32,128], index: 2, kind: input, shape index: {}]
  %s3 = inlined_call_operand.vmem [shape: f32[32,128], index: 3, kind: output, shape index: {}]
  %s4 = sld [smem:[#allocation0]]
  $region22: #{forward.114} parent=0
    _
  %s6 = ssub.s32 1, %s4
  %s7 = scalar_select 0, %s6, %s4
  // Predicated region
  $region2: #{forward.114} parent=0 // pred_check
    _
  $region3: #{forward.114} parent=0 // pred_check_branch
    %9 = sbr.rel (0) target = $region5
  $region4: #{forward.114} parent=0 // pred_region
    _
  $region5: #{forward.114} parent=0 // pred_fallthru
    _
  // Predicated region
  $region6: #{forward.114} parent=0 // pred_check
    _
  $region7: #{forward.114} parent=0 // pred_check_branch
    %11 = sbr.rel (0) target = $region9
  $region8: #{forward.114} parent=0 // pred_region
    _
  $region9: #{forward.114} parent=0 // pred_fallthru
    _
  // Predicated region
  $region10: #{forward.114} parent=0 // pred_check
    _
  $region11: #{forward.114} parent=0 // pred_check_branch
    %13 = sbr.rel (0) target = $region13
  $region12: #{forward.114} parent=0 // pred_region
    _
  $region13: #{forward.114} parent=0 // pred_fallthru
    _
  %v15 = vld [vmem:[%s0] sm:$0xf]
  %v16 = vld [vmem:[%s0 + $0x4] sm:$0xf]
  %v17 = vld [vmem:[%s0 + $0x8] sm:$0xf]
  %v18 = vld [vmem:[%s0 + $0xc] sm:$0xf]
  %v19 = vld [vmem:[%s1] sm:$0xf]
  %v20 = vld [vmem:[%s1 + $0x4] sm:$0xf]
  %v21 = vld [vmem:[%s1 + $0x8] sm:$0xf]
  %v22 = vld [vmem:[%s1 + $0xc] sm:$0xf]
  %v23 = vld [vmem:[%s2] sm:$0xff]
  %v24 = vld [vmem:[%s2 + $0x8] sm:$0xff]
  %v25 = vld [vmem:[%s2 + $0x10] sm:$0xff]
  %v26 = vld [vmem:[%s2 + $0x18] sm:$0xff]
  %v31 = vunpack.c.l.b16 %v15
  %v32 = vunpack.c.l.b16 %v16
  %v33 = vunpack.c.l.b16 %v17
  %v34 = vunpack.c.l.b16 %v18
  %v35 = vpack.c.b16 %v32, %v31
  %v36 = vpack.c.b16 %v34, %v33
  %v41 = vunpack.c.l.b16 %v19
  %v42 = vunpack.c.l.b16 %v20
  %v43 = vunpack.c.l.b16 %v21
  %v44 = vunpack.c.l.b16 %v22
  %v45 = vpack.c.b16 %v42, %v41
  %v46 = vpack.c.b16 %v44, %v43
  %vm49 = vcmask 261120
  %v51 = vsel %vm49, %v35, 0
  %v54 = vsel %vm49, %v36, 0
  %56 = vmatprep.subr.bf16.mxu0 0
  %57 = vmatpush1.bf16.msra.mxu0 %v45
  %58 = vmatprep.subr.bf16.mxu0 0
  %59 = vmatpush1.bf16.msra.mxu0 %v46
  %60 = vmatprep.subr.bf16.mxu0 0
  %61 = vmatpush1.bf16.msra.mxu0 0
  %62 = vmatprep.subr.bf16.mxu0 0
  %63 = vmatpush1.bf16.msra.mxu0 0
  %64 = vmatprep.subr.bf16.mxu0 0
  %65 = vmatpush1.bf16.msra.mxu0 0
  %66 = vmatprep.subr.bf16.mxu0 0
  %67 = vmatpush1.bf16.msra.mxu0 0
  %68 = vmatprep.subr.bf16.mxu0 0
  %69 = vmatpush1.bf16.msra.mxu0 0
  %70 = vmatprep.subr.bf16.mxu0 0
  %71 = vmatpush1.bf16.msra.mxu0 0
  %72 = vmatprep.subr.bf16.mxu0 0
  %73 = vmatpush1.bf16.msra.mxu0 0
  %74 = vmatprep.subr.bf16.mxu0 0
  %75 = vmatpush1.bf16.msra.mxu0 0
  %76 = vmatprep.subr.bf16.mxu0 0
  %77 = vmatpush1.bf16.msra.mxu0 0
  %78 = vmatprep.subr.bf16.mxu0 0
  %79 = vmatpush1.bf16.msra.mxu0 0
  %80 = vmatprep.subr.bf16.mxu0 0
  %81 = vmatpush1.bf16.msra.mxu0 0
  %82 = vmatprep.subr.bf16.mxu0 0
  %83 = vmatpush1.bf16.msra.mxu0 0
  %84 = vmatprep.subr.bf16.mxu0 0
  %85 = vmatpush1.bf16.msra.mxu0 0
  %86 = vmatprep.subr.bf16.mxu0 0
  %87 = vmatpush1.bf16.msra.mxu0 0
  %88 = vmatprep.mubr.bf16.mxu0 0
  %89 = vmatmul.mubr.bf16.gmra.mrb[0].mxu0 %v51
  %v90 = vpop.f32.mrb[0].mxu0
  %v91 = vadd.f32 %v23, %v90
  %v92 = vpop.f32.mrb[0].mxu0
  %v93 = vpop.f32.mrb[0].mxu0
  %v94 = vadd.f32 %v24, %v93
  %v95 = vpop.f32.mrb[0].mxu0
  %96 = vmatprep.mubr.bf16.mxu0 0
  %97 = vmatmul.mubr.bf16.gmra.mrb[0].mxu0 %v54
  %v98 = vpop.f32.mrb[0].mxu0
  %v99 = vadd.f32 %v25, %v98
  %v100 = vpop.f32.mrb[0].mxu0
  %v101 = vpop.f32.mrb[0].mxu0
  %v102 = vadd.f32 %v26, %v101
  %v103 = vpop.f32.mrb[0].mxu0
  %104 = vdwg.mxu0
  %vm105 = vcmp.ge.f32.partialorder %v91, 0.0
  %vm106 = vcmp.ge.f32.partialorder %v94, 0.0
  %vm107 = vcmp.ge.f32.partialorder %v99, 0.0
  %vm108 = vcmp.ge.f32.partialorder %v102, 0.0
  %v109 = vmul.f32 %v91, 0.25
  %v110 = vmul.f32 %v94, 0.25
  %v111 = vmul.f32 %v99, 0.25
  %v112 = vmul.f32 %v102, 0.25
  %v113 = vsel %vm105, %v91, %v109
  %v114 = vsel %vm106, %v94, %v110
  %v115 = vsel %vm107, %v99, %v111
  %v116 = vsel %vm108, %v102, %v112
  %117 = vst [vmem:[%s3] sm:$0xff] %v113
  %118 = vst [vmem:[%s3 + $0x8] sm:$0xff] %v114
  %119 = vst [vmem:[%s3 + $0x10] sm:$0xff] %v115
  %120 = vst [vmem:[%s3 + $0x18] sm:$0xff] %v116
  // Predicated region
  $region14: #{forward.114} parent=0 // pred_check
    _
  $region15: #{forward.114} parent=0 // pred_check_branch
    %122 = sbr.rel (0) target = $region17
  $region16: #{forward.114} parent=0 // pred_region
    _
  $region17: #{forward.114} parent=0 // pred_fallthru
    _
  // Predicated region
  $region18: #{forward.114} parent=0 // pred_check
    _
  $region19: #{forward.114} parent=0 // pred_check_branch
    %124 = sbr.rel (0) target = $region21
  $region20: #{forward.114} parent=0 // pred_region
    _
  $region21: #{forward.114} parent=0 // pred_fallthru
    _

// kernel: forward.119
$region0: #{forward.119}
  #allocation0 [shape = 'u32[]', space=smem, size = 0x4, offset = 0x4, fixed_abs, tag = 'smem constant byte address 0x4 - core index']
  #allocation1 [shape = 'u32[144,128]{1,0:T(1,128)}', space=vmem, size = 0x12000, scoped, tag = 'internal scratch']
  %s0 = inlined_call_operand.vmem [shape: bf16[32,160], index: 0, kind: input, shape index: {}]
  %s1 = inlined_call_operand.vmem [shape: bf16[160,128], index: 1, kind: input, shape index: {}]
  %s2 = inlined_call_operand.vmem [shape: f32[32,128], index: 2, kind: output, shape index: {}]
  %s3 = sld [smem:[#allocation0]]
  $region18: #{forward.119} parent=0
    _
  %s5 = ssub.s32 1, %s3
  %s6 = scalar_select 0, %s5, %s3
  // Predicated region
  $region2: #{forward.119} parent=0 // pred_check
    _
  $region3: #{forward.119} parent=0 // pred_check_branch
    %8 = sbr.rel (0) target = $region5
  $region4: #{forward.119} parent=0 // pred_region
    _
  $region5: #{forward.119} parent=0 // pred_fallthru
    _
  // Predicated region
  $region6: #{forward.119} parent=0 // pred_check
    _
  $region7: #{forward.119} parent=0 // pred_check_branch
    %10 = sbr.rel (0) target = $region9
  $region8: #{forward.119} parent=0 // pred_region
    _
  $region9: #{forward.119} parent=0 // pred_fallthru
    _
  %v12 = vld [vmem:[%s0] sm:$0xff]
  %v13 = vld [vmem:[%s0 + $0x8] sm:$0xff]
  %v14 = vld [vmem:[%s0 + $0x10] sm:$0xff]
  %v15 = vld [vmem:[%s0 + $0x18] sm:$0xff]
  %v16 = vld [vmem:[%s1] sm:$0xf]
  %v17 = vld [vmem:[%s1 + $0x4] sm:$0xf]
  %v18 = vld [vmem:[%s1 + $0x8] sm:$0xf]
  %v19 = vld [vmem:[%s1 + $0xc] sm:$0xf]
  %v20 = vld [vmem:[%s1 + $0x10] sm:$0xf]
  %v21 = vld [vmem:[%s1 + $0x14] sm:$0xf]
  %v22 = vld [vmem:[%s1 + $0x18] sm:$0xf]
  %v23 = vld [vmem:[%s1 + $0x1c] sm:$0xf]
  %v24 = vld [vmem:[%s1 + $0x20] sm:$0xf]
  %v25 = vld [vmem:[%s1 + $0x24] sm:$0xf]
  %v26 = vld [vmem:[%s1 + $0x28] sm:$0xf]
  %v27 = vld [vmem:[%s1 + $0x2c] sm:$0xf]
  %v28 = vld [vmem:[%s1 + $0x30] sm:$0xf]
  %v29 = vld [vmem:[%s1 + $0x34] sm:$0xf]
  %v30 = vld [vmem:[%s1 + $0x38] sm:$0xf]
  %v31 = vld [vmem:[%s1 + $0x3c] sm:$0xf]
  %v32 = vld [vmem:[%s1 + $0x40] sm:$0xf]
  %v33 = vld [vmem:[%s1 + $0x44] sm:$0xf]
  %v34 = vld [vmem:[%s1 + $0x48] sm:$0xf]
  %v35 = vld [vmem:[%s1 + $0x4c] sm:$0xf]
  %v40 = vunpack.c.l.b16 %v12
  %v41 = vunpack.c.h.b16 %v12
  %v42 = vunpack.c.l.b16 %v13
  %v43 = vunpack.c.h.b16 %v13
  %v44 = vunpack.c.l.b16 %v14
  %v45 = vunpack.c.h.b16 %v14
  %v46 = vunpack.c.l.b16 %v15
  %v47 = vunpack.c.h.b16 %v15
  %v48 = vpack.c.b16 %v42, %v40
  %v49 = vpack.c.b16 %v43, %v41
  %v50 = vpack.c.b16 %v46, %v44
  %v51 = vpack.c.b16 %v47, %v45
  %v74 = vunpack.c.l.b16 %v16
  %v75 = vunpack.c.l.b16 %v17
  %v76 = vunpack.c.l.b16 %v18
  %v77 = vunpack.c.l.b16 %v19
  %v78 = vunpack.c.l.b16 %v20
  %v79 = vunpack.c.l.b16 %v21
  %v80 = vunpack.c.l.b16 %v22
  %v81 = vunpack.c.l.b16 %v23
  %v82 = vunpack.c.l.b16 %v24
  %v83 = vunpack.c.l.b16 %v25
  %v84 = vunpack.c.l.b16 %v26
  %v85 = vunpack.c.l.b16 %v27
  %v86 = vunpack.c.l.b16 %v28
  %v87 = vunpack.c.l.b16 %v29
  %v88 = vunpack.c.l.b16 %v30
  %v89 = vunpack.c.l.b16 %v31
  %v90 = vunpack.c.l.b16 %v32
  %v91 = vunpack.c.l.b16 %v33
  %v92 = vunpack.c.l.b16 %v34
  %v93 = vunpack.c.l.b16 %v35
  %v94 = vpack.c.b16 %v75, %v74
  %v95 = vpack.c.b16 %v77, %v76
  %v96 = vpack.c.b16 %v79, %v78
  %v97 = vpack.c.b16 %v81, %v80
  %v98 = vpack.c.b16 %v83, %v82
  %v99 = vpack.c.b16 %v85, %v84
  %v100 = vpack.c.b16 %v87, %v86
  %v101 = vpack.c.b16 %v89, %v88
  %v102 = vpack.c.b16 %v91, %v90
  %v103 = vpack.c.b16 %v93, %v92
  %vm114 = vcmask 261120
  %v116 = vsel %vm114, %v49, 0
  %v119 = vsel %vm114, %v51, 0
  %121 = vmatprep.subr.bf16.mxu0 0
  %122 = vmatpush1.bf16.msra.mxu0 %v94
  %123 = vmatprep.subr.bf16.mxu0 0
  %124 = vmatpush1.bf16.msra.mxu0 %v95
  %125 = vmatprep.subr.bf16.mxu0 0
  %126 = vmatpush1.bf16.msra.mxu0 %v96
  %127 = vmatprep.subr.bf16.mxu0 0
  %128 = vmatpush1.bf16.msra.mxu0 %v97
  %129 = vmatprep.subr.bf16.mxu0 0
  %130 = vmatpush1.bf16.msra.mxu0 %v98
  %131 = vmatprep.subr.bf16.mxu0 0
  %132 = vmatpush1.bf16.msra.mxu0 %v99
  %133 = vmatprep.subr.bf16.mxu0 0
  %134 = vmatpush1.bf16.msra.mxu0 %v100
  %135 = vmatprep.subr.bf16.mxu0 0
  %136 = vmatpush1.bf16.msra.mxu0 %v101
  %137 = vmatprep.subr.bf16.mxu0 0
  %138 = vmatpush1.bf16.msra.mxu0 %v102
  %139 = vmatprep.subr.bf16.mxu0 0
  %140 = vmatpush1.bf16.msra.mxu0 %v103
  %141 = vmatprep.subr.bf16.mxu0 0
  %142 = vmatpush1.bf16.msra.mxu0 0
  %143 = vmatprep.subr.bf16.mxu0 0
  %144 = vmatpush1.bf16.msra.mxu0 0
  %145 = vmatprep.subr.bf16.mxu0 0
  %146 = vmatpush1.bf16.msra.mxu0 0
  %147 = vmatprep.subr.bf16.mxu0 0
  %148 = vmatpush1.bf16.msra.mxu0 0
  %149 = vmatprep.subr.bf16.mxu0 0
  %150 = vmatpush1.bf16.msra.mxu0 0
  %151 = vmatprep.subr.bf16.mxu0 0
  %152 = vmatpush1.bf16.msra.mxu0 0
  %153 = vmatprep.mubr.bf16.mxu0 %v116
  %154 = vmatmul.mubr.bf16.gmra.mrb[0].mxu0 %v48
  %v155 = vpop.f32.mrb[0].mxu0
  %v156 = vadd.f32 0.0, %v155
  %v157 = vpop.f32.mrb[0].mxu0
  %v158 = vpop.f32.mrb[0].mxu0
  %v159 = vadd.f32 0.0, %v158
  %v160 = vpop.f32.mrb[0].mxu0
  %161 = vmatprep.mubr.bf16.mxu0 %v119
  %162 = vmatmul.mubr.bf16.gmra.mrb[0].mxu0 %v50
  %v163 = vpop.f32.mrb[0].mxu0
  %v164 = vadd.f32 0.0, %v163
  %v165 = vpop.f32.mrb[0].mxu0
  %v166 = vpop.f32.mrb[0].mxu0
  %v167 = vadd.f32 0.0, %v166
  %v168 = vpop.f32.mrb[0].mxu0
  %169 = vdwg.mxu0
  %v170 = vmax.f32 %v156, 0.0
  %v171 = vmax.f32 %v159, 0.0
  %v172 = vmax.f32 %v164, 0.0
  %v173 = vmax.f32 %v167, 0.0
  %174 = vst [vmem:[%s2] sm:$0xff] %v170
  %175 = vst [vmem:[%s2 + $0x8] sm:$0xff] %v171
  %176 = vst [vmem:[%s2 + $0x10] sm:$0xff] %v172
  %177 = vst [vmem:[%s2 + $0x18] sm:$0xff] %v173
  // Predicated region
  $region10: #{forward.119} parent=0 // pred_check
    _
  $region11: #{forward.119} parent=0 // pred_check_branch
    %179 = sbr.rel (0) target = $region13
  $region12: #{forward.119} parent=0 // pred_region
    _
  $region13: #{forward.119} parent=0 // pred_fallthru
    _
  // Predicated region
  $region14: #{forward.119} parent=0 // pred_check
    _
  $region15: #{forward.119} parent=0 // pred_check_branch
    %181 = sbr.rel (0) target = $region17
  $region16: #{forward.119} parent=0 // pred_region
    _
  $region17: #{forward.119} parent=0 // pred_fallthru
    _

// kernel: forward.166
$region0: #{forward.166}
  #allocation0 [shape = 'u32[]', space=smem, size = 0x4, offset = 0x4, fixed_abs, tag = 'smem constant byte address 0x4 - core index']
  #allocation1 [shape = 'u32[144,128]{1,0:T(1,128)}', space=vmem, size = 0x12000, scoped, tag = 'internal scratch']
  %s0 = inlined_call_operand.vmem [shape: bf16[32,128], index: 0, kind: input, shape index: {}]
  %s1 = inlined_call_operand.vmem [shape: bf16[128,128], index: 1, kind: input, shape index: {}]
  %s2 = inlined_call_operand.vmem [shape: f32[32,128], index: 2, kind: output, shape index: {}]
  %s3 = sld [smem:[#allocation0]]
  $region18: #{forward.166} parent=0
    _
  %s5 = ssub.s32 1, %s3
  %s6 = scalar_select 0, %s5, %s3
  // Predicated region
  $region2: #{forward.166} parent=0 // pred_check
    _
  $region3: #{forward.166} parent=0 // pred_check_branch
    %8 = sbr.rel (0) target = $region5
  $region4: #{forward.166} parent=0 // pred_region
    _
  $region5: #{forward.166} parent=0 // pred_fallthru
    _
  // Predicated region
  $region6: #{forward.166} parent=0 // pred_check
    _
  $region7: #{forward.166} parent=0 // pred_check_branch
    %10 = sbr.rel (0) target = $region9
  $region8: #{forward.166} parent=0 // pred_region
    _
  $region9: #{forward.166} parent=0 // pred_fallthru
    _
  %v12 = vld [vmem:[%s0] sm:$0xf]
  %v13 = vld [vmem:[%s0 + $0x4] sm:$0xf]
  %v14 = vld [vmem:[%s0 + $0x8] sm:$0xf]
  %v15 = vld [vmem:[%s0 + $0xc] sm:$0xf]
  %v16 = vld [vmem:[%s1] sm:$0xf]
  %v17 = vld [vmem:[%s1 + $0x4] sm:$0xf]
  %v18 = vld [vmem:[%s1 + $0x8] sm:$0xf]
  %v19 = vld [vmem:[%s1 + $0xc] sm:$0xf]
  %v20 = vld [vmem:[%s1 + $0x10] sm:$0xf]
  %v21 = vld [vmem:[%s1 + $0x14] sm:$0xf]
  %v22 = vld [vmem:[%s1 + $0x18] sm:$0xf]
  %v23 = vld [vmem:[%s1 + $0x1c] sm:$0xf]
  %v24 = vld [vmem:[%s1 + $0x20] sm:$0xf]
  %v25 = vld [vmem:[%s1 + $0x24] sm:$0xf]
  %v26 = vld [vmem:[%s1 + $0x28] sm:$0xf]
  %v27 = vld [vmem:[%s1 + $0x2c] sm:$0xf]
  %v28 = vld [vmem:[%s1 + $0x30] sm:$0xf]
  %v29 = vld [vmem:[%s1 + $0x34] sm:$0xf]
  %v30 = vld [vmem:[%s1 + $0x38] sm:$0xf]
  %v31 = vld [vmem:[%s1 + $0x3c] sm:$0xf]
  %v36 = vunpack.c.l.b16 %v12
  %v37 = vunpack.c.l.b16 %v13
  %v38 = vunpack.c.l.b16 %v14
  %v39 = vunpack.c.l.b16 %v15
  %v40 = vpack.c.b16 %v37, %v36
  %v41 = vpack.c.b16 %v39, %v38
  %v60 = vunpack.c.l.b16 %v16
  %v61 = vunpack.c.l.b16 %v17
  %v62 = vunpack.c.l.b16 %v18
  %v63 = vunpack.c.l.b16 %v19
  %v64 = vunpack.c.l.b16 %v20
  %v65 = vunpack.c.l.b16 %v21
  %v66 = vunpack.c.l.b16 %v22
  %v67 = vunpack.c.l.b16 %v23
  %v68 = vunpack.c.l.b16 %v24
  %v69 = vunpack.c.l.b16 %v25
  %v70 = vunpack.c.l.b16 %v26
  %v71 = vunpack.c.l.b16 %v27
  %v72 = vunpack.c.l.b16 %v28
  %v73 = vunpack.c.l.b16 %v29
  %v74 = vunpack.c.l.b16 %v30
  %v75 = vunpack.c.l.b16 %v31
  %v76 = vpack.c.b16 %v61, %v60
  %v77 = vpack.c.b16 %v63, %v62
  %v78 = vpack.c.b16 %v65, %v64
  %v79 = vpack.c.b16 %v67, %v66
  %v80 = vpack.c.b16 %v69, %v68
  %v81 = vpack.c.b16 %v71, %v70
  %v82 = vpack.c.b16 %v73, %v72
  %v83 = vpack.c.b16 %v75, %v74
  %92 = vmatprep.subr.bf16.mxu0 0
  %93 = vmatpush1.bf16.msra.mxu0 %v76
  %94 = vmatprep.subr.bf16.mxu0 0
  %95 = vmatpush1.bf16.msra.mxu0 %v77
  %96 = vmatprep.subr.bf16.mxu0 0
  %97 = vmatpush1.bf16.msra.mxu0 %v78
  %98 = vmatprep.subr.bf16.mxu0 0
  %99 = vmatpush1.bf16.msra.mxu0 %v79
  %100 = vmatprep.subr.bf16.mxu0 0
  %101 = vmatpush1.bf16.msra.mxu0 %v80
  %102 = vmatprep.subr.bf16.mxu0 0
  %103 = vmatpush1.bf16.msra.mxu0 %v81
  %104 = vmatprep.subr.bf16.mxu0 0
  %105 = vmatpush1.bf16.msra.mxu0 %v82
  %106 = vmatprep.subr.bf16.mxu0 0
  %107 = vmatpush1.bf16.msra.mxu0 %v83
  %108 = vmatprep.subr.bf16.mxu0 0
  %109 = vmatpush1.bf16.msra.mxu0 0
  %110 = vmatprep.subr.bf16.mxu0 0
  %111 = vmatpush1.bf16.msra.mxu0 0
  %112 = vmatprep.subr.bf16.mxu0 0
  %113 = vmatpush1.bf16.msra.mxu0 0
  %114 = vmatprep.subr.bf16.mxu0 0
  %115 = vmatpush1.bf16.msra.mxu0 0
  %116 = vmatprep.subr.bf16.mxu0 0
  %117 = vmatpush1.bf16.msra.mxu0 0
  %118 = vmatprep.subr.bf16.mxu0 0
  %119 = vmatpush1.bf16.msra.mxu0 0
  %120 = vmatprep.subr.bf16.mxu0 0
  %121 = vmatpush1.bf16.msra.mxu0 0
  %122 = vmatprep.subr.bf16.mxu0 0
  %123 = vmatpush1.bf16.msra.mxu0 0
  %124 = vmatprep.mubr.bf16.mxu0 0
  %125 = vmatmul.mubr.bf16.gmra.mrb[0].mxu0 %v40
  %v126 = vpop.f32.mrb[0].mxu0
  %v127 = vadd.f32 0.0, %v126
  %v128 = vpop.f32.mrb[0].mxu0
  %v129 = vpop.f32.mrb[0].mxu0
  %v130 = vadd.f32 0.0, %v129
  %v131 = vpop.f32.mrb[0].mxu0
  %132 = vmatprep.mubr.bf16.mxu0 0
  %133 = vmatmul.mubr.bf16.gmra.mrb[0].mxu0 %v41
  %v134 = vpop.f32.mrb[0].mxu0
  %v135 = vadd.f32 0.0, %v134
  %v136 = vpop.f32.mrb[0].mxu0
  %v137 = vpop.f32.mrb[0].mxu0
  %v138 = vadd.f32 0.0, %v137
  %v139 = vpop.f32.mrb[0].mxu0
  %140 = vdwg.mxu0
  %141 = vst [vmem:[%s2] sm:$0xff] %v127
  %142 = vst [vmem:[%s2 + $0x8] sm:$0xff] %v130
  %143 = vst [vmem:[%s2 + $0x10] sm:$0xff] %v135
  %144 = vst [vmem:[%s2 + $0x18] sm:$0xff] %v138
  // Predicated region
  $region10: #{forward.166} parent=0 // pred_check
    _
  $region11: #{forward.166} parent=0 // pred_check_branch
    %146 = sbr.rel (0) target = $region13
  $region12: #{forward.166} parent=0 // pred_region
    _
  $region13: #{forward.166} parent=0 // pred_fallthru
    _
  // Predicated region
  $region14: #{forward.166} parent=0 // pred_check
    _
  $region15: #{forward.166} parent=0 // pred_check_branch
    %148 = sbr.rel (0) target = $region17
  $region16: #{forward.166} parent=0 // pred_region
    _
  $region17: #{forward.166} parent=0 // pred_fallthru
    _

// kernel: forward.167
$region0: #{forward.167}
  #allocation0 [shape = 'u32[]', space=smem, size = 0x4, offset = 0x4, fixed_abs, tag = 'smem constant byte address 0x4 - core index']
  #allocation1 [shape = 'u32[144,128]{1,0:T(1,128)}', space=vmem, size = 0x12000, scoped, tag = 'internal scratch']
  %s0 = inlined_call_operand.vmem [shape: bf16[128,32], index: 0, kind: input, shape index: {}]
  %s1 = inlined_call_operand.vmem [shape: bf16[32,128], index: 1, kind: input, shape index: {}]
  %s2 = inlined_call_operand.vmem [shape: f32[128,128], index: 2, kind: input, shape index: {}]
  %s3 = inlined_call_operand.vmem [shape: f32[128,128], index: 3, kind: output, shape index: {}]
  %s4 = sld [smem:[#allocation0]]
  $region22: #{forward.167} parent=0
    _
  %s6 = ssub.s32 1, %s4
  %s7 = scalar_select 0, %s6, %s4
  // Predicated region
  $region2: #{forward.167} parent=0 // pred_check
    _
  $region3: #{forward.167} parent=0 // pred_check_branch
    %9 = sbr.rel (0) target = $region5
  $region4: #{forward.167} parent=0 // pred_region
    _
  $region5: #{forward.167} parent=0 // pred_fallthru
    _
  // Predicated region
  $region6: #{forward.167} parent=0 // pred_check
    _
  $region7: #{forward.167} parent=0 // pred_check_branch
    %11 = sbr.rel (0) target = $region9
  $region8: #{forward.167} parent=0 // pred_region
    _
  $region9: #{forward.167} parent=0 // pred_fallthru
    _
  // Predicated region
  $region10: #{forward.167} parent=0 // pred_check
    _
  $region11: #{forward.167} parent=0 // pred_check_branch
    %13 = sbr.rel (0) target = $region13
  $region12: #{forward.167} parent=0 // pred_region
    _
  $region13: #{forward.167} parent=0 // pred_fallthru
    _
  %v15 = vld [vmem:[%s0] sm:$0xf]
  %v16 = vld [vmem:[%s0 + $0x4] sm:$0xf]
  %v17 = vld [vmem:[%s0 + $0x8] sm:$0xf]
  %v18 = vld [vmem:[%s0 + $0xc] sm:$0xf]
  %v19 = vld [vmem:[%s0 + $0x10] sm:$0xf]
  %v20 = vld [vmem:[%s0 + $0x14] sm:$0xf]
  %v21 = vld [vmem:[%s0 + $0x18] sm:$0xf]
  %v22 = vld [vmem:[%s0 + $0x1c] sm:$0xf]
  %v23 = vld [vmem:[%s0 + $0x20] sm:$0xf]
  %v24 = vld [vmem:[%s0 + $0x24] sm:$0xf]
  %v25 = vld [vmem:[%s0 + $0x28] sm:$0xf]
  %v26 = vld [vmem:[%s0 + $0x2c] sm:$0xf]
  %v27 = vld [vmem:[%s0 + $0x30] sm:$0xf]
  %v28 = vld [vmem:[%s0 + $0x34] sm:$0xf]
  %v29 = vld [vmem:[%s0 + $0x38] sm:$0xf]
  %v30 = vld [vmem:[%s0 + $0x3c] sm:$0xf]
  %v31 = vld [vmem:[%s1] sm:$0xf]
  %v32 = vld [vmem:[%s1 + $0x4] sm:$0xf]
  %v33 = vld [vmem:[%s1 + $0x8] sm:$0xf]
  %v34 = vld [vmem:[%s1 + $0xc] sm:$0xf]
  %v35 = vld [vmem:[%s2] sm:$0xff]
  %v36 = vld [vmem:[%s2 + $0x8] sm:$0xff]
  %v37 = vld [vmem:[%s2 + $0x10] sm:$0xff]
  %v38 = vld [vmem:[%s2 + $0x18] sm:$0xff]
  %v39 = vld [vmem:[%s2 + $0x20] sm:$0xff]
  %v40 = vld [vmem:[%s2 + $0x28] sm:$0xff]
  %v41 = vld [vmem:[%s2 + $0x30] sm:$0xff]
  %v42 = vld [vmem:[%s2 + $0x38] sm:$0xff]
  %v43 = vld [vmem:[%s2 + $0x40] sm:$0xff]
  %v44 = vld [vmem:[%s2 + $0x48] sm:$0xff]
  %v45 = vld [vmem:[%s2 + $0x50] sm:$0xff]
  %v46 = vld [vmem:[%s2 + $0x58] sm:$0xff]
  %v47 = vld [vmem:[%s2 + $0x60] sm:$0xff]
  %v48 = vld [vmem:[%s2 + $0x68] sm:$0xff]
  %v49 = vld [vmem:[%s2 + $0x70] sm:$0xff]
  %v50 = vld [vmem:[%s2 + $0x78] sm:$0xff]
  %v67 = vunpack.c.l.b16 %v15
  %v68 = vunpack.c.l.b16 %v16
  %v69 = vunpack.c.l.b16 %v17
  %v70 = vunpack.c.l.b16 %v18
  %v71 = vunpack.c.l.b16 %v19
  %v72 = vunpack.c.l.b16 %v20
  %v73 = vunpack.c.l.b16 %v21
  %v74 = vunpack.c.l.b16 %v22
  %v75 = vunpack.c.l.b16 %v23
  %v76 = vunpack.c.l.b16 %v24
  %v77 = vunpack.c.l.b16 %v25
  %v78 = vunpack.c.l.b16 %v26
  %v79 = vunpack.c.l.b16 %v27
  %v80 = vunpack.c.l.b16 %v28
  %v81 = vunpack.c.l.b16 %v29
  %v82 = vunpack.c.l.b16 %v30
  %v83 = vpack.c.b16 %v68, %v67
  %v84 = vpack.c.b16 %v70, %v69
  %v85 = vpack.c.b16 %v72, %v71
  %v86 = vpack.c.b16 %v74, %v73
  %v87 = vpack.c.b16 %v76, %v75
  %v88 = vpack.c.b16 %v78, %v77
  %v89 = vpack.c.b16 %v80, %v79
  %v90 = vpack.c.b16 %v82, %v81
  %v95 = vunpack.c.l.b16 %v31
  %v96 = vunpack.c.l.b16 %v32
  %v97 = vunpack.c.l.b16 %v33
  %v98 = vunpack.c.l.b16 %v34
  %v99 = vpack.c.b16 %v96, %v95
  %v100 = vpack.c.b16 %v98, %v97
  %vm103 = vcmask 261120
  %v105 = vsel %vm103, %v83, 0
  %v108 = vsel %vm103, %v84, 0
  %v111 = vsel %vm103, %v85, 0
  %v114 = vsel %vm103, %v86, 0
  %v117 = vsel %vm103, %v87, 0
  %v120 = vsel %vm103, %v88, 0
  %v123 = vsel %vm103, %v89, 0
  %v126 = vsel %vm103, %v90, 0
  %128 = vmatprep.subr.bf16.mxu0 0
  %129 = vmatpush1.bf16.msra.mxu0 %v99
  %130 = vmatprep.subr.bf16.mxu0 0
  %131 = vmatpush1.bf16.msra.mxu0 %v100
  %132 = vmatprep.subr.bf16.mxu0 0
  %133 = vmatpush1.bf16.msra.mxu0 0
  %134 = vmatprep.subr.bf16.mxu0 0
  %135 = vmatpush1.bf16.msra.mxu0 0
  %136 = vmatprep.subr.bf16.mxu0 0
  %137 = vmatpush1.bf16.msra.mxu0 0
  %138 = vmatprep.subr.bf16.mxu0 0
  %139 = vmatpush1.bf16.msra.mxu0 0
  %140 = vmatprep.subr.bf16.mxu0 0
  %141 = vmatpush1.bf16.msra.mxu0 0
  %142 = vmatprep.subr.bf16.mxu0 0
  %143 = vmatpush1.bf16.msra.mxu0 0
  %144 = vmatprep.subr.bf16.mxu0 0
  %145 = vmatpush1.bf16.msra.mxu0 0
  %146 = vmatprep.subr.bf16.mxu0 0
  %147 = vmatpush1.bf16.msra.mxu0 0
  %148 = vmatprep.subr.bf16.mxu0 0
  %149 = vmatpush1.bf16.msra.mxu0 0
  %150 = vmatprep.subr.bf16.mxu0 0
  %151 = vmatpush1.bf16.msra.mxu0 0
  %152 = vmatprep.subr.bf16.mxu0 0
  %153 = vmatpush1.bf16.msra.mxu0 0
  %154 = vmatprep.subr.bf16.mxu0 0
  %155 = vmatpush1.bf16.msra.mxu0 0
  %156 = vmatprep.subr.bf16.mxu0 0
  %157 = vmatpush1.bf16.msra.mxu0 0
  %158 = vmatprep.subr.bf16.mxu0 0
  %159 = vmatpush1.bf16.msra.mxu0 0
  %160 = vmatprep.mubr.bf16.mxu0 0
  %161 = vmatmul.mubr.bf16.gmra.mrb[0].mxu0 %v105
  %v162 = vpop.f32.mrb[0].mxu0
  %v163 = vadd.f32 %v35, %v162
  %v164 = vpop.f32.mrb[0].mxu0
  %v165 = vpop.f32.mrb[0].mxu0
  %v166 = vadd.f32 %v36, %v165
  %v167 = vpop.f32.mrb[0].mxu0
  %168 = vmatprep.mubr.bf16.mxu0 0
  %169 = vmatmul.mubr.bf16.gmra.mrb[0].mxu0 %v108
  %v170 = vpop.f32.mrb[0].mxu0
  %v171 = vadd.f32 %v37, %v170
  %v172 = vpop.f32.mrb[0].mxu0
  %v173 = vpop.f32.mrb[0].mxu0
  %v174 = vadd.f32 %v38, %v173
  %v175 = vpop.f32.mrb[0].mxu0
  %176 = vmatprep.mubr.bf16.mxu0 0
  %177 = vmatmul.mubr.bf16.gmra.mrb[0].mxu0 %v111
  %v178 = vpop.f32.mrb[0].mxu0
  %v179 = vadd.f32 %v39, %v178
  %v180 = vpop.f32.mrb[0].mxu0
  %v181 = vpop.f32.mrb[0].mxu0
  %v182 = vadd.f32 %v40, %v181
  %v183 = vpop.f32.mrb[0].mxu0
  %184 = vmatprep.mubr.bf16.mxu0 0
  %185 = vmatmul.mubr.bf16.gmra.mrb[0].mxu0 %v114
  %v186 = vpop.f32.mrb[0].mxu0
  %v187 = vadd.f32 %v41, %v186
  %v188 = vpop.f32.mrb[0].mxu0
  %v189 = vpop.f32.mrb[0].mxu0
  %v190 = vadd.f32 %v42, %v189
  %v191 = vpop.f32.mrb[0].mxu0
  %192 = vmatprep.mubr.bf16.mxu0 0
  %193 = vmatmul.mubr.bf16.gmra.mrb[0].mxu0 %v117
  %v194 = vpop.f32.mrb[0].mxu0
  %v195 = vadd.f32 %v43, %v194
  %v196 = vpop.f32.mrb[0].mxu0
  %v197 = vpop.f32.mrb[0].mxu0
  %v198 = vadd.f32 %v44, %v197
  %v199 = vpop.f32.mrb[0].mxu0
  %200 = vmatprep.mubr.bf16.mxu0 0
  %201 = vmatmul.mubr.bf16.gmra.mrb[0].mxu0 %v120
  %v202 = vpop.f32.mrb[0].mxu0
  %v203 = vadd.f32 %v45, %v202
  %v204 = vpop.f32.mrb[0].mxu0
  %v205 = vpop.f32.mrb[0].mxu0
  %v206 = vadd.f32 %v46, %v205
  %v207 = vpop.f32.mrb[0].mxu0
  %208 = vmatprep.mubr.bf16.mxu0 0
  %209 = vmatmul.mubr.bf16.gmra.mrb[0].mxu0 %v123
  %v210 = vpop.f32.mrb[0].mxu0
  %v211 = vadd.f32 %v47, %v210
  %v212 = vpop.f32.mrb[0].mxu0
  %v213 = vpop.f32.mrb[0].mxu0
  %v214 = vadd.f32 %v48, %v213
  %v215 = vpop.f32.mrb[0].mxu0
  %216 = vmatprep.mubr.bf16.mxu0 0
  %217 = vmatmul.mubr.bf16.gmra.mrb[0].mxu0 %v126
  %v218 = vpop.f32.mrb[0].mxu0
  %v219 = vadd.f32 %v49, %v218
  %v220 = vpop.f32.mrb[0].mxu0
  %v221 = vpop.f32.mrb[0].mxu0
  %v222 = vadd.f32 %v50, %v221
  %v223 = vpop.f32.mrb[0].mxu0
  %224 = vdwg.mxu0
  %vm225 = vcmp.ge.f32.partialorder %v163, 0.0
  %vm226 = vcmp.ge.f32.partialorder %v166, 0.0
  %vm227 = vcmp.ge.f32.partialorder %v171, 0.0
  %vm228 = vcmp.ge.f32.partialorder %v174, 0.0
  %vm229 = vcmp.ge.f32.partialorder %v179, 0.0
  %vm230 = vcmp.ge.f32.partialorder %v182, 0.0
  %vm231 = vcmp.ge.f32.partialorder %v187, 0.0
  %vm232 = vcmp.ge.f32.partialorder %v190, 0.0
  %vm233 = vcmp.ge.f32.partialorder %v195, 0.0
  %vm234 = vcmp.ge.f32.partialorder %v198, 0.0
  %vm235 = vcmp.ge.f32.partialorder %v203, 0.0
  %vm236 = vcmp.ge.f32.partialorder %v206, 0.0
  %vm237 = vcmp.ge.f32.partialorder %v211, 0.0
  %vm238 = vcmp.ge.f32.partialorder %v214, 0.0
  %vm239 = vcmp.ge.f32.partialorder %v219, 0.0
  %vm240 = vcmp.ge.f32.partialorder %v222, 0.0
  %v241 = vmul.f32 %v163, 0.25
  %v242 = vmul.f32 %v166, 0.25
  %v243 = vmul.f32 %v171, 0.25
  %v244 = vmul.f32 %v174, 0.25
  %v245 = vmul.f32 %v179, 0.25
  %v246 = vmul.f32 %v182, 0.25
  %v247 = vmul.f32 %v187, 0.25
  %v248 = vmul.f32 %v190, 0.25
  %v249 = vmul.f32 %v195, 0.25
  %v250 = vmul.f32 %v198, 0.25
  %v251 = vmul.f32 %v203, 0.25
  %v252 = vmul.f32 %v206, 0.25
  %v253 = vmul.f32 %v211, 0.25
  %v254 = vmul.f32 %v214, 0.25
  %v255 = vmul.f32 %v219, 0.25
  %v256 = vmul.f32 %v222, 0.25
  %v257 = vsel %vm225, %v163, %v241
  %v258 = vsel %vm226, %v166, %v242
  %v259 = vsel %vm227, %v171, %v243
  %v260 = vsel %vm228, %v174, %v244
  %v261 = vsel %vm229, %v179, %v245
  %v262 = vsel %vm230, %v182, %v246
  %v263 = vsel %vm231, %v187, %v247
  %v264 = vsel %vm232, %v190, %v248
  %v265 = vsel %vm233, %v195, %v249
  %v266 = vsel %vm234, %v198, %v250
  %v267 = vsel %vm235, %v203, %v251
  %v268 = vsel %vm236, %v206, %v252
  %v269 = vsel %vm237, %v211, %v253
  %v270 = vsel %vm238, %v214, %v254
  %v271 = vsel %vm239, %v219, %v255
  %v272 = vsel %vm240, %v222, %v256
  %273 = vst [vmem:[%s3] sm:$0xff] %v257
  %274 = vst [vmem:[%s3 + $0x8] sm:$0xff] %v258
  %275 = vst [vmem:[%s3 + $0x10] sm:$0xff] %v259
  %276 = vst [vmem:[%s3 + $0x18] sm:$0xff] %v260
  %277 = vst [vmem:[%s3 + $0x20] sm:$0xff] %v261
  %278 = vst [vmem:[%s3 + $0x28] sm:$0xff] %v262
  %279 = vst [vmem:[%s3 + $0x30] sm:$0xff] %v263
  %280 = vst [vmem:[%s3 + $0x38] sm:$0xff] %v264
  %281 = vst [vmem:[%s3 + $0x40] sm:$0xff] %v265
  %282 = vst [vmem:[%s3 + $0x48] sm:$0xff] %v266
  %283 = vst [vmem:[%s3 + $0x50] sm:$0xff] %v267
  %284 = vst [vmem:[%s3 + $0x58] sm:$0xff] %v268
  %285 = vst [vmem:[%s3 + $0x60] sm:$0xff] %v269
  %286 = vst [vmem:[%s3 + $0x68] sm:$0xff] %v270
  %287 = vst [vmem:[%s3 + $0x70] sm:$0xff] %v271
  %288 = vst [vmem:[%s3 + $0x78] sm:$0xff] %v272
  // Predicated region
  $region14: #{forward.167} parent=0 // pred_check
    _
  $region15: #{forward.167} parent=0 // pred_check_branch
    %290 = sbr.rel (0) target = $region17
  $region16: #{forward.167} parent=0 // pred_region
    _
  $region17: #{forward.167} parent=0 // pred_fallthru
    _
  // Predicated region
  $region18: #{forward.167} parent=0 // pred_check
    _
  $region19: #{forward.167} parent=0 // pred_check_branch
    %292 = sbr.rel (0) target = $region21
  $region20: #{forward.167} parent=0 // pred_region
    _
  $region21: #{forward.167} parent=0 // pred_fallthru
    _

// kernel: forward.176
$region0: #{forward.176}
  #allocation0 [shape = 'u32[]', space=smem, size = 0x4, offset = 0x4, fixed_abs, tag = 'smem constant byte address 0x4 - core index']
  #allocation1 [shape = 'u32[144,128]{1,0:T(1,128)}', space=vmem, size = 0x12000, scoped, tag = 'internal scratch']
  %s0 = inlined_call_operand.vmem [shape: bf16[128,64], index: 0, kind: input, shape index: {}]
  %s1 = inlined_call_operand.vmem [shape: bf16[64,128], index: 1, kind: input, shape index: {}]
  %s2 = inlined_call_operand.vmem [shape: f32[128,128], index: 2, kind: output, shape index: {}]
  %s3 = sld [smem:[#allocation0]]
  $region18: #{forward.176} parent=0
    _
  %s5 = ssub.s32 1, %s3
  %s6 = scalar_select 0, %s5, %s3
  // Predicated region
  $region2: #{forward.176} parent=0 // pred_check
    _
  $region3: #{forward.176} parent=0 // pred_check_branch
    %8 = sbr.rel (0) target = $region5
  $region4: #{forward.176} parent=0 // pred_region
    _
  $region5: #{forward.176} parent=0 // pred_fallthru
    _
  // Predicated region
  $region6: #{forward.176} parent=0 // pred_check
    _
  $region7: #{forward.176} parent=0 // pred_check_branch
    %10 = sbr.rel (0) target = $region9
  $region8: #{forward.176} parent=0 // pred_region
    _
  $region9: #{forward.176} parent=0 // pred_fallthru
    _
  %v12 = vld [vmem:[%s0] sm:$0xf]
  %v13 = vld [vmem:[%s0 + $0x4] sm:$0xf]
  %v14 = vld [vmem:[%s0 + $0x8] sm:$0xf]
  %v15 = vld [vmem:[%s0 + $0xc] sm:$0xf]
  %v16 = vld [vmem:[%s0 + $0x10] sm:$0xf]
  %v17 = vld [vmem:[%s0 + $0x14] sm:$0xf]
  %v18 = vld [vmem:[%s0 + $0x18] sm:$0xf]
  %v19 = vld [vmem:[%s0 + $0x1c] sm:$0xf]
  %v20 = vld [vmem:[%s0 + $0x20] sm:$0xf]
  %v21 = vld [vmem:[%s0 + $0x24] sm:$0xf]
  %v22 = vld [vmem:[%s0 + $0x28] sm:$0xf]
  %v23 = vld [vmem:[%s0 + $0x2c] sm:$0xf]
  %v24 = vld [vmem:[%s0 + $0x30] sm:$0xf]
  %v25 = vld [vmem:[%s0 + $0x34] sm:$0xf]
  %v26 = vld [vmem:[%s0 + $0x38] sm:$0xf]
  %v27 = vld [vmem:[%s0 + $0x3c] sm:$0xf]
  %v28 = vld [vmem:[%s1] sm:$0xf]
  %v29 = vld [vmem:[%s1 + $0x4] sm:$0xf]
  %v30 = vld [vmem:[%s1 + $0x8] sm:$0xf]
  %v31 = vld [vmem:[%s1 + $0xc] sm:$0xf]
  %v32 = vld [vmem:[%s1 + $0x10] sm:$0xf]
  %v33 = vld [vmem:[%s1 + $0x14] sm:$0xf]
  %v34 = vld [vmem:[%s1 + $0x18] sm:$0xf]
  %v35 = vld [vmem:[%s1 + $0x1c] sm:$0xf]
  %v52 = vunpack.c.l.b16 %v12
  %v53 = vunpack.c.l.b16 %v13
  %v54 = vunpack.c.l.b16 %v14
  %v55 = vunpack.c.l.b16 %v15
  %v56 = vunpack.c.l.b16 %v16
  %v57 = vunpack.c.l.b16 %v17
  %v58 = vunpack.c.l.b16 %v18
  %v59 = vunpack.c.l.b16 %v19
  %v60 = vunpack.c.l.b16 %v20
  %v61 = vunpack.c.l.b16 %v21
  %v62 = vunpack.c.l.b16 %v22
  %v63 = vunpack.c.l.b16 %v23
  %v64 = vunpack.c.l.b16 %v24
  %v65 = vunpack.c.l.b16 %v25
  %v66 = vunpack.c.l.b16 %v26
  %v67 = vunpack.c.l.b16 %v27
  %v68 = vpack.c.b16 %v53, %v52
  %v69 = vpack.c.b16 %v55, %v54
  %v70 = vpack.c.b16 %v57, %v56
  %v71 = vpack.c.b16 %v59, %v58
  %v72 = vpack.c.b16 %v61, %v60
  %v73 = vpack.c.b16 %v63, %v62
  %v74 = vpack.c.b16 %v65, %v64
  %v75 = vpack.c.b16 %v67, %v66
  %v84 = vunpack.c.l.b16 %v28
  %v85 = vunpack.c.l.b16 %v29
  %v86 = vunpack.c.l.b16 %v30
  %v87 = vunpack.c.l.b16 %v31
  %v88 = vunpack.c.l.b16 %v32
  %v89 = vunpack.c.l.b16 %v33
  %v90 = vunpack.c.l.b16 %v34
  %v91 = vunpack.c.l.b16 %v35
  %v92 = vpack.c.b16 %v85, %v84
  %v93 = vpack.c.b16 %v87, %v86
  %v94 = vpack.c.b16 %v89, %v88
  %v95 = vpack.c.b16 %v91, %v90
  %vm100 = vcmask 523264
  %v102 = vsel %vm100, %v68, 0
  %v105 = vsel %vm100, %v69, 0
  %v108 = vsel %vm100, %v70, 0
  %v111 = vsel %vm100, %v71, 0
  %v114 = vsel %vm100, %v72, 0
  %v117 = vsel %vm100, %v73, 0
  %v120 = vsel %vm100, %v74, 0
  %v123 = vsel %vm100, %v75, 0
  %125 = vmatprep.subr.bf16.mxu0 0
  %126 = vmatpush1.bf16.msra.mxu0 %v92
  %127 = vmatprep.subr.bf16.mxu0 0
  %128 = vmatpush1.bf16.msra.mxu0 %v93
  %129 = vmatprep.subr.bf16.mxu0 0
  %130 = vmatpush1.bf16.msra.mxu0 %v94
  %131 = vmatprep.subr.bf16.mxu0 0
  %132 = vmatpush1.bf16.msra.mxu0 %v95
  %133 = vmatprep.subr.bf16.mxu0 0
  %134 = vmatpush1.bf16.msra.mxu0 0
  %135 = vmatprep.subr.bf16.mxu0 0
  %136 = vmatpush1.bf16.msra.mxu0 0
  %137 = vmatprep.subr.bf16.mxu0 0
  %138 = vmatpush1.bf16.msra.mxu0 0
  %139 = vmatprep.subr.bf16.mxu0 0
  %140 = vmatpush1.bf16.msra.mxu0 0
  %141 = vmatprep.subr.bf16.mxu0 0
  %142 = vmatpush1.bf16.msra.mxu0 0
  %143 = vmatprep.subr.bf16.mxu0 0
  %144 = vmatpush1.bf16.msra.mxu0 0
  %145 = vmatprep.subr.bf16.mxu0 0
  %146 = vmatpush1.bf16.msra.mxu0 0
  %147 = vmatprep.subr.bf16.mxu0 0
  %148 = vmatpush1.bf16.msra.mxu0 0
  %149 = vmatprep.subr.bf16.mxu0 0
  %150 = vmatpush1.bf16.msra.mxu0 0
  %151 = vmatprep.subr.bf16.mxu0 0
  %152 = vmatpush1.bf16.msra.mxu0 0
  %153 = vmatprep.subr.bf16.mxu0 0
  %154 = vmatpush1.bf16.msra.mxu0 0
  %155 = vmatprep.subr.bf16.mxu0 0
  %156 = vmatpush1.bf16.msra.mxu0 0
  %157 = vmatprep.mubr.bf16.mxu0 0
  %158 = vmatmul.mubr.bf16.gmra.mrb[0].mxu0 %v102
  %v159 = vpop.f32.mrb[0].mxu0
  %v160 = vadd.f32 0.0, %v159
  %v161 = vpop.f32.mrb[0].mxu0
  %v162 = vpop.f32.mrb[0].mxu0
  %v163 = vadd.f32 0.0, %v162
  %v164 = vpop.f32.mrb[0].mxu0
  %165 = vmatprep.mubr.bf16.mxu0 0
  %166 = vmatmul.mubr.bf16.gmra.mrb[0].mxu0 %v105
  %v167 = vpop.f32.mrb[0].mxu0
  %v168 = vadd.f32 0.0, %v167
  %v169 = vpop.f32.mrb[0].mxu0
  %v170 = vpop.f32.mrb[0].mxu0
  %v171 = vadd.f32 0.0, %v170
  %v172 = vpop.f32.mrb[0].mxu0
  %173 = vmatprep.mubr.bf16.mxu0 0
  %174 = vmatmul.mubr.bf16.gmra.mrb[0].mxu0 %v108
  %v175 = vpop.f32.mrb[0].mxu0
  %v176 = vadd.f32 0.0, %v175
  %v177 = vpop.f32.mrb[0].mxu0
  %v178 = vpop.f32.mrb[0].mxu0
  %v179 = vadd.f32 0.0, %v178
  %v180 = vpop.f32.mrb[0].mxu0
  %181 = vmatprep.mubr.bf16.mxu0 0
  %182 = vmatmul.mubr.bf16.gmra.mrb[0].mxu0 %v111
  %v183 = vpop.f32.mrb[0].mxu0
  %v184 = vadd.f32 0.0, %v183
  %v185 = vpop.f32.mrb[0].mxu0
  %v186 = vpop.f32.mrb[0].mxu0
  %v187 = vadd.f32 0.0, %v186
  %v188 = vpop.f32.mrb[0].mxu0
  %189 = vmatprep.mubr.bf16.mxu0 0
  %190 = vmatmul.mubr.bf16.gmra.mrb[0].mxu0 %v114
  %v191 = vpop.f32.mrb[0].mxu0
  %v192 = vadd.f32 0.0, %v191
  %v193 = vpop.f32.mrb[0].mxu0
  %v194 = vpop.f32.mrb[0].mxu0
  %v195 = vadd.f32 0.0, %v194
  %v196 = vpop.f32.mrb[0].mxu0
  %197 = vmatprep.mubr.bf16.mxu0 0
  %198 = vmatmul.mubr.bf16.gmra.mrb[0].mxu0 %v117
  %v199 = vpop.f32.mrb[0].mxu0
  %v200 = vadd.f32 0.0, %v199
  %v201 = vpop.f32.mrb[0].mxu0
  %v202 = vpop.f32.mrb[0].mxu0
  %v203 = vadd.f32 0.0, %v202
  %v204 = vpop.f32.mrb[0].mxu0
  %205 = vmatprep.mubr.bf16.mxu0 0
  %206 = vmatmul.mubr.bf16.gmra.mrb[0].mxu0 %v120
  %v207 = vpop.f32.mrb[0].mxu0
  %v208 = vadd.f32 0.0, %v207
  %v209 = vpop.f32.mrb[0].mxu0
  %v210 = vpop.f32.mrb[0].mxu0
  %v211 = vadd.f32 0.0, %v210
  %v212 = vpop.f32.mrb[0].mxu0
  %213 = vmatprep.mubr.bf16.mxu0 0
  %214 = vmatmul.mubr.bf16.gmra.mrb[0].mxu0 %v123
  %v215 = vpop.f32.mrb[0].mxu0
  %v216 = vadd.f32 0.0, %v215
  %v217 = vpop.f32.mrb[0].mxu0
  %v218 = vpop.f32.mrb[0].mxu0
  %v219 = vadd.f32 0.0, %v218
  %v220 = vpop.f32.mrb[0].mxu0
  %221 = vdwg.mxu0
  %222 = vst [vmem:[%s2] sm:$0xff] %v160
  %223 = vst [vmem:[%s2 + $0x8] sm:$0xff] %v163
  %224 = vst [vmem:[%s2 + $0x10] sm:$0xff] %v168
  %225 = vst [vmem:[%s2 + $0x18] sm:$0xff] %v171
  %226 = vst [vmem:[%s2 + $0x20] sm:$0xff] %v176
  %227 = vst [vmem:[%s2 + $0x28] sm:$0xff] %v179
  %228 = vst [vmem:[%s2 + $0x30] sm:$0xff] %v184
  %229 = vst [vmem:[%s2 + $0x38] sm:$0xff] %v187
  %230 = vst [vmem:[%s2 + $0x40] sm:$0xff] %v192
  %231 = vst [vmem:[%s2 + $0x48] sm:$0xff] %v195
  %232 = vst [vmem:[%s2 + $0x50] sm:$0xff] %v200
  %233 = vst [vmem:[%s2 + $0x58] sm:$0xff] %v203
  %234 = vst [vmem:[%s2 + $0x60] sm:$0xff] %v208
  %235 = vst [vmem:[%s2 + $0x68] sm:$0xff] %v211
  %236 = vst [vmem:[%s2 + $0x70] sm:$0xff] %v216
  %237 = vst [vmem:[%s2 + $0x78] sm:$0xff] %v219
  // Predicated region
  $region10: #{forward.176} parent=0 // pred_check
    _
  $region11: #{forward.176} parent=0 // pred_check_branch
    %239 = sbr.rel (0) target = $region13
  $region12: #{forward.176} parent=0 // pred_region
    _
  $region13: #{forward.176} parent=0 // pred_fallthru
    _
  // Predicated region
  $region14: #{forward.176} parent=0 // pred_check
    _
  $region15: #{forward.176} parent=0 // pred_check_branch
    %241 = sbr.rel (0) target = $region17
  $region16: #{forward.176} parent=0 // pred_region
    _
  $region17: #{forward.176} parent=0 // pred_fallthru
    _

// kernel: forward.178
$region0: #{forward.178}
  #allocation0 [shape = 'u32[]', space=smem, size = 0x4, offset = 0x4, fixed_abs, tag = 'smem constant byte address 0x4 - core index']
  #allocation1 [shape = 'u32[144,128]{1,0:T(1,128)}', space=vmem, size = 0x12000, scoped, tag = 'internal scratch']
  %s0 = inlined_call_operand.vmem [shape: bf16[512,16], index: 0, kind: input, shape index: {}]
  %s1 = inlined_call_operand.vmem [shape: bf16[16,128], index: 1, kind: input, shape index: {}]
  %s2 = inlined_call_operand.vmem [shape: f32[512,128], index: 2, kind: output, shape index: {}]
  %s3 = sld [smem:[#allocation0]]
  $region18: #{forward.178} parent=0
    _
  %s5 = ssub.s32 1, %s3
  %s6 = scalar_select 0, %s5, %s3
  // Predicated region
  $region2: #{forward.178} parent=0 // pred_check
    _
  $region3: #{forward.178} parent=0 // pred_check_branch
    %8 = sbr.rel (0) target = $region5
  $region4: #{forward.178} parent=0 // pred_region
    _
  $region5: #{forward.178} parent=0 // pred_fallthru
    _
  // Predicated region
  $region6: #{forward.178} parent=0 // pred_check
    _
  $region7: #{forward.178} parent=0 // pred_check_branch
    %10 = sbr.rel (0) target = $region9
  $region8: #{forward.178} parent=0 // pred_region
    _
  $region9: #{forward.178} parent=0 // pred_fallthru
    _
  %v12 = vld [vmem:[%s0] sm:$0xf]
  %v13 = vld [vmem:[%s0 + $0x4] sm:$0xf]
  %v14 = vld [vmem:[%s0 + $0x8] sm:$0xf]
  %v15 = vld [vmem:[%s0 + $0xc] sm:$0xf]
  %v16 = vld [vmem:[%s0 + $0x10] sm:$0xf]
  %v17 = vld [vmem:[%s0 + $0x14] sm:$0xf]
  %v18 = vld [vmem:[%s0 + $0x18] sm:$0xf]
  %v19 = vld [vmem:[%s0 + $0x1c] sm:$0xf]
  %v20 = vld [vmem:[%s0 + $0x20] sm:$0xf]
  %v21 = vld [vmem:[%s0 + $0x24] sm:$0xf]
  %v22 = vld [vmem:[%s0 + $0x28] sm:$0xf]
  %v23 = vld [vmem:[%s0 + $0x2c] sm:$0xf]
  %v24 = vld [vmem:[%s0 + $0x30] sm:$0xf]
  %v25 = vld [vmem:[%s0 + $0x34] sm:$0xf]
  %v26 = vld [vmem:[%s0 + $0x38] sm:$0xf]
  %v27 = vld [vmem:[%s0 + $0x3c] sm:$0xf]
  %v28 = vld [vmem:[%s0 + $0x40] sm:$0xf]
  %v29 = vld [vmem:[%s0 + $0x44] sm:$0xf]
  %v30 = vld [vmem:[%s0 + $0x48] sm:$0xf]
  %v31 = vld [vmem:[%s0 + $0x4c] sm:$0xf]
  %v32 = vld [vmem:[%s0 + $0x50] sm:$0xf]
  %v33 = vld [vmem:[%s0 + $0x54] sm:$0xf]
  %v34 = vld [vmem:[%s0 + $0x58] sm:$0xf]
  %v35 = vld [vmem:[%s0 + $0x5c] sm:$0xf]
  %v36 = vld [vmem:[%s0 + $0x60] sm:$0xf]
  %v37 = vld [vmem:[%s0 + $0x64] sm:$0xf]
  %v38 = vld [vmem:[%s0 + $0x68] sm:$0xf]
  %v39 = vld [vmem:[%s0 + $0x6c] sm:$0xf]
  %v40 = vld [vmem:[%s0 + $0x70] sm:$0xf]
  %v41 = vld [vmem:[%s0 + $0x74] sm:$0xf]
  %v42 = vld [vmem:[%s0 + $0x78] sm:$0xf]
  %v43 = vld [vmem:[%s0 + $0x7c] sm:$0xf]
  %v44 = vld [vmem:[%s0 + $0x80] sm:$0xf]
  %v45 = vld [vmem:[%s0 + $0x84] sm:$0xf]
  %v46 = vld [vmem:[%s0 + $0x88] sm:$0xf]
  %v47 = vld [vmem:[%s0 + $0x8c] sm:$0xf]
  %v48 = vld [vmem:[%s0 + $0x90] sm:$0xf]
  %v49 = vld [vmem:[%s0 + $0x94] sm:$0xf]
  %v50 = vld [vmem:[%s0 + $0x98] sm:$0xf]
  %v51 = vld [vmem:[%s0 + $0x9c] sm:$0xf]
  %v52 = vld [vmem:[%s0 + $0xa0] sm:$0xf]
  %v53 = vld [vmem:[%s0 + $0xa4] sm:$0xf]
  %v54 = vld [vmem:[%s0 + $0xa8] sm:$0xf]
  %v55 = vld [vmem:[%s0 + $0xac] sm:$0xf]
  %v56 = vld [vmem:[%s0 + $0xb0] sm:$0xf]
  %v57 = vld [vmem:[%s0 + $0xb4] sm:$0xf]
  %v58 = vld [vmem:[%s0 + $0xb8] sm:$0xf]
  %v59 = vld [vmem:[%s0 + $0xbc] sm:$0xf]
  %v60 = vld [vmem:[%s0 + $0xc0] sm:$0xf]
  %v61 = vld [vmem:[%s0 + $0xc4] sm:$0xf]
  %v62 = vld [vmem:[%s0 + $0xc8] sm:$0xf]
  %v63 = vld [vmem:[%s0 + $0xcc] sm:$0xf]
  %v64 = vld [vmem:[%s0 + $0xd0] sm:$0xf]
  %v65 = vld [vmem:[%s0 + $0xd4] sm:$0xf]
  %v66 = vld [vmem:[%s0 + $0xd8] sm:$0xf]
  %v67 = vld [vmem:[%s0 + $0xdc] sm:$0xf]
  %v68 = vld [vmem:[%s0 + $0xe0] sm:$0xf]
  %v69 = vld [vmem:[%s0 + $0xe4] sm:$0xf]
  %v70 = vld [vmem:[%s0 + $0xe8] sm:$0xf]
  %v71 = vld [vmem:[%s0 + $0xec] sm:$0xf]
  %v72 = vld [vmem:[%s0 + $0xf0] sm:$0xf]
  %v73 = vld [vmem:[%s0 + $0xf4] sm:$0xf]
  %v74 = vld [vmem:[%s0 + $0xf8] sm:$0xf]
  %v75 = vld [vmem:[%s0 + $0xfc] sm:$0xf]
  %v76 = vld [vmem:[%s1] sm:$0xf]
  %v77 = vld [vmem:[%s1 + $0x4] sm:$0xf]
  %v142 = vunpack.c.l.b16 %v12
  %v143 = vunpack.c.l.b16 %v13
  %v144 = vunpack.c.l.b16 %v14
  %v145 = vunpack.c.l.b16 %v15
  %v146 = vunpack.c.l.b16 %v16
  %v147 = vunpack.c.l.b16 %v17
  %v148 = vunpack.c.l.b16 %v18
  %v149 = vunpack.c.l.b16 %v19
  %v150 = vunpack.c.l.b16 %v20
  %v151 = vunpack.c.l.b16 %v21
  %v152 = vunpack.c.l.b16 %v22
  %v153 = vunpack.c.l.b16 %v23
  %v154 = vunpack.c.l.b16 %v24
  %v155 = vunpack.c.l.b16 %v25
  %v156 = vunpack.c.l.b16 %v26
  %v157 = vunpack.c.l.b16 %v27
  %v158 = vunpack.c.l.b16 %v28
  %v159 = vunpack.c.l.b16 %v29
  %v160 = vunpack.c.l.b16 %v30
  %v161 = vunpack.c.l.b16 %v31
  %v162 = vunpack.c.l.b16 %v32
  %v163 = vunpack.c.l.b16 %v33
  %v164 = vunpack.c.l.b16 %v34
  %v165 = vunpack.c.l.b16 %v35
  %v166 = vunpack.c.l.b16 %v36
  %v167 = vunpack.c.l.b16 %v37
  %v168 = vunpack.c.l.b16 %v38
  %v169 = vunpack.c.l.b16 %v39
  %v170 = vunpack.c.l.b16 %v40
  %v171 = vunpack.c.l.b16 %v41
  %v172 = vunpack.c.l.b16 %v42
  %v173 = vunpack.c.l.b16 %v43
  %v174 = vunpack.c.l.b16 %v44
  %v175 = vunpack.c.l.b16 %v45
  %v176 = vunpack.c.l.b16 %v46
  %v177 = vunpack.c.l.b16 %v47
  %v178 = vunpack.c.l.b16 %v48
  %v179 = vunpack.c.l.b16 %v49
  %v180 = vunpack.c.l.b16 %v50
  %v181 = vunpack.c.l.b16 %v51
  %v182 = vunpack.c.l.b16 %v52
  %v183 = vunpack.c.l.b16 %v53
  %v184 = vunpack.c.l.b16 %v54
  %v185 = vunpack.c.l.b16 %v55
  %v186 = vunpack.c.l.b16 %v56
  %v187 = vunpack.c.l.b16 %v57
  %v188 = vunpack.c.l.b16 %v58
  %v189 = vunpack.c.l.b16 %v59
  %v190 = vunpack.c.l.b16 %v60
  %v191 = vunpack.c.l.b16 %v61
  %v192 = vunpack.c.l.b16 %v62
  %v193 = vunpack.c.l.b16 %v63
  %v194 = vunpack.c.l.b16 %v64
  %v195 = vunpack.c.l.b16 %v65
  %v196 = vunpack.c.l.b16 %v66
  %v197 = vunpack.c.l.b16 %v67
  %v198 = vunpack.c.l.b16 %v68
  %v199 = vunpack.c.l.b16 %v69
  %v200 = vunpack.c.l.b16 %v70
  %v201 = vunpack.c.l.b16 %v71
  %v202 = vunpack.c.l.b16 %v72
  %v203 = vunpack.c.l.b16 %v73
  %v204 = vunpack.c.l.b16 %v74
  %v205 = vunpack.c.l.b16 %v75
  %v206 = vpack.c.b16 %v143, %v142
  %v207 = vpack.c.b16 %v145, %v144
  %v208 = vpack.c.b16 %v147, %v146
  %v209 = vpack.c.b16 %v149, %v148
  %v210 = vpack.c.b16 %v151, %v150
  %v211 = vpack.c.b16 %v153, %v152
  %v212 = vpack.c.b16 %v155, %v154
  %v213 = vpack.c.b16 %v157, %v156
  %v214 = vpack.c.b16 %v159, %v158
  %v215 = vpack.c.b16 %v161, %v160
  %v216 = vpack.c.b16 %v163, %v162
  %v217 = vpack.c.b16 %v165, %v164
  %v218 = vpack.c.b16 %v167, %v166
  %v219 = vpack.c.b16 %v169, %v168
  %v220 = vpack.c.b16 %v171, %v170
  %v221 = vpack.c.b16 %v173, %v172
  %v222 = vpack.c.b16 %v175, %v174
  %v223 = vpack.c.b16 %v177, %v176
  %v224 = vpack.c.b16 %v179, %v178
  %v225 = vpack.c.b16 %v181, %v180
  %v226 = vpack.c.b16 %v183, %v182
  %v227 = vpack.c.b16 %v185, %v184
  %v228 = vpack.c.b16 %v187, %v186
  %v229 = vpack.c.b16 %v189, %v188
  %v230 = vpack.c.b16 %v191, %v190
  %v231 = vpack.c.b16 %v193, %v192
  %v232 = vpack.c.b16 %v195, %v194
  %v233 = vpack.c.b16 %v197, %v196
  %v234 = vpack.c.b16 %v199, %v198
  %v235 = vpack.c.b16 %v201, %v200
  %v236 = vpack.c.b16 %v203, %v202
  %v237 = vpack.c.b16 %v205, %v204
  %v240 = vunpack.c.l.b16 %v76
  %v241 = vunpack.c.l.b16 %v77
  %v242 = vpack.c.b16 %v241, %v240
  %vm244 = vcmask 130048
  %v246 = vsel %vm244, %v206, 0
  %v249 = vsel %vm244, %v207, 0
  %v252 = vsel %vm244, %v208, 0
  %v255 = vsel %vm244, %v209, 0
  %v258 = vsel %vm244, %v210, 0
  %v261 = vsel %vm244, %v211, 0
  %v264 = vsel %vm244, %v212, 0
  %v267 = vsel %vm244, %v213, 0
  %v270 = vsel %vm244, %v214, 0
  %v273 = vsel %vm244, %v215, 0
  %v276 = vsel %vm244, %v216, 0
  %v279 = vsel %vm244, %v217, 0
  %v282 = vsel %vm244, %v218, 0
  %v285 = vsel %vm244, %v219, 0
  %v288 = vsel %vm244, %v220, 0
  %v291 = vsel %vm244, %v221, 0
  %v294 = vsel %vm244, %v222, 0
  %v297 = vsel %vm244, %v223, 0
  %v300 = vsel %vm244, %v224, 0
  %v303 = vsel %vm244, %v225, 0
  %v306 = vsel %vm244, %v226, 0
  %v309 = vsel %vm244, %v227, 0
  %v312 = vsel %vm244, %v228, 0
  %v315 = vsel %vm244, %v229, 0
  %v318 = vsel %vm244, %v230, 0
  %v321 = vsel %vm244, %v231, 0
  %v324 = vsel %vm244, %v232, 0
  %v327 = vsel %vm244, %v233, 0
  %v330 = vsel %vm244, %v234, 0
  %v333 = vsel %vm244, %v235, 0
  %v336 = vsel %vm244, %v236, 0
  %v339 = vsel %vm244, %v237, 0
  %341 = vmatprep.subr.bf16.mxu0 0
  %342 = vmatpush1.bf16.msra.mxu0 %v242
  %343 = vmatprep.subr.bf16.mxu0 0
  %344 = vmatpush1.bf16.msra.mxu0 0
  %345 = vmatprep.subr.bf16.mxu0 0
  %346 = vmatpush1.bf16.msra.mxu0 0
  %347 = vmatprep.subr.bf16.mxu0 0
  %348 = vmatpush1.bf16.msra.mxu0 0
  %349 = vmatprep.subr.bf16.mxu0 0
  %350 = vmatpush1.bf16.msra.mxu0 0
  %351 = vmatprep.subr.bf16.mxu0 0
  %352 = vmatpush1.bf16.msra.mxu0 0
  %353 = vmatprep.subr.bf16.mxu0 0
  %354 = vmatpush1.bf16.msra.mxu0 0
  %355 = vmatprep.subr.bf16.mxu0 0
  %356 = vmatpush1.bf16.msra.mxu0 0
  %357 = vmatprep.subr.bf16.mxu0 0
  %358 = vmatpush1.bf16.msra.mxu0 0
  %359 = vmatprep.subr.bf16.mxu0 0
  %360 = vmatpush1.bf16.msra.mxu0 0
  %361 = vmatprep.subr.bf16.mxu0 0
  %362 = vmatpush1.bf16.msra.mxu0 0
  %363 = vmatprep.subr.bf16.mxu0 0
  %364 = vmatpush1.bf16.msra.mxu0 0
  %365 = vmatprep.subr.bf16.mxu0 0
  %366 = vmatpush1.bf16.msra.mxu0 0
  %367 = vmatprep.subr.bf16.mxu0 0
  %368 = vmatpush1.bf16.msra.mxu0 0
  %369 = vmatprep.subr.bf16.mxu0 0
  %370 = vmatpush1.bf16.msra.mxu0 0
  %371 = vmatprep.subr.bf16.mxu0 0
  %372 = vmatpush1.bf16.msra.mxu0 0
  %373 = vmatprep.mubr.bf16.mxu0 0
  %374 = vmatmul.mubr.bf16.gmra.mrb[0].mxu0 %v246
  %v375 = vpop.f32.mrb[0].mxu0
  %v376 = vadd.f32 0.0, %v375
  %v377 = vpop.f32.mrb[0].mxu0
  %v378 = vpop.f32.mrb[0].mxu0
  %v379 = vadd.f32 0.0, %v378
  %v380 = vpop.f32.mrb[0].mxu0
  %381 = vmatprep.mubr.bf16.mxu0 0
  %382 = vmatmul.mubr.bf16.gmra.mrb[0].mxu0 %v249
  %v383 = vpop.f32.mrb[0].mxu0
  %v384 = vadd.f32 0.0, %v383
  %v385 = vpop.f32.mrb[0].mxu0
  %v386 = vpop.f32.mrb[0].mxu0
  %v387 = vadd.f32 0.0, %v386
  %v388 = vpop.f32.mrb[0].mxu0
  %389 = vmatprep.mubr.bf16.mxu0 0
  %390 = vmatmul.mubr.bf16.gmra.mrb[0].mxu0 %v252
  %v391 = vpop.f32.mrb[0].mxu0
  %v392 = vadd.f32 0.0, %v391
  %v393 = vpop.f32.mrb[0].mxu0
  %v394 = vpop.f32.mrb[0].mxu0
  %v395 = vadd.f32 0.0, %v394
  %v396 = vpop.f32.mrb[0].mxu0
  %397 = vmatprep.mubr.bf16.mxu0 0
  %398 = vmatmul.mubr.bf16.gmra.mrb[0].mxu0 %v255
  %v399 = vpop.f32.mrb[0].mxu0
  %v400 = vadd.f32 0.0, %v399
  %v401 = vpop.f32.mrb[0].mxu0
  %v402 = vpop.f32.mrb[0].mxu0
  %v403 = vadd.f32 0.0, %v402
  %v404 = vpop.f32.mrb[0].mxu0
  %405 = vmatprep.mubr.bf16.mxu0 0
  %406 = vmatmul.mubr.bf16.gmra.mrb[0].mxu0 %v258
  %v407 = vpop.f32.mrb[0].mxu0
  %v408 = vadd.f32 0.0, %v407
  %v409 = vpop.f32.mrb[0].mxu0
  %v410 = vpop.f32.mrb[0].mxu0
  %v411 = vadd.f32 0.0, %v410
  %v412 = vpop.f32.mrb[0].mxu0
  %413 = vmatprep.mubr.bf16.mxu0 0
  %414 = vmatmul.mubr.bf16.gmra.mrb[0].mxu0 %v261
  %v415 = vpop.f32.mrb[0].mxu0
  %v416 = vadd.f32 0.0, %v415
  %v417 = vpop.f32.mrb[0].mxu0
  %v418 = vpop.f32.mrb[0].mxu0
  %v419 = vadd.f32 0.0, %v418
  %v420 = vpop.f32.mrb[0].mxu0
  %421 = vmatprep.mubr.bf16.mxu0 0
  %422 = vmatmul.mubr.bf16.gmra.mrb[0].mxu0 %v264
  %v423 = vpop.f32.mrb[0].mxu0
  %v424 = vadd.f32 0.0, %v423
  %v425 = vpop.f32.mrb[0].mxu0
  %v426 = vpop.f32.mrb[0].mxu0
  %v427 = vadd.f32 0.0, %v426
  %v428 = vpop.f32.mrb[0].mxu0
  %429 = vmatprep.mubr.bf16.mxu0 0
  %430 = vmatmul.mubr.bf16.gmra.mrb[0].mxu0 %v267
  %v431 = vpop.f32.mrb[0].mxu0
  %v432 = vadd.f32 0.0, %v431
  %v433 = vpop.f32.mrb[0].mxu0
  %v434 = vpop.f32.mrb[0].mxu0
  %v435 = vadd.f32 0.0, %v434
  %v436 = vpop.f32.mrb[0].mxu0
  %437 = vmatprep.mubr.bf16.mxu0 0
  %438 = vmatmul.mubr.bf16.gmra.mrb[0].mxu0 %v270
  %v439 = vpop.f32.mrb[0].mxu0
  %v440 = vadd.f32 0.0, %v439
  %v441 = vpop.f32.mrb[0].mxu0
  %v442 = vpop.f32.mrb[0].mxu0
  %v443 = vadd.f32 0.0, %v442
  %v444 = vpop.f32.mrb[0].mxu0
  %445 = vmatprep.mubr.bf16.mxu0 0
  %446 = vmatmul.mubr.bf16.gmra.mrb[0].mxu0 %v273
  %v447 = vpop.f32.mrb[0].mxu0
  %v448 = vadd.f32 0.0, %v447
  %v449 = vpop.f32.mrb[0].mxu0
  %v450 = vpop.f32.mrb[0].mxu0
  %v451 = vadd.f32 0.0, %v450
  %v452 = vpop.f32.mrb[0].mxu0
  %453 = vmatprep.mubr.bf16.mxu0 0
  %454 = vmatmul.mubr.bf16.gmra.mrb[0].mxu0 %v276
  %v455 = vpop.f32.mrb[0].mxu0
  %v456 = vadd.f32 0.0, %v455
  %v457 = vpop.f32.mrb[0].mxu0
  %v458 = vpop.f32.mrb[0].mxu0
  %v459 = vadd.f32 0.0, %v458
  %v460 = vpop.f32.mrb[0].mxu0
  %461 = vmatprep.mubr.bf16.mxu0 0
  %462 = vmatmul.mubr.bf16.gmra.mrb[0].mxu0 %v279
  %v463 = vpop.f32.mrb[0].mxu0
  %v464 = vadd.f32 0.0, %v463
  %v465 = vpop.f32.mrb[0].mxu0
  %v466 = vpop.f32.mrb[0].mxu0
  %v467 = vadd.f32 0.0, %v466
  %v468 = vpop.f32.mrb[0].mxu0
  %469 = vmatprep.mubr.bf16.mxu0 0
  %470 = vmatmul.mubr.bf16.gmra.mrb[0].mxu0 %v282
  %v471 = vpop.f32.mrb[0].mxu0
  %v472 = vadd.f32 0.0, %v471
  %v473 = vpop.f32.mrb[0].mxu0
  %v474 = vpop.f32.mrb[0].mxu0
  %v475 = vadd.f32 0.0, %v474
  %v476 = vpop.f32.mrb[0].mxu0
  %477 = vmatprep.mubr.bf16.mxu0 0
  %478 = vmatmul.mubr.bf16.gmra.mrb[0].mxu0 %v285
  %v479 = vpop.f32.mrb[0].mxu0
  %v480 = vadd.f32 0.0, %v479
  %v481 = vpop.f32.mrb[0].mxu0
  %v482 = vpop.f32.mrb[0].mxu0
  %v483 = vadd.f32 0.0, %v482
  %v484 = vpop.f32.mrb[0].mxu0
  %485 = vmatprep.mubr.bf16.mxu0 0
  %486 = vmatmul.mubr.bf16.gmra.mrb[0].mxu0 %v288
  %v487 = vpop.f32.mrb[0].mxu0
  %v488 = vadd.f32 0.0, %v487
  %v489 = vpop.f32.mrb[0].mxu0
  %v490 = vpop.f32.mrb[0].mxu0
  %v491 = vadd.f32 0.0, %v490
  %v492 = vpop.f32.mrb[0].mxu0
  %493 = vmatprep.mubr.bf16.mxu0 0
  %494 = vmatmul.mubr.bf16.gmra.mrb[0].mxu0 %v291
  %v495 = vpop.f32.mrb[0].mxu0
  %v496 = vadd.f32 0.0, %v495
  %v497 = vpop.f32.mrb[0].mxu0
  %v498 = vpop.f32.mrb[0].mxu0
  %v499 = vadd.f32 0.0, %v498
  %v500 = vpop.f32.mrb[0].mxu0
  %501 = vmatprep.mubr.bf16.mxu0 0
  %502 = vmatmul.mubr.bf16.gmra.mrb[0].mxu0 %v294
  %v503 = vpop.f32.mrb[0].mxu0
  %v504 = vadd.f32 0.0, %v503
  %v505 = vpop.f32.mrb[0].mxu0
  %v506 = vpop.f32.mrb[0].mxu0
  %v507 = vadd.f32 0.0, %v506
  %v508 = vpop.f32.mrb[0].mxu0
  %509 = vmatprep.mubr.bf16.mxu0 0
  %510 = vmatmul.mubr.bf16.gmra.mrb[0].mxu0 %v297
  %v511 = vpop.f32.mrb[0].mxu0
  %v512 = vadd.f32 0.0, %v511
  %v513 = vpop.f32.mrb[0].mxu0
  %v514 = vpop.f32.mrb[0].mxu0
  %v515 = vadd.f32 0.0, %v514
  %v516 = vpop.f32.mrb[0].mxu0
  %517 = vmatprep.mubr.bf16.mxu0 0
  %518 = vmatmul.mubr.bf16.gmra.mrb[0].mxu0 %v300
  %v519 = vpop.f32.mrb[0].mxu0
  %v520 = vadd.f32 0.0, %v519
  %v521 = vpop.f32.mrb[0].mxu0
  %v522 = vpop.f32.mrb[0].mxu0
  %v523 = vadd.f32 0.0, %v522
  %v524 = vpop.f32.mrb[0].mxu0
  %525 = vmatprep.mubr.bf16.mxu0 0
  %526 = vmatmul.mubr.bf16.gmra.mrb[0].mxu0 %v303
  %v527 = vpop.f32.mrb[0].mxu0
  %v528 = vadd.f32 0.0, %v527
  %v529 = vpop.f32.mrb[0].mxu0
  %v530 = vpop.f32.mrb[0].mxu0
  %v531 = vadd.f32 0.0, %v530
  %v532 = vpop.f32.mrb[0].mxu0
  %533 = vmatprep.mubr.bf16.mxu0 0
  %534 = vmatmul.mubr.bf16.gmra.mrb[0].mxu0 %v306
  %v535 = vpop.f32.mrb[0].mxu0
  %v536 = vadd.f32 0.0, %v535
  %v537 = vpop.f32.mrb[0].mxu0
  %v538 = vpop.f32.mrb[0].mxu0
  %v539 = vadd.f32 0.0, %v538
  %v540 = vpop.f32.mrb[0].mxu0
  %541 = vmatprep.mubr.bf16.mxu0 0
  %542 = vmatmul.mubr.bf16.gmra.mrb[0].mxu0 %v309
  %v543 = vpop.f32.mrb[0].mxu0
  %v544 = vadd.f32 0.0, %v543
  %v545 = vpop.f32.mrb[0].mxu0
  %v546 = vpop.f32.mrb[0].mxu0
  %v547 = vadd.f32 0.0, %v546
  %v548 = vpop.f32.mrb[0].mxu0
  %549 = vmatprep.mubr.bf16.mxu0 0
  %550 = vmatmul.mubr.bf16.gmra.mrb[0].mxu0 %v312
  %v551 = vpop.f32.mrb[0].mxu0
  %v552 = vadd.f32 0.0, %v551
  %v553 = vpop.f32.mrb[0].mxu0
  %v554 = vpop.f32.mrb[0].mxu0
  %v555 = vadd.f32 0.0, %v554
  %v556 = vpop.f32.mrb[0].mxu0
  %557 = vmatprep.mubr.bf16.mxu0 0
  %558 = vmatmul.mubr.bf16.gmra.mrb[0].mxu0 %v315
  %v559 = vpop.f32.mrb[0].mxu0
  %v560 = vadd.f32 0.0, %v559
  %v561 = vpop.f32.mrb[0].mxu0
  %v562 = vpop.f32.mrb[0].mxu0
  %v563 = vadd.f32 0.0, %v562
  %v564 = vpop.f32.mrb[0].mxu0
  %565 = vmatprep.mubr.bf16.mxu0 0
  %566 = vmatmul.mubr.bf16.gmra.mrb[0].mxu0 %v318
  %v567 = vpop.f32.mrb[0].mxu0
  %v568 = vadd.f32 0.0, %v567
  %v569 = vpop.f32.mrb[0].mxu0
  %v570 = vpop.f32.mrb[0].mxu0
  %v571 = vadd.f32 0.0, %v570
  %v572 = vpop.f32.mrb[0].mxu0
  %573 = vmatprep.mubr.bf16.mxu0 0
  %574 = vmatmul.mubr.bf16.gmra.mrb[0].mxu0 %v321
  %v575 = vpop.f32.mrb[0].mxu0
  %v576 = vadd.f32 0.0, %v575
  %v577 = vpop.f32.mrb[0].mxu0
  %v578 = vpop.f32.mrb[0].mxu0
  %v579 = vadd.f32 0.0, %v578
  %v580 = vpop.f32.mrb[0].mxu0
  %581 = vmatprep.mubr.bf16.mxu0 0
  %582 = vmatmul.mubr.bf16.gmra.mrb[0].mxu0 %v324
  %v583 = vpop.f32.mrb[0].mxu0
  %v584 = vadd.f32 0.0, %v583
  %v585 = vpop.f32.mrb[0].mxu0
  %v586 = vpop.f32.mrb[0].mxu0
  %v587 = vadd.f32 0.0, %v586
  %v588 = vpop.f32.mrb[0].mxu0
  %589 = vmatprep.mubr.bf16.mxu0 0
  %590 = vmatmul.mubr.bf16.gmra.mrb[0].mxu0 %v327
  %v591 = vpop.f32.mrb[0].mxu0
  %v592 = vadd.f32 0.0, %v591
  %v593 = vpop.f32.mrb[0].mxu0
  %v594 = vpop.f32.mrb[0].mxu0
  %v595 = vadd.f32 0.0, %v594
  %v596 = vpop.f32.mrb[0].mxu0
  %597 = vmatprep.mubr.bf16.mxu0 0
  %598 = vmatmul.mubr.bf16.gmra.mrb[0].mxu0 %v330
  %v599 = vpop.f32.mrb[0].mxu0
  %v600 = vadd.f32 0.0, %v599
  %v601 = vpop.f32.mrb[0].mxu0
  %v602 = vpop.f32.mrb[0].mxu0
  %v603 = vadd.f32 0.0, %v602
  %v604 = vpop.f32.mrb[0].mxu0
  %605 = vmatprep.mubr.bf16.mxu0 0
  %606 = vmatmul.mubr.bf16.gmra.mrb[0].mxu0 %v333
  %v607 = vpop.f32.mrb[0].mxu0
  %v608 = vadd.f32 0.0, %v607
  %v609 = vpop.f32.mrb[0].mxu0
  %v610 = vpop.f32.mrb[0].mxu0
  %v611 = vadd.f32 0.0, %v610
  %v612 = vpop.f32.mrb[0].mxu0
  %613 = vmatprep.mubr.bf16.mxu0 0
  %614 = vmatmul.mubr.bf16.gmra.mrb[0].mxu0 %v336
  %v615 = vpop.f32.mrb[0].mxu0
  %v616 = vadd.f32 0.0, %v615
  %v617 = vpop.f32.mrb[0].mxu0
  %v618 = vpop.f32.mrb[0].mxu0
  %v619 = vadd.f32 0.0, %v618
  %v620 = vpop.f32.mrb[0].mxu0
  %621 = vmatprep.mubr.bf16.mxu0 0
  %622 = vmatmul.mubr.bf16.gmra.mrb[0].mxu0 %v339
  %v623 = vpop.f32.mrb[0].mxu0
  %v624 = vadd.f32 0.0, %v623
  %v625 = vpop.f32.mrb[0].mxu0
  %v626 = vpop.f32.mrb[0].mxu0
  %v627 = vadd.f32 0.0, %v626
  %v628 = vpop.f32.mrb[0].mxu0
  %629 = vdwg.mxu0
  %v630 = vmax.f32 %v376, 0.0
  %v631 = vmax.f32 %v379, 0.0
  %v632 = vmax.f32 %v384, 0.0
  %v633 = vmax.f32 %v387, 0.0
  %v634 = vmax.f32 %v392, 0.0
  %v635 = vmax.f32 %v395, 0.0
  %v636 = vmax.f32 %v400, 0.0
  %v637 = vmax.f32 %v403, 0.0
  %v638 = vmax.f32 %v408, 0.0
  %v639 = vmax.f32 %v411, 0.0
  %v640 = vmax.f32 %v416, 0.0
  %v641 = vmax.f32 %v419, 0.0
  %v642 = vmax.f32 %v424, 0.0
  %v643 = vmax.f32 %v427, 0.0
  %v644 = vmax.f32 %v432, 0.0
  %v645 = vmax.f32 %v435, 0.0
  %v646 = vmax.f32 %v440, 0.0
  %v647 = vmax.f32 %v443, 0.0
  %v648 = vmax.f32 %v448, 0.0
  %v649 = vmax.f32 %v451, 0.0
  %v650 = vmax.f32 %v456, 0.0
  %v651 = vmax.f32 %v459, 0.0
  %v652 = vmax.f32 %v464, 0.0
  %v653 = vmax.f32 %v467, 0.0
  %v654 = vmax.f32 %v472, 0.0
  %v655 = vmax.f32 %v475, 0.0
  %v656 = vmax.f32 %v480, 0.0
  %v657 = vmax.f32 %v483, 0.0
  %v658 = vmax.f32 %v488, 0.0
  %v659 = vmax.f32 %v491, 0.0
  %v660 = vmax.f32 %v496, 0.0
  %v661 = vmax.f32 %v499, 0.0
  %v662 = vmax.f32 %v504, 0.0
  %v663 = vmax.f32 %v507, 0.0
  %v664 = vmax.f32 %v512, 0.0
  %v665 = vmax.f32 %v515, 0.0
  %v666 = vmax.f32 %v520, 0.0
  %v667 = vmax.f32 %v523, 0.0
  %v668 = vmax.f32 %v528, 0.0
  %v669 = vmax.f32 %v531, 0.0
  %v670 = vmax.f32 %v536, 0.0
  %v671 = vmax.f32 %v539, 0.0
  %v672 = vmax.f32 %v544, 0.0
  %v673 = vmax.f32 %v547, 0.0
  %v674 = vmax.f32 %v552, 0.0
  %v675 = vmax.f32 %v555, 0.0
  %v676 = vmax.f32 %v560, 0.0
  %v677 = vmax.f32 %v563, 0.0
  %v678 = vmax.f32 %v568, 0.0
  %v679 = vmax.f32 %v571, 0.0
  %v680 = vmax.f32 %v576, 0.0
  %v681 = vmax.f32 %v579, 0.0
  %v682 = vmax.f32 %v584, 0.0
  %v683 = vmax.f32 %v587, 0.0
  %v684 = vmax.f32 %v592, 0.0
  %v685 = vmax.f32 %v595, 0.0
  %v686 = vmax.f32 %v600, 0.0
  %v687 = vmax.f32 %v603, 0.0
  %v688 = vmax.f32 %v608, 0.0
  %v689 = vmax.f32 %v611, 0.0
  %v690 = vmax.f32 %v616, 0.0
  %v691 = vmax.f32 %v619, 0.0
  %v692 = vmax.f32 %v624, 0.0
  %v693 = vmax.f32 %v627, 0.0
  %694 = vst [vmem:[%s2] sm:$0xff] %v630
  %695 = vst [vmem:[%s2 + $0x8] sm:$0xff] %v631
  %696 = vst [vmem:[%s2 + $0x10] sm:$0xff] %v632
  %697 = vst [vmem:[%s2 + $0x18] sm:$0xff] %v633
  %698 = vst [vmem:[%s2 + $0x20] sm:$0xff] %v634
  %699 = vst [vmem:[%s2 + $0x28] sm:$0xff] %v635
  %700 = vst [vmem:[%s2 + $0x30] sm:$0xff] %v636
  %701 = vst [vmem:[%s2 + $0x38] sm:$0xff] %v637
  %702 = vst [vmem:[%s2 + $0x40] sm:$0xff] %v638
  %703 = vst [vmem:[%s2 + $0x48] sm:$0xff] %v639
  %704 = vst [vmem:[%s2 + $0x50] sm:$0xff] %v640
  %705 = vst [vmem:[%s2 + $0x58] sm:$0xff] %v641
  %706 = vst [vmem:[%s2 + $0x60] sm:$0xff] %v642
  %707 = vst [vmem:[%s2 + $0x68] sm:$0xff] %v643
  %708 = vst [vmem:[%s2 + $0x70] sm:$0xff] %v644
  %709 = vst [vmem:[%s2 + $0x78] sm:$0xff] %v645
  %710 = vst [vmem:[%s2 + $0x80] sm:$0xff] %v646
  %711 = vst [vmem:[%s2 + $0x88] sm:$0xff] %v647
  %712 = vst [vmem:[%s2 + $0x90] sm:$0xff] %v648
  %713 = vst [vmem:[%s2 + $0x98] sm:$0xff] %v649
  %714 = vst [vmem:[%s2 + $0xa0] sm:$0xff] %v650
  %715 = vst [vmem:[%s2 + $0xa8] sm:$0xff] %v651
  %716 = vst [vmem:[%s2 + $0xb0] sm:$0xff] %v652
  %717 = vst [vmem:[%s2 + $0xb8] sm:$0xff] %v653
  %718 = vst [vmem:[%s2 + $0xc0] sm:$0xff] %v654
  %719 = vst [vmem:[%s2 + $0xc8] sm:$0xff] %v655
  %720 = vst [vmem:[%s2 + $0xd0] sm:$0xff] %v656
  %721 = vst [vmem:[%s2 + $0xd8] sm:$0xff] %v657
  %722 = vst [vmem:[%s2 + $0xe0] sm:$0xff] %v658
  %723 = vst [vmem:[%s2 + $0xe8] sm:$0xff] %v659
  %724 = vst [vmem:[%s2 + $0xf0] sm:$0xff] %v660
  %725 = vst [vmem:[%s2 + $0xf8] sm:$0xff] %v661
  %726 = vst [vmem:[%s2 + $0x100] sm:$0xff] %v662
  %727 = vst [vmem:[%s2 + $0x108] sm:$0xff] %v663
  %728 = vst [vmem:[%s2 + $0x110] sm:$0xff] %v664
  %729 = vst [vmem:[%s2 + $0x118] sm:$0xff] %v665
  %730 = vst [vmem:[%s2 + $0x120] sm:$0xff] %v666
  %731 = vst [vmem:[%s2 + $0x128] sm:$0xff] %v667
  %732 = vst [vmem:[%s2 + $0x130] sm:$0xff] %v668
  %733 = vst [vmem:[%s2 + $0x138] sm:$0xff] %v669
  %734 = vst [vmem:[%s2 + $0x140] sm:$0xff] %v670
  %735 = vst [vmem:[%s2 + $0x148] sm:$0xff] %v671
  %736 = vst [vmem:[%s2 + $0x150] sm:$0xff] %v672
  %737 = vst [vmem:[%s2 + $0x158] sm:$0xff] %v673
  %738 = vst [vmem:[%s2 + $0x160] sm:$0xff] %v674
  %739 = vst [vmem:[%s2 + $0x168] sm:$0xff] %v675
  %740 = vst [vmem:[%s2 + $0x170] sm:$0xff] %v676
  %741 = vst [vmem:[%s2 + $0x178] sm:$0xff] %v677
  %742 = vst [vmem:[%s2 + $0x180] sm:$0xff] %v678
  %743 = vst [vmem:[%s2 + $0x188] sm:$0xff] %v679
  %744 = vst [vmem:[%s2 + $0x190] sm:$0xff] %v680
  %745 = vst [vmem:[%s2 + $0x198] sm:$0xff] %v681
  %746 = vst [vmem:[%s2 + $0x1a0] sm:$0xff] %v682
  %747 = vst [vmem:[%s2 + $0x1a8] sm:$0xff] %v683
  %748 = vst [vmem:[%s2 + $0x1b0] sm:$0xff] %v684
  %749 = vst [vmem:[%s2 + $0x1b8] sm:$0xff] %v685
  %750 = vst [vmem:[%s2 + $0x1c0] sm:$0xff] %v686
  %751 = vst [vmem:[%s2 + $0x1c8] sm:$0xff] %v687
  %752 = vst [vmem:[%s2 + $0x1d0] sm:$0xff] %v688
  %753 = vst [vmem:[%s2 + $0x1d8] sm:$0xff] %v689
  %754 = vst [vmem:[%s2 + $0x1e0] sm:$0xff] %v690
  %755 = vst [vmem:[%s2 + $0x1e8] sm:$0xff] %v691
  %756 = vst [vmem:[%s2 + $0x1f0] sm:$0xff] %v692
  %757 = vst [vmem:[%s2 + $0x1f8] sm:$0xff] %v693
  // Predicated region
  $region10: #{forward.178} parent=0 // pred_check
    _
  $region11: #{forward.178} parent=0 // pred_check_branch
    %759 = sbr.rel (0) target = $region13
  $region12: #{forward.178} parent=0 // pred_region
    _
  $region13: #{forward.178} parent=0 // pred_fallthru
    _
  // Predicated region
  $region14: #{forward.178} parent=0 // pred_check
    _
  $region15: #{forward.178} parent=0 // pred_check_branch
    %761 = sbr.rel (0) target = $region17
  $region16: #{forward.178} parent=0 // pred_region
    _
  $region17: #{forward.178} parent=0 // pred_fallthru
    _

// kernel: forward.177
$region0: #{forward.177}
  #allocation0 [shape = 'u32[]', space=smem, size = 0x4, offset = 0x4, fixed_abs, tag = 'smem constant byte address 0x4 - core index']
  #allocation1 [shape = 'u32[144,128]{1,0:T(1,128)}', space=vmem, size = 0x12000, scoped, tag = 'internal scratch']
  %s0 = inlined_call_operand.vmem [shape: bf16[512,16], index: 0, kind: input, shape index: {}]
  %s1 = inlined_call_operand.vmem [shape: bf16[16,128], index: 1, kind: input, shape index: {}]
  %s2 = inlined_call_operand.vmem [shape: f32[512,128], index: 2, kind: input, shape index: {}]
  %s3 = inlined_call_operand.vmem [shape: f32[512,128], index: 3, kind: output, shape index: {}]
  %s4 = sld [smem:[#allocation0]]
  $region22: #{forward.177} parent=0
    _
  %s6 = ssub.s32 1, %s4
  %s7 = scalar_select 0, %s6, %s4
  // Predicated region
  $region2: #{forward.177} parent=0 // pred_check
    _
  $region3: #{forward.177} parent=0 // pred_check_branch
    %9 = sbr.rel (0) target = $region5
  $region4: #{forward.177} parent=0 // pred_region
    _
  $region5: #{forward.177} parent=0 // pred_fallthru
    _
  // Predicated region
  $region6: #{forward.177} parent=0 // pred_check
    _
  $region7: #{forward.177} parent=0 // pred_check_branch
    %11 = sbr.rel (0) target = $region9
  $region8: #{forward.177} parent=0 // pred_region
    _
  $region9: #{forward.177} parent=0 // pred_fallthru
    _
  // Predicated region
  $region10: #{forward.177} parent=0 // pred_check
    _
  $region11: #{forward.177} parent=0 // pred_check_branch
    %13 = sbr.rel (0) target = $region13
  $region12: #{forward.177} parent=0 // pred_region
    _
  $region13: #{forward.177} parent=0 // pred_fallthru
    _
  %v15 = vld [vmem:[%s0] sm:$0xf]
  %v16 = vld [vmem:[%s0 + $0x4] sm:$0xf]
  %v17 = vld [vmem:[%s0 + $0x8] sm:$0xf]
  %v18 = vld [vmem:[%s0 + $0xc] sm:$0xf]
  %v19 = vld [vmem:[%s0 + $0x10] sm:$0xf]
  %v20 = vld [vmem:[%s0 + $0x14] sm:$0xf]
  %v21 = vld [vmem:[%s0 + $0x18] sm:$0xf]
  %v22 = vld [vmem:[%s0 + $0x1c] sm:$0xf]
  %v23 = vld [vmem:[%s0 + $0x20] sm:$0xf]
  %v24 = vld [vmem:[%s0 + $0x24] sm:$0xf]
  %v25 = vld [vmem:[%s0 + $0x28] sm:$0xf]
  %v26 = vld [vmem:[%s0 + $0x2c] sm:$0xf]
  %v27 = vld [vmem:[%s0 + $0x30] sm:$0xf]
  %v28 = vld [vmem:[%s0 + $0x34] sm:$0xf]
  %v29 = vld [vmem:[%s0 + $0x38] sm:$0xf]
  %v30 = vld [vmem:[%s0 + $0x3c] sm:$0xf]
  %v31 = vld [vmem:[%s0 + $0x40] sm:$0xf]
  %v32 = vld [vmem:[%s0 + $0x44] sm:$0xf]
  %v33 = vld [vmem:[%s0 + $0x48] sm:$0xf]
  %v34 = vld [vmem:[%s0 + $0x4c] sm:$0xf]
  %v35 = vld [vmem:[%s0 + $0x50] sm:$0xf]
  %v36 = vld [vmem:[%s0 + $0x54] sm:$0xf]
  %v37 = vld [vmem:[%s0 + $0x58] sm:$0xf]
  %v38 = vld [vmem:[%s0 + $0x5c] sm:$0xf]
  %v39 = vld [vmem:[%s0 + $0x60] sm:$0xf]
  %v40 = vld [vmem:[%s0 + $0x64] sm:$0xf]
  %v41 = vld [vmem:[%s0 + $0x68] sm:$0xf]
  %v42 = vld [vmem:[%s0 + $0x6c] sm:$0xf]
  %v43 = vld [vmem:[%s0 + $0x70] sm:$0xf]
  %v44 = vld [vmem:[%s0 + $0x74] sm:$0xf]
  %v45 = vld [vmem:[%s0 + $0x78] sm:$0xf]
  %v46 = vld [vmem:[%s0 + $0x7c] sm:$0xf]
  %v47 = vld [vmem:[%s0 + $0x80] sm:$0xf]
  %v48 = vld [vmem:[%s0 + $0x84] sm:$0xf]
  %v49 = vld [vmem:[%s0 + $0x88] sm:$0xf]
  %v50 = vld [vmem:[%s0 + $0x8c] sm:$0xf]
  %v51 = vld [vmem:[%s0 + $0x90] sm:$0xf]
  %v52 = vld [vmem:[%s0 + $0x94] sm:$0xf]
  %v53 = vld [vmem:[%s0 + $0x98] sm:$0xf]
  %v54 = vld [vmem:[%s0 + $0x9c] sm:$0xf]
  %v55 = vld [vmem:[%s0 + $0xa0] sm:$0xf]
  %v56 = vld [vmem:[%s0 + $0xa4] sm:$0xf]
  %v57 = vld [vmem:[%s0 + $0xa8] sm:$0xf]
  %v58 = vld [vmem:[%s0 + $0xac] sm:$0xf]
  %v59 = vld [vmem:[%s0 + $0xb0] sm:$0xf]
  %v60 = vld [vmem:[%s0 + $0xb4] sm:$0xf]
  %v61 = vld [vmem:[%s0 + $0xb8] sm:$0xf]
  %v62 = vld [vmem:[%s0 + $0xbc] sm:$0xf]
  %v63 = vld [vmem:[%s0 + $0xc0] sm:$0xf]
  %v64 = vld [vmem:[%s0 + $0xc4] sm:$0xf]
  %v65 = vld [vmem:[%s0 + $0xc8] sm:$0xf]
  %v66 = vld [vmem:[%s0 + $0xcc] sm:$0xf]
  %v67 = vld [vmem:[%s0 + $0xd0] sm:$0xf]
  %v68 = vld [vmem:[%s0 + $0xd4] sm:$0xf]
  %v69 = vld [vmem:[%s0 + $0xd8] sm:$0xf]
  %v70 = vld [vmem:[%s0 + $0xdc] sm:$0xf]
  %v71 = vld [vmem:[%s0 + $0xe0] sm:$0xf]
  %v72 = vld [vmem:[%s0 + $0xe4] sm:$0xf]
  %v73 = vld [vmem:[%s0 + $0xe8] sm:$0xf]
  %v74 = vld [vmem:[%s0 + $0xec] sm:$0xf]
  %v75 = vld [vmem:[%s0 + $0xf0] sm:$0xf]
  %v76 = vld [vmem:[%s0 + $0xf4] sm:$0xf]
  %v77 = vld [vmem:[%s0 + $0xf8] sm:$0xf]
  %v78 = vld [vmem:[%s0 + $0xfc] sm:$0xf]
  %v79 = vld [vmem:[%s1] sm:$0xf]
  %v80 = vld [vmem:[%s1 + $0x4] sm:$0xf]
  %v81 = vld [vmem:[%s2] sm:$0xff]
  %v82 = vld [vmem:[%s2 + $0x8] sm:$0xff]
  %v83 = vld [vmem:[%s2 + $0x10] sm:$0xff]
  %v84 = vld [vmem:[%s2 + $0x18] sm:$0xff]
  %v85 = vld [vmem:[%s2 + $0x20] sm:$0xff]
  %v86 = vld [vmem:[%s2 + $0x28] sm:$0xff]
  %v87 = vld [vmem:[%s2 + $0x30] sm:$0xff]
  %v88 = vld [vmem:[%s2 + $0x38] sm:$0xff]
  %v89 = vld [vmem:[%s2 + $0x40] sm:$0xff]
  %v90 = vld [vmem:[%s2 + $0x48] sm:$0xff]
  %v91 = vld [vmem:[%s2 + $0x50] sm:$0xff]
  %v92 = vld [vmem:[%s2 + $0x58] sm:$0xff]
  %v93 = vld [vmem:[%s2 + $0x60] sm:$0xff]
  %v94 = vld [vmem:[%s2 + $0x68] sm:$0xff]
  %v95 = vld [vmem:[%s2 + $0x70] sm:$0xff]
  %v96 = vld [vmem:[%s2 + $0x78] sm:$0xff]
  %v97 = vld [vmem:[%s2 + $0x80] sm:$0xff]
  %v98 = vld [vmem:[%s2 + $0x88] sm:$0xff]
  %v99 = vld [vmem:[%s2 + $0x90] sm:$0xff]
  %v100 = vld [vmem:[%s2 + $0x98] sm:$0xff]
  %v101 = vld [vmem:[%s2 + $0xa0] sm:$0xff]
  %v102 = vld [vmem:[%s2 + $0xa8] sm:$0xff]
  %v103 = vld [vmem:[%s2 + $0xb0] sm:$0xff]
  %v104 = vld [vmem:[%s2 + $0xb8] sm:$0xff]
  %v105 = vld [vmem:[%s2 + $0xc0] sm:$0xff]
  %v106 = vld [vmem:[%s2 + $0xc8] sm:$0xff]
  %v107 = vld [vmem:[%s2 + $0xd0] sm:$0xff]
  %v108 = vld [vmem:[%s2 + $0xd8] sm:$0xff]
  %v109 = vld [vmem:[%s2 + $0xe0] sm:$0xff]
  %v110 = vld [vmem:[%s2 + $0xe8] sm:$0xff]
  %v111 = vld [vmem:[%s2 + $0xf0] sm:$0xff]
  %v112 = vld [vmem:[%s2 + $0xf8] sm:$0xff]
  %v113 = vld [vmem:[%s2 + $0x100] sm:$0xff]
  %v114 = vld [vmem:[%s2 + $0x108] sm:$0xff]
  %v115 = vld [vmem:[%s2 + $0x110] sm:$0xff]
  %v116 = vld [vmem:[%s2 + $0x118] sm:$0xff]
  %v117 = vld [vmem:[%s2 + $0x120] sm:$0xff]
  %v118 = vld [vmem:[%s2 + $0x128] sm:$0xff]
  %v119 = vld [vmem:[%s2 + $0x130] sm:$0xff]
  %v120 = vld [vmem:[%s2 + $0x138] sm:$0xff]
  %v121 = vld [vmem:[%s2 + $0x140] sm:$0xff]
  %v122 = vld [vmem:[%s2 + $0x148] sm:$0xff]
  %v123 = vld [vmem:[%s2 + $0x150] sm:$0xff]
  %v124 = vld [vmem:[%s2 + $0x158] sm:$0xff]
  %v125 = vld [vmem:[%s2 + $0x160] sm:$0xff]
  %v126 = vld [vmem:[%s2 + $0x168] sm:$0xff]
  %v127 = vld [vmem:[%s2 + $0x170] sm:$0xff]
  %v128 = vld [vmem:[%s2 + $0x178] sm:$0xff]
  %v129 = vld [vmem:[%s2 + $0x180] sm:$0xff]
  %v130 = vld [vmem:[%s2 + $0x188] sm:$0xff]
  %v131 = vld [vmem:[%s2 + $0x190] sm:$0xff]
  %v132 = vld [vmem:[%s2 + $0x198] sm:$0xff]
  %v133 = vld [vmem:[%s2 + $0x1a0] sm:$0xff]
  %v134 = vld [vmem:[%s2 + $0x1a8] sm:$0xff]
  %v135 = vld [vmem:[%s2 + $0x1b0] sm:$0xff]
  %v136 = vld [vmem:[%s2 + $0x1b8] sm:$0xff]
  %v137 = vld [vmem:[%s2 + $0x1c0] sm:$0xff]
  %v138 = vld [vmem:[%s2 + $0x1c8] sm:$0xff]
  %v139 = vld [vmem:[%s2 + $0x1d0] sm:$0xff]
  %v140 = vld [vmem:[%s2 + $0x1d8] sm:$0xff]
  %v141 = vld [vmem:[%s2 + $0x1e0] sm:$0xff]
  %v142 = vld [vmem:[%s2 + $0x1e8] sm:$0xff]
  %v143 = vld [vmem:[%s2 + $0x1f0] sm:$0xff]
  %v144 = vld [vmem:[%s2 + $0x1f8] sm:$0xff]
  %v209 = vunpack.c.l.b16 %v15
  %v210 = vunpack.c.l.b16 %v16
  %v211 = vunpack.c.l.b16 %v17
  %v212 = vunpack.c.l.b16 %v18
  %v213 = vunpack.c.l.b16 %v19
  %v214 = vunpack.c.l.b16 %v20
  %v215 = vunpack.c.l.b16 %v21
  %v216 = vunpack.c.l.b16 %v22
  %v217 = vunpack.c.l.b16 %v23
  %v218 = vunpack.c.l.b16 %v24
  %v219 = vunpack.c.l.b16 %v25
  %v220 = vunpack.c.l.b16 %v26
  %v221 = vunpack.c.l.b16 %v27
  %v222 = vunpack.c.l.b16 %v28
  %v223 = vunpack.c.l.b16 %v29
  %v224 = vunpack.c.l.b16 %v30
  %v225 = vunpack.c.l.b16 %v31
  %v226 = vunpack.c.l.b16 %v32
  %v227 = vunpack.c.l.b16 %v33
  %v228 = vunpack.c.l.b16 %v34
  %v229 = vunpack.c.l.b16 %v35
  %v230 = vunpack.c.l.b16 %v36
  %v231 = vunpack.c.l.b16 %v37
  %v232 = vunpack.c.l.b16 %v38
  %v233 = vunpack.c.l.b16 %v39
  %v234 = vunpack.c.l.b16 %v40
  %v235 = vunpack.c.l.b16 %v41
  %v236 = vunpack.c.l.b16 %v42
  %v237 = vunpack.c.l.b16 %v43
  %v238 = vunpack.c.l.b16 %v44
  %v239 = vunpack.c.l.b16 %v45
  %v240 = vunpack.c.l.b16 %v46
  %v241 = vunpack.c.l.b16 %v47
  %v242 = vunpack.c.l.b16 %v48
  %v243 = vunpack.c.l.b16 %v49
  %v244 = vunpack.c.l.b16 %v50
  %v245 = vunpack.c.l.b16 %v51
  %v246 = vunpack.c.l.b16 %v52
  %v247 = vunpack.c.l.b16 %v53
  %v248 = vunpack.c.l.b16 %v54
  %v249 = vunpack.c.l.b16 %v55
  %v250 = vunpack.c.l.b16 %v56
  %v251 = vunpack.c.l.b16 %v57
  %v252 = vunpack.c.l.b16 %v58
  %v253 = vunpack.c.l.b16 %v59
  %v254 = vunpack.c.l.b16 %v60
  %v255 = vunpack.c.l.b16 %v61
  %v256 = vunpack.c.l.b16 %v62
  %v257 = vunpack.c.l.b16 %v63
  %v258 = vunpack.c.l.b16 %v64
  %v259 = vunpack.c.l.b16 %v65
  %v260 = vunpack.c.l.b16 %v66
  %v261 = vunpack.c.l.b16 %v67
  %v262 = vunpack.c.l.b16 %v68
  %v263 = vunpack.c.l.b16 %v69
  %v264 = vunpack.c.l.b16 %v70
  %v265 = vunpack.c.l.b16 %v71
  %v266 = vunpack.c.l.b16 %v72
  %v267 = vunpack.c.l.b16 %v73
  %v268 = vunpack.c.l.b16 %v74
  %v269 = vunpack.c.l.b16 %v75
  %v270 = vunpack.c.l.b16 %v76
  %v271 = vunpack.c.l.b16 %v77
  %v272 = vunpack.c.l.b16 %v78
  %v273 = vpack.c.b16 %v210, %v209
  %v274 = vpack.c.b16 %v212, %v211
  %v275 = vpack.c.b16 %v214, %v213
  %v276 = vpack.c.b16 %v216, %v215
  %v277 = vpack.c.b16 %v218, %v217
  %v278 = vpack.c.b16 %v220, %v219
  %v279 = vpack.c.b16 %v222, %v221
  %v280 = vpack.c.b16 %v224, %v223
  %v281 = vpack.c.b16 %v226, %v225
  %v282 = vpack.c.b16 %v228, %v227
  %v283 = vpack.c.b16 %v230, %v229
  %v284 = vpack.c.b16 %v232, %v231
  %v285 = vpack.c.b16 %v234, %v233
  %v286 = vpack.c.b16 %v236, %v235
  %v287 = vpack.c.b16 %v238, %v237
  %v288 = vpack.c.b16 %v240, %v239
  %v289 = vpack.c.b16 %v242, %v241
  %v290 = vpack.c.b16 %v244, %v243
  %v291 = vpack.c.b16 %v246, %v245
  %v292 = vpack.c.b16 %v248, %v247
  %v293 = vpack.c.b16 %v250, %v249
  %v294 = vpack.c.b16 %v252, %v251
  %v295 = vpack.c.b16 %v254, %v253
  %v296 = vpack.c.b16 %v256, %v255
  %v297 = vpack.c.b16 %v258, %v257
  %v298 = vpack.c.b16 %v260, %v259
  %v299 = vpack.c.b16 %v262, %v261
  %v300 = vpack.c.b16 %v264, %v263
  %v301 = vpack.c.b16 %v266, %v265
  %v302 = vpack.c.b16 %v268, %v267
  %v303 = vpack.c.b16 %v270, %v269
  %v304 = vpack.c.b16 %v272, %v271
  %v307 = vunpack.c.l.b16 %v79
  %v308 = vunpack.c.l.b16 %v80
  %v309 = vpack.c.b16 %v308, %v307
  %vm311 = vcmask 130048
  %v313 = vsel %vm311, %v273, 0
  %v316 = vsel %vm311, %v274, 0
  %v319 = vsel %vm311, %v275, 0
  %v322 = vsel %vm311, %v276, 0
  %v325 = vsel %vm311, %v277, 0
  %v328 = vsel %vm311, %v278, 0
  %v331 = vsel %vm311, %v279, 0
  %v334 = vsel %vm311, %v280, 0
  %v337 = vsel %vm311, %v281, 0
  %v340 = vsel %vm311, %v282, 0
  %v343 = vsel %vm311, %v283, 0
  %v346 = vsel %vm311, %v284, 0
  %v349 = vsel %vm311, %v285, 0
  %v352 = vsel %vm311, %v286, 0
  %v355 = vsel %vm311, %v287, 0
  %v358 = vsel %vm311, %v288, 0
  %v361 = vsel %vm311, %v289, 0
  %v364 = vsel %vm311, %v290, 0
  %v367 = vsel %vm311, %v291, 0
  %v370 = vsel %vm311, %v292, 0
  %v373 = vsel %vm311, %v293, 0
  %v376 = vsel %vm311, %v294, 0
  %v379 = vsel %vm311, %v295, 0
  %v382 = vsel %vm311, %v296, 0
  %v385 = vsel %vm311, %v297, 0
  %v388 = vsel %vm311, %v298, 0
  %v391 = vsel %vm311, %v299, 0
  %v394 = vsel %vm311, %v300, 0
  %v397 = vsel %vm311, %v301, 0
  %v400 = vsel %vm311, %v302, 0
  %v403 = vsel %vm311, %v303, 0
  %v406 = vsel %vm311, %v304, 0
  %408 = vmatprep.subr.bf16.mxu0 0
  %409 = vmatpush1.bf16.msra.mxu0 %v309
  %410 = vmatprep.subr.bf16.mxu0 0
  %411 = vmatpush1.bf16.msra.mxu0 0
  %412 = vmatprep.subr.bf16.mxu0 0
  %413 = vmatpush1.bf16.msra.mxu0 0
  %414 = vmatprep.subr.bf16.mxu0 0
  %415 = vmatpush1.bf16.msra.mxu0 0
  %416 = vmatprep.subr.bf16.mxu0 0
  %417 = vmatpush1.bf16.msra.mxu0 0
  %418 = vmatprep.subr.bf16.mxu0 0
  %419 = vmatpush1.bf16.msra.mxu0 0
  %420 = vmatprep.subr.bf16.mxu0 0
  %421 = vmatpush1.bf16.msra.mxu0 0
  %422 = vmatprep.subr.bf16.mxu0 0
  %423 = vmatpush1.bf16.msra.mxu0 0
  %424 = vmatprep.subr.bf16.mxu0 0
  %425 = vmatpush1.bf16.msra.mxu0 0
  %426 = vmatprep.subr.bf16.mxu0 0
  %427 = vmatpush1.bf16.msra.mxu0 0
  %428 = vmatprep.subr.bf16.mxu0 0
  %429 = vmatpush1.bf16.msra.mxu0 0
  %430 = vmatprep.subr.bf16.mxu0 0
  %431 = vmatpush1.bf16.msra.mxu0 0
  %432 = vmatprep.subr.bf16.mxu0 0
  %433 = vmatpush1.bf16.msra.mxu0 0
  %434 = vmatprep.subr.bf16.mxu0 0
  %435 = vmatpush1.bf16.msra.mxu0 0
  %436 = vmatprep.subr.bf16.mxu0 0
  %437 = vmatpush1.bf16.msra.mxu0 0
  %438 = vmatprep.subr.bf16.mxu0 0
  %439 = vmatpush1.bf16.msra.mxu0 0
  %440 = vmatprep.mubr.bf16.mxu0 0
  %441 = vmatmul.mubr.bf16.gmra.mrb[0].mxu0 %v313
  %v442 = vpop.f32.mrb[0].mxu0
  %v443 = vadd.f32 %v81, %v442
  %v444 = vpop.f32.mrb[0].mxu0
  %v445 = vpop.f32.mrb[0].mxu0
  %v446 = vadd.f32 %v82, %v445
  %v447 = vpop.f32.mrb[0].mxu0
  %448 = vmatprep.mubr.bf16.mxu0 0
  %449 = vmatmul.mubr.bf16.gmra.mrb[0].mxu0 %v316
  %v450 = vpop.f32.mrb[0].mxu0
  %v451 = vadd.f32 %v83, %v450
  %v452 = vpop.f32.mrb[0].mxu0
  %v453 = vpop.f32.mrb[0].mxu0
  %v454 = vadd.f32 %v84, %v453
  %v455 = vpop.f32.mrb[0].mxu0
  %456 = vmatprep.mubr.bf16.mxu0 0
  %457 = vmatmul.mubr.bf16.gmra.mrb[0].mxu0 %v319
  %v458 = vpop.f32.mrb[0].mxu0
  %v459 = vadd.f32 %v85, %v458
  %v460 = vpop.f32.mrb[0].mxu0
  %v461 = vpop.f32.mrb[0].mxu0
  %v462 = vadd.f32 %v86, %v461
  %v463 = vpop.f32.mrb[0].mxu0
  %464 = vmatprep.mubr.bf16.mxu0 0
  %465 = vmatmul.mubr.bf16.gmra.mrb[0].mxu0 %v322
  %v466 = vpop.f32.mrb[0].mxu0
  %v467 = vadd.f32 %v87, %v466
  %v468 = vpop.f32.mrb[0].mxu0
  %v469 = vpop.f32.mrb[0].mxu0
  %v470 = vadd.f32 %v88, %v469
  %v471 = vpop.f32.mrb[0].mxu0
  %472 = vmatprep.mubr.bf16.mxu0 0
  %473 = vmatmul.mubr.bf16.gmra.mrb[0].mxu0 %v325
  %v474 = vpop.f32.mrb[0].mxu0
  %v475 = vadd.f32 %v89, %v474
  %v476 = vpop.f32.mrb[0].mxu0
  %v477 = vpop.f32.mrb[0].mxu0
  %v478 = vadd.f32 %v90, %v477
  %v479 = vpop.f32.mrb[0].mxu0
  %480 = vmatprep.mubr.bf16.mxu0 0
  %481 = vmatmul.mubr.bf16.gmra.mrb[0].mxu0 %v328
  %v482 = vpop.f32.mrb[0].mxu0
  %v483 = vadd.f32 %v91, %v482
  %v484 = vpop.f32.mrb[0].mxu0
  %v485 = vpop.f32.mrb[0].mxu0
  %v486 = vadd.f32 %v92, %v485
  %v487 = vpop.f32.mrb[0].mxu0
  %488 = vmatprep.mubr.bf16.mxu0 0
  %489 = vmatmul.mubr.bf16.gmra.mrb[0].mxu0 %v331
  %v490 = vpop.f32.mrb[0].mxu0
  %v491 = vadd.f32 %v93, %v490
  %v492 = vpop.f32.mrb[0].mxu0
  %v493 = vpop.f32.mrb[0].mxu0
  %v494 = vadd.f32 %v94, %v493
  %v495 = vpop.f32.mrb[0].mxu0
  %496 = vmatprep.mubr.bf16.mxu0 0
  %497 = vmatmul.mubr.bf16.gmra.mrb[0].mxu0 %v334
  %v498 = vpop.f32.mrb[0].mxu0
  %v499 = vadd.f32 %v95, %v498
  %v500 = vpop.f32.mrb[0].mxu0
  %v501 = vpop.f32.mrb[0].mxu0
  %v502 = vadd.f32 %v96, %v501
  %v503 = vpop.f32.mrb[0].mxu0
  %504 = vmatprep.mubr.bf16.mxu0 0
  %505 = vmatmul.mubr.bf16.gmra.mrb[0].mxu0 %v337
  %v506 = vpop.f32.mrb[0].mxu0
  %v507 = vadd.f32 %v97, %v506
  %v508 = vpop.f32.mrb[0].mxu0
  %v509 = vpop.f32.mrb[0].mxu0
  %v510 = vadd.f32 %v98, %v509
  %v511 = vpop.f32.mrb[0].mxu0
  %512 = vmatprep.mubr.bf16.mxu0 0
  %513 = vmatmul.mubr.bf16.gmra.mrb[0].mxu0 %v340
  %v514 = vpop.f32.mrb[0].mxu0
  %v515 = vadd.f32 %v99, %v514
  %v516 = vpop.f32.mrb[0].mxu0
  %v517 = vpop.f32.mrb[0].mxu0
  %v518 = vadd.f32 %v100, %v517
  %v519 = vpop.f32.mrb[0].mxu0
  %520 = vmatprep.mubr.bf16.mxu0 0
  %521 = vmatmul.mubr.bf16.gmra.mrb[0].mxu0 %v343
  %v522 = vpop.f32.mrb[0].mxu0
  %v523 = vadd.f32 %v101, %v522
  %v524 = vpop.f32.mrb[0].mxu0
  %v525 = vpop.f32.mrb[0].mxu0
  %v526 = vadd.f32 %v102, %v525
  %v527 = vpop.f32.mrb[0].mxu0
  %528 = vmatprep.mubr.bf16.mxu0 0
  %529 = vmatmul.mubr.bf16.gmra.mrb[0].mxu0 %v346
  %v530 = vpop.f32.mrb[0].mxu0
  %v531 = vadd.f32 %v103, %v530
  %v532 = vpop.f32.mrb[0].mxu0
  %v533 = vpop.f32.mrb[0].mxu0
  %v534 = vadd.f32 %v104, %v533
  %v535 = vpop.f32.mrb[0].mxu0
  %536 = vmatprep.mubr.bf16.mxu0 0
  %537 = vmatmul.mubr.bf16.gmra.mrb[0].mxu0 %v349
  %v538 = vpop.f32.mrb[0].mxu0
  %v539 = vadd.f32 %v105, %v538
  %v540 = vpop.f32.mrb[0].mxu0
  %v541 = vpop.f32.mrb[0].mxu0
  %v542 = vadd.f32 %v106, %v541
  %v543 = vpop.f32.mrb[0].mxu0
  %544 = vmatprep.mubr.bf16.mxu0 0
  %545 = vmatmul.mubr.bf16.gmra.mrb[0].mxu0 %v352
  %v546 = vpop.f32.mrb[0].mxu0
  %v547 = vadd.f32 %v107, %v546
  %v548 = vpop.f32.mrb[0].mxu0
  %v549 = vpop.f32.mrb[0].mxu0
  %v550 = vadd.f32 %v108, %v549
  %v551 = vpop.f32.mrb[0].mxu0
  %552 = vmatprep.mubr.bf16.mxu0 0
  %553 = vmatmul.mubr.bf16.gmra.mrb[0].mxu0 %v355
  %v554 = vpop.f32.mrb[0].mxu0
  %v555 = vadd.f32 %v109, %v554
  %v556 = vpop.f32.mrb[0].mxu0
  %v557 = vpop.f32.mrb[0].mxu0
  %v558 = vadd.f32 %v110, %v557
  %v559 = vpop.f32.mrb[0].mxu0
  %560 = vmatprep.mubr.bf16.mxu0 0
  %561 = vmatmul.mubr.bf16.gmra.mrb[0].mxu0 %v358
  %v562 = vpop.f32.mrb[0].mxu0
  %v563 = vadd.f32 %v111, %v562
  %v564 = vpop.f32.mrb[0].mxu0
  %v565 = vpop.f32.mrb[0].mxu0
  %v566 = vadd.f32 %v112, %v565
  %v567 = vpop.f32.mrb[0].mxu0
  %568 = vmatprep.mubr.bf16.mxu0 0
  %569 = vmatmul.mubr.bf16.gmra.mrb[0].mxu0 %v361
  %v570 = vpop.f32.mrb[0].mxu0
  %v571 = vadd.f32 %v113, %v570
  %v572 = vpop.f32.mrb[0].mxu0
  %v573 = vpop.f32.mrb[0].mxu0
  %v574 = vadd.f32 %v114, %v573
  %v575 = vpop.f32.mrb[0].mxu0
  %576 = vmatprep.mubr.bf16.mxu0 0
  %577 = vmatmul.mubr.bf16.gmra.mrb[0].mxu0 %v364
  %v578 = vpop.f32.mrb[0].mxu0
  %v579 = vadd.f32 %v115, %v578
  %v580 = vpop.f32.mrb[0].mxu0
  %v581 = vpop.f32.mrb[0].mxu0
  %v582 = vadd.f32 %v116, %v581
  %v583 = vpop.f32.mrb[0].mxu0
  %584 = vmatprep.mubr.bf16.mxu0 0
  %585 = vmatmul.mubr.bf16.gmra.mrb[0].mxu0 %v367
  %v586 = vpop.f32.mrb[0].mxu0
  %v587 = vadd.f32 %v117, %v586
  %v588 = vpop.f32.mrb[0].mxu0
  %v589 = vpop.f32.mrb[0].mxu0
  %v590 = vadd.f32 %v118, %v589
  %v591 = vpop.f32.mrb[0].mxu0
  %592 = vmatprep.mubr.bf16.mxu0 0
  %593 = vmatmul.mubr.bf16.gmra.mrb[0].mxu0 %v370
  %v594 = vpop.f32.mrb[0].mxu0
  %v595 = vadd.f32 %v119, %v594
  %v596 = vpop.f32.mrb[0].mxu0
  %v597 = vpop.f32.mrb[0].mxu0
  %v598 = vadd.f32 %v120, %v597
  %v599 = vpop.f32.mrb[0].mxu0
  %600 = vmatprep.mubr.bf16.mxu0 0
  %601 = vmatmul.mubr.bf16.gmra.mrb[0].mxu0 %v373
  %v602 = vpop.f32.mrb[0].mxu0
  %v603 = vadd.f32 %v121, %v602
  %v604 = vpop.f32.mrb[0].mxu0
  %v605 = vpop.f32.mrb[0].mxu0
  %v606 = vadd.f32 %v122, %v605
  %v607 = vpop.f32.mrb[0].mxu0
  %608 = vmatprep.mubr.bf16.mxu0 0
  %609 = vmatmul.mubr.bf16.gmra.mrb[0].mxu0 %v376
  %v610 = vpop.f32.mrb[0].mxu0
  %v611 = vadd.f32 %v123, %v610
  %v612 = vpop.f32.mrb[0].mxu0
  %v613 = vpop.f32.mrb[0].mxu0
  %v614 = vadd.f32 %v124, %v613
  %v615 = vpop.f32.mrb[0].mxu0
  %616 = vmatprep.mubr.bf16.mxu0 0
  %617 = vmatmul.mubr.bf16.gmra.mrb[0].mxu0 %v379
  %v618 = vpop.f32.mrb[0].mxu0
  %v619 = vadd.f32 %v125, %v618
  %v620 = vpop.f32.mrb[0].mxu0
  %v621 = vpop.f32.mrb[0].mxu0
  %v622 = vadd.f32 %v126, %v621
  %v623 = vpop.f32.mrb[0].mxu0
  %624 = vmatprep.mubr.bf16.mxu0 0
  %625 = vmatmul.mubr.bf16.gmra.mrb[0].mxu0 %v382
  %v626 = vpop.f32.mrb[0].mxu0
  %v627 = vadd.f32 %v127, %v626
  %v628 = vpop.f32.mrb[0].mxu0
  %v629 = vpop.f32.mrb[0].mxu0
  %v630 = vadd.f32 %v128, %v629
  %v631 = vpop.f32.mrb[0].mxu0
  %632 = vmatprep.mubr.bf16.mxu0 0
  %633 = vmatmul.mubr.bf16.gmra.mrb[0].mxu0 %v385
  %v634 = vpop.f32.mrb[0].mxu0
  %v635 = vadd.f32 %v129, %v634
  %v636 = vpop.f32.mrb[0].mxu0
  %v637 = vpop.f32.mrb[0].mxu0
  %v638 = vadd.f32 %v130, %v637
  %v639 = vpop.f32.mrb[0].mxu0
  %640 = vmatprep.mubr.bf16.mxu0 0
  %641 = vmatmul.mubr.bf16.gmra.mrb[0].mxu0 %v388
  %v642 = vpop.f32.mrb[0].mxu0
  %v643 = vadd.f32 %v131, %v642
  %v644 = vpop.f32.mrb[0].mxu0
  %v645 = vpop.f32.mrb[0].mxu0
  %v646 = vadd.f32 %v132, %v645
  %v647 = vpop.f32.mrb[0].mxu0
  %648 = vmatprep.mubr.bf16.mxu0 0
  %649 = vmatmul.mubr.bf16.gmra.mrb[0].mxu0 %v391
  %v650 = vpop.f32.mrb[0].mxu0
  %v651 = vadd.f32 %v133, %v650
  %v652 = vpop.f32.mrb[0].mxu0
  %v653 = vpop.f32.mrb[0].mxu0
  %v654 = vadd.f32 %v134, %v653
  %v655 = vpop.f32.mrb[0].mxu0
  %656 = vmatprep.mubr.bf16.mxu0 0
  %657 = vmatmul.mubr.bf16.gmra.mrb[0].mxu0 %v394
  %v658 = vpop.f32.mrb[0].mxu0
  %v659 = vadd.f32 %v135, %v658
  %v660 = vpop.f32.mrb[0].mxu0
  %v661 = vpop.f32.mrb[0].mxu0
  %v662 = vadd.f32 %v136, %v661
  %v663 = vpop.f32.mrb[0].mxu0
  %664 = vmatprep.mubr.bf16.mxu0 0
  %665 = vmatmul.mubr.bf16.gmra.mrb[0].mxu0 %v397
  %v666 = vpop.f32.mrb[0].mxu0
  %v667 = vadd.f32 %v137, %v666
  %v668 = vpop.f32.mrb[0].mxu0
  %v669 = vpop.f32.mrb[0].mxu0
  %v670 = vadd.f32 %v138, %v669
  %v671 = vpop.f32.mrb[0].mxu0
  %672 = vmatprep.mubr.bf16.mxu0 0
  %673 = vmatmul.mubr.bf16.gmra.mrb[0].mxu0 %v400
  %v674 = vpop.f32.mrb[0].mxu0
  %v675 = vadd.f32 %v139, %v674
  %v676 = vpop.f32.mrb[0].mxu0
  %v677 = vpop.f32.mrb[0].mxu0
  %v678 = vadd.f32 %v140, %v677
  %v679 = vpop.f32.mrb[0].mxu0
  %680 = vmatprep.mubr.bf16.mxu0 0
  %681 = vmatmul.mubr.bf16.gmra.mrb[0].mxu0 %v403
  %v682 = vpop.f32.mrb[0].mxu0
  %v683 = vadd.f32 %v141, %v682
  %v684 = vpop.f32.mrb[0].mxu0
  %v685 = vpop.f32.mrb[0].mxu0
  %v686 = vadd.f32 %v142, %v685
  %v687 = vpop.f32.mrb[0].mxu0
  %688 = vmatprep.mubr.bf16.mxu0 0
  %689 = vmatmul.mubr.bf16.gmra.mrb[0].mxu0 %v406
  %v690 = vpop.f32.mrb[0].mxu0
  %v691 = vadd.f32 %v143, %v690
  %v692 = vpop.f32.mrb[0].mxu0
  %v693 = vpop.f32.mrb[0].mxu0
  %v694 = vadd.f32 %v144, %v693
  %v695 = vpop.f32.mrb[0].mxu0
  %696 = vdwg.mxu0
  %vm697 = vcmp.ge.f32.partialorder %v443, 0.0
  %vm698 = vcmp.ge.f32.partialorder %v446, 0.0
  %vm699 = vcmp.ge.f32.partialorder %v451, 0.0
  %vm700 = vcmp.ge.f32.partialorder %v454, 0.0
  %vm701 = vcmp.ge.f32.partialorder %v459, 0.0
  %vm702 = vcmp.ge.f32.partialorder %v462, 0.0
  %vm703 = vcmp.ge.f32.partialorder %v467, 0.0
  %vm704 = vcmp.ge.f32.partialorder %v470, 0.0
  %vm705 = vcmp.ge.f32.partialorder %v475, 0.0
  %vm706 = vcmp.ge.f32.partialorder %v478, 0.0
  %vm707 = vcmp.ge.f32.partialorder %v483, 0.0
  %vm708 = vcmp.ge.f32.partialorder %v486, 0.0
  %vm709 = vcmp.ge.f32.partialorder %v491, 0.0
  %vm710 = vcmp.ge.f32.partialorder %v494, 0.0
  %vm711 = vcmp.ge.f32.partialorder %v499, 0.0
  %vm712 = vcmp.ge.f32.partialorder %v502, 0.0
  %vm713 = vcmp.ge.f32.partialorder %v507, 0.0
  %vm714 = vcmp.ge.f32.partialorder %v510, 0.0
  %vm715 = vcmp.ge.f32.partialorder %v515, 0.0
  %vm716 = vcmp.ge.f32.partialorder %v518, 0.0
  %vm717 = vcmp.ge.f32.partialorder %v523, 0.0
  %vm718 = vcmp.ge.f32.partialorder %v526, 0.0
  %vm719 = vcmp.ge.f32.partialorder %v531, 0.0
  %vm720 = vcmp.ge.f32.partialorder %v534, 0.0
  %vm721 = vcmp.ge.f32.partialorder %v539, 0.0
  %vm722 = vcmp.ge.f32.partialorder %v542, 0.0
  %vm723 = vcmp.ge.f32.partialorder %v547, 0.0
  %vm724 = vcmp.ge.f32.partialorder %v550, 0.0
  %vm725 = vcmp.ge.f32.partialorder %v555, 0.0
  %vm726 = vcmp.ge.f32.partialorder %v558, 0.0
  %vm727 = vcmp.ge.f32.partialorder %v563, 0.0
  %vm728 = vcmp.ge.f32.partialorder %v566, 0.0
  %vm729 = vcmp.ge.f32.partialorder %v571, 0.0
  %vm730 = vcmp.ge.f32.partialorder %v574, 0.0
  %vm731 = vcmp.ge.f32.partialorder %v579, 0.0
  %vm732 = vcmp.ge.f32.partialorder %v582, 0.0
  %vm733 = vcmp.ge.f32.partialorder %v587, 0.0
  %vm734 = vcmp.ge.f32.partialorder %v590, 0.0
  %vm735 = vcmp.ge.f32.partialorder %v595, 0.0
  %vm736 = vcmp.ge.f32.partialorder %v598, 0.0
  %vm737 = vcmp.ge.f32.partialorder %v603, 0.0
  %vm738 = vcmp.ge.f32.partialorder %v606, 0.0
  %vm739 = vcmp.ge.f32.partialorder %v611, 0.0
  %vm740 = vcmp.ge.f32.partialorder %v614, 0.0
  %vm741 = vcmp.ge.f32.partialorder %v619, 0.0
  %vm742 = vcmp.ge.f32.partialorder %v622, 0.0
  %vm743 = vcmp.ge.f32.partialorder %v627, 0.0
  %vm744 = vcmp.ge.f32.partialorder %v630, 0.0
  %vm745 = vcmp.ge.f32.partialorder %v635, 0.0
  %vm746 = vcmp.ge.f32.partialorder %v638, 0.0
  %vm747 = vcmp.ge.f32.partialorder %v643, 0.0
  %vm748 = vcmp.ge.f32.partialorder %v646, 0.0
  %vm749 = vcmp.ge.f32.partialorder %v651, 0.0
  %vm750 = vcmp.ge.f32.partialorder %v654, 0.0
  %vm751 = vcmp.ge.f32.partialorder %v659, 0.0
  %vm752 = vcmp.ge.f32.partialorder %v662, 0.0
  %vm753 = vcmp.ge.f32.partialorder %v667, 0.0
  %vm754 = vcmp.ge.f32.partialorder %v670, 0.0
  %vm755 = vcmp.ge.f32.partialorder %v675, 0.0
  %vm756 = vcmp.ge.f32.partialorder %v678, 0.0
  %vm757 = vcmp.ge.f32.partialorder %v683, 0.0
  %vm758 = vcmp.ge.f32.partialorder %v686, 0.0
  %vm759 = vcmp.ge.f32.partialorder %v691, 0.0
  %vm760 = vcmp.ge.f32.partialorder %v694, 0.0
  %v761 = vmul.f32 %v443, 0.25
  %v762 = vmul.f32 %v446, 0.25
  %v763 = vmul.f32 %v451, 0.25
  %v764 = vmul.f32 %v454, 0.25
  %v765 = vmul.f32 %v459, 0.25
  %v766 = vmul.f32 %v462, 0.25
  %v767 = vmul.f32 %v467, 0.25
  %v768 = vmul.f32 %v470, 0.25
  %v769 = vmul.f32 %v475, 0.25
  %v770 = vmul.f32 %v478, 0.25
  %v771 = vmul.f32 %v483, 0.25
  %v772 = vmul.f32 %v486, 0.25
  %v773 = vmul.f32 %v491, 0.25
  %v774 = vmul.f32 %v494, 0.25
  %v775 = vmul.f32 %v499, 0.25
  %v776 = vmul.f32 %v502, 0.25
  %v777 = vmul.f32 %v507, 0.25
  %v778 = vmul.f32 %v510, 0.25
  %v779 = vmul.f32 %v515, 0.25
  %v780 = vmul.f32 %v518, 0.25
  %v781 = vmul.f32 %v523, 0.25
  %v782 = vmul.f32 %v526, 0.25
  %v783 = vmul.f32 %v531, 0.25
  %v784 = vmul.f32 %v534, 0.25
  %v785 = vmul.f32 %v539, 0.25
  %v786 = vmul.f32 %v542, 0.25
  %v787 = vmul.f32 %v547, 0.25
  %v788 = vmul.f32 %v550, 0.25
  %v789 = vmul.f32 %v555, 0.25
  %v790 = vmul.f32 %v558, 0.25
  %v791 = vmul.f32 %v563, 0.25
  %v792 = vmul.f32 %v566, 0.25
  %v793 = vmul.f32 %v571, 0.25
  %v794 = vmul.f32 %v574, 0.25
  %v795 = vmul.f32 %v579, 0.25
  %v796 = vmul.f32 %v582, 0.25
  %v797 = vmul.f32 %v587, 0.25
  %v798 = vmul.f32 %v590, 0.25
  %v799 = vmul.f32 %v595, 0.25
  %v800 = vmul.f32 %v598, 0.25
  %v801 = vmul.f32 %v603, 0.25
  %v802 = vmul.f32 %v606, 0.25
  %v803 = vmul.f32 %v611, 0.25
  %v804 = vmul.f32 %v614, 0.25
  %v805 = vmul.f32 %v619, 0.25
  %v806 = vmul.f32 %v622, 0.25
  %v807 = vmul.f32 %v627, 0.25
  %v808 = vmul.f32 %v630, 0.25
  %v809 = vmul.f32 %v635, 0.25
  %v810 = vmul.f32 %v638, 0.25
  %v811 = vmul.f32 %v643, 0.25
  %v812 = vmul.f32 %v646, 0.25
  %v813 = vmul.f32 %v651, 0.25
  %v814 = vmul.f32 %v654, 0.25
  %v815 = vmul.f32 %v659, 0.25
  %v816 = vmul.f32 %v662, 0.25
  %v817 = vmul.f32 %v667, 0.25
  %v818 = vmul.f32 %v670, 0.25
  %v819 = vmul.f32 %v675, 0.25
  %v820 = vmul.f32 %v678, 0.25
  %v821 = vmul.f32 %v683, 0.25
  %v822 = vmul.f32 %v686, 0.25
  %v823 = vmul.f32 %v691, 0.25
  %v824 = vmul.f32 %v694, 0.25
  %v825 = vsel %vm697, %v443, %v761
  %v826 = vsel %vm698, %v446, %v762
  %v827 = vsel %vm699, %v451, %v763
  %v828 = vsel %vm700, %v454, %v764
  %v829 = vsel %vm701, %v459, %v765
  %v830 = vsel %vm702, %v462, %v766
  %v831 = vsel %vm703, %v467, %v767
  %v832 = vsel %vm704, %v470, %v768
  %v833 = vsel %vm705, %v475, %v769
  %v834 = vsel %vm706, %v478, %v770
  %v835 = vsel %vm707, %v483, %v771
  %v836 = vsel %vm708, %v486, %v772
  %v837 = vsel %vm709, %v491, %v773
  %v838 = vsel %vm710, %v494, %v774
  %v839 = vsel %vm711, %v499, %v775
  %v840 = vsel %vm712, %v502, %v776
  %v841 = vsel %vm713, %v507, %v777
  %v842 = vsel %vm714, %v510, %v778
  %v843 = vsel %vm715, %v515, %v779
  %v844 = vsel %vm716, %v518, %v780
  %v845 = vsel %vm717, %v523, %v781
  %v846 = vsel %vm718, %v526, %v782
  %v847 = vsel %vm719, %v531, %v783
  %v848 = vsel %vm720, %v534, %v784
  %v849 = vsel %vm721, %v539, %v785
  %v850 = vsel %vm722, %v542, %v786
  %v851 = vsel %vm723, %v547, %v787
  %v852 = vsel %vm724, %v550, %v788
  %v853 = vsel %vm725, %v555, %v789
  %v854 = vsel %vm726, %v558, %v790
  %v855 = vsel %vm727, %v563, %v791
  %v856 = vsel %vm728, %v566, %v792
  %v857 = vsel %vm729, %v571, %v793
  %v858 = vsel %vm730, %v574, %v794
  %v859 = vsel %vm731, %v579, %v795
  %v860 = vsel %vm732, %v582, %v796
  %v861 = vsel %vm733, %v587, %v797
  %v862 = vsel %vm734, %v590, %v798
  %v863 = vsel %vm735, %v595, %v799
  %v864 = vsel %vm736, %v598, %v800
  %v865 = vsel %vm737, %v603, %v801
  %v866 = vsel %vm738, %v606, %v802
  %v867 = vsel %vm739, %v611, %v803
  %v868 = vsel %vm740, %v614, %v804
  %v869 = vsel %vm741, %v619, %v805
  %v870 = vsel %vm742, %v622, %v806
  %v871 = vsel %vm743, %v627, %v807
  %v872 = vsel %vm744, %v630, %v808
  %v873 = vsel %vm745, %v635, %v809
  %v874 = vsel %vm746, %v638, %v810
  %v875 = vsel %vm747, %v643, %v811
  %v876 = vsel %vm748, %v646, %v812
  %v877 = vsel %vm749, %v651, %v813
  %v878 = vsel %vm750, %v654, %v814
  %v879 = vsel %vm751, %v659, %v815
  %v880 = vsel %vm752, %v662, %v816
  %v881 = vsel %vm753, %v667, %v817
  %v882 = vsel %vm754, %v670, %v818
  %v883 = vsel %vm755, %v675, %v819
  %v884 = vsel %vm756, %v678, %v820
  %v885 = vsel %vm757, %v683, %v821
  %v886 = vsel %vm758, %v686, %v822
  %v887 = vsel %vm759, %v691, %v823
  %v888 = vsel %vm760, %v694, %v824
  %889 = vst [vmem:[%s3] sm:$0xff] %v825
  %890 = vst [vmem:[%s3 + $0x8] sm:$0xff] %v826
  %891 = vst [vmem:[%s3 + $0x10] sm:$0xff] %v827
  %892 = vst [vmem:[%s3 + $0x18] sm:$0xff] %v828
  %893 = vst [vmem:[%s3 + $0x20] sm:$0xff] %v829
  %894 = vst [vmem:[%s3 + $0x28] sm:$0xff] %v830
  %895 = vst [vmem:[%s3 + $0x30] sm:$0xff] %v831
  %896 = vst [vmem:[%s3 + $0x38] sm:$0xff] %v832
  %897 = vst [vmem:[%s3 + $0x40] sm:$0xff] %v833
  %898 = vst [vmem:[%s3 + $0x48] sm:$0xff] %v834
  %899 = vst [vmem:[%s3 + $0x50] sm:$0xff] %v835
  %900 = vst [vmem:[%s3 + $0x58] sm:$0xff] %v836
  %901 = vst [vmem:[%s3 + $0x60] sm:$0xff] %v837
  %902 = vst [vmem:[%s3 + $0x68] sm:$0xff] %v838
  %903 = vst [vmem:[%s3 + $0x70] sm:$0xff] %v839
  %904 = vst [vmem:[%s3 + $0x78] sm:$0xff] %v840
  %905 = vst [vmem:[%s3 + $0x80] sm:$0xff] %v841
  %906 = vst [vmem:[%s3 + $0x88] sm:$0xff] %v842
  %907 = vst [vmem:[%s3 + $0x90] sm:$0xff] %v843
  %908 = vst [vmem:[%s3 + $0x98] sm:$0xff] %v844
  %909 = vst [vmem:[%s3 + $0xa0] sm:$0xff] %v845
  %910 = vst [vmem:[%s3 + $0xa8] sm:$0xff] %v846
  %911 = vst [vmem:[%s3 + $0xb0] sm:$0xff] %v847
  %912 = vst [vmem:[%s3 + $0xb8] sm:$0xff] %v848
  %913 = vst [vmem:[%s3 + $0xc0] sm:$0xff] %v849
  %914 = vst [vmem:[%s3 + $0xc8] sm:$0xff] %v850
  %915 = vst [vmem:[%s3 + $0xd0] sm:$0xff] %v851
  %916 = vst [vmem:[%s3 + $0xd8] sm:$0xff] %v852
  %917 = vst [vmem:[%s3 + $0xe0] sm:$0xff] %v853
  %918 = vst [vmem:[%s3 + $0xe8] sm:$0xff] %v854
  %919 = vst [vmem:[%s3 + $0xf0] sm:$0xff] %v855
  %920 = vst [vmem:[%s3 + $0xf8] sm:$0xff] %v856
  %921 = vst [vmem:[%s3 + $0x100] sm:$0xff] %v857
  %922 = vst [vmem:[%s3 + $0x108] sm:$0xff] %v858
  %923 = vst [vmem:[%s3 + $0x110] sm:$0xff] %v859
  %924 = vst [vmem:[%s3 + $0x118] sm:$0xff] %v860
  %925 = vst [vmem:[%s3 + $0x120] sm:$0xff] %v861
  %926 = vst [vmem:[%s3 + $0x128] sm:$0xff] %v862
  %927 = vst [vmem:[%s3 + $0x130] sm:$0xff] %v863
  %928 = vst [vmem:[%s3 + $0x138] sm:$0xff] %v864
  %929 = vst [vmem:[%s3 + $0x140] sm:$0xff] %v865
  %930 = vst [vmem:[%s3 + $0x148] sm:$0xff] %v866
  %931 = vst [vmem:[%s3 + $0x150] sm:$0xff] %v867
  %932 = vst [vmem:[%s3 + $0x158] sm:$0xff] %v868
  %933 = vst [vmem:[%s3 + $0x160] sm:$0xff] %v869
  %934 = vst [vmem:[%s3 + $0x168] sm:$0xff] %v870
  %935 = vst [vmem:[%s3 + $0x170] sm:$0xff] %v871
  %936 = vst [vmem:[%s3 + $0x178] sm:$0xff] %v872
  %937 = vst [vmem:[%s3 + $0x180] sm:$0xff] %v873
  %938 = vst [vmem:[%s3 + $0x188] sm:$0xff] %v874
  %939 = vst [vmem:[%s3 + $0x190] sm:$0xff] %v875
  %940 = vst [vmem:[%s3 + $0x198] sm:$0xff] %v876
  %941 = vst [vmem:[%s3 + $0x1a0] sm:$0xff] %v877
  %942 = vst [vmem:[%s3 + $0x1a8] sm:$0xff] %v878
  %943 = vst [vmem:[%s3 + $0x1b0] sm:$0xff] %v879
  %944 = vst [vmem:[%s3 + $0x1b8] sm:$0xff] %v880
  %945 = vst [vmem:[%s3 + $0x1c0] sm:$0xff] %v881
  %946 = vst [vmem:[%s3 + $0x1c8] sm:$0xff] %v882
  %947 = vst [vmem:[%s3 + $0x1d0] sm:$0xff] %v883
  %948 = vst [vmem:[%s3 + $0x1d8] sm:$0xff] %v884
  %949 = vst [vmem:[%s3 + $0x1e0] sm:$0xff] %v885
  %950 = vst [vmem:[%s3 + $0x1e8] sm:$0xff] %v886
  %951 = vst [vmem:[%s3 + $0x1f0] sm:$0xff] %v887
  %952 = vst [vmem:[%s3 + $0x1f8] sm:$0xff] %v888
  // Predicated region
  $region14: #{forward.177} parent=0 // pred_check
    _
  $region15: #{forward.177} parent=0 // pred_check_branch
    %954 = sbr.rel (0) target = $region17
  $region16: #{forward.177} parent=0 // pred_region
    _
  $region17: #{forward.177} parent=0 // pred_fallthru
    _
  // Predicated region
  $region18: #{forward.177} parent=0 // pred_check
    _
  $region19: #{forward.177} parent=0 // pred_check_branch
    %956 = sbr.rel (0) target = $region21
  $region20: #{forward.177} parent=0 // pred_region
    _
  $region21: #{forward.177} parent=0 // pred_fallthru
    _

// kernel: forward.179
$region0: #{forward.179}
  #allocation0 [shape = 'u32[]', space=smem, size = 0x4, offset = 0x4, fixed_abs, tag = 'smem constant byte address 0x4 - core index']
  #allocation1 [shape = 'u32[144,128]{1,0:T(1,128)}', space=vmem, size = 0x12000, scoped, tag = 'internal scratch']
  %s0 = inlined_call_operand.vmem [shape: bf16[512,36], index: 0, kind: input, shape index: {}]
  %s1 = inlined_call_operand.vmem [shape: bf16[36,128], index: 1, kind: input, shape index: {}]
  %s2 = inlined_call_operand.vmem [shape: f32[512,128], index: 2, kind: output, shape index: {}]
  %s3 = sld [smem:[#allocation0]]
  $region18: #{forward.179} parent=0
    _
  %s5 = ssub.s32 1, %s3
  %s6 = scalar_select 0, %s5, %s3
  // Predicated region
  $region2: #{forward.179} parent=0 // pred_check
    _
  $region3: #{forward.179} parent=0 // pred_check_branch
    %8 = sbr.rel (0) target = $region5
  $region4: #{forward.179} parent=0 // pred_region
    _
  $region5: #{forward.179} parent=0 // pred_fallthru
    _
  // Predicated region
  $region6: #{forward.179} parent=0 // pred_check
    _
  $region7: #{forward.179} parent=0 // pred_check_branch
    %10 = sbr.rel (0) target = $region9
  $region8: #{forward.179} parent=0 // pred_region
    _
  $region9: #{forward.179} parent=0 // pred_fallthru
    _
  %v12 = vld [vmem:[%s0] sm:$0xf]
  %v13 = vld [vmem:[%s0 + $0x4] sm:$0xf]
  %v14 = vld [vmem:[%s0 + $0x8] sm:$0xf]
  %v15 = vld [vmem:[%s0 + $0xc] sm:$0xf]
  %v16 = vld [vmem:[%s0 + $0x10] sm:$0xf]
  %v17 = vld [vmem:[%s0 + $0x14] sm:$0xf]
  %v18 = vld [vmem:[%s0 + $0x18] sm:$0xf]
  %v19 = vld [vmem:[%s0 + $0x1c] sm:$0xf]
  %v20 = vld [vmem:[%s0 + $0x20] sm:$0xf]
  %v21 = vld [vmem:[%s0 + $0x24] sm:$0xf]
  %v22 = vld [vmem:[%s0 + $0x28] sm:$0xf]
  %v23 = vld [vmem:[%s0 + $0x2c] sm:$0xf]
  %v24 = vld [vmem:[%s0 + $0x30] sm:$0xf]
  %v25 = vld [vmem:[%s0 + $0x34] sm:$0xf]
  %v26 = vld [vmem:[%s0 + $0x38] sm:$0xf]
  %v27 = vld [vmem:[%s0 + $0x3c] sm:$0xf]
  %v28 = vld [vmem:[%s0 + $0x40] sm:$0xf]
  %v29 = vld [vmem:[%s0 + $0x44] sm:$0xf]
  %v30 = vld [vmem:[%s0 + $0x48] sm:$0xf]
  %v31 = vld [vmem:[%s0 + $0x4c] sm:$0xf]
  %v32 = vld [vmem:[%s0 + $0x50] sm:$0xf]
  %v33 = vld [vmem:[%s0 + $0x54] sm:$0xf]
  %v34 = vld [vmem:[%s0 + $0x58] sm:$0xf]
  %v35 = vld [vmem:[%s0 + $0x5c] sm:$0xf]
  %v36 = vld [vmem:[%s0 + $0x60] sm:$0xf]
  %v37 = vld [vmem:[%s0 + $0x64] sm:$0xf]
  %v38 = vld [vmem:[%s0 + $0x68] sm:$0xf]
  %v39 = vld [vmem:[%s0 + $0x6c] sm:$0xf]
  %v40 = vld [vmem:[%s0 + $0x70] sm:$0xf]
  %v41 = vld [vmem:[%s0 + $0x74] sm:$0xf]
  %v42 = vld [vmem:[%s0 + $0x78] sm:$0xf]
  %v43 = vld [vmem:[%s0 + $0x7c] sm:$0xf]
  %v44 = vld [vmem:[%s0 + $0x80] sm:$0xf]
  %v45 = vld [vmem:[%s0 + $0x84] sm:$0xf]
  %v46 = vld [vmem:[%s0 + $0x88] sm:$0xf]
  %v47 = vld [vmem:[%s0 + $0x8c] sm:$0xf]
  %v48 = vld [vmem:[%s0 + $0x90] sm:$0xf]
  %v49 = vld [vmem:[%s0 + $0x94] sm:$0xf]
  %v50 = vld [vmem:[%s0 + $0x98] sm:$0xf]
  %v51 = vld [vmem:[%s0 + $0x9c] sm:$0xf]
  %v52 = vld [vmem:[%s0 + $0xa0] sm:$0xf]
  %v53 = vld [vmem:[%s0 + $0xa4] sm:$0xf]
  %v54 = vld [vmem:[%s0 + $0xa8] sm:$0xf]
  %v55 = vld [vmem:[%s0 + $0xac] sm:$0xf]
  %v56 = vld [vmem:[%s0 + $0xb0] sm:$0xf]
  %v57 = vld [vmem:[%s0 + $0xb4] sm:$0xf]
  %v58 = vld [vmem:[%s0 + $0xb8] sm:$0xf]
  %v59 = vld [vmem:[%s0 + $0xbc] sm:$0xf]
  %v60 = vld [vmem:[%s0 + $0xc0] sm:$0xf]
  %v61 = vld [vmem:[%s0 + $0xc4] sm:$0xf]
  %v62 = vld [vmem:[%s0 + $0xc8] sm:$0xf]
  %v63 = vld [vmem:[%s0 + $0xcc] sm:$0xf]
  %v64 = vld [vmem:[%s0 + $0xd0] sm:$0xf]
  %v65 = vld [vmem:[%s0 + $0xd4] sm:$0xf]
  %v66 = vld [vmem:[%s0 + $0xd8] sm:$0xf]
  %v67 = vld [vmem:[%s0 + $0xdc] sm:$0xf]
  %v68 = vld [vmem:[%s0 + $0xe0] sm:$0xf]
  %v69 = vld [vmem:[%s0 + $0xe4] sm:$0xf]
  %v70 = vld [vmem:[%s0 + $0xe8] sm:$0xf]
  %v71 = vld [vmem:[%s0 + $0xec] sm:$0xf]
  %v72 = vld [vmem:[%s0 + $0xf0] sm:$0xf]
  %v73 = vld [vmem:[%s0 + $0xf4] sm:$0xf]
  %v74 = vld [vmem:[%s0 + $0xf8] sm:$0xf]
  %v75 = vld [vmem:[%s0 + $0xfc] sm:$0xf]
  %v76 = vld [vmem:[%s1] sm:$0xf]
  %v77 = vld [vmem:[%s1 + $0x4] sm:$0xf]
  %v78 = vld [vmem:[%s1 + $0x8] sm:$0xf]
  %v79 = vld [vmem:[%s1 + $0xc] sm:$0xf]
  %v80 = vld [vmem:[%s1 + $0x10] sm:$0x3]
  %v145 = vunpack.c.l.b16 %v12
  %v146 = vunpack.c.l.b16 %v13
  %v147 = vunpack.c.l.b16 %v14
  %v148 = vunpack.c.l.b16 %v15
  %v149 = vunpack.c.l.b16 %v16
  %v150 = vunpack.c.l.b16 %v17
  %v151 = vunpack.c.l.b16 %v18
  %v152 = vunpack.c.l.b16 %v19
  %v153 = vunpack.c.l.b16 %v20
  %v154 = vunpack.c.l.b16 %v21
  %v155 = vunpack.c.l.b16 %v22
  %v156 = vunpack.c.l.b16 %v23
  %v157 = vunpack.c.l.b16 %v24
  %v158 = vunpack.c.l.b16 %v25
  %v159 = vunpack.c.l.b16 %v26
  %v160 = vunpack.c.l.b16 %v27
  %v161 = vunpack.c.l.b16 %v28
  %v162 = vunpack.c.l.b16 %v29
  %v163 = vunpack.c.l.b16 %v30
  %v164 = vunpack.c.l.b16 %v31
  %v165 = vunpack.c.l.b16 %v32
  %v166 = vunpack.c.l.b16 %v33
  %v167 = vunpack.c.l.b16 %v34
  %v168 = vunpack.c.l.b16 %v35
  %v169 = vunpack.c.l.b16 %v36
  %v170 = vunpack.c.l.b16 %v37
  %v171 = vunpack.c.l.b16 %v38
  %v172 = vunpack.c.l.b16 %v39
  %v173 = vunpack.c.l.b16 %v40
  %v174 = vunpack.c.l.b16 %v41
  %v175 = vunpack.c.l.b16 %v42
  %v176 = vunpack.c.l.b16 %v43
  %v177 = vunpack.c.l.b16 %v44
  %v178 = vunpack.c.l.b16 %v45
  %v179 = vunpack.c.l.b16 %v46
  %v180 = vunpack.c.l.b16 %v47
  %v181 = vunpack.c.l.b16 %v48
  %v182 = vunpack.c.l.b16 %v49
  %v183 = vunpack.c.l.b16 %v50
  %v184 = vunpack.c.l.b16 %v51
  %v185 = vunpack.c.l.b16 %v52
  %v186 = vunpack.c.l.b16 %v53
  %v187 = vunpack.c.l.b16 %v54
  %v188 = vunpack.c.l.b16 %v55
  %v189 = vunpack.c.l.b16 %v56
  %v190 = vunpack.c.l.b16 %v57
  %v191 = vunpack.c.l.b16 %v58
  %v192 = vunpack.c.l.b16 %v59
  %v193 = vunpack.c.l.b16 %v60
  %v194 = vunpack.c.l.b16 %v61
  %v195 = vunpack.c.l.b16 %v62
  %v196 = vunpack.c.l.b16 %v63
  %v197 = vunpack.c.l.b16 %v64
  %v198 = vunpack.c.l.b16 %v65
  %v199 = vunpack.c.l.b16 %v66
  %v200 = vunpack.c.l.b16 %v67
  %v201 = vunpack.c.l.b16 %v68
  %v202 = vunpack.c.l.b16 %v69
  %v203 = vunpack.c.l.b16 %v70
  %v204 = vunpack.c.l.b16 %v71
  %v205 = vunpack.c.l.b16 %v72
  %v206 = vunpack.c.l.b16 %v73
  %v207 = vunpack.c.l.b16 %v74
  %v208 = vunpack.c.l.b16 %v75
  %v209 = vpack.c.b16 %v146, %v145
  %v210 = vpack.c.b16 %v148, %v147
  %v211 = vpack.c.b16 %v150, %v149
  %v212 = vpack.c.b16 %v152, %v151
  %v213 = vpack.c.b16 %v154, %v153
  %v214 = vpack.c.b16 %v156, %v155
  %v215 = vpack.c.b16 %v158, %v157
  %v216 = vpack.c.b16 %v160, %v159
  %v217 = vpack.c.b16 %v162, %v161
  %v218 = vpack.c.b16 %v164, %v163
  %v219 = vpack.c.b16 %v166, %v165
  %v220 = vpack.c.b16 %v168, %v167
  %v221 = vpack.c.b16 %v170, %v169
  %v222 = vpack.c.b16 %v172, %v171
  %v223 = vpack.c.b16 %v174, %v173
  %v224 = vpack.c.b16 %v176, %v175
  %v225 = vpack.c.b16 %v178, %v177
  %v226 = vpack.c.b16 %v180, %v179
  %v227 = vpack.c.b16 %v182, %v181
  %v228 = vpack.c.b16 %v184, %v183
  %v229 = vpack.c.b16 %v186, %v185
  %v230 = vpack.c.b16 %v188, %v187
  %v231 = vpack.c.b16 %v190, %v189
  %v232 = vpack.c.b16 %v192, %v191
  %v233 = vpack.c.b16 %v194, %v193
  %v234 = vpack.c.b16 %v196, %v195
  %v235 = vpack.c.b16 %v198, %v197
  %v236 = vpack.c.b16 %v200, %v199
  %v237 = vpack.c.b16 %v202, %v201
  %v238 = vpack.c.b16 %v204, %v203
  %v239 = vpack.c.b16 %v206, %v205
  %v240 = vpack.c.b16 %v208, %v207
  %v246 = vunpack.c.l.b16 %v76
  %v247 = vunpack.c.l.b16 %v77
  %v248 = vunpack.c.l.b16 %v78
  %v249 = vunpack.c.l.b16 %v79
  %v250 = vunpack.c.l.b16 %v80
  %v251 = vpack.c.b16 %v247, %v246
  %v252 = vpack.c.b16 %v249, %v248
  %v253 = vpack.c.b16 %v250, %v250
  %vm256 = vcmask 293888
  %v258 = vsel %vm256, %v209, 0
  %v261 = vsel %vm256, %v210, 0
  %v264 = vsel %vm256, %v211, 0
  %v267 = vsel %vm256, %v212, 0
  %v270 = vsel %vm256, %v213, 0
  %v273 = vsel %vm256, %v214, 0
  %v276 = vsel %vm256, %v215, 0
  %v279 = vsel %vm256, %v216, 0
  %v282 = vsel %vm256, %v217, 0
  %v285 = vsel %vm256, %v218, 0
  %v288 = vsel %vm256, %v219, 0
  %v291 = vsel %vm256, %v220, 0
  %v294 = vsel %vm256, %v221, 0
  %v297 = vsel %vm256, %v222, 0
  %v300 = vsel %vm256, %v223, 0
  %v303 = vsel %vm256, %v224, 0
  %v306 = vsel %vm256, %v225, 0
  %v309 = vsel %vm256, %v226, 0
  %v312 = vsel %vm256, %v227, 0
  %v315 = vsel %vm256, %v228, 0
  %v318 = vsel %vm256, %v229, 0
  %v321 = vsel %vm256, %v230, 0
  %v324 = vsel %vm256, %v231, 0
  %v327 = vsel %vm256, %v232, 0
  %v330 = vsel %vm256, %v233, 0
  %v333 = vsel %vm256, %v234, 0
  %v336 = vsel %vm256, %v235, 0
  %v339 = vsel %vm256, %v236, 0
  %v342 = vsel %vm256, %v237, 0
  %v345 = vsel %vm256, %v238, 0
  %v348 = vsel %vm256, %v239, 0
  %v351 = vsel %vm256, %v240, 0
  %vm353 = vcmask 1041408
  %v355 = vsel %vm353, %v253, 0
  %357 = vmatprep.subr.bf16.mxu0 0
  %358 = vmatpush1.bf16.msra.mxu0 %v251
  %359 = vmatprep.subr.bf16.mxu0 0
  %360 = vmatpush1.bf16.msra.mxu0 %v252
  %361 = vmatprep.subr.bf16.mxu0 0
  %362 = vmatpush1.bf16.msra.mxu0 %v355
  %363 = vmatprep.subr.bf16.mxu0 0
  %364 = vmatpush1.bf16.msra.mxu0 0
  %365 = vmatprep.subr.bf16.mxu0 0
  %366 = vmatpush1.bf16.msra.mxu0 0
  %367 = vmatprep.subr.bf16.mxu0 0
  %368 = vmatpush1.bf16.msra.mxu0 0
  %369 = vmatprep.subr.bf16.mxu0 0
  %370 = vmatpush1.bf16.msra.mxu0 0
  %371 = vmatprep.subr.bf16.mxu0 0
  %372 = vmatpush1.bf16.msra.mxu0 0
  %373 = vmatprep.subr.bf16.mxu0 0
  %374 = vmatpush1.bf16.msra.mxu0 0
  %375 = vmatprep.subr.bf16.mxu0 0
  %376 = vmatpush1.bf16.msra.mxu0 0
  %377 = vmatprep.subr.bf16.mxu0 0
  %378 = vmatpush1.bf16.msra.mxu0 0
  %379 = vmatprep.subr.bf16.mxu0 0
  %380 = vmatpush1.bf16.msra.mxu0 0
  %381 = vmatprep.subr.bf16.mxu0 0
  %382 = vmatpush1.bf16.msra.mxu0 0
  %383 = vmatprep.subr.bf16.mxu0 0
  %384 = vmatpush1.bf16.msra.mxu0 0
  %385 = vmatprep.subr.bf16.mxu0 0
  %386 = vmatpush1.bf16.msra.mxu0 0
  %387 = vmatprep.subr.bf16.mxu0 0
  %388 = vmatpush1.bf16.msra.mxu0 0
  %389 = vmatprep.mubr.bf16.mxu0 0
  %390 = vmatmul.mubr.bf16.gmra.mrb[0].mxu0 %v258
  %v391 = vpop.f32.mrb[0].mxu0
  %v392 = vadd.f32 0.0, %v391
  %v393 = vpop.f32.mrb[0].mxu0
  %v394 = vpop.f32.mrb[0].mxu0
  %v395 = vadd.f32 0.0, %v394
  %v396 = vpop.f32.mrb[0].mxu0
  %397 = vmatprep.mubr.bf16.mxu0 0
  %398 = vmatmul.mubr.bf16.gmra.mrb[0].mxu0 %v261
  %v399 = vpop.f32.mrb[0].mxu0
  %v400 = vadd.f32 0.0, %v399
  %v401 = vpop.f32.mrb[0].mxu0
  %v402 = vpop.f32.mrb[0].mxu0
  %v403 = vadd.f32 0.0, %v402
  %v404 = vpop.f32.mrb[0].mxu0
  %405 = vmatprep.mubr.bf16.mxu0 0
  %406 = vmatmul.mubr.bf16.gmra.mrb[0].mxu0 %v264
  %v407 = vpop.f32.mrb[0].mxu0
  %v408 = vadd.f32 0.0, %v407
  %v409 = vpop.f32.mrb[0].mxu0
  %v410 = vpop.f32.mrb[0].mxu0
  %v411 = vadd.f32 0.0, %v410
  %v412 = vpop.f32.mrb[0].mxu0
  %413 = vmatprep.mubr.bf16.mxu0 0
  %414 = vmatmul.mubr.bf16.gmra.mrb[0].mxu0 %v267
  %v415 = vpop.f32.mrb[0].mxu0
  %v416 = vadd.f32 0.0, %v415
  %v417 = vpop.f32.mrb[0].mxu0
  %v418 = vpop.f32.mrb[0].mxu0
  %v419 = vadd.f32 0.0, %v418
  %v420 = vpop.f32.mrb[0].mxu0
  %421 = vmatprep.mubr.bf16.mxu0 0
  %422 = vmatmul.mubr.bf16.gmra.mrb[0].mxu0 %v270
  %v423 = vpop.f32.mrb[0].mxu0
  %v424 = vadd.f32 0.0, %v423
  %v425 = vpop.f32.mrb[0].mxu0
  %v426 = vpop.f32.mrb[0].mxu0
  %v427 = vadd.f32 0.0, %v426
  %v428 = vpop.f32.mrb[0].mxu0
  %429 = vmatprep.mubr.bf16.mxu0 0
  %430 = vmatmul.mubr.bf16.gmra.mrb[0].mxu0 %v273
  %v431 = vpop.f32.mrb[0].mxu0
  %v432 = vadd.f32 0.0, %v431
  %v433 = vpop.f32.mrb[0].mxu0
  %v434 = vpop.f32.mrb[0].mxu0
  %v435 = vadd.f32 0.0, %v434
  %v436 = vpop.f32.mrb[0].mxu0
  %437 = vmatprep.mubr.bf16.mxu0 0
  %438 = vmatmul.mubr.bf16.gmra.mrb[0].mxu0 %v276
  %v439 = vpop.f32.mrb[0].mxu0
  %v440 = vadd.f32 0.0, %v439
  %v441 = vpop.f32.mrb[0].mxu0
  %v442 = vpop.f32.mrb[0].mxu0
  %v443 = vadd.f32 0.0, %v442
  %v444 = vpop.f32.mrb[0].mxu0
  %445 = vmatprep.mubr.bf16.mxu0 0
  %446 = vmatmul.mubr.bf16.gmra.mrb[0].mxu0 %v279
  %v447 = vpop.f32.mrb[0].mxu0
  %v448 = vadd.f32 0.0, %v447
  %v449 = vpop.f32.mrb[0].mxu0
  %v450 = vpop.f32.mrb[0].mxu0
  %v451 = vadd.f32 0.0, %v450
  %v452 = vpop.f32.mrb[0].mxu0
  %453 = vmatprep.mubr.bf16.mxu0 0
  %454 = vmatmul.mubr.bf16.gmra.mrb[0].mxu0 %v282
  %v455 = vpop.f32.mrb[0].mxu0
  %v456 = vadd.f32 0.0, %v455
  %v457 = vpop.f32.mrb[0].mxu0
  %v458 = vpop.f32.mrb[0].mxu0
  %v459 = vadd.f32 0.0, %v458
  %v460 = vpop.f32.mrb[0].mxu0
  %461 = vmatprep.mubr.bf16.mxu0 0
  %462 = vmatmul.mubr.bf16.gmra.mrb[0].mxu0 %v285
  %v463 = vpop.f32.mrb[0].mxu0
  %v464 = vadd.f32 0.0, %v463
  %v465 = vpop.f32.mrb[0].mxu0
  %v466 = vpop.f32.mrb[0].mxu0
  %v467 = vadd.f32 0.0, %v466
  %v468 = vpop.f32.mrb[0].mxu0
  %469 = vmatprep.mubr.bf16.mxu0 0
  %470 = vmatmul.mubr.bf16.gmra.mrb[0].mxu0 %v288
  %v471 = vpop.f32.mrb[0].mxu0
  %v472 = vadd.f32 0.0, %v471
  %v473 = vpop.f32.mrb[0].mxu0
  %v474 = vpop.f32.mrb[0].mxu0
  %v475 = vadd.f32 0.0, %v474
  %v476 = vpop.f32.mrb[0].mxu0
  %477 = vmatprep.mubr.bf16.mxu0 0
  %478 = vmatmul.mubr.bf16.gmra.mrb[0].mxu0 %v291
  %v479 = vpop.f32.mrb[0].mxu0
  %v480 = vadd.f32 0.0, %v479
  %v481 = vpop.f32.mrb[0].mxu0
  %v482 = vpop.f32.mrb[0].mxu0
  %v483 = vadd.f32 0.0, %v482
  %v484 = vpop.f32.mrb[0].mxu0
  %485 = vmatprep.mubr.bf16.mxu0 0
  %486 = vmatmul.mubr.bf16.gmra.mrb[0].mxu0 %v294
  %v487 = vpop.f32.mrb[0].mxu0
  %v488 = vadd.f32 0.0, %v487
  %v489 = vpop.f32.mrb[0].mxu0
  %v490 = vpop.f32.mrb[0].mxu0
  %v491 = vadd.f32 0.0, %v490
  %v492 = vpop.f32.mrb[0].mxu0
  %493 = vmatprep.mubr.bf16.mxu0 0
  %494 = vmatmul.mubr.bf16.gmra.mrb[0].mxu0 %v297
  %v495 = vpop.f32.mrb[0].mxu0
  %v496 = vadd.f32 0.0, %v495
  %v497 = vpop.f32.mrb[0].mxu0
  %v498 = vpop.f32.mrb[0].mxu0
  %v499 = vadd.f32 0.0, %v498
  %v500 = vpop.f32.mrb[0].mxu0
  %501 = vmatprep.mubr.bf16.mxu0 0
  %502 = vmatmul.mubr.bf16.gmra.mrb[0].mxu0 %v300
  %v503 = vpop.f32.mrb[0].mxu0
  %v504 = vadd.f32 0.0, %v503
  %v505 = vpop.f32.mrb[0].mxu0
  %v506 = vpop.f32.mrb[0].mxu0
  %v507 = vadd.f32 0.0, %v506
  %v508 = vpop.f32.mrb[0].mxu0
  %509 = vmatprep.mubr.bf16.mxu0 0
  %510 = vmatmul.mubr.bf16.gmra.mrb[0].mxu0 %v303
  %v511 = vpop.f32.mrb[0].mxu0
  %v512 = vadd.f32 0.0, %v511
  %v513 = vpop.f32.mrb[0].mxu0
  %v514 = vpop.f32.mrb[0].mxu0
  %v515 = vadd.f32 0.0, %v514
  %v516 = vpop.f32.mrb[0].mxu0
  %517 = vmatprep.mubr.bf16.mxu0 0
  %518 = vmatmul.mubr.bf16.gmra.mrb[0].mxu0 %v306
  %v519 = vpop.f32.mrb[0].mxu0
  %v520 = vadd.f32 0.0, %v519
  %v521 = vpop.f32.mrb[0].mxu0
  %v522 = vpop.f32.mrb[0].mxu0
  %v523 = vadd.f32 0.0, %v522
  %v524 = vpop.f32.mrb[0].mxu0
  %525 = vmatprep.mubr.bf16.mxu0 0
  %526 = vmatmul.mubr.bf16.gmra.mrb[0].mxu0 %v309
  %v527 = vpop.f32.mrb[0].mxu0
  %v528 = vadd.f32 0.0, %v527
  %v529 = vpop.f32.mrb[0].mxu0
  %v530 = vpop.f32.mrb[0].mxu0
  %v531 = vadd.f32 0.0, %v530
  %v532 = vpop.f32.mrb[0].mxu0
  %533 = vmatprep.mubr.bf16.mxu0 0
  %534 = vmatmul.mubr.bf16.gmra.mrb[0].mxu0 %v312
  %v535 = vpop.f32.mrb[0].mxu0
  %v536 = vadd.f32 0.0, %v535
  %v537 = vpop.f32.mrb[0].mxu0
  %v538 = vpop.f32.mrb[0].mxu0
  %v539 = vadd.f32 0.0, %v538
  %v540 = vpop.f32.mrb[0].mxu0
  %541 = vmatprep.mubr.bf16.mxu0 0
  %542 = vmatmul.mubr.bf16.gmra.mrb[0].mxu0 %v315
  %v543 = vpop.f32.mrb[0].mxu0
  %v544 = vadd.f32 0.0, %v543
  %v545 = vpop.f32.mrb[0].mxu0
  %v546 = vpop.f32.mrb[0].mxu0
  %v547 = vadd.f32 0.0, %v546
  %v548 = vpop.f32.mrb[0].mxu0
  %549 = vmatprep.mubr.bf16.mxu0 0
  %550 = vmatmul.mubr.bf16.gmra.mrb[0].mxu0 %v318
  %v551 = vpop.f32.mrb[0].mxu0
  %v552 = vadd.f32 0.0, %v551
  %v553 = vpop.f32.mrb[0].mxu0
  %v554 = vpop.f32.mrb[0].mxu0
  %v555 = vadd.f32 0.0, %v554
  %v556 = vpop.f32.mrb[0].mxu0
  %557 = vmatprep.mubr.bf16.mxu0 0
  %558 = vmatmul.mubr.bf16.gmra.mrb[0].mxu0 %v321
  %v559 = vpop.f32.mrb[0].mxu0
  %v560 = vadd.f32 0.0, %v559
  %v561 = vpop.f32.mrb[0].mxu0
  %v562 = vpop.f32.mrb[0].mxu0
  %v563 = vadd.f32 0.0, %v562
  %v564 = vpop.f32.mrb[0].mxu0
  %565 = vmatprep.mubr.bf16.mxu0 0
  %566 = vmatmul.mubr.bf16.gmra.mrb[0].mxu0 %v324
  %v567 = vpop.f32.mrb[0].mxu0
  %v568 = vadd.f32 0.0, %v567
  %v569 = vpop.f32.mrb[0].mxu0
  %v570 = vpop.f32.mrb[0].mxu0
  %v571 = vadd.f32 0.0, %v570
  %v572 = vpop.f32.mrb[0].mxu0
  %573 = vmatprep.mubr.bf16.mxu0 0
  %574 = vmatmul.mubr.bf16.gmra.mrb[0].mxu0 %v327
  %v575 = vpop.f32.mrb[0].mxu0
  %v576 = vadd.f32 0.0, %v575
  %v577 = vpop.f32.mrb[0].mxu0
  %v578 = vpop.f32.mrb[0].mxu0
  %v579 = vadd.f32 0.0, %v578
  %v580 = vpop.f32.mrb[0].mxu0
  %581 = vmatprep.mubr.bf16.mxu0 0
  %582 = vmatmul.mubr.bf16.gmra.mrb[0].mxu0 %v330
  %v583 = vpop.f32.mrb[0].mxu0
  %v584 = vadd.f32 0.0, %v583
  %v585 = vpop.f32.mrb[0].mxu0
  %v586 = vpop.f32.mrb[0].mxu0
  %v587 = vadd.f32 0.0, %v586
  %v588 = vpop.f32.mrb[0].mxu0
  %589 = vmatprep.mubr.bf16.mxu0 0
  %590 = vmatmul.mubr.bf16.gmra.mrb[0].mxu0 %v333
  %v591 = vpop.f32.mrb[0].mxu0
  %v592 = vadd.f32 0.0, %v591
  %v593 = vpop.f32.mrb[0].mxu0
  %v594 = vpop.f32.mrb[0].mxu0
  %v595 = vadd.f32 0.0, %v594
  %v596 = vpop.f32.mrb[0].mxu0
  %597 = vmatprep.mubr.bf16.mxu0 0
  %598 = vmatmul.mubr.bf16.gmra.mrb[0].mxu0 %v336
  %v599 = vpop.f32.mrb[0].mxu0
  %v600 = vadd.f32 0.0, %v599
  %v601 = vpop.f32.mrb[0].mxu0
  %v602 = vpop.f32.mrb[0].mxu0
  %v603 = vadd.f32 0.0, %v602
  %v604 = vpop.f32.mrb[0].mxu0
  %605 = vmatprep.mubr.bf16.mxu0 0
  %606 = vmatmul.mubr.bf16.gmra.mrb[0].mxu0 %v339
  %v607 = vpop.f32.mrb[0].mxu0
  %v608 = vadd.f32 0.0, %v607
  %v609 = vpop.f32.mrb[0].mxu0
  %v610 = vpop.f32.mrb[0].mxu0
  %v611 = vadd.f32 0.0, %v610
  %v612 = vpop.f32.mrb[0].mxu0
  %613 = vmatprep.mubr.bf16.mxu0 0
  %614 = vmatmul.mubr.bf16.gmra.mrb[0].mxu0 %v342
  %v615 = vpop.f32.mrb[0].mxu0
  %v616 = vadd.f32 0.0, %v615
  %v617 = vpop.f32.mrb[0].mxu0
  %v618 = vpop.f32.mrb[0].mxu0
  %v619 = vadd.f32 0.0, %v618
  %v620 = vpop.f32.mrb[0].mxu0
  %621 = vmatprep.mubr.bf16.mxu0 0
  %622 = vmatmul.mubr.bf16.gmra.mrb[0].mxu0 %v345
  %v623 = vpop.f32.mrb[0].mxu0
  %v624 = vadd.f32 0.0, %v623
  %v625 = vpop.f32.mrb[0].mxu0
  %v626 = vpop.f32.mrb[0].mxu0
  %v627 = vadd.f32 0.0, %v626
  %v628 = vpop.f32.mrb[0].mxu0
  %629 = vmatprep.mubr.bf16.mxu0 0
  %630 = vmatmul.mubr.bf16.gmra.mrb[0].mxu0 %v348
  %v631 = vpop.f32.mrb[0].mxu0
  %v632 = vadd.f32 0.0, %v631
  %v633 = vpop.f32.mrb[0].mxu0
  %v634 = vpop.f32.mrb[0].mxu0
  %v635 = vadd.f32 0.0, %v634
  %v636 = vpop.f32.mrb[0].mxu0
  %637 = vmatprep.mubr.bf16.mxu0 0
  %638 = vmatmul.mubr.bf16.gmra.mrb[0].mxu0 %v351
  %v639 = vpop.f32.mrb[0].mxu0
  %v640 = vadd.f32 0.0, %v639
  %v641 = vpop.f32.mrb[0].mxu0
  %v642 = vpop.f32.mrb[0].mxu0
  %v643 = vadd.f32 0.0, %v642
  %v644 = vpop.f32.mrb[0].mxu0
  %645 = vdwg.mxu0
  %v646 = vmax.f32 %v392, 0.0
  %v647 = vmax.f32 %v395, 0.0
  %v648 = vmax.f32 %v400, 0.0
  %v649 = vmax.f32 %v403, 0.0
  %v650 = vmax.f32 %v408, 0.0
  %v651 = vmax.f32 %v411, 0.0
  %v652 = vmax.f32 %v416, 0.0
  %v653 = vmax.f32 %v419, 0.0
  %v654 = vmax.f32 %v424, 0.0
  %v655 = vmax.f32 %v427, 0.0
  %v656 = vmax.f32 %v432, 0.0
  %v657 = vmax.f32 %v435, 0.0
  %v658 = vmax.f32 %v440, 0.0
  %v659 = vmax.f32 %v443, 0.0
  %v660 = vmax.f32 %v448, 0.0
  %v661 = vmax.f32 %v451, 0.0
  %v662 = vmax.f32 %v456, 0.0
  %v663 = vmax.f32 %v459, 0.0
  %v664 = vmax.f32 %v464, 0.0
  %v665 = vmax.f32 %v467, 0.0
  %v666 = vmax.f32 %v472, 0.0
  %v667 = vmax.f32 %v475, 0.0
  %v668 = vmax.f32 %v480, 0.0
  %v669 = vmax.f32 %v483, 0.0
  %v670 = vmax.f32 %v488, 0.0
  %v671 = vmax.f32 %v491, 0.0
  %v672 = vmax.f32 %v496, 0.0
  %v673 = vmax.f32 %v499, 0.0
  %v674 = vmax.f32 %v504, 0.0
  %v675 = vmax.f32 %v507, 0.0
  %v676 = vmax.f32 %v512, 0.0
  %v677 = vmax.f32 %v515, 0.0
  %v678 = vmax.f32 %v520, 0.0
  %v679 = vmax.f32 %v523, 0.0
  %v680 = vmax.f32 %v528, 0.0
  %v681 = vmax.f32 %v531, 0.0
  %v682 = vmax.f32 %v536, 0.0
  %v683 = vmax.f32 %v539, 0.0
  %v684 = vmax.f32 %v544, 0.0
  %v685 = vmax.f32 %v547, 0.0
  %v686 = vmax.f32 %v552, 0.0
  %v687 = vmax.f32 %v555, 0.0
  %v688 = vmax.f32 %v560, 0.0
  %v689 = vmax.f32 %v563, 0.0
  %v690 = vmax.f32 %v568, 0.0
  %v691 = vmax.f32 %v571, 0.0
  %v692 = vmax.f32 %v576, 0.0
  %v693 = vmax.f32 %v579, 0.0
  %v694 = vmax.f32 %v584, 0.0
  %v695 = vmax.f32 %v587, 0.0
  %v696 = vmax.f32 %v592, 0.0
  %v697 = vmax.f32 %v595, 0.0
  %v698 = vmax.f32 %v600, 0.0
  %v699 = vmax.f32 %v603, 0.0
  %v700 = vmax.f32 %v608, 0.0
  %v701 = vmax.f32 %v611, 0.0
  %v702 = vmax.f32 %v616, 0.0
  %v703 = vmax.f32 %v619, 0.0
  %v704 = vmax.f32 %v624, 0.0
  %v705 = vmax.f32 %v627, 0.0
  %v706 = vmax.f32 %v632, 0.0
  %v707 = vmax.f32 %v635, 0.0
  %v708 = vmax.f32 %v640, 0.0
  %v709 = vmax.f32 %v643, 0.0
  %710 = vst [vmem:[%s2] sm:$0xff] %v646
  %711 = vst [vmem:[%s2 + $0x8] sm:$0xff] %v647
  %712 = vst [vmem:[%s2 + $0x10] sm:$0xff] %v648
  %713 = vst [vmem:[%s2 + $0x18] sm:$0xff] %v649
  %714 = vst [vmem:[%s2 + $0x20] sm:$0xff] %v650
  %715 = vst [vmem:[%s2 + $0x28] sm:$0xff] %v651
  %716 = vst [vmem:[%s2 + $0x30] sm:$0xff] %v652
  %717 = vst [vmem:[%s2 + $0x38] sm:$0xff] %v653
  %718 = vst [vmem:[%s2 + $0x40] sm:$0xff] %v654
  %719 = vst [vmem:[%s2 + $0x48] sm:$0xff] %v655
  %720 = vst [vmem:[%s2 + $0x50] sm:$0xff] %v656
  %721 = vst [vmem:[%s2 + $0x58] sm:$0xff] %v657
  %722 = vst [vmem:[%s2 + $0x60] sm:$0xff] %v658
  %723 = vst [vmem:[%s2 + $0x68] sm:$0xff] %v659
  %724 = vst [vmem:[%s2 + $0x70] sm:$0xff] %v660
  %725 = vst [vmem:[%s2 + $0x78] sm:$0xff] %v661
  %726 = vst [vmem:[%s2 + $0x80] sm:$0xff] %v662
  %727 = vst [vmem:[%s2 + $0x88] sm:$0xff] %v663
  %728 = vst [vmem:[%s2 + $0x90] sm:$0xff] %v664
  %729 = vst [vmem:[%s2 + $0x98] sm:$0xff] %v665
  %730 = vst [vmem:[%s2 + $0xa0] sm:$0xff] %v666
  %731 = vst [vmem:[%s2 + $0xa8] sm:$0xff] %v667
  %732 = vst [vmem:[%s2 + $0xb0] sm:$0xff] %v668
  %733 = vst [vmem:[%s2 + $0xb8] sm:$0xff] %v669
  %734 = vst [vmem:[%s2 + $0xc0] sm:$0xff] %v670
  %735 = vst [vmem:[%s2 + $0xc8] sm:$0xff] %v671
  %736 = vst [vmem:[%s2 + $0xd0] sm:$0xff] %v672
  %737 = vst [vmem:[%s2 + $0xd8] sm:$0xff] %v673
  %738 = vst [vmem:[%s2 + $0xe0] sm:$0xff] %v674
  %739 = vst [vmem:[%s2 + $0xe8] sm:$0xff] %v675
  %740 = vst [vmem:[%s2 + $0xf0] sm:$0xff] %v676
  %741 = vst [vmem:[%s2 + $0xf8] sm:$0xff] %v677
  %742 = vst [vmem:[%s2 + $0x100] sm:$0xff] %v678
  %743 = vst [vmem:[%s2 + $0x108] sm:$0xff] %v679
  %744 = vst [vmem:[%s2 + $0x110] sm:$0xff] %v680
  %745 = vst [vmem:[%s2 + $0x118] sm:$0xff] %v681
  %746 = vst [vmem:[%s2 + $0x120] sm:$0xff] %v682
  %747 = vst [vmem:[%s2 + $0x128] sm:$0xff] %v683
  %748 = vst [vmem:[%s2 + $0x130] sm:$0xff] %v684
  %749 = vst [vmem:[%s2 + $0x138] sm:$0xff] %v685
  %750 = vst [vmem:[%s2 + $0x140] sm:$0xff] %v686
  %751 = vst [vmem:[%s2 + $0x148] sm:$0xff] %v687
  %752 = vst [vmem:[%s2 + $0x150] sm:$0xff] %v688
  %753 = vst [vmem:[%s2 + $0x158] sm:$0xff] %v689
  %754 = vst [vmem:[%s2 + $0x160] sm:$0xff] %v690
  %755 = vst [vmem:[%s2 + $0x168] sm:$0xff] %v691
  %756 = vst [vmem:[%s2 + $0x170] sm:$0xff] %v692
  %757 = vst [vmem:[%s2 + $0x178] sm:$0xff] %v693
  %758 = vst [vmem:[%s2 + $0x180] sm:$0xff] %v694
  %759 = vst [vmem:[%s2 + $0x188] sm:$0xff] %v695
  %760 = vst [vmem:[%s2 + $0x190] sm:$0xff] %v696
  %761 = vst [vmem:[%s2 + $0x198] sm:$0xff] %v697
  %762 = vst [vmem:[%s2 + $0x1a0] sm:$0xff] %v698
  %763 = vst [vmem:[%s2 + $0x1a8] sm:$0xff] %v699
  %764 = vst [vmem:[%s2 + $0x1b0] sm:$0xff] %v700
  %765 = vst [vmem:[%s2 + $0x1b8] sm:$0xff] %v701
  %766 = vst [vmem:[%s2 + $0x1c0] sm:$0xff] %v702
  %767 = vst [vmem:[%s2 + $0x1c8] sm:$0xff] %v703
  %768 = vst [vmem:[%s2 + $0x1d0] sm:$0xff] %v704
  %769 = vst [vmem:[%s2 + $0x1d8] sm:$0xff] %v705
  %770 = vst [vmem:[%s2 + $0x1e0] sm:$0xff] %v706
  %771 = vst [vmem:[%s2 + $0x1e8] sm:$0xff] %v707
  %772 = vst [vmem:[%s2 + $0x1f0] sm:$0xff] %v708
  %773 = vst [vmem:[%s2 + $0x1f8] sm:$0xff] %v709
  // Predicated region
  $region10: #{forward.179} parent=0 // pred_check
    _
  $region11: #{forward.179} parent=0 // pred_check_branch
    %775 = sbr.rel (0) target = $region13
  $region12: #{forward.179} parent=0 // pred_region
    _
  $region13: #{forward.179} parent=0 // pred_fallthru
    _
  // Predicated region
  $region14: #{forward.179} parent=0 // pred_check
    _
  $region15: #{forward.179} parent=0 // pred_check_branch
    %777 = sbr.rel (0) target = $region17
  $region16: #{forward.179} parent=0 // pred_region
    _
  $region17: #{forward.179} parent=0 // pred_fallthru
    _

// kernel: forward.181
$region0: #{forward.181}
  #allocation0 [shape = 'u32[]', space=smem, size = 0x4, offset = 0x4, fixed_abs, tag = 'smem constant byte address 0x4 - core index']
  #allocation1 [shape = 'u32[144,128]{1,0:T(1,128)}', space=vmem, size = 0x12000, scoped, tag = 'internal scratch']
  %s0 = inlined_call_operand.vmem [shape: bf16[512,16], index: 0, kind: input, shape index: {}]
  %s1 = inlined_call_operand.vmem [shape: bf16[16,128], index: 1, kind: input, shape index: {}]
  %s2 = inlined_call_operand.vmem [shape: f32[512,128], index: 2, kind: output, shape index: {}]
  %s3 = sld [smem:[#allocation0]]
  $region18: #{forward.181} parent=0
    _
  %s5 = ssub.s32 1, %s3
  %s6 = scalar_select 0, %s5, %s3
  // Predicated region
  $region2: #{forward.181} parent=0 // pred_check
    _
  $region3: #{forward.181} parent=0 // pred_check_branch
    %8 = sbr.rel (0) target = $region5
  $region4: #{forward.181} parent=0 // pred_region
    _
  $region5: #{forward.181} parent=0 // pred_fallthru
    _
  // Predicated region
  $region6: #{forward.181} parent=0 // pred_check
    _
  $region7: #{forward.181} parent=0 // pred_check_branch
    %10 = sbr.rel (0) target = $region9
  $region8: #{forward.181} parent=0 // pred_region
    _
  $region9: #{forward.181} parent=0 // pred_fallthru
    _
  %v12 = vld [vmem:[%s0] sm:$0xf]
  %v13 = vld [vmem:[%s0 + $0x4] sm:$0xf]
  %v14 = vld [vmem:[%s0 + $0x8] sm:$0xf]
  %v15 = vld [vmem:[%s0 + $0xc] sm:$0xf]
  %v16 = vld [vmem:[%s0 + $0x10] sm:$0xf]
  %v17 = vld [vmem:[%s0 + $0x14] sm:$0xf]
  %v18 = vld [vmem:[%s0 + $0x18] sm:$0xf]
  %v19 = vld [vmem:[%s0 + $0x1c] sm:$0xf]
  %v20 = vld [vmem:[%s0 + $0x20] sm:$0xf]
  %v21 = vld [vmem:[%s0 + $0x24] sm:$0xf]
  %v22 = vld [vmem:[%s0 + $0x28] sm:$0xf]
  %v23 = vld [vmem:[%s0 + $0x2c] sm:$0xf]
  %v24 = vld [vmem:[%s0 + $0x30] sm:$0xf]
  %v25 = vld [vmem:[%s0 + $0x34] sm:$0xf]
  %v26 = vld [vmem:[%s0 + $0x38] sm:$0xf]
  %v27 = vld [vmem:[%s0 + $0x3c] sm:$0xf]
  %v28 = vld [vmem:[%s0 + $0x40] sm:$0xf]
  %v29 = vld [vmem:[%s0 + $0x44] sm:$0xf]
  %v30 = vld [vmem:[%s0 + $0x48] sm:$0xf]
  %v31 = vld [vmem:[%s0 + $0x4c] sm:$0xf]
  %v32 = vld [vmem:[%s0 + $0x50] sm:$0xf]
  %v33 = vld [vmem:[%s0 + $0x54] sm:$0xf]
  %v34 = vld [vmem:[%s0 + $0x58] sm:$0xf]
  %v35 = vld [vmem:[%s0 + $0x5c] sm:$0xf]
  %v36 = vld [vmem:[%s0 + $0x60] sm:$0xf]
  %v37 = vld [vmem:[%s0 + $0x64] sm:$0xf]
  %v38 = vld [vmem:[%s0 + $0x68] sm:$0xf]
  %v39 = vld [vmem:[%s0 + $0x6c] sm:$0xf]
  %v40 = vld [vmem:[%s0 + $0x70] sm:$0xf]
  %v41 = vld [vmem:[%s0 + $0x74] sm:$0xf]
  %v42 = vld [vmem:[%s0 + $0x78] sm:$0xf]
  %v43 = vld [vmem:[%s0 + $0x7c] sm:$0xf]
  %v44 = vld [vmem:[%s0 + $0x80] sm:$0xf]
  %v45 = vld [vmem:[%s0 + $0x84] sm:$0xf]
  %v46 = vld [vmem:[%s0 + $0x88] sm:$0xf]
  %v47 = vld [vmem:[%s0 + $0x8c] sm:$0xf]
  %v48 = vld [vmem:[%s0 + $0x90] sm:$0xf]
  %v49 = vld [vmem:[%s0 + $0x94] sm:$0xf]
  %v50 = vld [vmem:[%s0 + $0x98] sm:$0xf]
  %v51 = vld [vmem:[%s0 + $0x9c] sm:$0xf]
  %v52 = vld [vmem:[%s0 + $0xa0] sm:$0xf]
  %v53 = vld [vmem:[%s0 + $0xa4] sm:$0xf]
  %v54 = vld [vmem:[%s0 + $0xa8] sm:$0xf]
  %v55 = vld [vmem:[%s0 + $0xac] sm:$0xf]
  %v56 = vld [vmem:[%s0 + $0xb0] sm:$0xf]
  %v57 = vld [vmem:[%s0 + $0xb4] sm:$0xf]
  %v58 = vld [vmem:[%s0 + $0xb8] sm:$0xf]
  %v59 = vld [vmem:[%s0 + $0xbc] sm:$0xf]
  %v60 = vld [vmem:[%s0 + $0xc0] sm:$0xf]
  %v61 = vld [vmem:[%s0 + $0xc4] sm:$0xf]
  %v62 = vld [vmem:[%s0 + $0xc8] sm:$0xf]
  %v63 = vld [vmem:[%s0 + $0xcc] sm:$0xf]
  %v64 = vld [vmem:[%s0 + $0xd0] sm:$0xf]
  %v65 = vld [vmem:[%s0 + $0xd4] sm:$0xf]
  %v66 = vld [vmem:[%s0 + $0xd8] sm:$0xf]
  %v67 = vld [vmem:[%s0 + $0xdc] sm:$0xf]
  %v68 = vld [vmem:[%s0 + $0xe0] sm:$0xf]
  %v69 = vld [vmem:[%s0 + $0xe4] sm:$0xf]
  %v70 = vld [vmem:[%s0 + $0xe8] sm:$0xf]
  %v71 = vld [vmem:[%s0 + $0xec] sm:$0xf]
  %v72 = vld [vmem:[%s0 + $0xf0] sm:$0xf]
  %v73 = vld [vmem:[%s0 + $0xf4] sm:$0xf]
  %v74 = vld [vmem:[%s0 + $0xf8] sm:$0xf]
  %v75 = vld [vmem:[%s0 + $0xfc] sm:$0xf]
  %v76 = vld [vmem:[%s1] sm:$0xf]
  %v77 = vld [vmem:[%s1 + $0x4] sm:$0xf]
  %v142 = vunpack.c.l.b16 %v12
  %v143 = vunpack.c.l.b16 %v13
  %v144 = vunpack.c.l.b16 %v14
  %v145 = vunpack.c.l.b16 %v15
  %v146 = vunpack.c.l.b16 %v16
  %v147 = vunpack.c.l.b16 %v17
  %v148 = vunpack.c.l.b16 %v18
  %v149 = vunpack.c.l.b16 %v19
  %v150 = vunpack.c.l.b16 %v20
  %v151 = vunpack.c.l.b16 %v21
  %v152 = vunpack.c.l.b16 %v22
  %v153 = vunpack.c.l.b16 %v23
  %v154 = vunpack.c.l.b16 %v24
  %v155 = vunpack.c.l.b16 %v25
  %v156 = vunpack.c.l.b16 %v26
  %v157 = vunpack.c.l.b16 %v27
  %v158 = vunpack.c.l.b16 %v28
  %v159 = vunpack.c.l.b16 %v29
  %v160 = vunpack.c.l.b16 %v30
  %v161 = vunpack.c.l.b16 %v31
  %v162 = vunpack.c.l.b16 %v32
  %v163 = vunpack.c.l.b16 %v33
  %v164 = vunpack.c.l.b16 %v34
  %v165 = vunpack.c.l.b16 %v35
  %v166 = vunpack.c.l.b16 %v36
  %v167 = vunpack.c.l.b16 %v37
  %v168 = vunpack.c.l.b16 %v38
  %v169 = vunpack.c.l.b16 %v39
  %v170 = vunpack.c.l.b16 %v40
  %v171 = vunpack.c.l.b16 %v41
  %v172 = vunpack.c.l.b16 %v42
  %v173 = vunpack.c.l.b16 %v43
  %v174 = vunpack.c.l.b16 %v44
  %v175 = vunpack.c.l.b16 %v45
  %v176 = vunpack.c.l.b16 %v46
  %v177 = vunpack.c.l.b16 %v47
  %v178 = vunpack.c.l.b16 %v48
  %v179 = vunpack.c.l.b16 %v49
  %v180 = vunpack.c.l.b16 %v50
  %v181 = vunpack.c.l.b16 %v51
  %v182 = vunpack.c.l.b16 %v52
  %v183 = vunpack.c.l.b16 %v53
  %v184 = vunpack.c.l.b16 %v54
  %v185 = vunpack.c.l.b16 %v55
  %v186 = vunpack.c.l.b16 %v56
  %v187 = vunpack.c.l.b16 %v57
  %v188 = vunpack.c.l.b16 %v58
  %v189 = vunpack.c.l.b16 %v59
  %v190 = vunpack.c.l.b16 %v60
  %v191 = vunpack.c.l.b16 %v61
  %v192 = vunpack.c.l.b16 %v62
  %v193 = vunpack.c.l.b16 %v63
  %v194 = vunpack.c.l.b16 %v64
  %v195 = vunpack.c.l.b16 %v65
  %v196 = vunpack.c.l.b16 %v66
  %v197 = vunpack.c.l.b16 %v67
  %v198 = vunpack.c.l.b16 %v68
  %v199 = vunpack.c.l.b16 %v69
  %v200 = vunpack.c.l.b16 %v70
  %v201 = vunpack.c.l.b16 %v71
  %v202 = vunpack.c.l.b16 %v72
  %v203 = vunpack.c.l.b16 %v73
  %v204 = vunpack.c.l.b16 %v74
  %v205 = vunpack.c.l.b16 %v75
  %v206 = vpack.c.b16 %v143, %v142
  %v207 = vpack.c.b16 %v145, %v144
  %v208 = vpack.c.b16 %v147, %v146
  %v209 = vpack.c.b16 %v149, %v148
  %v210 = vpack.c.b16 %v151, %v150
  %v211 = vpack.c.b16 %v153, %v152
  %v212 = vpack.c.b16 %v155, %v154
  %v213 = vpack.c.b16 %v157, %v156
  %v214 = vpack.c.b16 %v159, %v158
  %v215 = vpack.c.b16 %v161, %v160
  %v216 = vpack.c.b16 %v163, %v162
  %v217 = vpack.c.b16 %v165, %v164
  %v218 = vpack.c.b16 %v167, %v166
  %v219 = vpack.c.b16 %v169, %v168
  %v220 = vpack.c.b16 %v171, %v170
  %v221 = vpack.c.b16 %v173, %v172
  %v222 = vpack.c.b16 %v175, %v174
  %v223 = vpack.c.b16 %v177, %v176
  %v224 = vpack.c.b16 %v179, %v178
  %v225 = vpack.c.b16 %v181, %v180
  %v226 = vpack.c.b16 %v183, %v182
  %v227 = vpack.c.b16 %v185, %v184
  %v228 = vpack.c.b16 %v187, %v186
  %v229 = vpack.c.b16 %v189, %v188
  %v230 = vpack.c.b16 %v191, %v190
  %v231 = vpack.c.b16 %v193, %v192
  %v232 = vpack.c.b16 %v195, %v194
  %v233 = vpack.c.b16 %v197, %v196
  %v234 = vpack.c.b16 %v199, %v198
  %v235 = vpack.c.b16 %v201, %v200
  %v236 = vpack.c.b16 %v203, %v202
  %v237 = vpack.c.b16 %v205, %v204
  %v240 = vunpack.c.l.b16 %v76
  %v241 = vunpack.c.l.b16 %v77
  %v242 = vpack.c.b16 %v241, %v240
  %vm244 = vcmask 130048
  %v246 = vsel %vm244, %v206, 0
  %v249 = vsel %vm244, %v207, 0
  %v252 = vsel %vm244, %v208, 0
  %v255 = vsel %vm244, %v209, 0
  %v258 = vsel %vm244, %v210, 0
  %v261 = vsel %vm244, %v211, 0
  %v264 = vsel %vm244, %v212, 0
  %v267 = vsel %vm244, %v213, 0
  %v270 = vsel %vm244, %v214, 0
  %v273 = vsel %vm244, %v215, 0
  %v276 = vsel %vm244, %v216, 0
  %v279 = vsel %vm244, %v217, 0
  %v282 = vsel %vm244, %v218, 0
  %v285 = vsel %vm244, %v219, 0
  %v288 = vsel %vm244, %v220, 0
  %v291 = vsel %vm244, %v221, 0
  %v294 = vsel %vm244, %v222, 0
  %v297 = vsel %vm244, %v223, 0
  %v300 = vsel %vm244, %v224, 0
  %v303 = vsel %vm244, %v225, 0
  %v306 = vsel %vm244, %v226, 0
  %v309 = vsel %vm244, %v227, 0
  %v312 = vsel %vm244, %v228, 0
  %v315 = vsel %vm244, %v229, 0
  %v318 = vsel %vm244, %v230, 0
  %v321 = vsel %vm244, %v231, 0
  %v324 = vsel %vm244, %v232, 0
  %v327 = vsel %vm244, %v233, 0
  %v330 = vsel %vm244, %v234, 0
  %v333 = vsel %vm244, %v235, 0
  %v336 = vsel %vm244, %v236, 0
  %v339 = vsel %vm244, %v237, 0
  %341 = vmatprep.subr.bf16.mxu0 0
  %342 = vmatpush1.bf16.msra.mxu0 %v242
  %343 = vmatprep.subr.bf16.mxu0 0
  %344 = vmatpush1.bf16.msra.mxu0 0
  %345 = vmatprep.subr.bf16.mxu0 0
  %346 = vmatpush1.bf16.msra.mxu0 0
  %347 = vmatprep.subr.bf16.mxu0 0
  %348 = vmatpush1.bf16.msra.mxu0 0
  %349 = vmatprep.subr.bf16.mxu0 0
  %350 = vmatpush1.bf16.msra.mxu0 0
  %351 = vmatprep.subr.bf16.mxu0 0
  %352 = vmatpush1.bf16.msra.mxu0 0
  %353 = vmatprep.subr.bf16.mxu0 0
  %354 = vmatpush1.bf16.msra.mxu0 0
  %355 = vmatprep.subr.bf16.mxu0 0
  %356 = vmatpush1.bf16.msra.mxu0 0
  %357 = vmatprep.subr.bf16.mxu0 0
  %358 = vmatpush1.bf16.msra.mxu0 0
  %359 = vmatprep.subr.bf16.mxu0 0
  %360 = vmatpush1.bf16.msra.mxu0 0
  %361 = vmatprep.subr.bf16.mxu0 0
  %362 = vmatpush1.bf16.msra.mxu0 0
  %363 = vmatprep.subr.bf16.mxu0 0
  %364 = vmatpush1.bf16.msra.mxu0 0
  %365 = vmatprep.subr.bf16.mxu0 0
  %366 = vmatpush1.bf16.msra.mxu0 0
  %367 = vmatprep.subr.bf16.mxu0 0
  %368 = vmatpush1.bf16.msra.mxu0 0
  %369 = vmatprep.subr.bf16.mxu0 0
  %370 = vmatpush1.bf16.msra.mxu0 0
  %371 = vmatprep.subr.bf16.mxu0 0
  %372 = vmatpush1.bf16.msra.mxu0 0
  %373 = vmatprep.mubr.bf16.mxu0 0
  %374 = vmatmul.mubr.bf16.gmra.mrb[0].mxu0 %v246
  %v375 = vpop.f32.mrb[0].mxu0
  %v376 = vadd.f32 0.0, %v375
  %v377 = vpop.f32.mrb[0].mxu0
  %v378 = vpop.f32.mrb[0].mxu0
  %v379 = vadd.f32 0.0, %v378
  %v380 = vpop.f32.mrb[0].mxu0
  %381 = vmatprep.mubr.bf16.mxu0 0
  %382 = vmatmul.mubr.bf16.gmra.mrb[0].mxu0 %v249
  %v383 = vpop.f32.mrb[0].mxu0
  %v384 = vadd.f32 0.0, %v383
  %v385 = vpop.f32.mrb[0].mxu0
  %v386 = vpop.f32.mrb[0].mxu0
  %v387 = vadd.f32 0.0, %v386
  %v388 = vpop.f32.mrb[0].mxu0
  %389 = vmatprep.mubr.bf16.mxu0 0
  %390 = vmatmul.mubr.bf16.gmra.mrb[0].mxu0 %v252
  %v391 = vpop.f32.mrb[0].mxu0
  %v392 = vadd.f32 0.0, %v391
  %v393 = vpop.f32.mrb[0].mxu0
  %v394 = vpop.f32.mrb[0].mxu0
  %v395 = vadd.f32 0.0, %v394
  %v396 = vpop.f32.mrb[0].mxu0
  %397 = vmatprep.mubr.bf16.mxu0 0
  %398 = vmatmul.mubr.bf16.gmra.mrb[0].mxu0 %v255
  %v399 = vpop.f32.mrb[0].mxu0
  %v400 = vadd.f32 0.0, %v399
  %v401 = vpop.f32.mrb[0].mxu0
  %v402 = vpop.f32.mrb[0].mxu0
  %v403 = vadd.f32 0.0, %v402
  %v404 = vpop.f32.mrb[0].mxu0
  %405 = vmatprep.mubr.bf16.mxu0 0
  %406 = vmatmul.mubr.bf16.gmra.mrb[0].mxu0 %v258
  %v407 = vpop.f32.mrb[0].mxu0
  %v408 = vadd.f32 0.0, %v407
  %v409 = vpop.f32.mrb[0].mxu0
  %v410 = vpop.f32.mrb[0].mxu0
  %v411 = vadd.f32 0.0, %v410
  %v412 = vpop.f32.mrb[0].mxu0
  %413 = vmatprep.mubr.bf16.mxu0 0
  %414 = vmatmul.mubr.bf16.gmra.mrb[0].mxu0 %v261
  %v415 = vpop.f32.mrb[0].mxu0
  %v416 = vadd.f32 0.0, %v415
  %v417 = vpop.f32.mrb[0].mxu0
  %v418 = vpop.f32.mrb[0].mxu0
  %v419 = vadd.f32 0.0, %v418
  %v420 = vpop.f32.mrb[0].mxu0
  %421 = vmatprep.mubr.bf16.mxu0 0
  %422 = vmatmul.mubr.bf16.gmra.mrb[0].mxu0 %v264
  %v423 = vpop.f32.mrb[0].mxu0
  %v424 = vadd.f32 0.0, %v423
  %v425 = vpop.f32.mrb[0].mxu0
  %v426 = vpop.f32.mrb[0].mxu0
  %v427 = vadd.f32 0.0, %v426
  %v428 = vpop.f32.mrb[0].mxu0
  %429 = vmatprep.mubr.bf16.mxu0 0
  %430 = vmatmul.mubr.bf16.gmra.mrb[0].mxu0 %v267
  %v431 = vpop.f32.mrb[0].mxu0
  %v432 = vadd.f32 0.0, %v431
  %v433 = vpop.f32.mrb[0].mxu0
  %v434 = vpop.f32.mrb[0].mxu0
  %v435 = vadd.f32 0.0, %v434
  %v436 = vpop.f32.mrb[0].mxu0
  %437 = vmatprep.mubr.bf16.mxu0 0
  %438 = vmatmul.mubr.bf16.gmra.mrb[0].mxu0 %v270
  %v439 = vpop.f32.mrb[0].mxu0
  %v440 = vadd.f32 0.0, %v439
  %v441 = vpop.f32.mrb[0].mxu0
  %v442 = vpop.f32.mrb[0].mxu0
  %v443 = vadd.f32 0.0, %v442
  %v444 = vpop.f32.mrb[0].mxu0
  %445 = vmatprep.mubr.bf16.mxu0 0
  %446 = vmatmul.mubr.bf16.gmra.mrb[0].mxu0 %v273
  %v447 = vpop.f32.mrb[0].mxu0
  %v448 = vadd.f32 0.0, %v447
  %v449 = vpop.f32.mrb[0].mxu0
  %v450 = vpop.f32.mrb[0].mxu0
  %v451 = vadd.f32 0.0, %v450
  %v452 = vpop.f32.mrb[0].mxu0
  %453 = vmatprep.mubr.bf16.mxu0 0
  %454 = vmatmul.mubr.bf16.gmra.mrb[0].mxu0 %v276
  %v455 = vpop.f32.mrb[0].mxu0
  %v456 = vadd.f32 0.0, %v455
  %v457 = vpop.f32.mrb[0].mxu0
  %v458 = vpop.f32.mrb[0].mxu0
  %v459 = vadd.f32 0.0, %v458
  %v460 = vpop.f32.mrb[0].mxu0
  %461 = vmatprep.mubr.bf16.mxu0 0
  %462 = vmatmul.mubr.bf16.gmra.mrb[0].mxu0 %v279
  %v463 = vpop.f32.mrb[0].mxu0
  %v464 = vadd.f32 0.0, %v463
  %v465 = vpop.f32.mrb[0].mxu0
  %v466 = vpop.f32.mrb[0].mxu0
  %v467 = vadd.f32 0.0, %v466
  %v468 = vpop.f32.mrb[0].mxu0
  %469 = vmatprep.mubr.bf16.mxu0 0
  %470 = vmatmul.mubr.bf16.gmra.mrb[0].mxu0 %v282
  %v471 = vpop.f32.mrb[0].mxu0
  %v472 = vadd.f32 0.0, %v471
  %v473 = vpop.f32.mrb[0].mxu0
  %v474 = vpop.f32.mrb[0].mxu0
  %v475 = vadd.f32 0.0, %v474
  %v476 = vpop.f32.mrb[0].mxu0
  %477 = vmatprep.mubr.bf16.mxu0 0
  %478 = vmatmul.mubr.bf16.gmra.mrb[0].mxu0 %v285
  %v479 = vpop.f32.mrb[0].mxu0
  %v480 = vadd.f32 0.0, %v479
  %v481 = vpop.f32.mrb[0].mxu0
  %v482 = vpop.f32.mrb[0].mxu0
  %v483 = vadd.f32 0.0, %v482
  %v484 = vpop.f32.mrb[0].mxu0
  %485 = vmatprep.mubr.bf16.mxu0 0
  %486 = vmatmul.mubr.bf16.gmra.mrb[0].mxu0 %v288
  %v487 = vpop.f32.mrb[0].mxu0
  %v488 = vadd.f32 0.0, %v487
  %v489 = vpop.f32.mrb[0].mxu0
  %v490 = vpop.f32.mrb[0].mxu0
  %v491 = vadd.f32 0.0, %v490
  %v492 = vpop.f32.mrb[0].mxu0
  %493 = vmatprep.mubr.bf16.mxu0 0
  %494 = vmatmul.mubr.bf16.gmra.mrb[0].mxu0 %v291
  %v495 = vpop.f32.mrb[0].mxu0
  %v496 = vadd.f32 0.0, %v495
  %v497 = vpop.f32.mrb[0].mxu0
  %v498 = vpop.f32.mrb[0].mxu0
  %v499 = vadd.f32 0.0, %v498
  %v500 = vpop.f32.mrb[0].mxu0
  %501 = vmatprep.mubr.bf16.mxu0 0
  %502 = vmatmul.mubr.bf16.gmra.mrb[0].mxu0 %v294
  %v503 = vpop.f32.mrb[0].mxu0
  %v504 = vadd.f32 0.0, %v503
  %v505 = vpop.f32.mrb[0].mxu0
  %v506 = vpop.f32.mrb[0].mxu0
  %v507 = vadd.f32 0.0, %v506
  %v508 = vpop.f32.mrb[0].mxu0
  %509 = vmatprep.mubr.bf16.mxu0 0
  %510 = vmatmul.mubr.bf16.gmra.mrb[0].mxu0 %v297
  %v511 = vpop.f32.mrb[0].mxu0
  %v512 = vadd.f32 0.0, %v511
  %v513 = vpop.f32.mrb[0].mxu0
  %v514 = vpop.f32.mrb[0].mxu0
  %v515 = vadd.f32 0.0, %v514
  %v516 = vpop.f32.mrb[0].mxu0
  %517 = vmatprep.mubr.bf16.mxu0 0
  %518 = vmatmul.mubr.bf16.gmra.mrb[0].mxu0 %v300
  %v519 = vpop.f32.mrb[0].mxu0
  %v520 = vadd.f32 0.0, %v519
  %v521 = vpop.f32.mrb[0].mxu0
  %v522 = vpop.f32.mrb[0].mxu0
  %v523 = vadd.f32 0.0, %v522
  %v524 = vpop.f32.mrb[0].mxu0
  %525 = vmatprep.mubr.bf16.mxu0 0
  %526 = vmatmul.mubr.bf16.gmra.mrb[0].mxu0 %v303
  %v527 = vpop.f32.mrb[0].mxu0
  %v528 = vadd.f32 0.0, %v527
  %v529 = vpop.f32.mrb[0].mxu0
  %v530 = vpop.f32.mrb[0].mxu0
  %v531 = vadd.f32 0.0, %v530
  %v532 = vpop.f32.mrb[0].mxu0
  %533 = vmatprep.mubr.bf16.mxu0 0
  %534 = vmatmul.mubr.bf16.gmra.mrb[0].mxu0 %v306
  %v535 = vpop.f32.mrb[0].mxu0
  %v536 = vadd.f32 0.0, %v535
  %v537 = vpop.f32.mrb[0].mxu0
  %v538 = vpop.f32.mrb[0].mxu0
  %v539 = vadd.f32 0.0, %v538
  %v540 = vpop.f32.mrb[0].mxu0
  %541 = vmatprep.mubr.bf16.mxu0 0
  %542 = vmatmul.mubr.bf16.gmra.mrb[0].mxu0 %v309
  %v543 = vpop.f32.mrb[0].mxu0
  %v544 = vadd.f32 0.0, %v543
  %v545 = vpop.f32.mrb[0].mxu0
  %v546 = vpop.f32.mrb[0].mxu0
  %v547 = vadd.f32 0.0, %v546
  %v548 = vpop.f32.mrb[0].mxu0
  %549 = vmatprep.mubr.bf16.mxu0 0
  %550 = vmatmul.mubr.bf16.gmra.mrb[0].mxu0 %v312
  %v551 = vpop.f32.mrb[0].mxu0
  %v552 = vadd.f32 0.0, %v551
  %v553 = vpop.f32.mrb[0].mxu0
  %v554 = vpop.f32.mrb[0].mxu0
  %v555 = vadd.f32 0.0, %v554
  %v556 = vpop.f32.mrb[0].mxu0
  %557 = vmatprep.mubr.bf16.mxu0 0
  %558 = vmatmul.mubr.bf16.gmra.mrb[0].mxu0 %v315
  %v559 = vpop.f32.mrb[0].mxu0
  %v560 = vadd.f32 0.0, %v559
  %v561 = vpop.f32.mrb[0].mxu0
  %v562 = vpop.f32.mrb[0].mxu0
  %v563 = vadd.f32 0.0, %v562
  %v564 = vpop.f32.mrb[0].mxu0
  %565 = vmatprep.mubr.bf16.mxu0 0
  %566 = vmatmul.mubr.bf16.gmra.mrb[0].mxu0 %v318
  %v567 = vpop.f32.mrb[0].mxu0
  %v568 = vadd.f32 0.0, %v567
  %v569 = vpop.f32.mrb[0].mxu0
  %v570 = vpop.f32.mrb[0].mxu0
  %v571 = vadd.f32 0.0, %v570
  %v572 = vpop.f32.mrb[0].mxu0
  %573 = vmatprep.mubr.bf16.mxu0 0
  %574 = vmatmul.mubr.bf16.gmra.mrb[0].mxu0 %v321
  %v575 = vpop.f32.mrb[0].mxu0
  %v576 = vadd.f32 0.0, %v575
  %v577 = vpop.f32.mrb[0].mxu0
  %v578 = vpop.f32.mrb[0].mxu0
  %v579 = vadd.f32 0.0, %v578
  %v580 = vpop.f32.mrb[0].mxu0
  %581 = vmatprep.mubr.bf16.mxu0 0
  %582 = vmatmul.mubr.bf16.gmra.mrb[0].mxu0 %v324
  %v583 = vpop.f32.mrb[0].mxu0
  %v584 = vadd.f32 0.0, %v583
  %v585 = vpop.f32.mrb[0].mxu0
  %v586 = vpop.f32.mrb[0].mxu0
  %v587 = vadd.f32 0.0, %v586
  %v588 = vpop.f32.mrb[0].mxu0
  %589 = vmatprep.mubr.bf16.mxu0 0
  %590 = vmatmul.mubr.bf16.gmra.mrb[0].mxu0 %v327
  %v591 = vpop.f32.mrb[0].mxu0
  %v592 = vadd.f32 0.0, %v591
  %v593 = vpop.f32.mrb[0].mxu0
  %v594 = vpop.f32.mrb[0].mxu0
  %v595 = vadd.f32 0.0, %v594
  %v596 = vpop.f32.mrb[0].mxu0
  %597 = vmatprep.mubr.bf16.mxu0 0
  %598 = vmatmul.mubr.bf16.gmra.mrb[0].mxu0 %v330
  %v599 = vpop.f32.mrb[0].mxu0
  %v600 = vadd.f32 0.0, %v599
  %v601 = vpop.f32.mrb[0].mxu0
  %v602 = vpop.f32.mrb[0].mxu0
  %v603 = vadd.f32 0.0, %v602
  %v604 = vpop.f32.mrb[0].mxu0
  %605 = vmatprep.mubr.bf16.mxu0 0
  %606 = vmatmul.mubr.bf16.gmra.mrb[0].mxu0 %v333
  %v607 = vpop.f32.mrb[0].mxu0
  %v608 = vadd.f32 0.0, %v607
  %v609 = vpop.f32.mrb[0].mxu0
  %v610 = vpop.f32.mrb[0].mxu0
  %v611 = vadd.f32 0.0, %v610
  %v612 = vpop.f32.mrb[0].mxu0
  %613 = vmatprep.mubr.bf16.mxu0 0
  %614 = vmatmul.mubr.bf16.gmra.mrb[0].mxu0 %v336
  %v615 = vpop.f32.mrb[0].mxu0
  %v616 = vadd.f32 0.0, %v615
  %v617 = vpop.f32.mrb[0].mxu0
  %v618 = vpop.f32.mrb[0].mxu0
  %v619 = vadd.f32 0.0, %v618
  %v620 = vpop.f32.mrb[0].mxu0
  %621 = vmatprep.mubr.bf16.mxu0 0
  %622 = vmatmul.mubr.bf16.gmra.mrb[0].mxu0 %v339
  %v623 = vpop.f32.mrb[0].mxu0
  %v624 = vadd.f32 0.0, %v623
  %v625 = vpop.f32.mrb[0].mxu0
  %v626 = vpop.f32.mrb[0].mxu0
  %v627 = vadd.f32 0.0, %v626
  %v628 = vpop.f32.mrb[0].mxu0
  %629 = vdwg.mxu0
  %vm630 = vcmp.ge.f32.partialorder %v376, 0.0
  %vm631 = vcmp.ge.f32.partialorder %v379, 0.0
  %vm632 = vcmp.ge.f32.partialorder %v384, 0.0
  %vm633 = vcmp.ge.f32.partialorder %v387, 0.0
  %vm634 = vcmp.ge.f32.partialorder %v392, 0.0
  %vm635 = vcmp.ge.f32.partialorder %v395, 0.0
  %vm636 = vcmp.ge.f32.partialorder %v400, 0.0
  %vm637 = vcmp.ge.f32.partialorder %v403, 0.0
  %vm638 = vcmp.ge.f32.partialorder %v408, 0.0
  %vm639 = vcmp.ge.f32.partialorder %v411, 0.0
  %vm640 = vcmp.ge.f32.partialorder %v416, 0.0
  %vm641 = vcmp.ge.f32.partialorder %v419, 0.0
  %vm642 = vcmp.ge.f32.partialorder %v424, 0.0
  %vm643 = vcmp.ge.f32.partialorder %v427, 0.0
  %vm644 = vcmp.ge.f32.partialorder %v432, 0.0
  %vm645 = vcmp.ge.f32.partialorder %v435, 0.0
  %vm646 = vcmp.ge.f32.partialorder %v440, 0.0
  %vm647 = vcmp.ge.f32.partialorder %v443, 0.0
  %vm648 = vcmp.ge.f32.partialorder %v448, 0.0
  %vm649 = vcmp.ge.f32.partialorder %v451, 0.0
  %vm650 = vcmp.ge.f32.partialorder %v456, 0.0
  %vm651 = vcmp.ge.f32.partialorder %v459, 0.0
  %vm652 = vcmp.ge.f32.partialorder %v464, 0.0
  %vm653 = vcmp.ge.f32.partialorder %v467, 0.0
  %vm654 = vcmp.ge.f32.partialorder %v472, 0.0
  %vm655 = vcmp.ge.f32.partialorder %v475, 0.0
  %vm656 = vcmp.ge.f32.partialorder %v480, 0.0
  %vm657 = vcmp.ge.f32.partialorder %v483, 0.0
  %vm658 = vcmp.ge.f32.partialorder %v488, 0.0
  %vm659 = vcmp.ge.f32.partialorder %v491, 0.0
  %vm660 = vcmp.ge.f32.partialorder %v496, 0.0
  %vm661 = vcmp.ge.f32.partialorder %v499, 0.0
  %vm662 = vcmp.ge.f32.partialorder %v504, 0.0
  %vm663 = vcmp.ge.f32.partialorder %v507, 0.0
  %vm664 = vcmp.ge.f32.partialorder %v512, 0.0
  %vm665 = vcmp.ge.f32.partialorder %v515, 0.0
  %vm666 = vcmp.ge.f32.partialorder %v520, 0.0
  %vm667 = vcmp.ge.f32.partialorder %v523, 0.0
  %vm668 = vcmp.ge.f32.partialorder %v528, 0.0
  %vm669 = vcmp.ge.f32.partialorder %v531, 0.0
  %vm670 = vcmp.ge.f32.partialorder %v536, 0.0
  %vm671 = vcmp.ge.f32.partialorder %v539, 0.0
  %vm672 = vcmp.ge.f32.partialorder %v544, 0.0
  %vm673 = vcmp.ge.f32.partialorder %v547, 0.0
  %vm674 = vcmp.ge.f32.partialorder %v552, 0.0
  %vm675 = vcmp.ge.f32.partialorder %v555, 0.0
  %vm676 = vcmp.ge.f32.partialorder %v560, 0.0
  %vm677 = vcmp.ge.f32.partialorder %v563, 0.0
  %vm678 = vcmp.ge.f32.partialorder %v568, 0.0
  %vm679 = vcmp.ge.f32.partialorder %v571, 0.0
  %vm680 = vcmp.ge.f32.partialorder %v576, 0.0
  %vm681 = vcmp.ge.f32.partialorder %v579, 0.0
  %vm682 = vcmp.ge.f32.partialorder %v584, 0.0
  %vm683 = vcmp.ge.f32.partialorder %v587, 0.0
  %vm684 = vcmp.ge.f32.partialorder %v592, 0.0
  %vm685 = vcmp.ge.f32.partialorder %v595, 0.0
  %vm686 = vcmp.ge.f32.partialorder %v600, 0.0
  %vm687 = vcmp.ge.f32.partialorder %v603, 0.0
  %vm688 = vcmp.ge.f32.partialorder %v608, 0.0
  %vm689 = vcmp.ge.f32.partialorder %v611, 0.0
  %vm690 = vcmp.ge.f32.partialorder %v616, 0.0
  %vm691 = vcmp.ge.f32.partialorder %v619, 0.0
  %vm692 = vcmp.ge.f32.partialorder %v624, 0.0
  %vm693 = vcmp.ge.f32.partialorder %v627, 0.0
  %v694 = vmul.f32 %v376, 0.25
  %v695 = vmul.f32 %v379, 0.25
  %v696 = vmul.f32 %v384, 0.25
  %v697 = vmul.f32 %v387, 0.25
  %v698 = vmul.f32 %v392, 0.25
  %v699 = vmul.f32 %v395, 0.25
  %v700 = vmul.f32 %v400, 0.25
  %v701 = vmul.f32 %v403, 0.25
  %v702 = vmul.f32 %v408, 0.25
  %v703 = vmul.f32 %v411, 0.25
  %v704 = vmul.f32 %v416, 0.25
  %v705 = vmul.f32 %v419, 0.25
  %v706 = vmul.f32 %v424, 0.25
  %v707 = vmul.f32 %v427, 0.25
  %v708 = vmul.f32 %v432, 0.25
  %v709 = vmul.f32 %v435, 0.25
  %v710 = vmul.f32 %v440, 0.25
  %v711 = vmul.f32 %v443, 0.25
  %v712 = vmul.f32 %v448, 0.25
  %v713 = vmul.f32 %v451, 0.25
  %v714 = vmul.f32 %v456, 0.25
  %v715 = vmul.f32 %v459, 0.25
  %v716 = vmul.f32 %v464, 0.25
  %v717 = vmul.f32 %v467, 0.25
  %v718 = vmul.f32 %v472, 0.25
  %v719 = vmul.f32 %v475, 0.25
  %v720 = vmul.f32 %v480, 0.25
  %v721 = vmul.f32 %v483, 0.25
  %v722 = vmul.f32 %v488, 0.25
  %v723 = vmul.f32 %v491, 0.25
  %v724 = vmul.f32 %v496, 0.25
  %v725 = vmul.f32 %v499, 0.25
  %v726 = vmul.f32 %v504, 0.25
  %v727 = vmul.f32 %v507, 0.25
  %v728 = vmul.f32 %v512, 0.25
  %v729 = vmul.f32 %v515, 0.25
  %v730 = vmul.f32 %v520, 0.25
  %v731 = vmul.f32 %v523, 0.25
  %v732 = vmul.f32 %v528, 0.25
  %v733 = vmul.f32 %v531, 0.25
  %v734 = vmul.f32 %v536, 0.25
  %v735 = vmul.f32 %v539, 0.25
  %v736 = vmul.f32 %v544, 0.25
  %v737 = vmul.f32 %v547, 0.25
  %v738 = vmul.f32 %v552, 0.25
  %v739 = vmul.f32 %v555, 0.25
  %v740 = vmul.f32 %v560, 0.25
  %v741 = vmul.f32 %v563, 0.25
  %v742 = vmul.f32 %v568, 0.25
  %v743 = vmul.f32 %v571, 0.25
  %v744 = vmul.f32 %v576, 0.25
  %v745 = vmul.f32 %v579, 0.25
  %v746 = vmul.f32 %v584, 0.25
  %v747 = vmul.f32 %v587, 0.25
  %v748 = vmul.f32 %v592, 0.25
  %v749 = vmul.f32 %v595, 0.25
  %v750 = vmul.f32 %v600, 0.25
  %v751 = vmul.f32 %v603, 0.25
  %v752 = vmul.f32 %v608, 0.25
  %v753 = vmul.f32 %v611, 0.25
  %v754 = vmul.f32 %v616, 0.25
  %v755 = vmul.f32 %v619, 0.25
  %v756 = vmul.f32 %v624, 0.25
  %v757 = vmul.f32 %v627, 0.25
  %v758 = vsel %vm630, %v376, %v694
  %v759 = vsel %vm631, %v379, %v695
  %v760 = vsel %vm632, %v384, %v696
  %v761 = vsel %vm633, %v387, %v697
  %v762 = vsel %vm634, %v392, %v698
  %v763 = vsel %vm635, %v395, %v699
  %v764 = vsel %vm636, %v400, %v700
  %v765 = vsel %vm637, %v403, %v701
  %v766 = vsel %vm638, %v408, %v702
  %v767 = vsel %vm639, %v411, %v703
  %v768 = vsel %vm640, %v416, %v704
  %v769 = vsel %vm641, %v419, %v705
  %v770 = vsel %vm642, %v424, %v706
  %v771 = vsel %vm643, %v427, %v707
  %v772 = vsel %vm644, %v432, %v708
  %v773 = vsel %vm645, %v435, %v709
  %v774 = vsel %vm646, %v440, %v710
  %v775 = vsel %vm647, %v443, %v711
  %v776 = vsel %vm648, %v448, %v712
  %v777 = vsel %vm649, %v451, %v713
  %v778 = vsel %vm650, %v456, %v714
  %v779 = vsel %vm651, %v459, %v715
  %v780 = vsel %vm652, %v464, %v716
  %v781 = vsel %vm653, %v467, %v717
  %v782 = vsel %vm654, %v472, %v718
  %v783 = vsel %vm655, %v475, %v719
  %v784 = vsel %vm656, %v480, %v720
  %v785 = vsel %vm657, %v483, %v721
  %v786 = vsel %vm658, %v488, %v722
  %v787 = vsel %vm659, %v491, %v723
  %v788 = vsel %vm660, %v496, %v724
  %v789 = vsel %vm661, %v499, %v725
  %v790 = vsel %vm662, %v504, %v726
  %v791 = vsel %vm663, %v507, %v727
  %v792 = vsel %vm664, %v512, %v728
  %v793 = vsel %vm665, %v515, %v729
  %v794 = vsel %vm666, %v520, %v730
  %v795 = vsel %vm667, %v523, %v731
  %v796 = vsel %vm668, %v528, %v732
  %v797 = vsel %vm669, %v531, %v733
  %v798 = vsel %vm670, %v536, %v734
  %v799 = vsel %vm671, %v539, %v735
  %v800 = vsel %vm672, %v544, %v736
  %v801 = vsel %vm673, %v547, %v737
  %v802 = vsel %vm674, %v552, %v738
  %v803 = vsel %vm675, %v555, %v739
  %v804 = vsel %vm676, %v560, %v740
  %v805 = vsel %vm677, %v563, %v741
  %v806 = vsel %vm678, %v568, %v742
  %v807 = vsel %vm679, %v571, %v743
  %v808 = vsel %vm680, %v576, %v744
  %v809 = vsel %vm681, %v579, %v745
  %v810 = vsel %vm682, %v584, %v746
  %v811 = vsel %vm683, %v587, %v747
  %v812 = vsel %vm684, %v592, %v748
  %v813 = vsel %vm685, %v595, %v749
  %v814 = vsel %vm686, %v600, %v750
  %v815 = vsel %vm687, %v603, %v751
  %v816 = vsel %vm688, %v608, %v752
  %v817 = vsel %vm689, %v611, %v753
  %v818 = vsel %vm690, %v616, %v754
  %v819 = vsel %vm691, %v619, %v755
  %v820 = vsel %vm692, %v624, %v756
  %v821 = vsel %vm693, %v627, %v757
  %822 = vst [vmem:[%s2] sm:$0xff] %v758
  %823 = vst [vmem:[%s2 + $0x8] sm:$0xff] %v759
  %824 = vst [vmem:[%s2 + $0x10] sm:$0xff] %v760
  %825 = vst [vmem:[%s2 + $0x18] sm:$0xff] %v761
  %826 = vst [vmem:[%s2 + $0x20] sm:$0xff] %v762
  %827 = vst [vmem:[%s2 + $0x28] sm:$0xff] %v763
  %828 = vst [vmem:[%s2 + $0x30] sm:$0xff] %v764
  %829 = vst [vmem:[%s2 + $0x38] sm:$0xff] %v765
  %830 = vst [vmem:[%s2 + $0x40] sm:$0xff] %v766
  %831 = vst [vmem:[%s2 + $0x48] sm:$0xff] %v767
  %832 = vst [vmem:[%s2 + $0x50] sm:$0xff] %v768
  %833 = vst [vmem:[%s2 + $0x58] sm:$0xff] %v769
  %834 = vst [vmem:[%s2 + $0x60] sm:$0xff] %v770
  %835 = vst [vmem:[%s2 + $0x68] sm:$0xff] %v771
  %836 = vst [vmem:[%s2 + $0x70] sm:$0xff] %v772
  %837 = vst [vmem:[%s2 + $0x78] sm:$0xff] %v773
  %838 = vst [vmem:[%s2 + $0x80] sm:$0xff] %v774
  %839 = vst [vmem:[%s2 + $0x88] sm:$0xff] %v775
  %840 = vst [vmem:[%s2 + $0x90] sm:$0xff] %v776
  %841 = vst [vmem:[%s2 + $0x98] sm:$0xff] %v777
  %842 = vst [vmem:[%s2 + $0xa0] sm:$0xff] %v778
  %843 = vst [vmem:[%s2 + $0xa8] sm:$0xff] %v779
  %844 = vst [vmem:[%s2 + $0xb0] sm:$0xff] %v780
  %845 = vst [vmem:[%s2 + $0xb8] sm:$0xff] %v781
  %846 = vst [vmem:[%s2 + $0xc0] sm:$0xff] %v782
  %847 = vst [vmem:[%s2 + $0xc8] sm:$0xff] %v783
  %848 = vst [vmem:[%s2 + $0xd0] sm:$0xff] %v784
  %849 = vst [vmem:[%s2 + $0xd8] sm:$0xff] %v785
  %850 = vst [vmem:[%s2 + $0xe0] sm:$0xff] %v786
  %851 = vst [vmem:[%s2 + $0xe8] sm:$0xff] %v787
  %852 = vst [vmem:[%s2 + $0xf0] sm:$0xff] %v788
  %853 = vst [vmem:[%s2 + $0xf8] sm:$0xff] %v789
  %854 = vst [vmem:[%s2 + $0x100] sm:$0xff] %v790
  %855 = vst [vmem:[%s2 + $0x108] sm:$0xff] %v791
  %856 = vst [vmem:[%s2 + $0x110] sm:$0xff] %v792
  %857 = vst [vmem:[%s2 + $0x118] sm:$0xff] %v793
  %858 = vst [vmem:[%s2 + $0x120] sm:$0xff] %v794
  %859 = vst [vmem:[%s2 + $0x128] sm:$0xff] %v795
  %860 = vst [vmem:[%s2 + $0x130] sm:$0xff] %v796
  %861 = vst [vmem:[%s2 + $0x138] sm:$0xff] %v797
  %862 = vst [vmem:[%s2 + $0x140] sm:$0xff] %v798
  %863 = vst [vmem:[%s2 + $0x148] sm:$0xff] %v799
  %864 = vst [vmem:[%s2 + $0x150] sm:$0xff] %v800
  %865 = vst [vmem:[%s2 + $0x158] sm:$0xff] %v801
  %866 = vst [vmem:[%s2 + $0x160] sm:$0xff] %v802
  %867 = vst [vmem:[%s2 + $0x168] sm:$0xff] %v803
  %868 = vst [vmem:[%s2 + $0x170] sm:$0xff] %v804
  %869 = vst [vmem:[%s2 + $0x178] sm:$0xff] %v805
  %870 = vst [vmem:[%s2 + $0x180] sm:$0xff] %v806
  %871 = vst [vmem:[%s2 + $0x188] sm:$0xff] %v807
  %872 = vst [vmem:[%s2 + $0x190] sm:$0xff] %v808
  %873 = vst [vmem:[%s2 + $0x198] sm:$0xff] %v809
  %874 = vst [vmem:[%s2 + $0x1a0] sm:$0xff] %v810
  %875 = vst [vmem:[%s2 + $0x1a8] sm:$0xff] %v811
  %876 = vst [vmem:[%s2 + $0x1b0] sm:$0xff] %v812
  %877 = vst [vmem:[%s2 + $0x1b8] sm:$0xff] %v813
  %878 = vst [vmem:[%s2 + $0x1c0] sm:$0xff] %v814
  %879 = vst [vmem:[%s2 + $0x1c8] sm:$0xff] %v815
  %880 = vst [vmem:[%s2 + $0x1d0] sm:$0xff] %v816
  %881 = vst [vmem:[%s2 + $0x1d8] sm:$0xff] %v817
  %882 = vst [vmem:[%s2 + $0x1e0] sm:$0xff] %v818
  %883 = vst [vmem:[%s2 + $0x1e8] sm:$0xff] %v819
  %884 = vst [vmem:[%s2 + $0x1f0] sm:$0xff] %v820
  %885 = vst [vmem:[%s2 + $0x1f8] sm:$0xff] %v821
  // Predicated region
  $region10: #{forward.181} parent=0 // pred_check
    _
  $region11: #{forward.181} parent=0 // pred_check_branch
    %887 = sbr.rel (0) target = $region13
  $region12: #{forward.181} parent=0 // pred_region
    _
  $region13: #{forward.181} parent=0 // pred_fallthru
    _
  // Predicated region
  $region14: #{forward.181} parent=0 // pred_check
    _
  $region15: #{forward.181} parent=0 // pred_check_branch
    %889 = sbr.rel (0) target = $region17
  $region16: #{forward.181} parent=0 // pred_region
    _
  $region17: #{forward.181} parent=0 // pred_fallthru
    _

// kernel: forward.180
$region0: #{forward.180}
  #allocation0 [shape = 'u32[]', space=smem, size = 0x4, offset = 0x4, fixed_abs, tag = 'smem constant byte address 0x4 - core index']
  #allocation1 [shape = 'u32[144,128]{1,0:T(1,128)}', space=vmem, size = 0x12000, scoped, tag = 'internal scratch']
  %s0 = inlined_call_operand.vmem [shape: bf16[512,4], index: 0, kind: input, shape index: {}]
  %s1 = inlined_call_operand.vmem [shape: bf16[4,128], index: 1, kind: input, shape index: {}]
  %s2 = inlined_call_operand.vmem [shape: f32[512,128], index: 2, kind: input, shape index: {}]
  %s3 = inlined_call_operand.vmem [shape: f32[512,128], index: 3, kind: output, shape index: {}]
  %s4 = sld [smem:[#allocation0]]
  $region22: #{forward.180} parent=0
    _
  %s6 = ssub.s32 1, %s4
  %s7 = scalar_select 0, %s6, %s4
  // Predicated region
  $region2: #{forward.180} parent=0 // pred_check
    _
  $region3: #{forward.180} parent=0 // pred_check_branch
    %9 = sbr.rel (0) target = $region5
  $region4: #{forward.180} parent=0 // pred_region
    _
  $region5: #{forward.180} parent=0 // pred_fallthru
    _
  // Predicated region
  $region6: #{forward.180} parent=0 // pred_check
    _
  $region7: #{forward.180} parent=0 // pred_check_branch
    %11 = sbr.rel (0) target = $region9
  $region8: #{forward.180} parent=0 // pred_region
    _
  $region9: #{forward.180} parent=0 // pred_fallthru
    _
  // Predicated region
  $region10: #{forward.180} parent=0 // pred_check
    _
  $region11: #{forward.180} parent=0 // pred_check_branch
    %13 = sbr.rel (0) target = $region13
  $region12: #{forward.180} parent=0 // pred_region
    _
  $region13: #{forward.180} parent=0 // pred_fallthru
    _
  %v15 = vld [vmem:[%s0] sm:$0xf]
  %v16 = vld [vmem:[%s0 + $0x4] sm:$0xf]
  %v17 = vld [vmem:[%s0 + $0x8] sm:$0xf]
  %v18 = vld [vmem:[%s0 + $0xc] sm:$0xf]
  %v19 = vld [vmem:[%s0 + $0x10] sm:$0xf]
  %v20 = vld [vmem:[%s0 + $0x14] sm:$0xf]
  %v21 = vld [vmem:[%s0 + $0x18] sm:$0xf]
  %v22 = vld [vmem:[%s0 + $0x1c] sm:$0xf]
  %v23 = vld [vmem:[%s0 + $0x20] sm:$0xf]
  %v24 = vld [vmem:[%s0 + $0x24] sm:$0xf]
  %v25 = vld [vmem:[%s0 + $0x28] sm:$0xf]
  %v26 = vld [vmem:[%s0 + $0x2c] sm:$0xf]
  %v27 = vld [vmem:[%s0 + $0x30] sm:$0xf]
  %v28 = vld [vmem:[%s0 + $0x34] sm:$0xf]
  %v29 = vld [vmem:[%s0 + $0x38] sm:$0xf]
  %v30 = vld [vmem:[%s0 + $0x3c] sm:$0xf]
  %v31 = vld [vmem:[%s0 + $0x40] sm:$0xf]
  %v32 = vld [vmem:[%s0 + $0x44] sm:$0xf]
  %v33 = vld [vmem:[%s0 + $0x48] sm:$0xf]
  %v34 = vld [vmem:[%s0 + $0x4c] sm:$0xf]
  %v35 = vld [vmem:[%s0 + $0x50] sm:$0xf]
  %v36 = vld [vmem:[%s0 + $0x54] sm:$0xf]
  %v37 = vld [vmem:[%s0 + $0x58] sm:$0xf]
  %v38 = vld [vmem:[%s0 + $0x5c] sm:$0xf]
  %v39 = vld [vmem:[%s0 + $0x60] sm:$0xf]
  %v40 = vld [vmem:[%s0 + $0x64] sm:$0xf]
  %v41 = vld [vmem:[%s0 + $0x68] sm:$0xf]
  %v42 = vld [vmem:[%s0 + $0x6c] sm:$0xf]
  %v43 = vld [vmem:[%s0 + $0x70] sm:$0xf]
  %v44 = vld [vmem:[%s0 + $0x74] sm:$0xf]
  %v45 = vld [vmem:[%s0 + $0x78] sm:$0xf]
  %v46 = vld [vmem:[%s0 + $0x7c] sm:$0xf]
  %v47 = vld [vmem:[%s0 + $0x80] sm:$0xf]
  %v48 = vld [vmem:[%s0 + $0x84] sm:$0xf]
  %v49 = vld [vmem:[%s0 + $0x88] sm:$0xf]
  %v50 = vld [vmem:[%s0 + $0x8c] sm:$0xf]
  %v51 = vld [vmem:[%s0 + $0x90] sm:$0xf]
  %v52 = vld [vmem:[%s0 + $0x94] sm:$0xf]
  %v53 = vld [vmem:[%s0 + $0x98] sm:$0xf]
  %v54 = vld [vmem:[%s0 + $0x9c] sm:$0xf]
  %v55 = vld [vmem:[%s0 + $0xa0] sm:$0xf]
  %v56 = vld [vmem:[%s0 + $0xa4] sm:$0xf]
  %v57 = vld [vmem:[%s0 + $0xa8] sm:$0xf]
  %v58 = vld [vmem:[%s0 + $0xac] sm:$0xf]
  %v59 = vld [vmem:[%s0 + $0xb0] sm:$0xf]
  %v60 = vld [vmem:[%s0 + $0xb4] sm:$0xf]
  %v61 = vld [vmem:[%s0 + $0xb8] sm:$0xf]
  %v62 = vld [vmem:[%s0 + $0xbc] sm:$0xf]
  %v63 = vld [vmem:[%s0 + $0xc0] sm:$0xf]
  %v64 = vld [vmem:[%s0 + $0xc4] sm:$0xf]
  %v65 = vld [vmem:[%s0 + $0xc8] sm:$0xf]
  %v66 = vld [vmem:[%s0 + $0xcc] sm:$0xf]
  %v67 = vld [vmem:[%s0 + $0xd0] sm:$0xf]
  %v68 = vld [vmem:[%s0 + $0xd4] sm:$0xf]
  %v69 = vld [vmem:[%s0 + $0xd8] sm:$0xf]
  %v70 = vld [vmem:[%s0 + $0xdc] sm:$0xf]
  %v71 = vld [vmem:[%s0 + $0xe0] sm:$0xf]
  %v72 = vld [vmem:[%s0 + $0xe4] sm:$0xf]
  %v73 = vld [vmem:[%s0 + $0xe8] sm:$0xf]
  %v74 = vld [vmem:[%s0 + $0xec] sm:$0xf]
  %v75 = vld [vmem:[%s0 + $0xf0] sm:$0xf]
  %v76 = vld [vmem:[%s0 + $0xf4] sm:$0xf]
  %v77 = vld [vmem:[%s0 + $0xf8] sm:$0xf]
  %v78 = vld [vmem:[%s0 + $0xfc] sm:$0xf]
  %v79 = vld [vmem:[%s1] sm:$0x3]
  %v80 = vld [vmem:[%s2] sm:$0xff]
  %v81 = vld [vmem:[%s2 + $0x8] sm:$0xff]
  %v82 = vld [vmem:[%s2 + $0x10] sm:$0xff]
  %v83 = vld [vmem:[%s2 + $0x18] sm:$0xff]
  %v84 = vld [vmem:[%s2 + $0x20] sm:$0xff]
  %v85 = vld [vmem:[%s2 + $0x28] sm:$0xff]
  %v86 = vld [vmem:[%s2 + $0x30] sm:$0xff]
  %v87 = vld [vmem:[%s2 + $0x38] sm:$0xff]
  %v88 = vld [vmem:[%s2 + $0x40] sm:$0xff]
  %v89 = vld [vmem:[%s2 + $0x48] sm:$0xff]
  %v90 = vld [vmem:[%s2 + $0x50] sm:$0xff]
  %v91 = vld [vmem:[%s2 + $0x58] sm:$0xff]
  %v92 = vld [vmem:[%s2 + $0x60] sm:$0xff]
  %v93 = vld [vmem:[%s2 + $0x68] sm:$0xff]
  %v94 = vld [vmem:[%s2 + $0x70] sm:$0xff]
  %v95 = vld [vmem:[%s2 + $0x78] sm:$0xff]
  %v96 = vld [vmem:[%s2 + $0x80] sm:$0xff]
  %v97 = vld [vmem:[%s2 + $0x88] sm:$0xff]
  %v98 = vld [vmem:[%s2 + $0x90] sm:$0xff]
  %v99 = vld [vmem:[%s2 + $0x98] sm:$0xff]
  %v100 = vld [vmem:[%s2 + $0xa0] sm:$0xff]
  %v101 = vld [vmem:[%s2 + $0xa8] sm:$0xff]
  %v102 = vld [vmem:[%s2 + $0xb0] sm:$0xff]
  %v103 = vld [vmem:[%s2 + $0xb8] sm:$0xff]
  %v104 = vld [vmem:[%s2 + $0xc0] sm:$0xff]
  %v105 = vld [vmem:[%s2 + $0xc8] sm:$0xff]
  %v106 = vld [vmem:[%s2 + $0xd0] sm:$0xff]
  %v107 = vld [vmem:[%s2 + $0xd8] sm:$0xff]
  %v108 = vld [vmem:[%s2 + $0xe0] sm:$0xff]
  %v109 = vld [vmem:[%s2 + $0xe8] sm:$0xff]
  %v110 = vld [vmem:[%s2 + $0xf0] sm:$0xff]
  %v111 = vld [vmem:[%s2 + $0xf8] sm:$0xff]
  %v112 = vld [vmem:[%s2 + $0x100] sm:$0xff]
  %v113 = vld [vmem:[%s2 + $0x108] sm:$0xff]
  %v114 = vld [vmem:[%s2 + $0x110] sm:$0xff]
  %v115 = vld [vmem:[%s2 + $0x118] sm:$0xff]
  %v116 = vld [vmem:[%s2 + $0x120] sm:$0xff]
  %v117 = vld [vmem:[%s2 + $0x128] sm:$0xff]
  %v118 = vld [vmem:[%s2 + $0x130] sm:$0xff]
  %v119 = vld [vmem:[%s2 + $0x138] sm:$0xff]
  %v120 = vld [vmem:[%s2 + $0x140] sm:$0xff]
  %v121 = vld [vmem:[%s2 + $0x148] sm:$0xff]
  %v122 = vld [vmem:[%s2 + $0x150] sm:$0xff]
  %v123 = vld [vmem:[%s2 + $0x158] sm:$0xff]
  %v124 = vld [vmem:[%s2 + $0x160] sm:$0xff]
  %v125 = vld [vmem:[%s2 + $0x168] sm:$0xff]
  %v126 = vld [vmem:[%s2 + $0x170] sm:$0xff]
  %v127 = vld [vmem:[%s2 + $0x178] sm:$0xff]
  %v128 = vld [vmem:[%s2 + $0x180] sm:$0xff]
  %v129 = vld [vmem:[%s2 + $0x188] sm:$0xff]
  %v130 = vld [vmem:[%s2 + $0x190] sm:$0xff]
  %v131 = vld [vmem:[%s2 + $0x198] sm:$0xff]
  %v132 = vld [vmem:[%s2 + $0x1a0] sm:$0xff]
  %v133 = vld [vmem:[%s2 + $0x1a8] sm:$0xff]
  %v134 = vld [vmem:[%s2 + $0x1b0] sm:$0xff]
  %v135 = vld [vmem:[%s2 + $0x1b8] sm:$0xff]
  %v136 = vld [vmem:[%s2 + $0x1c0] sm:$0xff]
  %v137 = vld [vmem:[%s2 + $0x1c8] sm:$0xff]
  %v138 = vld [vmem:[%s2 + $0x1d0] sm:$0xff]
  %v139 = vld [vmem:[%s2 + $0x1d8] sm:$0xff]
  %v140 = vld [vmem:[%s2 + $0x1e0] sm:$0xff]
  %v141 = vld [vmem:[%s2 + $0x1e8] sm:$0xff]
  %v142 = vld [vmem:[%s2 + $0x1f0] sm:$0xff]
  %v143 = vld [vmem:[%s2 + $0x1f8] sm:$0xff]
  %v208 = vunpack.c.l.b16 %v15
  %v209 = vunpack.c.l.b16 %v16
  %v210 = vunpack.c.l.b16 %v17
  %v211 = vunpack.c.l.b16 %v18
  %v212 = vunpack.c.l.b16 %v19
  %v213 = vunpack.c.l.b16 %v20
  %v214 = vunpack.c.l.b16 %v21
  %v215 = vunpack.c.l.b16 %v22
  %v216 = vunpack.c.l.b16 %v23
  %v217 = vunpack.c.l.b16 %v24
  %v218 = vunpack.c.l.b16 %v25
  %v219 = vunpack.c.l.b16 %v26
  %v220 = vunpack.c.l.b16 %v27
  %v221 = vunpack.c.l.b16 %v28
  %v222 = vunpack.c.l.b16 %v29
  %v223 = vunpack.c.l.b16 %v30
  %v224 = vunpack.c.l.b16 %v31
  %v225 = vunpack.c.l.b16 %v32
  %v226 = vunpack.c.l.b16 %v33
  %v227 = vunpack.c.l.b16 %v34
  %v228 = vunpack.c.l.b16 %v35
  %v229 = vunpack.c.l.b16 %v36
  %v230 = vunpack.c.l.b16 %v37
  %v231 = vunpack.c.l.b16 %v38
  %v232 = vunpack.c.l.b16 %v39
  %v233 = vunpack.c.l.b16 %v40
  %v234 = vunpack.c.l.b16 %v41
  %v235 = vunpack.c.l.b16 %v42
  %v236 = vunpack.c.l.b16 %v43
  %v237 = vunpack.c.l.b16 %v44
  %v238 = vunpack.c.l.b16 %v45
  %v239 = vunpack.c.l.b16 %v46
  %v240 = vunpack.c.l.b16 %v47
  %v241 = vunpack.c.l.b16 %v48
  %v242 = vunpack.c.l.b16 %v49
  %v243 = vunpack.c.l.b16 %v50
  %v244 = vunpack.c.l.b16 %v51
  %v245 = vunpack.c.l.b16 %v52
  %v246 = vunpack.c.l.b16 %v53
  %v247 = vunpack.c.l.b16 %v54
  %v248 = vunpack.c.l.b16 %v55
  %v249 = vunpack.c.l.b16 %v56
  %v250 = vunpack.c.l.b16 %v57
  %v251 = vunpack.c.l.b16 %v58
  %v252 = vunpack.c.l.b16 %v59
  %v253 = vunpack.c.l.b16 %v60
  %v254 = vunpack.c.l.b16 %v61
  %v255 = vunpack.c.l.b16 %v62
  %v256 = vunpack.c.l.b16 %v63
  %v257 = vunpack.c.l.b16 %v64
  %v258 = vunpack.c.l.b16 %v65
  %v259 = vunpack.c.l.b16 %v66
  %v260 = vunpack.c.l.b16 %v67
  %v261 = vunpack.c.l.b16 %v68
  %v262 = vunpack.c.l.b16 %v69
  %v263 = vunpack.c.l.b16 %v70
  %v264 = vunpack.c.l.b16 %v71
  %v265 = vunpack.c.l.b16 %v72
  %v266 = vunpack.c.l.b16 %v73
  %v267 = vunpack.c.l.b16 %v74
  %v268 = vunpack.c.l.b16 %v75
  %v269 = vunpack.c.l.b16 %v76
  %v270 = vunpack.c.l.b16 %v77
  %v271 = vunpack.c.l.b16 %v78
  %v272 = vpack.c.b16 %v209, %v208
  %v273 = vpack.c.b16 %v211, %v210
  %v274 = vpack.c.b16 %v213, %v212
  %v275 = vpack.c.b16 %v215, %v214
  %v276 = vpack.c.b16 %v217, %v216
  %v277 = vpack.c.b16 %v219, %v218
  %v278 = vpack.c.b16 %v221, %v220
  %v279 = vpack.c.b16 %v223, %v222
  %v280 = vpack.c.b16 %v225, %v224
  %v281 = vpack.c.b16 %v227, %v226
  %v282 = vpack.c.b16 %v229, %v228
  %v283 = vpack.c.b16 %v231, %v230
  %v284 = vpack.c.b16 %v233, %v232
  %v285 = vpack.c.b16 %v235, %v234
  %v286 = vpack.c.b16 %v237, %v236
  %v287 = vpack.c.b16 %v239, %v238
  %v288 = vpack.c.b16 %v241, %v240
  %v289 = vpack.c.b16 %v243, %v242
  %v290 = vpack.c.b16 %v245, %v244
  %v291 = vpack.c.b16 %v247, %v246
  %v292 = vpack.c.b16 %v249, %v248
  %v293 = vpack.c.b16 %v251, %v250
  %v294 = vpack.c.b16 %v253, %v252
  %v295 = vpack.c.b16 %v255, %v254
  %v296 = vpack.c.b16 %v257, %v256
  %v297 = vpack.c.b16 %v259, %v258
  %v298 = vpack.c.b16 %v261, %v260
  %v299 = vpack.c.b16 %v263, %v262
  %v300 = vpack.c.b16 %v265, %v264
  %v301 = vpack.c.b16 %v267, %v266
  %v302 = vpack.c.b16 %v269, %v268
  %v303 = vpack.c.b16 %v271, %v270
  %vm304 = vcmask 31744
  %v306 = vsel %vm304, %v272, 0
  %v309 = vsel %vm304, %v273, 0
  %v312 = vsel %vm304, %v274, 0
  %v315 = vsel %vm304, %v275, 0
  %v318 = vsel %vm304, %v276, 0
  %v321 = vsel %vm304, %v277, 0
  %v324 = vsel %vm304, %v278, 0
  %v327 = vsel %vm304, %v279, 0
  %v330 = vsel %vm304, %v280, 0
  %v333 = vsel %vm304, %v281, 0
  %v336 = vsel %vm304, %v282, 0
  %v339 = vsel %vm304, %v283, 0
  %v342 = vsel %vm304, %v284, 0
  %v345 = vsel %vm304, %v285, 0
  %v348 = vsel %vm304, %v286, 0
  %v351 = vsel %vm304, %v287, 0
  %v354 = vsel %vm304, %v288, 0
  %v357 = vsel %vm304, %v289, 0
  %v360 = vsel %vm304, %v290, 0
  %v363 = vsel %vm304, %v291, 0
  %v366 = vsel %vm304, %v292, 0
  %v369 = vsel %vm304, %v293, 0
  %v372 = vsel %vm304, %v294, 0
  %v375 = vsel %vm304, %v295, 0
  %v378 = vsel %vm304, %v296, 0
  %v381 = vsel %vm304, %v297, 0
  %v384 = vsel %vm304, %v298, 0
  %v387 = vsel %vm304, %v299, 0
  %v390 = vsel %vm304, %v300, 0
  %v393 = vsel %vm304, %v301, 0
  %v396 = vsel %vm304, %v302, 0
  %v399 = vsel %vm304, %v303, 0
  %vm401 = vcmask 1041408
  %v403 = vsel %vm401, %v79, 0
  %405 = vmatprep.subr.bf16.mxu0 0
  %406 = vmatpush1.bf16.msra.mxu0 %v403
  %407 = vmatprep.subr.bf16.mxu0 0
  %408 = vmatpush1.bf16.msra.mxu0 0
  %409 = vmatprep.subr.bf16.mxu0 0
  %410 = vmatpush1.bf16.msra.mxu0 0
  %411 = vmatprep.subr.bf16.mxu0 0
  %412 = vmatpush1.bf16.msra.mxu0 0
  %413 = vmatprep.subr.bf16.mxu0 0
  %414 = vmatpush1.bf16.msra.mxu0 0
  %415 = vmatprep.subr.bf16.mxu0 0
  %416 = vmatpush1.bf16.msra.mxu0 0
  %417 = vmatprep.subr.bf16.mxu0 0
  %418 = vmatpush1.bf16.msra.mxu0 0
  %419 = vmatprep.subr.bf16.mxu0 0
  %420 = vmatpush1.bf16.msra.mxu0 0
  %421 = vmatprep.subr.bf16.mxu0 0
  %422 = vmatpush1.bf16.msra.mxu0 0
  %423 = vmatprep.subr.bf16.mxu0 0
  %424 = vmatpush1.bf16.msra.mxu0 0
  %425 = vmatprep.subr.bf16.mxu0 0
  %426 = vmatpush1.bf16.msra.mxu0 0
  %427 = vmatprep.subr.bf16.mxu0 0
  %428 = vmatpush1.bf16.msra.mxu0 0
  %429 = vmatprep.subr.bf16.mxu0 0
  %430 = vmatpush1.bf16.msra.mxu0 0
  %431 = vmatprep.subr.bf16.mxu0 0
  %432 = vmatpush1.bf16.msra.mxu0 0
  %433 = vmatprep.subr.bf16.mxu0 0
  %434 = vmatpush1.bf16.msra.mxu0 0
  %435 = vmatprep.subr.bf16.mxu0 0
  %436 = vmatpush1.bf16.msra.mxu0 0
  %437 = vmatprep.mubr.bf16.mxu0 0
  %438 = vmatmul.mubr.bf16.gmra.mrb[0].mxu0 %v306
  %v439 = vpop.f32.mrb[0].mxu0
  %v440 = vadd.f32 %v80, %v439
  %v441 = vpop.f32.mrb[0].mxu0
  %v442 = vpop.f32.mrb[0].mxu0
  %v443 = vadd.f32 %v81, %v442
  %v444 = vpop.f32.mrb[0].mxu0
  %445 = vmatprep.mubr.bf16.mxu0 0
  %446 = vmatmul.mubr.bf16.gmra.mrb[0].mxu0 %v309
  %v447 = vpop.f32.mrb[0].mxu0
  %v448 = vadd.f32 %v82, %v447
  %v449 = vpop.f32.mrb[0].mxu0
  %v450 = vpop.f32.mrb[0].mxu0
  %v451 = vadd.f32 %v83, %v450
  %v452 = vpop.f32.mrb[0].mxu0
  %453 = vmatprep.mubr.bf16.mxu0 0
  %454 = vmatmul.mubr.bf16.gmra.mrb[0].mxu0 %v312
  %v455 = vpop.f32.mrb[0].mxu0
  %v456 = vadd.f32 %v84, %v455
  %v457 = vpop.f32.mrb[0].mxu0
  %v458 = vpop.f32.mrb[0].mxu0
  %v459 = vadd.f32 %v85, %v458
  %v460 = vpop.f32.mrb[0].mxu0
  %461 = vmatprep.mubr.bf16.mxu0 0
  %462 = vmatmul.mubr.bf16.gmra.mrb[0].mxu0 %v315
  %v463 = vpop.f32.mrb[0].mxu0
  %v464 = vadd.f32 %v86, %v463
  %v465 = vpop.f32.mrb[0].mxu0
  %v466 = vpop.f32.mrb[0].mxu0
  %v467 = vadd.f32 %v87, %v466
  %v468 = vpop.f32.mrb[0].mxu0
  %469 = vmatprep.mubr.bf16.mxu0 0
  %470 = vmatmul.mubr.bf16.gmra.mrb[0].mxu0 %v318
  %v471 = vpop.f32.mrb[0].mxu0
  %v472 = vadd.f32 %v88, %v471
  %v473 = vpop.f32.mrb[0].mxu0
  %v474 = vpop.f32.mrb[0].mxu0
  %v475 = vadd.f32 %v89, %v474
  %v476 = vpop.f32.mrb[0].mxu0
  %477 = vmatprep.mubr.bf16.mxu0 0
  %478 = vmatmul.mubr.bf16.gmra.mrb[0].mxu0 %v321
  %v479 = vpop.f32.mrb[0].mxu0
  %v480 = vadd.f32 %v90, %v479
  %v481 = vpop.f32.mrb[0].mxu0
  %v482 = vpop.f32.mrb[0].mxu0
  %v483 = vadd.f32 %v91, %v482
  %v484 = vpop.f32.mrb[0].mxu0
  %485 = vmatprep.mubr.bf16.mxu0 0
  %486 = vmatmul.mubr.bf16.gmra.mrb[0].mxu0 %v324
  %v487 = vpop.f32.mrb[0].mxu0
  %v488 = vadd.f32 %v92, %v487
  %v489 = vpop.f32.mrb[0].mxu0
  %v490 = vpop.f32.mrb[0].mxu0
  %v491 = vadd.f32 %v93, %v490
  %v492 = vpop.f32.mrb[0].mxu0
  %493 = vmatprep.mubr.bf16.mxu0 0
  %494 = vmatmul.mubr.bf16.gmra.mrb[0].mxu0 %v327
  %v495 = vpop.f32.mrb[0].mxu0
  %v496 = vadd.f32 %v94, %v495
  %v497 = vpop.f32.mrb[0].mxu0
  %v498 = vpop.f32.mrb[0].mxu0
  %v499 = vadd.f32 %v95, %v498
  %v500 = vpop.f32.mrb[0].mxu0
  %501 = vmatprep.mubr.bf16.mxu0 0
  %502 = vmatmul.mubr.bf16.gmra.mrb[0].mxu0 %v330
  %v503 = vpop.f32.mrb[0].mxu0
  %v504 = vadd.f32 %v96, %v503
  %v505 = vpop.f32.mrb[0].mxu0
  %v506 = vpop.f32.mrb[0].mxu0
  %v507 = vadd.f32 %v97, %v506
  %v508 = vpop.f32.mrb[0].mxu0
  %509 = vmatprep.mubr.bf16.mxu0 0
  %510 = vmatmul.mubr.bf16.gmra.mrb[0].mxu0 %v333
  %v511 = vpop.f32.mrb[0].mxu0
  %v512 = vadd.f32 %v98, %v511
  %v513 = vpop.f32.mrb[0].mxu0
  %v514 = vpop.f32.mrb[0].mxu0
  %v515 = vadd.f32 %v99, %v514
  %v516 = vpop.f32.mrb[0].mxu0
  %517 = vmatprep.mubr.bf16.mxu0 0
  %518 = vmatmul.mubr.bf16.gmra.mrb[0].mxu0 %v336
  %v519 = vpop.f32.mrb[0].mxu0
  %v520 = vadd.f32 %v100, %v519
  %v521 = vpop.f32.mrb[0].mxu0
  %v522 = vpop.f32.mrb[0].mxu0
  %v523 = vadd.f32 %v101, %v522
  %v524 = vpop.f32.mrb[0].mxu0
  %525 = vmatprep.mubr.bf16.mxu0 0
  %526 = vmatmul.mubr.bf16.gmra.mrb[0].mxu0 %v339
  %v527 = vpop.f32.mrb[0].mxu0
  %v528 = vadd.f32 %v102, %v527
  %v529 = vpop.f32.mrb[0].mxu0
  %v530 = vpop.f32.mrb[0].mxu0
  %v531 = vadd.f32 %v103, %v530
  %v532 = vpop.f32.mrb[0].mxu0
  %533 = vmatprep.mubr.bf16.mxu0 0
  %534 = vmatmul.mubr.bf16.gmra.mrb[0].mxu0 %v342
  %v535 = vpop.f32.mrb[0].mxu0
  %v536 = vadd.f32 %v104, %v535
  %v537 = vpop.f32.mrb[0].mxu0
  %v538 = vpop.f32.mrb[0].mxu0
  %v539 = vadd.f32 %v105, %v538
  %v540 = vpop.f32.mrb[0].mxu0
  %541 = vmatprep.mubr.bf16.mxu0 0
  %542 = vmatmul.mubr.bf16.gmra.mrb[0].mxu0 %v345
  %v543 = vpop.f32.mrb[0].mxu0
  %v544 = vadd.f32 %v106, %v543
  %v545 = vpop.f32.mrb[0].mxu0
  %v546 = vpop.f32.mrb[0].mxu0
  %v547 = vadd.f32 %v107, %v546
  %v548 = vpop.f32.mrb[0].mxu0
  %549 = vmatprep.mubr.bf16.mxu0 0
  %550 = vmatmul.mubr.bf16.gmra.mrb[0].mxu0 %v348
  %v551 = vpop.f32.mrb[0].mxu0
  %v552 = vadd.f32 %v108, %v551
  %v553 = vpop.f32.mrb[0].mxu0
  %v554 = vpop.f32.mrb[0].mxu0
  %v555 = vadd.f32 %v109, %v554
  %v556 = vpop.f32.mrb[0].mxu0
  %557 = vmatprep.mubr.bf16.mxu0 0
  %558 = vmatmul.mubr.bf16.gmra.mrb[0].mxu0 %v351
  %v559 = vpop.f32.mrb[0].mxu0
  %v560 = vadd.f32 %v110, %v559
  %v561 = vpop.f32.mrb[0].mxu0
  %v562 = vpop.f32.mrb[0].mxu0
  %v563 = vadd.f32 %v111, %v562
  %v564 = vpop.f32.mrb[0].mxu0
  %565 = vmatprep.mubr.bf16.mxu0 0
  %566 = vmatmul.mubr.bf16.gmra.mrb[0].mxu0 %v354
  %v567 = vpop.f32.mrb[0].mxu0
  %v568 = vadd.f32 %v112, %v567
  %v569 = vpop.f32.mrb[0].mxu0
  %v570 = vpop.f32.mrb[0].mxu0
  %v571 = vadd.f32 %v113, %v570
  %v572 = vpop.f32.mrb[0].mxu0
  %573 = vmatprep.mubr.bf16.mxu0 0
  %574 = vmatmul.mubr.bf16.gmra.mrb[0].mxu0 %v357
  %v575 = vpop.f32.mrb[0].mxu0
  %v576 = vadd.f32 %v114, %v575
  %v577 = vpop.f32.mrb[0].mxu0
  %v578 = vpop.f32.mrb[0].mxu0
  %v579 = vadd.f32 %v115, %v578
  %v580 = vpop.f32.mrb[0].mxu0
  %581 = vmatprep.mubr.bf16.mxu0 0
  %582 = vmatmul.mubr.bf16.gmra.mrb[0].mxu0 %v360
  %v583 = vpop.f32.mrb[0].mxu0
  %v584 = vadd.f32 %v116, %v583
  %v585 = vpop.f32.mrb[0].mxu0
  %v586 = vpop.f32.mrb[0].mxu0
  %v587 = vadd.f32 %v117, %v586
  %v588 = vpop.f32.mrb[0].mxu0
  %589 = vmatprep.mubr.bf16.mxu0 0
  %590 = vmatmul.mubr.bf16.gmra.mrb[0].mxu0 %v363
  %v591 = vpop.f32.mrb[0].mxu0
  %v592 = vadd.f32 %v118, %v591
  %v593 = vpop.f32.mrb[0].mxu0
  %v594 = vpop.f32.mrb[0].mxu0
  %v595 = vadd.f32 %v119, %v594
  %v596 = vpop.f32.mrb[0].mxu0
  %597 = vmatprep.mubr.bf16.mxu0 0
  %598 = vmatmul.mubr.bf16.gmra.mrb[0].mxu0 %v366
  %v599 = vpop.f32.mrb[0].mxu0
  %v600 = vadd.f32 %v120, %v599
  %v601 = vpop.f32.mrb[0].mxu0
  %v602 = vpop.f32.mrb[0].mxu0
  %v603 = vadd.f32 %v121, %v602
  %v604 = vpop.f32.mrb[0].mxu0
  %605 = vmatprep.mubr.bf16.mxu0 0
  %606 = vmatmul.mubr.bf16.gmra.mrb[0].mxu0 %v369
  %v607 = vpop.f32.mrb[0].mxu0
  %v608 = vadd.f32 %v122, %v607
  %v609 = vpop.f32.mrb[0].mxu0
  %v610 = vpop.f32.mrb[0].mxu0
  %v611 = vadd.f32 %v123, %v610
  %v612 = vpop.f32.mrb[0].mxu0
  %613 = vmatprep.mubr.bf16.mxu0 0
  %614 = vmatmul.mubr.bf16.gmra.mrb[0].mxu0 %v372
  %v615 = vpop.f32.mrb[0].mxu0
  %v616 = vadd.f32 %v124, %v615
  %v617 = vpop.f32.mrb[0].mxu0
  %v618 = vpop.f32.mrb[0].mxu0
  %v619 = vadd.f32 %v125, %v618
  %v620 = vpop.f32.mrb[0].mxu0
  %621 = vmatprep.mubr.bf16.mxu0 0
  %622 = vmatmul.mubr.bf16.gmra.mrb[0].mxu0 %v375
  %v623 = vpop.f32.mrb[0].mxu0
  %v624 = vadd.f32 %v126, %v623
  %v625 = vpop.f32.mrb[0].mxu0
  %v626 = vpop.f32.mrb[0].mxu0
  %v627 = vadd.f32 %v127, %v626
  %v628 = vpop.f32.mrb[0].mxu0
  %629 = vmatprep.mubr.bf16.mxu0 0
  %630 = vmatmul.mubr.bf16.gmra.mrb[0].mxu0 %v378
  %v631 = vpop.f32.mrb[0].mxu0
  %v632 = vadd.f32 %v128, %v631
  %v633 = vpop.f32.mrb[0].mxu0
  %v634 = vpop.f32.mrb[0].mxu0
  %v635 = vadd.f32 %v129, %v634
  %v636 = vpop.f32.mrb[0].mxu0
  %637 = vmatprep.mubr.bf16.mxu0 0
  %638 = vmatmul.mubr.bf16.gmra.mrb[0].mxu0 %v381
  %v639 = vpop.f32.mrb[0].mxu0
  %v640 = vadd.f32 %v130, %v639
  %v641 = vpop.f32.mrb[0].mxu0
  %v642 = vpop.f32.mrb[0].mxu0
  %v643 = vadd.f32 %v131, %v642
  %v644 = vpop.f32.mrb[0].mxu0
  %645 = vmatprep.mubr.bf16.mxu0 0
  %646 = vmatmul.mubr.bf16.gmra.mrb[0].mxu0 %v384
  %v647 = vpop.f32.mrb[0].mxu0
  %v648 = vadd.f32 %v132, %v647
  %v649 = vpop.f32.mrb[0].mxu0
  %v650 = vpop.f32.mrb[0].mxu0
  %v651 = vadd.f32 %v133, %v650
  %v652 = vpop.f32.mrb[0].mxu0
  %653 = vmatprep.mubr.bf16.mxu0 0
  %654 = vmatmul.mubr.bf16.gmra.mrb[0].mxu0 %v387
  %v655 = vpop.f32.mrb[0].mxu0
  %v656 = vadd.f32 %v134, %v655
  %v657 = vpop.f32.mrb[0].mxu0
  %v658 = vpop.f32.mrb[0].mxu0
  %v659 = vadd.f32 %v135, %v658
  %v660 = vpop.f32.mrb[0].mxu0
  %661 = vmatprep.mubr.bf16.mxu0 0
  %662 = vmatmul.mubr.bf16.gmra.mrb[0].mxu0 %v390
  %v663 = vpop.f32.mrb[0].mxu0
  %v664 = vadd.f32 %v136, %v663
  %v665 = vpop.f32.mrb[0].mxu0
  %v666 = vpop.f32.mrb[0].mxu0
  %v667 = vadd.f32 %v137, %v666
  %v668 = vpop.f32.mrb[0].mxu0
  %669 = vmatprep.mubr.bf16.mxu0 0
  %670 = vmatmul.mubr.bf16.gmra.mrb[0].mxu0 %v393
  %v671 = vpop.f32.mrb[0].mxu0
  %v672 = vadd.f32 %v138, %v671
  %v673 = vpop.f32.mrb[0].mxu0
  %v674 = vpop.f32.mrb[0].mxu0
  %v675 = vadd.f32 %v139, %v674
  %v676 = vpop.f32.mrb[0].mxu0
  %677 = vmatprep.mubr.bf16.mxu0 0
  %678 = vmatmul.mubr.bf16.gmra.mrb[0].mxu0 %v396
  %v679 = vpop.f32.mrb[0].mxu0
  %v680 = vadd.f32 %v140, %v679
  %v681 = vpop.f32.mrb[0].mxu0
  %v682 = vpop.f32.mrb[0].mxu0
  %v683 = vadd.f32 %v141, %v682
  %v684 = vpop.f32.mrb[0].mxu0
  %685 = vmatprep.mubr.bf16.mxu0 0
  %686 = vmatmul.mubr.bf16.gmra.mrb[0].mxu0 %v399
  %v687 = vpop.f32.mrb[0].mxu0
  %v688 = vadd.f32 %v142, %v687
  %v689 = vpop.f32.mrb[0].mxu0
  %v690 = vpop.f32.mrb[0].mxu0
  %v691 = vadd.f32 %v143, %v690
  %v692 = vpop.f32.mrb[0].mxu0
  %693 = vdwg.mxu0
  %vm694 = vcmp.ge.f32.partialorder %v440, 0.0
  %vm695 = vcmp.ge.f32.partialorder %v443, 0.0
  %vm696 = vcmp.ge.f32.partialorder %v448, 0.0
  %vm697 = vcmp.ge.f32.partialorder %v451, 0.0
  %vm698 = vcmp.ge.f32.partialorder %v456, 0.0
  %vm699 = vcmp.ge.f32.partialorder %v459, 0.0
  %vm700 = vcmp.ge.f32.partialorder %v464, 0.0
  %vm701 = vcmp.ge.f32.partialorder %v467, 0.0
  %vm702 = vcmp.ge.f32.partialorder %v472, 0.0
  %vm703 = vcmp.ge.f32.partialorder %v475, 0.0
  %vm704 = vcmp.ge.f32.partialorder %v480, 0.0
  %vm705 = vcmp.ge.f32.partialorder %v483, 0.0
  %vm706 = vcmp.ge.f32.partialorder %v488, 0.0
  %vm707 = vcmp.ge.f32.partialorder %v491, 0.0
  %vm708 = vcmp.ge.f32.partialorder %v496, 0.0
  %vm709 = vcmp.ge.f32.partialorder %v499, 0.0
  %vm710 = vcmp.ge.f32.partialorder %v504, 0.0
  %vm711 = vcmp.ge.f32.partialorder %v507, 0.0
  %vm712 = vcmp.ge.f32.partialorder %v512, 0.0
  %vm713 = vcmp.ge.f32.partialorder %v515, 0.0
  %vm714 = vcmp.ge.f32.partialorder %v520, 0.0
  %vm715 = vcmp.ge.f32.partialorder %v523, 0.0
  %vm716 = vcmp.ge.f32.partialorder %v528, 0.0
  %vm717 = vcmp.ge.f32.partialorder %v531, 0.0
  %vm718 = vcmp.ge.f32.partialorder %v536, 0.0
  %vm719 = vcmp.ge.f32.partialorder %v539, 0.0
  %vm720 = vcmp.ge.f32.partialorder %v544, 0.0
  %vm721 = vcmp.ge.f32.partialorder %v547, 0.0
  %vm722 = vcmp.ge.f32.partialorder %v552, 0.0
  %vm723 = vcmp.ge.f32.partialorder %v555, 0.0
  %vm724 = vcmp.ge.f32.partialorder %v560, 0.0
  %vm725 = vcmp.ge.f32.partialorder %v563, 0.0
  %vm726 = vcmp.ge.f32.partialorder %v568, 0.0
  %vm727 = vcmp.ge.f32.partialorder %v571, 0.0
  %vm728 = vcmp.ge.f32.partialorder %v576, 0.0
  %vm729 = vcmp.ge.f32.partialorder %v579, 0.0
  %vm730 = vcmp.ge.f32.partialorder %v584, 0.0
  %vm731 = vcmp.ge.f32.partialorder %v587, 0.0
  %vm732 = vcmp.ge.f32.partialorder %v592, 0.0
  %vm733 = vcmp.ge.f32.partialorder %v595, 0.0
  %vm734 = vcmp.ge.f32.partialorder %v600, 0.0
  %vm735 = vcmp.ge.f32.partialorder %v603, 0.0
  %vm736 = vcmp.ge.f32.partialorder %v608, 0.0
  %vm737 = vcmp.ge.f32.partialorder %v611, 0.0
  %vm738 = vcmp.ge.f32.partialorder %v616, 0.0
  %vm739 = vcmp.ge.f32.partialorder %v619, 0.0
  %vm740 = vcmp.ge.f32.partialorder %v624, 0.0
  %vm741 = vcmp.ge.f32.partialorder %v627, 0.0
  %vm742 = vcmp.ge.f32.partialorder %v632, 0.0
  %vm743 = vcmp.ge.f32.partialorder %v635, 0.0
  %vm744 = vcmp.ge.f32.partialorder %v640, 0.0
  %vm745 = vcmp.ge.f32.partialorder %v643, 0.0
  %vm746 = vcmp.ge.f32.partialorder %v648, 0.0
  %vm747 = vcmp.ge.f32.partialorder %v651, 0.0
  %vm748 = vcmp.ge.f32.partialorder %v656, 0.0
  %vm749 = vcmp.ge.f32.partialorder %v659, 0.0
  %vm750 = vcmp.ge.f32.partialorder %v664, 0.0
  %vm751 = vcmp.ge.f32.partialorder %v667, 0.0
  %vm752 = vcmp.ge.f32.partialorder %v672, 0.0
  %vm753 = vcmp.ge.f32.partialorder %v675, 0.0
  %vm754 = vcmp.ge.f32.partialorder %v680, 0.0
  %vm755 = vcmp.ge.f32.partialorder %v683, 0.0
  %vm756 = vcmp.ge.f32.partialorder %v688, 0.0
  %vm757 = vcmp.ge.f32.partialorder %v691, 0.0
  %v758 = vmul.f32 %v440, 0.25
  %v759 = vmul.f32 %v443, 0.25
  %v760 = vmul.f32 %v448, 0.25
  %v761 = vmul.f32 %v451, 0.25
  %v762 = vmul.f32 %v456, 0.25
  %v763 = vmul.f32 %v459, 0.25
  %v764 = vmul.f32 %v464, 0.25
  %v765 = vmul.f32 %v467, 0.25
  %v766 = vmul.f32 %v472, 0.25
  %v767 = vmul.f32 %v475, 0.25
  %v768 = vmul.f32 %v480, 0.25
  %v769 = vmul.f32 %v483, 0.25
  %v770 = vmul.f32 %v488, 0.25
  %v771 = vmul.f32 %v491, 0.25
  %v772 = vmul.f32 %v496, 0.25
  %v773 = vmul.f32 %v499, 0.25
  %v774 = vmul.f32 %v504, 0.25
  %v775 = vmul.f32 %v507, 0.25
  %v776 = vmul.f32 %v512, 0.25
  %v777 = vmul.f32 %v515, 0.25
  %v778 = vmul.f32 %v520, 0.25
  %v779 = vmul.f32 %v523, 0.25
  %v780 = vmul.f32 %v528, 0.25
  %v781 = vmul.f32 %v531, 0.25
  %v782 = vmul.f32 %v536, 0.25
  %v783 = vmul.f32 %v539, 0.25
  %v784 = vmul.f32 %v544, 0.25
  %v785 = vmul.f32 %v547, 0.25
  %v786 = vmul.f32 %v552, 0.25
  %v787 = vmul.f32 %v555, 0.25
  %v788 = vmul.f32 %v560, 0.25
  %v789 = vmul.f32 %v563, 0.25
  %v790 = vmul.f32 %v568, 0.25
  %v791 = vmul.f32 %v571, 0.25
  %v792 = vmul.f32 %v576, 0.25
  %v793 = vmul.f32 %v579, 0.25
  %v794 = vmul.f32 %v584, 0.25
  %v795 = vmul.f32 %v587, 0.25
  %v796 = vmul.f32 %v592, 0.25
  %v797 = vmul.f32 %v595, 0.25
  %v798 = vmul.f32 %v600, 0.25
  %v799 = vmul.f32 %v603, 0.25
  %v800 = vmul.f32 %v608, 0.25
  %v801 = vmul.f32 %v611, 0.25
  %v802 = vmul.f32 %v616, 0.25
  %v803 = vmul.f32 %v619, 0.25
  %v804 = vmul.f32 %v624, 0.25
  %v805 = vmul.f32 %v627, 0.25
  %v806 = vmul.f32 %v632, 0.25
  %v807 = vmul.f32 %v635, 0.25
  %v808 = vmul.f32 %v640, 0.25
  %v809 = vmul.f32 %v643, 0.25
  %v810 = vmul.f32 %v648, 0.25
  %v811 = vmul.f32 %v651, 0.25
  %v812 = vmul.f32 %v656, 0.25
  %v813 = vmul.f32 %v659, 0.25
  %v814 = vmul.f32 %v664, 0.25
  %v815 = vmul.f32 %v667, 0.25
  %v816 = vmul.f32 %v672, 0.25
  %v817 = vmul.f32 %v675, 0.25
  %v818 = vmul.f32 %v680, 0.25
  %v819 = vmul.f32 %v683, 0.25
  %v820 = vmul.f32 %v688, 0.25
  %v821 = vmul.f32 %v691, 0.25
  %v822 = vsel %vm694, %v440, %v758
  %v823 = vsel %vm695, %v443, %v759
  %v824 = vsel %vm696, %v448, %v760
  %v825 = vsel %vm697, %v451, %v761
  %v826 = vsel %vm698, %v456, %v762
  %v827 = vsel %vm699, %v459, %v763
  %v828 = vsel %vm700, %v464, %v764
  %v829 = vsel %vm701, %v467, %v765
  %v830 = vsel %vm702, %v472, %v766
  %v831 = vsel %vm703, %v475, %v767
  %v832 = vsel %vm704, %v480, %v768
  %v833 = vsel %vm705, %v483, %v769
  %v834 = vsel %vm706, %v488, %v770
  %v835 = vsel %vm707, %v491, %v771
  %v836 = vsel %vm708, %v496, %v772
  %v837 = vsel %vm709, %v499, %v773
  %v838 = vsel %vm710, %v504, %v774
  %v839 = vsel %vm711, %v507, %v775
  %v840 = vsel %vm712, %v512, %v776
  %v841 = vsel %vm713, %v515, %v777
  %v842 = vsel %vm714, %v520, %v778
  %v843 = vsel %vm715, %v523, %v779
  %v844 = vsel %vm716, %v528, %v780
  %v845 = vsel %vm717, %v531, %v781
  %v846 = vsel %vm718, %v536, %v782
  %v847 = vsel %vm719, %v539, %v783
  %v848 = vsel %vm720, %v544, %v784
  %v849 = vsel %vm721, %v547, %v785
  %v850 = vsel %vm722, %v552, %v786
  %v851 = vsel %vm723, %v555, %v787
  %v852 = vsel %vm724, %v560, %v788
  %v853 = vsel %vm725, %v563, %v789
  %v854 = vsel %vm726, %v568, %v790
  %v855 = vsel %vm727, %v571, %v791
  %v856 = vsel %vm728, %v576, %v792
  %v857 = vsel %vm729, %v579, %v793
  %v858 = vsel %vm730, %v584, %v794
  %v859 = vsel %vm731, %v587, %v795
  %v860 = vsel %vm732, %v592, %v796
  %v861 = vsel %vm733, %v595, %v797
  %v862 = vsel %vm734, %v600, %v798
  %v863 = vsel %vm735, %v603, %v799
  %v864 = vsel %vm736, %v608, %v800
  %v865 = vsel %vm737, %v611, %v801
  %v866 = vsel %vm738, %v616, %v802
  %v867 = vsel %vm739, %v619, %v803
  %v868 = vsel %vm740, %v624, %v804
  %v869 = vsel %vm741, %v627, %v805
  %v870 = vsel %vm742, %v632, %v806
  %v871 = vsel %vm743, %v635, %v807
  %v872 = vsel %vm744, %v640, %v808
  %v873 = vsel %vm745, %v643, %v809
  %v874 = vsel %vm746, %v648, %v810
  %v875 = vsel %vm747, %v651, %v811
  %v876 = vsel %vm748, %v656, %v812
  %v877 = vsel %vm749, %v659, %v813
  %v878 = vsel %vm750, %v664, %v814
  %v879 = vsel %vm751, %v667, %v815
  %v880 = vsel %vm752, %v672, %v816
  %v881 = vsel %vm753, %v675, %v817
  %v882 = vsel %vm754, %v680, %v818
  %v883 = vsel %vm755, %v683, %v819
  %v884 = vsel %vm756, %v688, %v820
  %v885 = vsel %vm757, %v691, %v821
  %886 = vst [vmem:[%s3] sm:$0xff] %v822
  %887 = vst [vmem:[%s3 + $0x8] sm:$0xff] %v823
  %888 = vst [vmem:[%s3 + $0x10] sm:$0xff] %v824
  %889 = vst [vmem:[%s3 + $0x18] sm:$0xff] %v825
  %890 = vst [vmem:[%s3 + $0x20] sm:$0xff] %v826
  %891 = vst [vmem:[%s3 + $0x28] sm:$0xff] %v827
  %892 = vst [vmem:[%s3 + $0x30] sm:$0xff] %v828
  %893 = vst [vmem:[%s3 + $0x38] sm:$0xff] %v829
  %894 = vst [vmem:[%s3 + $0x40] sm:$0xff] %v830
  %895 = vst [vmem:[%s3 + $0x48] sm:$0xff] %v831
  %896 = vst [vmem:[%s3 + $0x50] sm:$0xff] %v832
  %897 = vst [vmem:[%s3 + $0x58] sm:$0xff] %v833
  %898 = vst [vmem:[%s3 + $0x60] sm:$0xff] %v834
  %899 = vst [vmem:[%s3 + $0x68] sm:$0xff] %v835
  %900 = vst [vmem:[%s3 + $0x70] sm:$0xff] %v836
  %901 = vst [vmem:[%s3 + $0x78] sm:$0xff] %v837
  %902 = vst [vmem:[%s3 + $0x80] sm:$0xff] %v838
  %903 = vst [vmem:[%s3 + $0x88] sm:$0xff] %v839
  %904 = vst [vmem:[%s3 + $0x90] sm:$0xff] %v840
  %905 = vst [vmem:[%s3 + $0x98] sm:$0xff] %v841
  %906 = vst [vmem:[%s3 + $0xa0] sm:$0xff] %v842
  %907 = vst [vmem:[%s3 + $0xa8] sm:$0xff] %v843
  %908 = vst [vmem:[%s3 + $0xb0] sm:$0xff] %v844
  %909 = vst [vmem:[%s3 + $0xb8] sm:$0xff] %v845
  %910 = vst [vmem:[%s3 + $0xc0] sm:$0xff] %v846
  %911 = vst [vmem:[%s3 + $0xc8] sm:$0xff] %v847
  %912 = vst [vmem:[%s3 + $0xd0] sm:$0xff] %v848
  %913 = vst [vmem:[%s3 + $0xd8] sm:$0xff] %v849
  %914 = vst [vmem:[%s3 + $0xe0] sm:$0xff] %v850
  %915 = vst [vmem:[%s3 + $0xe8] sm:$0xff] %v851
  %916 = vst [vmem:[%s3 + $0xf0] sm:$0xff] %v852
  %917 = vst [vmem:[%s3 + $0xf8] sm:$0xff] %v853
  %918 = vst [vmem:[%s3 + $0x100] sm:$0xff] %v854
  %919 = vst [vmem:[%s3 + $0x108] sm:$0xff] %v855
  %920 = vst [vmem:[%s3 + $0x110] sm:$0xff] %v856
  %921 = vst [vmem:[%s3 + $0x118] sm:$0xff] %v857
  %922 = vst [vmem:[%s3 + $0x120] sm:$0xff] %v858
  %923 = vst [vmem:[%s3 + $0x128] sm:$0xff] %v859
  %924 = vst [vmem:[%s3 + $0x130] sm:$0xff] %v860
  %925 = vst [vmem:[%s3 + $0x138] sm:$0xff] %v861
  %926 = vst [vmem:[%s3 + $0x140] sm:$0xff] %v862
  %927 = vst [vmem:[%s3 + $0x148] sm:$0xff] %v863
  %928 = vst [vmem:[%s3 + $0x150] sm:$0xff] %v864
  %929 = vst [vmem:[%s3 + $0x158] sm:$0xff] %v865
  %930 = vst [vmem:[%s3 + $0x160] sm:$0xff] %v866
  %931 = vst [vmem:[%s3 + $0x168] sm:$0xff] %v867
  %932 = vst [vmem:[%s3 + $0x170] sm:$0xff] %v868
  %933 = vst [vmem:[%s3 + $0x178] sm:$0xff] %v869
  %934 = vst [vmem:[%s3 + $0x180] sm:$0xff] %v870
  %935 = vst [vmem:[%s3 + $0x188] sm:$0xff] %v871
  %936 = vst [vmem:[%s3 + $0x190] sm:$0xff] %v872
  %937 = vst [vmem:[%s3 + $0x198] sm:$0xff] %v873
  %938 = vst [vmem:[%s3 + $0x1a0] sm:$0xff] %v874
  %939 = vst [vmem:[%s3 + $0x1a8] sm:$0xff] %v875
  %940 = vst [vmem:[%s3 + $0x1b0] sm:$0xff] %v876
  %941 = vst [vmem:[%s3 + $0x1b8] sm:$0xff] %v877
  %942 = vst [vmem:[%s3 + $0x1c0] sm:$0xff] %v878
  %943 = vst [vmem:[%s3 + $0x1c8] sm:$0xff] %v879
  %944 = vst [vmem:[%s3 + $0x1d0] sm:$0xff] %v880
  %945 = vst [vmem:[%s3 + $0x1d8] sm:$0xff] %v881
  %946 = vst [vmem:[%s3 + $0x1e0] sm:$0xff] %v882
  %947 = vst [vmem:[%s3 + $0x1e8] sm:$0xff] %v883
  %948 = vst [vmem:[%s3 + $0x1f0] sm:$0xff] %v884
  %949 = vst [vmem:[%s3 + $0x1f8] sm:$0xff] %v885
  // Predicated region
  $region14: #{forward.180} parent=0 // pred_check
    _
  $region15: #{forward.180} parent=0 // pred_check_branch
    %951 = sbr.rel (0) target = $region17
  $region16: #{forward.180} parent=0 // pred_region
    _
  $region17: #{forward.180} parent=0 // pred_fallthru
    _
  // Predicated region
  $region18: #{forward.180} parent=0 // pred_check
    _
  $region19: #{forward.180} parent=0 // pred_check_branch
    %953 = sbr.rel (0) target = $region21
  $region20: #{forward.180} parent=0 // pred_region
    _
  $region21: #{forward.180} parent=0 // pred_fallthru
    _

</llo_original>
